<compile_context>
chip_gen: v7x
topology: tpu7x:2x2x1
jax: 0.10.0
libtpu: 0.0.40
codegen_flags: <defaults>
</compile_context>

<pallas_src>
import functools

import numpy as np
import jax
import jax.numpy as jnp
from jax.experimental import pallas as pl
from jax.experimental.pallas import tpu as pltpu

HIDDEN = 16
NUM_LAYERS = 4
NUM_DIRS = 2  # bidirectional


def _bilstm_kernel(T, B, H,
                   xc_ref,      # (T*B, 2I)        [x natural | x time-reversed]
                   w_in0_ref,   # (2I, 8H)         layer-0 input weights (combined gate layout)
                   w_inr_ref,   # (L-1, 4H, 8H)    layer 1..L-1 input weights
                   whh_ref,     # (L, 2H, 8H)      block-diag recurrent weights (fw/bw)
                   b_ref,       # (L, 1, 8H)       pre-summed biases (b_ih + b_hh), both dirs
                   wfc_ref,     # (2H, Opad)       FC weight (lane-padded to 128)
                   bfc_ref,     # (1, Opad)        FC bias
                   out_ref,     # (T*B, Opad)      output slab (lane-dense)
                   seq_ref,     # (T*B, 2H) scratch  layer output, natural time order
                   flip_ref):   # (T*B, 2H) scratch  layer output, time-reversed order
    f32 = jnp.float32
    L = whh_ref.shape[0]
    H2 = 2 * H   # width of the fused hidden / cell state [h_fw | h_bw]

    for l in range(L):
        whh_l = whh_ref[l]                  # (2H, 8H) -- hoisted, stays vreg-resident
        b_l = b_ref[l]                      # (1, 8H)

        # ---- hoisted input projection: pre[t] = [x_fw(t), x_bw(T-1-t)] gates ----
        if l == 0:
            pre = jnp.dot(xc_ref[...], w_in0_ref[...],
                          preferred_element_type=f32) + b_l        # (T*B, 8H)
        else:
            # Read the previous layer's sequences fully before overwriting them.
            seq = seq_ref[...]              # natural order   (T*B, 2H)
            seqf = flip_ref[...]            # reversed order  (T*B, 2H)
            w_in = w_inr_ref[l - 1]         # (4H, 8H): rows 0:2H -> fw cols, 2H:4H -> bw cols
            pre = (jnp.dot(seq, w_in[:H2, :], preferred_element_type=f32)
                   + jnp.dot(seqf, w_in[H2:, :], preferred_element_type=f32)
                   + b_l)                   # (T*B, 8H)

        # ---- fused bidirectional recurrence: step s = fw time s, bw time T-1-s ----
        h = jnp.zeros((B, H2), f32)
        c = jnp.zeros((B, H2), f32)
        last_layer = (l == L - 1)
        for s in range(T):                  # fully unrolled (T static): static slices
            g = pre[s * B:(s + 1) * B, :] + jnp.dot(h, whh_l,
                                                    preferred_element_type=f32)  # (B, 8H)
            sg = jax.nn.sigmoid(g)          # one EUP pass over the whole 128-lane tile
            th = jnp.tanh(g)                # one EUP pass
            # combined gate layout: [i | f | g | o], each 2H wide = [fw, bw]
            c = sg[:, H2:2 * H2] * c + sg[:, 0:H2] * th[:, 2 * H2:3 * H2]
            h = sg[:, 3 * H2:4 * H2] * jnp.tanh(c)
            # natural-order sequence (feeds next layer's fw path and the FC head)
            seq_ref[s * B:(s + 1) * B, 0:H] = h[:, 0:H]
            seq_ref[(T - 1 - s) * B:(T - s) * B, H:H2] = h[:, H:H2]
            if not last_layer:
                # reversed-order copy (feeds next layer's bw path); off the critical path
                flip_ref[(T - 1 - s) * B:(T - s) * B, 0:H] = h[:, 0:H]
                flip_ref[s * B:(s + 1) * B, H:H2] = h[:, H:H2]

    # ---- final linear head: one batched matmul, one lane-dense slab write ----
    out_ref[...] = (jnp.dot(seq_ref[...], wfc_ref[...], preferred_element_type=f32)
                    + bfc_ref[...])


def init_params(key, num_country, hidden=HIDDEN, num_layers=NUM_LAYERS):
    """Deterministic synthetic init mirroring PyTorch LSTM U(-1/sqrt(H), 1/sqrt(H))."""
    in_dim0 = num_country + 1
    out_dim = num_country + 1
    k = 1.0 / np.sqrt(hidden)

    wih0 = None
    wihr, whh, bias = [], [], []
    for l in range(num_layers):
        in_dim = in_dim0 if l == 0 else 2 * hidden
        d_wih, d_whh, d_b = [], [], []
        for _d in range(NUM_DIRS):
            key, k1, k2, k3, k4 = jax.random.split(key, 5)
            wih = jax.random.uniform(k1, (4 * hidden, in_dim), jnp.float32, -k, k)
            whh_ = jax.random.uniform(k2, (4 * hidden, hidden), jnp.float32, -k, k)
            bih = jax.random.uniform(k3, (4 * hidden,), jnp.float32, -k, k)
            bhh = jax.random.uniform(k4, (4 * hidden,), jnp.float32, -k, k)
            d_wih.append(wih.T)                    # (in_dim, 4H)
            d_whh.append(whh_.T)                   # (H, 4H)
            d_b.append((bih + bhh)[None, :])       # (1, 4H) pre-summed bias
        if l == 0:
            wih0 = jnp.stack(d_wih)                # (2, I, 4H)
        else:
            wihr.append(jnp.stack(d_wih))          # (2, 2H, 4H)
        whh.append(jnp.stack(d_whh))
        bias.append(jnp.stack(d_b))

    key, k1, k2 = jax.random.split(key, 3)
    kf = 1.0 / np.sqrt(2 * hidden)
    wfc = jax.random.uniform(k1, (out_dim, 2 * hidden), jnp.float32, -kf, kf)
    bfc = jax.random.uniform(k2, (out_dim,), jnp.float32, -kf, kf)
    return {
        "wih0": wih0,                              # (2, I, 4H)
        "wihr": jnp.stack(wihr),                   # (L-1, 2, 2H, 4H)
        "whh": jnp.stack(whh),                     # (L, 2, H, 4H)
        "b": jnp.stack(bias),                      # (L, 2, 1, 4H)
        "wfc": wfc.T,                              # (2H, O)
        "bfc": bfc[None, :],                       # (1, O)
    }


def _place_gate_cols(dst, rows, w, H, d):
    """Scatter the 4 gate blocks of direction-d weight `w` (rows, 4H) into the
    interleaved combined layout [i_f i_b | f_f f_b | g_f g_b | o_f o_b] of `dst`."""
    for k in range(4):
        c0 = k * 2 * H + d * H
        dst[rows, c0:c0 + H] = w[:, k * H:(k + 1) * H]


def pack_params(params, hidden=HIDDEN):
    """Repack raw per-direction parameters into the fused kernel layout (host-side)."""
    H = hidden
    wih0 = np.asarray(params["wih0"])     # (2, I, 4H)
    wihr = np.asarray(params["wihr"])     # (L-1, 2, 2H, 4H)
    whh = np.asarray(params["whh"])       # (L, 2, H, 4H)
    b = np.asarray(params["b"])           # (L, 2, 1, 4H)
    wfc = np.asarray(params["wfc"])       # (2H, O)
    bfc = np.asarray(params["bfc"])       # (1, O)
    L = whh.shape[0]
    I = wih0.shape[1]
    O = wfc.shape[1]
    Opad = ((O + 127) // 128) * 128       # lane-dense output slab

    # layer 0: rows 0:I multiply x (natural), rows I:2I multiply x (time-reversed)
    w_in0 = np.zeros((2 * I, 8 * H), np.float32)
    _place_gate_cols(w_in0, slice(0, I), wih0[0], H, 0)
    _place_gate_cols(w_in0, slice(I, 2 * I), wih0[1], H, 1)

    # layers 1..L-1: rows 0:2H multiply seq (natural), rows 2H:4H multiply seq (reversed)
    w_inr = np.zeros((L - 1, 4 * H, 8 * H), np.float32)
    for l in range(1, L):
        _place_gate_cols(w_inr[l - 1], slice(0, 2 * H), wihr[l - 1, 0], H, 0)
        _place_gate_cols(w_inr[l - 1], slice(2 * H, 4 * H), wihr[l - 1, 1], H, 1)

    # block-diagonal recurrent weights: rows 0:H (h_fw) -> fw cols, rows H:2H (h_bw) -> bw cols
    whh_blk = np.zeros((L, 2 * H, 8 * H), np.float32)
    for l in range(L):
        _place_gate_cols(whh_blk[l], slice(0, H), whh[l, 0], H, 0)
        _place_gate_cols(whh_blk[l], slice(H, 2 * H), whh[l, 1], H, 1)

    b_blk = np.zeros((L, 1, 8 * H), np.float32)
    for l in range(L):
        _place_gate_cols(b_blk[l], slice(0, 1), b[l, 0], H, 0)
        _place_gate_cols(b_blk[l], slice(0, 1), b[l, 1], H, 1)

    wfc_pad = np.zeros((2 * H, Opad), np.float32)
    wfc_pad[:, :O] = wfc
    bfc_pad = np.zeros((1, Opad), np.float32)
    bfc_pad[:, :O] = bfc

    return {
        "w_in0": jnp.asarray(w_in0),               # (2I, 8H)
        "w_inr": jnp.asarray(w_inr),               # (L-1, 4H, 8H)
        "whh": jnp.asarray(whh_blk),               # (L, 2H, 8H)
        "b": jnp.asarray(b_blk),                   # (L, 1, 8H)
        "wfc": jnp.asarray(wfc_pad),               # (2H, Opad)
        "bfc": jnp.asarray(bfc_pad),               # (1, Opad)
        "out_dim": O,
    }


def bilstm_model_forward(x, packed):
    """x: (B, T, num_country+1) batch_first, like the PyTorch module. Returns (B, T, num_country+1)."""
    B, T, I = x.shape
    H = HIDDEN
    O = packed["out_dim"]
    Opad = packed["wfc"].shape[1]

    # time-major, and pack [x natural | x time-reversed] along lanes so the layer-0
    # pre-activation (both directions) is a single batched matmul in the kernel.
    xt = jnp.transpose(x, (1, 0, 2)).astype(jnp.float32)             # (T, B, I)
    xc = jnp.concatenate([xt, xt[::-1]], axis=-1).reshape(T * B, 2 * I)

    vmem = pl.BlockSpec(memory_space=pltpu.MemorySpace.VMEM)
    out_pad = pl.pallas_call(
        functools.partial(_bilstm_kernel, T, B, H),
        out_shape=jax.ShapeDtypeStruct((T * B, Opad), jnp.float32),
        in_specs=[vmem] * 7,
        out_specs=vmem,
        scratch_shapes=[pltpu.VMEM((T * B, 2 * H), jnp.float32),   # natural-order hidden seq
                        pltpu.VMEM((T * B, 2 * H), jnp.float32)],  # time-reversed hidden seq
    )(xc, packed["w_in0"], packed["w_inr"], packed["whh"], packed["b"],
      packed["wfc"], packed["bfc"])

    out = out_pad[:, :O].reshape(T, B, O)
    return jnp.transpose(out, (1, 0, 2))


def reference_forward(x, params):
    """Pure-JAX reference with PyTorch bidirectional-LSTM semantics (gate order i,f,g,o)."""
    B, T, _ = x.shape
    H = HIDDEN
    seq = x.astype(jnp.float32)                    # (B, T, feat)
    for l in range(NUM_LAYERS):
        dir_outs = []
        for d in range(NUM_DIRS):
            wih = params["wih0"][d] if l == 0 else params["wihr"][l - 1, d]
            whh = params["whh"][l, d]
            b = params["b"][l, d]
            h = jnp.zeros((B, H), jnp.float32)
            c = jnp.zeros((B, H), jnp.float32)
            outs = [None] * T
            ts = range(T) if d == 0 else range(T - 1, -1, -1)
            for t in ts:
                g = seq[:, t, :] @ wih + h @ whh + b
                i = jax.nn.sigmoid(g[:, :H])
                f = jax.nn.sigmoid(g[:, H:2 * H])
                gg = jnp.tanh(g[:, 2 * H:3 * H])
                o = jax.nn.sigmoid(g[:, 3 * H:])
                c = f * c + i * gg
                h = o * jnp.tanh(c)
                outs[t] = h
            dir_outs.append(jnp.stack(outs, axis=1))           # (B, T, H)
        seq = jnp.concatenate(dir_outs, axis=-1)               # (B, T, 2H)
    return seq @ params["wfc"] + params["bfc"]


if __name__ == "__main__":
    num_country = 4          # feature dim = num_country + 1 = 5
    batch, seq_len = 2, 8

    key = jax.random.PRNGKey(0)
    key, pkey, xkey = jax.random.split(key, 3)
    params = init_params(pkey, num_country)
    packed = pack_params(params)
    x = jax.random.normal(xkey, (batch, seq_len, num_country + 1), jnp.float32)

    out = bilstm_model_forward(x, packed)
    out = jax.block_until_ready(out)

    ref = reference_forward(x, params)
    assert out.shape == (batch, seq_len, num_country + 1)
    np.testing.assert_allclose(np.asarray(out), np.asarray(ref), rtol=1e-2, atol=1e-2)
    print("KERNEL_OK")
</pallas_src>

<mosaic_0001>
module attributes {stable_mosaic.version = 11 : i64} {
  func.func @_bilstm_kernel(%arg0: memref<16x10xf32, #tpu.memory_space<vmem>>, %arg1: memref<10x128xf32, #tpu.memory_space<vmem>>, %arg2: memref<3x64x128xf32, #tpu.memory_space<vmem>>, %arg3: memref<4x32x128xf32, #tpu.memory_space<vmem>>, %arg4: memref<4x1x128xf32, #tpu.memory_space<vmem>>, %arg5: memref<32x128xf32, #tpu.memory_space<vmem>>, %arg6: memref<1x128xf32, #tpu.memory_space<vmem>>, %arg7: memref<16x128xf32, #tpu.memory_space<vmem>>, %arg8: memref<16x32xf32, #tpu.memory_space<vmem>>, %arg9: memref<16x32xf32, #tpu.memory_space<vmem>>) attributes {dimension_semantics = [], scalar_prefetch = 0 : i64, scratch_operands = 2 : i64, tpu.core_type = #tpu.core_type<tc>} {
    %c0 = arith.constant 0 : index
    %c0_0 = arith.constant 0 : index
    %c0_1 = arith.constant 0 : index
    %0 = vector.load %arg3[%c0, %c0_0, %c0_1] : memref<4x32x128xf32, #tpu.memory_space<vmem>>, vector<1x32x128xf32>
    %1 = vector.shape_cast %0 : vector<1x32x128xf32> to vector<32x128xf32>
    %c0_2 = arith.constant 0 : index
    %c0_3 = arith.constant 0 : index
    %c0_4 = arith.constant 0 : index
    %2 = vector.load %arg4[%c0_2, %c0_3, %c0_4] : memref<4x1x128xf32, #tpu.memory_space<vmem>>, vector<1x1x128xf32>
    %3 = vector.shape_cast %2 : vector<1x1x128xf32> to vector<1x128xf32>
    %c0_5 = arith.constant 0 : index
    %c0_6 = arith.constant 0 : index
    %4 = vector.load %arg0[%c0_5, %c0_6] : memref<16x10xf32, #tpu.memory_space<vmem>>, vector<16x10xf32>
    %c0_7 = arith.constant 0 : index
    %c0_8 = arith.constant 0 : index
    %5 = vector.load %arg1[%c0_7, %c0_8] : memref<10x128xf32, #tpu.memory_space<vmem>>, vector<10x128xf32>
    %cst = arith.constant dense<0.000000e+00> : vector<16x128xf32>
    %6 = tpu.matmul %4, %5, %cst {dimension_numbers = #tpu.dot_dimension_numbers<[1], [0], [0], [1], [0, 0, 1, 1], [], []>} : vector<16x10xf32>, vector<10x128xf32>, vector<16x128xf32> -> vector<16x128xf32>
    %7 = vector.broadcast %3 : vector<1x128xf32> to vector<16x128xf32>
    %8 = arith.addf %6, %7 : vector<16x128xf32>
    %cst_9 = arith.constant 0.000000e+00 : f32
    %9 = vector.broadcast %cst_9 : f32 to vector<2x32xf32>
    %cst_10 = arith.constant 0.000000e+00 : f32
    %10 = vector.broadcast %cst_10 : f32 to vector<2x32xf32>
    %11 = vector.extract_strided_slice %8 {offsets = [0, 0], sizes = [2, 128], strides = [1, 1]} : vector<16x128xf32> to vector<2x128xf32>
    %cst_11 = arith.constant dense<0.000000e+00> : vector<2x128xf32>
    %12 = tpu.matmul %9, %1, %cst_11 {dimension_numbers = #tpu.dot_dimension_numbers<[1], [0], [0], [1], [0, 0, 1, 1], [], []>} : vector<2x32xf32>, vector<32x128xf32>, vector<2x128xf32> -> vector<2x128xf32>
    %13 = arith.addf %11, %12 : vector<2x128xf32>
    %14 = arith.negf %13 : vector<2x128xf32>
    %15 = math.exp %14 : vector<2x128xf32>
    %cst_12 = arith.constant 1.000000e+00 : f32
    %16 = vector.broadcast %cst_12 : f32 to vector<2x128xf32>
    %17 = arith.addf %16, %15 : vector<2x128xf32>
    %18 = arith.divf %16, %17 : vector<2x128xf32>
    %19 = math.tanh %13 : vector<2x128xf32>
    %20 = vector.extract_strided_slice %18 {offsets = [0, 32], sizes = [2, 32], strides = [1, 1]} : vector<2x128xf32> to vector<2x32xf32>
    %21 = arith.mulf %20, %10 : vector<2x32xf32>
    %22 = vector.extract_strided_slice %18 {offsets = [0, 0], sizes = [2, 32], strides = [1, 1]} : vector<2x128xf32> to vector<2x32xf32>
    %23 = vector.extract_strided_slice %19 {offsets = [0, 64], sizes = [2, 32], strides = [1, 1]} : vector<2x128xf32> to vector<2x32xf32>
    %24 = arith.mulf %22, %23 : vector<2x32xf32>
    %25 = arith.addf %21, %24 : vector<2x32xf32>
    %26 = vector.extract_strided_slice %18 {offsets = [0, 96], sizes = [2, 32], strides = [1, 1]} : vector<2x128xf32> to vector<2x32xf32>
    %27 = math.tanh %25 : vector<2x32xf32>
    %28 = arith.mulf %26, %27 : vector<2x32xf32>
    %29 = vector.extract_strided_slice %28 {offsets = [0, 0], sizes = [2, 16], strides = [1, 1]} : vector<2x32xf32> to vector<2x16xf32>
    %c0_13 = arith.constant 0 : index
    %c0_14 = arith.constant 0 : index
    %30 = vector.load %arg8[%c0_13, %c0_14] : memref<16x32xf32, #tpu.memory_space<vmem>>, vector<2x16xf32>
    tpu.vector_store %arg8[%c0_13, %c0_14], %29 {strides = array<i32>} : memref<16x32xf32, #tpu.memory_space<vmem>>, vector<2x16xf32>,
    %31 = vector.extract_strided_slice %28 {offsets = [0, 16], sizes = [2, 16], strides = [1, 1]} : vector<2x32xf32> to vector<2x16xf32>
    %c14 = arith.constant 14 : index
    %c16 = arith.constant 16 : index
    %32 = vector.load %arg8[%c14, %c16] : memref<16x32xf32, #tpu.memory_space<vmem>>, vector<2x16xf32>
    tpu.vector_store %arg8[%c14, %c16], %31 {strides = array<i32>} : memref<16x32xf32, #tpu.memory_space<vmem>>, vector<2x16xf32>,
    %33 = vector.extract_strided_slice %28 {offsets = [0, 0], sizes = [2, 16], strides = [1, 1]} : vector<2x32xf32> to vector<2x16xf32>
    %c14_15 = arith.constant 14 : index
    %c0_16 = arith.constant 0 : index
    %34 = vector.load %arg9[%c14_15, %c0_16] : memref<16x32xf32, #tpu.memory_space<vmem>>, vector<2x16xf32>
    tpu.vector_store %arg9[%c14_15, %c0_16], %33 {strides = array<i32>} : memref<16x32xf32, #tpu.memory_space<vmem>>, vector<2x16xf32>,
    %35 = vector.extract_strided_slice %28 {offsets = [0, 16], sizes = [2, 16], strides = [1, 1]} : vector<2x32xf32> to vector<2x16xf32>
    %c0_17 = arith.constant 0 : index
    %c16_18 = arith.constant 16 : index
    %36 = vector.load %arg9[%c0_17, %c16_18] : memref<16x32xf32, #tpu.memory_space<vmem>>, vector<2x16xf32>
    tpu.vector_store %arg9[%c0_17, %c16_18], %35 {strides = array<i32>} : memref<16x32xf32, #tpu.memory_space<vmem>>, vector<2x16xf32>,
    %37 = vector.extract_strided_slice %8 {offsets = [2, 0], sizes = [2, 128], strides = [1, 1]} : vector<16x128xf32> to vector<2x128xf32>
    %cst_19 = arith.constant dense<0.000000e+00> : vector<2x128xf32>
    %38 = tpu.matmul %28, %1, %cst_19 {dimension_numbers = #tpu.dot_dimension_numbers<[1], [0], [0], [1], [0, 0, 1, 1], [], []>} : vector<2x32xf32>, vector<32x128xf32>, vector<2x128xf32> -> vector<2x128xf32>
    %39 = arith.addf %37, %38 : vector<2x128xf32>
    %40 = arith.negf %39 : vector<2x128xf32>
    %41 = math.exp %40 : vector<2x128xf32>
    %cst_20 = arith.constant 1.000000e+00 : f32
    %42 = vector.broadcast %cst_20 : f32 to vector<2x128xf32>
    %43 = arith.addf %42, %41 : vector<2x128xf32>
    %44 = arith.divf %42, %43 : vector<2x128xf32>
    %45 = math.tanh %39 : vector<2x128xf32>
    %46 = vector.extract_strided_slice %44 {offsets = [0, 32], sizes = [2, 32], strides = [1, 1]} : vector<2x128xf32> to vector<2x32xf32>
    %47 = arith.mulf %46, %25 : vector<2x32xf32>
    %48 = vector.extract_strided_slice %44 {offsets = [0, 0], sizes = [2, 32], strides = [1, 1]} : vector<2x128xf32> to vector<2x32xf32>
    %49 = vector.extract_strided_slice %45 {offsets = [0, 64], sizes = [2, 32], strides = [1, 1]} : vector<2x128xf32> to vector<2x32xf32>
    %50 = arith.mulf %48, %49 : vector<2x32xf32>
    %51 = arith.addf %47, %50 : vector<2x32xf32>
    %52 = vector.extract_strided_slice %44 {offsets = [0, 96], sizes = [2, 32], strides = [1, 1]} : vector<2x128xf32> to vector<2x32xf32>
    %53 = math.tanh %51 : vector<2x32xf32>
    %54 = arith.mulf %52, %53 : vector<2x32xf32>
    %55 = vector.extract_strided_slice %54 {offsets = [0, 0], sizes = [2, 16], strides = [1, 1]} : vector<2x32xf32> to vector<2x16xf32>
    %c2 = arith.constant 2 : index
    %c0_21 = arith.constant 0 : index
    %56 = vector.load %arg8[%c2, %c0_21] : memref<16x32xf32, #tpu.memory_space<vmem>>, vector<2x16xf32>
    tpu.vector_store %arg8[%c2, %c0_21], %55 {strides = array<i32>} : memref<16x32xf32, #tpu.memory_space<vmem>>, vector<2x16xf32>,
    %57 = vector.extract_strided_slice %54 {offsets = [0, 16], sizes = [2, 16], strides = [1, 1]} : vector<2x32xf32> to vector<2x16xf32>
    %c12 = arith.constant 12 : index
    %c16_22 = arith.constant 16 : index
    %58 = vector.load %arg8[%c12, %c16_22] : memref<16x32xf32, #tpu.memory_space<vmem>>, vector<2x16xf32>
    tpu.vector_store %arg8[%c12, %c16_22], %57 {strides = array<i32>} : memref<16x32xf32, #tpu.memory_space<vmem>>, vector<2x16xf32>,
    %59 = vector.extract_strided_slice %54 {offsets = [0, 0], sizes = [2, 16], strides = [1, 1]} : vector<2x32xf32> to vector<2x16xf32>
    %c12_23 = arith.constant 12 : index
    %c0_24 = arith.constant 0 : index
    %60 = vector.load %arg9[%c12_23, %c0_24] : memref<16x32xf32, #tpu.memory_space<vmem>>, vector<2x16xf32>
    tpu.vector_store %arg9[%c12_23, %c0_24], %59 {strides = array<i32>} : memref<16x32xf32, #tpu.memory_space<vmem>>, vector<2x16xf32>,
    %61 = vector.extract_strided_slice %54 {offsets = [0, 16], sizes = [2, 16], strides = [1, 1]} : vector<2x32xf32> to vector<2x16xf32>
    %c2_25 = arith.constant 2 : index
    %c16_26 = arith.constant 16 : index
    %62 = vector.load %arg9[%c2_25, %c16_26] : memref<16x32xf32, #tpu.memory_space<vmem>>, vector<2x16xf32>
    tpu.vector_store %arg9[%c2_25, %c16_26], %61 {strides = array<i32>} : memref<16x32xf32, #tpu.memory_space<vmem>>, vector<2x16xf32>,
    %63 = vector.extract_strided_slice %8 {offsets = [4, 0], sizes = [2, 128], strides = [1, 1]} : vector<16x128xf32> to vector<2x128xf32>
    %cst_27 = arith.constant dense<0.000000e+00> : vector<2x128xf32>
    %64 = tpu.matmul %54, %1, %cst_27 {dimension_numbers = #tpu.dot_dimension_numbers<[1], [0], [0], [1], [0, 0, 1, 1], [], []>} : vector<2x32xf32>, vector<32x128xf32>, vector<2x128xf32> -> vector<2x128xf32>
    %65 = arith.addf %63, %64 : vector<2x128xf32>
    %66 = arith.negf %65 : vector<2x128xf32>
    %67 = math.exp %66 : vector<2x128xf32>
    %cst_28 = arith.constant 1.000000e+00 : f32
    %68 = vector.broadcast %cst_28 : f32 to vector<2x128xf32>
    %69 = arith.addf %68, %67 : vector<2x128xf32>
    %70 = arith.divf %68, %69 : vector<2x128xf32>
    %71 = math.tanh %65 : vector<2x128xf32>
    %72 = vector.extract_strided_slice %70 {offsets = [0, 32], sizes = [2, 32], strides = [1, 1]} : vector<2x128xf32> to vector<2x32xf32>
    %73 = arith.mulf %72, %51 : vector<2x32xf32>
    %74 = vector.extract_strided_slice %70 {offsets = [0, 0], sizes = [2, 32], strides = [1, 1]} : vector<2x128xf32> to vector<2x32xf32>
    %75 = vector.extract_strided_slice %71 {offsets = [0, 64], sizes = [2, 32], strides = [1, 1]} : vector<2x128xf32> to vector<2x32xf32>
    %76 = arith.mulf %74, %75 : vector<2x32xf32>
    %77 = arith.addf %73, %76 : vector<2x32xf32>
    %78 = vector.extract_strided_slice %70 {offsets = [0, 96], sizes = [2, 32], strides = [1, 1]} : vector<2x128xf32> to vector<2x32xf32>
    %79 = math.tanh %77 : vector<2x32xf32>
    %80 = arith.mulf %78, %79 : vector<2x32xf32>
    %81 = vector.extract_strided_slice %80 {offsets = [0, 0], sizes = [2, 16], strides = [1, 1]} : vector<2x32xf32> to vector<2x16xf32>
    %c4 = arith.constant 4 : index
    %c0_29 = arith.constant 0 : index
    %82 = vector.load %arg8[%c4, %c0_29] : memref<16x32xf32, #tpu.memory_space<vmem>>, vector<2x16xf32>
    tpu.vector_store %arg8[%c4, %c0_29], %81 {strides = array<i32>} : memref<16x32xf32, #tpu.memory_space<vmem>>, vector<2x16xf32>,
    %83 = vector.extract_strided_slice %80 {offsets = [0, 16], sizes = [2, 16], strides = [1, 1]} : vector<2x32xf32> to vector<2x16xf32>
    %c10 = arith.constant 10 : index
    %c16_30 = arith.constant 16 : index
    %84 = vector.load %arg8[%c10, %c16_30] : memref<16x32xf32, #tpu.memory_space<vmem>>, vector<2x16xf32>
    tpu.vector_store %arg8[%c10, %c16_30], %83 {strides = array<i32>} : memref<16x32xf32, #tpu.memory_space<vmem>>, vector<2x16xf32>,
    %85 = vector.extract_strided_slice %80 {offsets = [0, 0], sizes = [2, 16], strides = [1, 1]} : vector<2x32xf32> to vector<2x16xf32>
    %c10_31 = arith.constant 10 : index
    %c0_32 = arith.constant 0 : index
    %86 = vector.load %arg9[%c10_31, %c0_32] : memref<16x32xf32, #tpu.memory_space<vmem>>, vector<2x16xf32>
    tpu.vector_store %arg9[%c10_31, %c0_32], %85 {strides = array<i32>} : memref<16x32xf32, #tpu.memory_space<vmem>>, vector<2x16xf32>,
    %87 = vector.extract_strided_slice %80 {offsets = [0, 16], sizes = [2, 16], strides = [1, 1]} : vector<2x32xf32> to vector<2x16xf32>
    %c4_33 = arith.constant 4 : index
    %c16_34 = arith.constant 16 : index
    %88 = vector.load %arg9[%c4_33, %c16_34] : memref<16x32xf32, #tpu.memory_space<vmem>>, vector<2x16xf32>
    tpu.vector_store %arg9[%c4_33, %c16_34], %87 {strides = array<i32>} : memref<16x32xf32, #tpu.memory_space<vmem>>, vector<2x16xf32>,
    %89 = vector.extract_strided_slice %8 {offsets = [6, 0], sizes = [2, 128], strides = [1, 1]} : vector<16x128xf32> to vector<2x128xf32>
    %cst_35 = arith.constant dense<0.000000e+00> : vector<2x128xf32>
    %90 = tpu.matmul %80, %1, %cst_35 {dimension_numbers = #tpu.dot_dimension_numbers<[1], [0], [0], [1], [0, 0, 1, 1], [], []>} : vector<2x32xf32>, vector<32x128xf32>, vector<2x128xf32> -> vector<2x128xf32>
    %91 = arith.addf %89, %90 : vector<2x128xf32>
    %92 = arith.negf %91 : vector<2x128xf32>
    %93 = math.exp %92 : vector<2x128xf32>
    %cst_36 = arith.constant 1.000000e+00 : f32
    %94 = vector.broadcast %cst_36 : f32 to vector<2x128xf32>
    %95 = arith.addf %94, %93 : vector<2x128xf32>
    %96 = arith.divf %94, %95 : vector<2x128xf32>
    %97 = math.tanh %91 : vector<2x128xf32>
    %98 = vector.extract_strided_slice %96 {offsets = [0, 32], sizes = [2, 32], strides = [1, 1]} : vector<2x128xf32> to vector<2x32xf32>
    %99 = arith.mulf %98, %77 : vector<2x32xf32>
    %100 = vector.extract_strided_slice %96 {offsets = [0, 0], sizes = [2, 32], strides = [1, 1]} : vector<2x128xf32> to vector<2x32xf32>
    %101 = vector.extract_strided_slice %97 {offsets = [0, 64], sizes = [2, 32], strides = [1, 1]} : vector<2x128xf32> to vector<2x32xf32>
    %102 = arith.mulf %100, %101 : vector<2x32xf32>
    %103 = arith.addf %99, %102 : vector<2x32xf32>
    %104 = vector.extract_strided_slice %96 {offsets = [0, 96], sizes = [2, 32], strides = [1, 1]} : vector<2x128xf32> to vector<2x32xf32>
    %105 = math.tanh %103 : vector<2x32xf32>
    %106 = arith.mulf %104, %105 : vector<2x32xf32>
    %107 = vector.extract_strided_slice %106 {offsets = [0, 0], sizes = [2, 16], strides = [1, 1]} : vector<2x32xf32> to vector<2x16xf32>
    %c6 = arith.constant 6 : index
    %c0_37 = arith.constant 0 : index
    %108 = vector.load %arg8[%c6, %c0_37] : memref<16x32xf32, #tpu.memory_space<vmem>>, vector<2x16xf32>
    tpu.vector_store %arg8[%c6, %c0_37], %107 {strides = array<i32>} : memref<16x32xf32, #tpu.memory_space<vmem>>, vector<2x16xf32>,
    %109 = vector.extract_strided_slice %106 {offsets = [0, 16], sizes = [2, 16], strides = [1, 1]} : vector<2x32xf32> to vector<2x16xf32>
    %c8 = arith.constant 8 : index
    %c16_38 = arith.constant 16 : index
    %110 = vector.load %arg8[%c8, %c16_38] : memref<16x32xf32, #tpu.memory_space<vmem>>, vector<2x16xf32>
    tpu.vector_store %arg8[%c8, %c16_38], %109 {strides = array<i32>} : memref<16x32xf32, #tpu.memory_space<vmem>>, vector<2x16xf32>,
    %111 = vector.extract_strided_slice %106 {offsets = [0, 0], sizes = [2, 16], strides = [1, 1]} : vector<2x32xf32> to vector<2x16xf32>
    %c8_39 = arith.constant 8 : index
    %c0_40 = arith.constant 0 : index
    %112 = vector.load %arg9[%c8_39, %c0_40] : memref<16x32xf32, #tpu.memory_space<vmem>>, vector<2x16xf32>
    tpu.vector_store %arg9[%c8_39, %c0_40], %111 {strides = array<i32>} : memref<16x32xf32, #tpu.memory_space<vmem>>, vector<2x16xf32>,
    %113 = vector.extract_strided_slice %106 {offsets = [0, 16], sizes = [2, 16], strides = [1, 1]} : vector<2x32xf32> to vector<2x16xf32>
    %c6_41 = arith.constant 6 : index
    %c16_42 = arith.constant 16 : index
    %114 = vector.load %arg9[%c6_41, %c16_42] : memref<16x32xf32, #tpu.memory_space<vmem>>, vector<2x16xf32>
    tpu.vector_store %arg9[%c6_41, %c16_42], %113 {strides = array<i32>} : memref<16x32xf32, #tpu.memory_space<vmem>>, vector<2x16xf32>,
    %115 = vector.extract_strided_slice %8 {offsets = [8, 0], sizes = [2, 128], strides = [1, 1]} : vector<16x128xf32> to vector<2x128xf32>
    %cst_43 = arith.constant dense<0.000000e+00> : vector<2x128xf32>
    %116 = tpu.matmul %106, %1, %cst_43 {dimension_numbers = #tpu.dot_dimension_numbers<[1], [0], [0], [1], [0, 0, 1, 1], [], []>} : vector<2x32xf32>, vector<32x128xf32>, vector<2x128xf32> -> vector<2x128xf32>
    %117 = arith.addf %115, %116 : vector<2x128xf32>
    %118 = arith.negf %117 : vector<2x128xf32>
    %119 = math.exp %118 : vector<2x128xf32>
    %cst_44 = arith.constant 1.000000e+00 : f32
    %120 = vector.broadcast %cst_44 : f32 to vector<2x128xf32>
    %121 = arith.addf %120, %119 : vector<2x128xf32>
    %122 = arith.divf %120, %121 : vector<2x128xf32>
    %123 = math.tanh %117 : vector<2x128xf32>
    %124 = vector.extract_strided_slice %122 {offsets = [0, 32], sizes = [2, 32], strides = [1, 1]} : vector<2x128xf32> to vector<2x32xf32>
    %125 = arith.mulf %124, %103 : vector<2x32xf32>
    %126 = vector.extract_strided_slice %122 {offsets = [0, 0], sizes = [2, 32], strides = [1, 1]} : vector<2x128xf32> to vector<2x32xf32>
    %127 = vector.extract_strided_slice %123 {offsets = [0, 64], sizes = [2, 32], strides = [1, 1]} : vector<2x128xf32> to vector<2x32xf32>
    %128 = arith.mulf %126, %127 : vector<2x32xf32>
    %129 = arith.addf %125, %128 : vector<2x32xf32>
    %130 = vector.extract_strided_slice %122 {offsets = [0, 96], sizes = [2, 32], strides = [1, 1]} : vector<2x128xf32> to vector<2x32xf32>
    %131 = math.tanh %129 : vector<2x32xf32>
    %132 = arith.mulf %130, %131 : vector<2x32xf32>
    %133 = vector.extract_strided_slice %132 {offsets = [0, 0], sizes = [2, 16], strides = [1, 1]} : vector<2x32xf32> to vector<2x16xf32>
    %c8_45 = arith.constant 8 : index
    %c0_46 = arith.constant 0 : index
    %134 = vector.load %arg8[%c8_45, %c0_46] : memref<16x32xf32, #tpu.memory_space<vmem>>, vector<2x16xf32>
    tpu.vector_store %arg8[%c8_45, %c0_46], %133 {strides = array<i32>} : memref<16x32xf32, #tpu.memory_space<vmem>>, vector<2x16xf32>,
    %135 = vector.extract_strided_slice %132 {offsets = [0, 16], sizes = [2, 16], strides = [1, 1]} : vector<2x32xf32> to vector<2x16xf32>
    %c6_47 = arith.constant 6 : index
    %c16_48 = arith.constant 16 : index
    %136 = vector.load %arg8[%c6_47, %c16_48] : memref<16x32xf32, #tpu.memory_space<vmem>>, vector<2x16xf32>
    tpu.vector_store %arg8[%c6_47, %c16_48], %135 {strides = array<i32>} : memref<16x32xf32, #tpu.memory_space<vmem>>, vector<2x16xf32>,
    %137 = vector.extract_strided_slice %132 {offsets = [0, 0], sizes = [2, 16], strides = [1, 1]} : vector<2x32xf32> to vector<2x16xf32>
    %c6_49 = arith.constant 6 : index
    %c0_50 = arith.constant 0 : index
    %138 = vector.load %arg9[%c6_49, %c0_50] : memref<16x32xf32, #tpu.memory_space<vmem>>, vector<2x16xf32>
    tpu.vector_store %arg9[%c6_49, %c0_50], %137 {strides = array<i32>} : memref<16x32xf32, #tpu.memory_space<vmem>>, vector<2x16xf32>,
    %139 = vector.extract_strided_slice %132 {offsets = [0, 16], sizes = [2, 16], strides = [1, 1]} : vector<2x32xf32> to vector<2x16xf32>
    %c8_51 = arith.constant 8 : index
    %c16_52 = arith.constant 16 : index
    %140 = vector.load %arg9[%c8_51, %c16_52] : memref<16x32xf32, #tpu.memory_space<vmem>>, vector<2x16xf32>
    tpu.vector_store %arg9[%c8_51, %c16_52], %139 {strides = array<i32>} : memref<16x32xf32, #tpu.memory_space<vmem>>, vector<2x16xf32>,
    %141 = vector.extract_strided_slice %8 {offsets = [10, 0], sizes = [2, 128], strides = [1, 1]} : vector<16x128xf32> to vector<2x128xf32>
    %cst_53 = arith.constant dense<0.000000e+00> : vector<2x128xf32>
    %142 = tpu.matmul %132, %1, %cst_53 {dimension_numbers = #tpu.dot_dimension_numbers<[1], [0], [0], [1], [0, 0, 1, 1], [], []>} : vector<2x32xf32>, vector<32x128xf32>, vector<2x128xf32> -> vector<2x128xf32>
    %143 = arith.addf %141, %142 : vector<2x128xf32>
    %144 = arith.negf %143 : vector<2x128xf32>
    %145 = math.exp %144 : vector<2x128xf32>
    %cst_54 = arith.constant 1.000000e+00 : f32
    %146 = vector.broadcast %cst_54 : f32 to vector<2x128xf32>
    %147 = arith.addf %146, %145 : vector<2x128xf32>
    %148 = arith.divf %146, %147 : vector<2x128xf32>
    %149 = math.tanh %143 : vector<2x128xf32>
    %150 = vector.extract_strided_slice %148 {offsets = [0, 32], sizes = [2, 32], strides = [1, 1]} : vector<2x128xf32> to vector<2x32xf32>
    %151 = arith.mulf %150, %129 : vector<2x32xf32>
    %152 = vector.extract_strided_slice %148 {offsets = [0, 0], sizes = [2, 32], strides = [1, 1]} : vector<2x128xf32> to vector<2x32xf32>
    %153 = vector.extract_strided_slice %149 {offsets = [0, 64], sizes = [2, 32], strides = [1, 1]} : vector<2x128xf32> to vector<2x32xf32>
    %154 = arith.mulf %152, %153 : vector<2x32xf32>
    %155 = arith.addf %151, %154 : vector<2x32xf32>
    %156 = vector.extract_strided_slice %148 {offsets = [0, 96], sizes = [2, 32], strides = [1, 1]} : vector<2x128xf32> to vector<2x32xf32>
    %157 = math.tanh %155 : vector<2x32xf32>
    %158 = arith.mulf %156, %157 : vector<2x32xf32>
    %159 = vector.extract_strided_slice %158 {offsets = [0, 0], sizes = [2, 16], strides = [1, 1]} : vector<2x32xf32> to vector<2x16xf32>
    %c10_55 = arith.constant 10 : index
    %c0_56 = arith.constant 0 : index
    %160 = vector.load %arg8[%c10_55, %c0_56] : memref<16x32xf32, #tpu.memory_space<vmem>>, vector<2x16xf32>
    tpu.vector_store %arg8[%c10_55, %c0_56], %159 {strides = array<i32>} : memref<16x32xf32, #tpu.memory_space<vmem>>, vector<2x16xf32>,
    %161 = vector.extract_strided_slice %158 {offsets = [0, 16], sizes = [2, 16], strides = [1, 1]} : vector<2x32xf32> to vector<2x16xf32>
    %c4_57 = arith.constant 4 : index
    %c16_58 = arith.constant 16 : index
    %162 = vector.load %arg8[%c4_57, %c16_58] : memref<16x32xf32, #tpu.memory_space<vmem>>, vector<2x16xf32>
    tpu.vector_store %arg8[%c4_57, %c16_58], %161 {strides = array<i32>} : memref<16x32xf32, #tpu.memory_space<vmem>>, vector<2x16xf32>,
    %163 = vector.extract_strided_slice %158 {offsets = [0, 0], sizes = [2, 16], strides = [1, 1]} : vector<2x32xf32> to vector<2x16xf32>
    %c4_59 = arith.constant 4 : index
    %c0_60 = arith.constant 0 : index
    %164 = vector.load %arg9[%c4_59, %c0_60] : memref<16x32xf32, #tpu.memory_space<vmem>>, vector<2x16xf32>
    tpu.vector_store %arg9[%c4_59, %c0_60], %163 {strides = array<i32>} : memref<16x32xf32, #tpu.memory_space<vmem>>, vector<2x16xf32>,
    %165 = vector.extract_strided_slice %158 {offsets = [0, 16], sizes = [2, 16], strides = [1, 1]} : vector<2x32xf32> to vector<2x16xf32>
    %c10_61 = arith.constant 10 : index
    %c16_62 = arith.constant 16 : index
    %166 = vector.load %arg9[%c10_61, %c16_62] : memref<16x32xf32, #tpu.memory_space<vmem>>, vector<2x16xf32>
    tpu.vector_store %arg9[%c10_61, %c16_62], %165 {strides = array<i32>} : memref<16x32xf32, #tpu.memory_space<vmem>>, vector<2x16xf32>,
    %167 = vector.extract_strided_slice %8 {offsets = [12, 0], sizes = [2, 128], strides = [1, 1]} : vector<16x128xf32> to vector<2x128xf32>
    %cst_63 = arith.constant dense<0.000000e+00> : vector<2x128xf32>
    %168 = tpu.matmul %158, %1, %cst_63 {dimension_numbers = #tpu.dot_dimension_numbers<[1], [0], [0], [1], [0, 0, 1, 1], [], []>} : vector<2x32xf32>, vector<32x128xf32>, vector<2x128xf32> -> vector<2x128xf32>
    %169 = arith.addf %167, %168 : vector<2x128xf32>
    %170 = arith.negf %169 : vector<2x128xf32>
    %171 = math.exp %170 : vector<2x128xf32>
    %cst_64 = arith.constant 1.000000e+00 : f32
    %172 = vector.broadcast %cst_64 : f32 to vector<2x128xf32>
    %173 = arith.addf %172, %171 : vector<2x128xf32>
    %174 = arith.divf %172, %173 : vector<2x128xf32>
    %175 = math.tanh %169 : vector<2x128xf32>
    %176 = vector.extract_strided_slice %174 {offsets = [0, 32], sizes = [2, 32], strides = [1, 1]} : vector<2x128xf32> to vector<2x32xf32>
    %177 = arith.mulf %176, %155 : vector<2x32xf32>
    %178 = vector.extract_strided_slice %174 {offsets = [0, 0], sizes = [2, 32], strides = [1, 1]} : vector<2x128xf32> to vector<2x32xf32>
    %179 = vector.extract_strided_slice %175 {offsets = [0, 64], sizes = [2, 32], strides = [1, 1]} : vector<2x128xf32> to vector<2x32xf32>
    %180 = arith.mulf %178, %179 : vector<2x32xf32>
    %181 = arith.addf %177, %180 : vector<2x32xf32>
    %182 = vector.extract_strided_slice %174 {offsets = [0, 96], sizes = [2, 32], strides = [1, 1]} : vector<2x128xf32> to vector<2x32xf32>
    %183 = math.tanh %181 : vector<2x32xf32>
    %184 = arith.mulf %182, %183 : vector<2x32xf32>
    %185 = vector.extract_strided_slice %184 {offsets = [0, 0], sizes = [2, 16], strides = [1, 1]} : vector<2x32xf32> to vector<2x16xf32>
    %c12_65 = arith.constant 12 : index
    %c0_66 = arith.constant 0 : index
    %186 = vector.load %arg8[%c12_65, %c0_66] : memref<16x32xf32, #tpu.memory_space<vmem>>, vector<2x16xf32>
    tpu.vector_store %arg8[%c12_65, %c0_66], %185 {strides = array<i32>} : memref<16x32xf32, #tpu.memory_space<vmem>>, vector<2x16xf32>,
    %187 = vector.extract_strided_slice %184 {offsets = [0, 16], sizes = [2, 16], strides = [1, 1]} : vector<2x32xf32> to vector<2x16xf32>
    %c2_67 = arith.constant 2 : index
    %c16_68 = arith.constant 16 : index
    %188 = vector.load %arg8[%c2_67, %c16_68] : memref<16x32xf32, #tpu.memory_space<vmem>>, vector<2x16xf32>
    tpu.vector_store %arg8[%c2_67, %c16_68], %187 {strides = array<i32>} : memref<16x32xf32, #tpu.memory_space<vmem>>, vector<2x16xf32>,
    %189 = vector.extract_strided_slice %184 {offsets = [0, 0], sizes = [2, 16], strides = [1, 1]} : vector<2x32xf32> to vector<2x16xf32>
    %c2_69 = arith.constant 2 : index
    %c0_70 = arith.constant 0 : index
    %190 = vector.load %arg9[%c2_69, %c0_70] : memref<16x32xf32, #tpu.memory_space<vmem>>, vector<2x16xf32>
    tpu.vector_store %arg9[%c2_69, %c0_70], %189 {strides = array<i32>} : memref<16x32xf32, #tpu.memory_space<vmem>>, vector<2x16xf32>,
    %191 = vector.extract_strided_slice %184 {offsets = [0, 16], sizes = [2, 16], strides = [1, 1]} : vector<2x32xf32> to vector<2x16xf32>
    %c12_71 = arith.constant 12 : index
    %c16_72 = arith.constant 16 : index
    %192 = vector.load %arg9[%c12_71, %c16_72] : memref<16x32xf32, #tpu.memory_space<vmem>>, vector<2x16xf32>
    tpu.vector_store %arg9[%c12_71, %c16_72], %191 {strides = array<i32>} : memref<16x32xf32, #tpu.memory_space<vmem>>, vector<2x16xf32>,
    %193 = vector.extract_strided_slice %8 {offsets = [14, 0], sizes = [2, 128], strides = [1, 1]} : vector<16x128xf32> to vector<2x128xf32>
    %cst_73 = arith.constant dense<0.000000e+00> : vector<2x128xf32>
    %194 = tpu.matmul %184, %1, %cst_73 {dimension_numbers = #tpu.dot_dimension_numbers<[1], [0], [0], [1], [0, 0, 1, 1], [], []>} : vector<2x32xf32>, vector<32x128xf32>, vector<2x128xf32> -> vector<2x128xf32>
    %195 = arith.addf %193, %194 : vector<2x128xf32>
    %196 = arith.negf %195 : vector<2x128xf32>
    %197 = math.exp %196 : vector<2x128xf32>
    %cst_74 = arith.constant 1.000000e+00 : f32
    %198 = vector.broadcast %cst_74 : f32 to vector<2x128xf32>
    %199 = arith.addf %198, %197 : vector<2x128xf32>
    %200 = arith.divf %198, %199 : vector<2x128xf32>
    %201 = math.tanh %195 : vector<2x128xf32>
    %202 = vector.extract_strided_slice %200 {offsets = [0, 32], sizes = [2, 32], strides = [1, 1]} : vector<2x128xf32> to vector<2x32xf32>
    %203 = arith.mulf %202, %181 : vector<2x32xf32>
    %204 = vector.extract_strided_slice %200 {offsets = [0, 0], sizes = [2, 32], strides = [1, 1]} : vector<2x128xf32> to vector<2x32xf32>
    %205 = vector.extract_strided_slice %201 {offsets = [0, 64], sizes = [2, 32], strides = [1, 1]} : vector<2x128xf32> to vector<2x32xf32>
    %206 = arith.mulf %204, %205 : vector<2x32xf32>
    %207 = arith.addf %203, %206 : vector<2x32xf32>
    %208 = vector.extract_strided_slice %200 {offsets = [0, 96], sizes = [2, 32], strides = [1, 1]} : vector<2x128xf32> to vector<2x32xf32>
    %209 = math.tanh %207 : vector<2x32xf32>
    %210 = arith.mulf %208, %209 : vector<2x32xf32>
    %211 = vector.extract_strided_slice %210 {offsets = [0, 0], sizes = [2, 16], strides = [1, 1]} : vector<2x32xf32> to vector<2x16xf32>
    %c14_75 = arith.constant 14 : index
    %c0_76 = arith.constant 0 : index
    %212 = vector.load %arg8[%c14_75, %c0_76] : memref<16x32xf32, #tpu.memory_space<vmem>>, vector<2x16xf32>
    tpu.vector_store %arg8[%c14_75, %c0_76], %211 {strides = array<i32>} : memref<16x32xf32, #tpu.memory_space<vmem>>, vector<2x16xf32>,
    %213 = vector.extract_strided_slice %210 {offsets = [0, 16], sizes = [2, 16], strides = [1, 1]} : vector<2x32xf32> to vector<2x16xf32>
    %c0_77 = arith.constant 0 : index
    %c16_78 = arith.constant 16 : index
    %214 = vector.load %arg8[%c0_77, %c16_78] : memref<16x32xf32, #tpu.memory_space<vmem>>, vector<2x16xf32>
    tpu.vector_store %arg8[%c0_77, %c16_78], %213 {strides = array<i32>} : memref<16x32xf32, #tpu.memory_space<vmem>>, vector<2x16xf32>,
    %215 = vector.extract_strided_slice %210 {offsets = [0, 0], sizes = [2, 16], strides = [1, 1]} : vector<2x32xf32> to vector<2x16xf32>
    %c0_79 = arith.constant 0 : index
    %c0_80 = arith.constant 0 : index
    %216 = vector.load %arg9[%c0_79, %c0_80] : memref<16x32xf32, #tpu.memory_space<vmem>>, vector<2x16xf32>
    tpu.vector_store %arg9[%c0_79, %c0_80], %215 {strides = array<i32>} : memref<16x32xf32, #tpu.memory_space<vmem>>, vector<2x16xf32>,
    %217 = vector.extract_strided_slice %210 {offsets = [0, 16], sizes = [2, 16], strides = [1, 1]} : vector<2x32xf32> to vector<2x16xf32>
    %c14_81 = arith.constant 14 : index
    %c16_82 = arith.constant 16 : index
    %218 = vector.load %arg9[%c14_81, %c16_82] : memref<16x32xf32, #tpu.memory_space<vmem>>, vector<2x16xf32>
    tpu.vector_store %arg9[%c14_81, %c16_82], %217 {strides = array<i32>} : memref<16x32xf32, #tpu.memory_space<vmem>>, vector<2x16xf32>,
    %c1 = arith.constant 1 : index
    %c0_83 = arith.constant 0 : index
    %c0_84 = arith.constant 0 : index
    %219 = vector.load %arg3[%c1, %c0_83, %c0_84] : memref<4x32x128xf32, #tpu.memory_space<vmem>>, vector<1x32x128xf32>
    %220 = vector.shape_cast %219 : vector<1x32x128xf32> to vector<32x128xf32>
    %c1_85 = arith.constant 1 : index
    %c0_86 = arith.constant 0 : index
    %c0_87 = arith.constant 0 : index
    %221 = vector.load %arg4[%c1_85, %c0_86, %c0_87] : memref<4x1x128xf32, #tpu.memory_space<vmem>>, vector<1x1x128xf32>
    %222 = vector.shape_cast %221 : vector<1x1x128xf32> to vector<1x128xf32>
    %c0_88 = arith.constant 0 : index
    %c0_89 = arith.constant 0 : index
    %223 = vector.load %arg8[%c0_88, %c0_89] : memref<16x32xf32, #tpu.memory_space<vmem>>, vector<16x32xf32>
    %c0_90 = arith.constant 0 : index
    %c0_91 = arith.constant 0 : index
    %224 = vector.load %arg9[%c0_90, %c0_91] : memref<16x32xf32, #tpu.memory_space<vmem>>, vector<16x32xf32>
    %c0_92 = arith.constant 0 : index
    %c0_93 = arith.constant 0 : index
    %c0_94 = arith.constant 0 : index
    %225 = vector.load %arg2[%c0_92, %c0_93, %c0_94] : memref<3x64x128xf32, #tpu.memory_space<vmem>>, vector<1x64x128xf32>
    %226 = vector.shape_cast %225 : vector<1x64x128xf32> to vector<64x128xf32>
    %227 = vector.extract_strided_slice %226 {offsets = [0, 0], sizes = [32, 128], strides = [1, 1]} : vector<64x128xf32> to vector<32x128xf32>
    %cst_95 = arith.constant dense<0.000000e+00> : vector<16x128xf32>
    %228 = tpu.matmul %223, %227, %cst_95 {dimension_numbers = #tpu.dot_dimension_numbers<[1], [0], [0], [1], [0, 0, 1, 1], [], []>} : vector<16x32xf32>, vector<32x128xf32>, vector<16x128xf32> -> vector<16x128xf32>
    %229 = vector.extract_strided_slice %226 {offsets = [32, 0], sizes = [32, 128], strides = [1, 1]} : vector<64x128xf32> to vector<32x128xf32>
    %cst_96 = arith.constant dense<0.000000e+00> : vector<16x128xf32>
    %230 = tpu.matmul %224, %229, %cst_96 {dimension_numbers = #tpu.dot_dimension_numbers<[1], [0], [0], [1], [0, 0, 1, 1], [], []>} : vector<16x32xf32>, vector<32x128xf32>, vector<16x128xf32> -> vector<16x128xf32>
    %231 = arith.addf %228, %230 : vector<16x128xf32>
    %232 = vector.broadcast %222 : vector<1x128xf32> to vector<16x128xf32>
    %233 = arith.addf %231, %232 : vector<16x128xf32>
    %cst_97 = arith.constant 0.000000e+00 : f32
    %234 = vector.broadcast %cst_97 : f32 to vector<2x32xf32>
    %cst_98 = arith.constant 0.000000e+00 : f32
    %235 = vector.broadcast %cst_98 : f32 to vector<2x32xf32>
    %236 = vector.extract_strided_slice %233 {offsets = [0, 0], sizes = [2, 128], strides = [1, 1]} : vector<16x128xf32> to vector<2x128xf32>
    %cst_99 = arith.constant dense<0.000000e+00> : vector<2x128xf32>
    %237 = tpu.matmul %234, %220, %cst_99 {dimension_numbers = #tpu.dot_dimension_numbers<[1], [0], [0], [1], [0, 0, 1, 1], [], []>} : vector<2x32xf32>, vector<32x128xf32>, vector<2x128xf32> -> vector<2x128xf32>
    %238 = arith.addf %236, %237 : vector<2x128xf32>
    %239 = arith.negf %238 : vector<2x128xf32>
    %240 = math.exp %239 : vector<2x128xf32>
    %cst_100 = arith.constant 1.000000e+00 : f32
    %241 = vector.broadcast %cst_100 : f32 to vector<2x128xf32>
    %242 = arith.addf %241, %240 : vector<2x128xf32>
    %243 = arith.divf %241, %242 : vector<2x128xf32>
    %244 = math.tanh %238 : vector<2x128xf32>
    %245 = vector.extract_strided_slice %243 {offsets = [0, 32], sizes = [2, 32], strides = [1, 1]} : vector<2x128xf32> to vector<2x32xf32>
    %246 = arith.mulf %245, %235 : vector<2x32xf32>
    %247 = vector.extract_strided_slice %243 {offsets = [0, 0], sizes = [2, 32], strides = [1, 1]} : vector<2x128xf32> to vector<2x32xf32>
    %248 = vector.extract_strided_slice %244 {offsets = [0, 64], sizes = [2, 32], strides = [1, 1]} : vector<2x128xf32> to vector<2x32xf32>
    %249 = arith.mulf %247, %248 : vector<2x32xf32>
    %250 = arith.addf %246, %249 : vector<2x32xf32>
    %251 = vector.extract_strided_slice %243 {offsets = [0, 96], sizes = [2, 32], strides = [1, 1]} : vector<2x128xf32> to vector<2x32xf32>
    %252 = math.tanh %250 : vector<2x32xf32>
    %253 = arith.mulf %251, %252 : vector<2x32xf32>
    %254 = vector.extract_strided_slice %253 {offsets = [0, 0], sizes = [2, 16], strides = [1, 1]} : vector<2x32xf32> to vector<2x16xf32>
    %c0_101 = arith.constant 0 : index
    %c0_102 = arith.constant 0 : index
    %255 = vector.load %arg8[%c0_101, %c0_102] : memref<16x32xf32, #tpu.memory_space<vmem>>, vector<2x16xf32>
    tpu.vector_store %arg8[%c0_101, %c0_102], %254 {strides = array<i32>} : memref<16x32xf32, #tpu.memory_space<vmem>>, vector<2x16xf32>,
    %256 = vector.extract_strided_slice %253 {offsets = [0, 16], sizes = [2, 16], strides = [1, 1]} : vector<2x32xf32> to vector<2x16xf32>
    %c14_103 = arith.constant 14 : index
    %c16_104 = arith.constant 16 : index
    %257 = vector.load %arg8[%c14_103, %c16_104] : memref<16x32xf32, #tpu.memory_space<vmem>>, vector<2x16xf32>
    tpu.vector_store %arg8[%c14_103, %c16_104], %256 {strides = array<i32>} : memref<16x32xf32, #tpu.memory_space<vmem>>, vector<2x16xf32>,
    %258 = vector.extract_strided_slice %253 {offsets = [0, 0], sizes = [2, 16], strides = [1, 1]} : vector<2x32xf32> to vector<2x16xf32>
    %c14_105 = arith.constant 14 : index
    %c0_106 = arith.constant 0 : index
    %259 = vector.load %arg9[%c14_105, %c0_106] : memref<16x32xf32, #tpu.memory_space<vmem>>, vector<2x16xf32>
    tpu.vector_store %arg9[%c14_105, %c0_106], %258 {strides = array<i32>} : memref<16x32xf32, #tpu.memory_space<vmem>>, vector<2x16xf32>,
    %260 = vector.extract_strided_slice %253 {offsets = [0, 16], sizes = [2, 16], strides = [1, 1]} : vector<2x32xf32> to vector<2x16xf32>
    %c0_107 = arith.constant 0 : index
    %c16_108 = arith.constant 16 : index
    %261 = vector.load %arg9[%c0_107, %c16_108] : memref<16x32xf32, #tpu.memory_space<vmem>>, vector<2x16xf32>
    tpu.vector_store %arg9[%c0_107, %c16_108], %260 {strides = array<i32>} : memref<16x32xf32, #tpu.memory_space<vmem>>, vector<2x16xf32>,
    %262 = vector.extract_strided_slice %233 {offsets = [2, 0], sizes = [2, 128], strides = [1, 1]} : vector<16x128xf32> to vector<2x128xf32>
    %cst_109 = arith.constant dense<0.000000e+00> : vector<2x128xf32>
    %263 = tpu.matmul %253, %220, %cst_109 {dimension_numbers = #tpu.dot_dimension_numbers<[1], [0], [0], [1], [0, 0, 1, 1], [], []>} : vector<2x32xf32>, vector<32x128xf32>, vector<2x128xf32> -> vector<2x128xf32>
    %264 = arith.addf %262, %263 : vector<2x128xf32>
    %265 = arith.negf %264 : vector<2x128xf32>
    %266 = math.exp %265 : vector<2x128xf32>
    %cst_110 = arith.constant 1.000000e+00 : f32
    %267 = vector.broadcast %cst_110 : f32 to vector<2x128xf32>
    %268 = arith.addf %267, %266 : vector<2x128xf32>
    %269 = arith.divf %267, %268 : vector<2x128xf32>
    %270 = math.tanh %264 : vector<2x128xf32>
    %271 = vector.extract_strided_slice %269 {offsets = [0, 32], sizes = [2, 32], strides = [1, 1]} : vector<2x128xf32> to vector<2x32xf32>
    %272 = arith.mulf %271, %250 : vector<2x32xf32>
    %273 = vector.extract_strided_slice %269 {offsets = [0, 0], sizes = [2, 32], strides = [1, 1]} : vector<2x128xf32> to vector<2x32xf32>
    %274 = vector.extract_strided_slice %270 {offsets = [0, 64], sizes = [2, 32], strides = [1, 1]} : vector<2x128xf32> to vector<2x32xf32>
    %275 = arith.mulf %273, %274 : vector<2x32xf32>
    %276 = arith.addf %272, %275 : vector<2x32xf32>
    %277 = vector.extract_strided_slice %269 {offsets = [0, 96], sizes = [2, 32], strides = [1, 1]} : vector<2x128xf32> to vector<2x32xf32>
    %278 = math.tanh %276 : vector<2x32xf32>
    %279 = arith.mulf %277, %278 : vector<2x32xf32>
    %280 = vector.extract_strided_slice %279 {offsets = [0, 0], sizes = [2, 16], strides = [1, 1]} : vector<2x32xf32> to vector<2x16xf32>
    %c2_111 = arith.constant 2 : index
    %c0_112 = arith.constant 0 : index
    %281 = vector.load %arg8[%c2_111, %c0_112] : memref<16x32xf32, #tpu.memory_space<vmem>>, vector<2x16xf32>
    tpu.vector_store %arg8[%c2_111, %c0_112], %280 {strides = array<i32>} : memref<16x32xf32, #tpu.memory_space<vmem>>, vector<2x16xf32>,
    %282 = vector.extract_strided_slice %279 {offsets = [0, 16], sizes = [2, 16], strides = [1, 1]} : vector<2x32xf32> to vector<2x16xf32>
    %c12_113 = arith.constant 12 : index
    %c16_114 = arith.constant 16 : index
    %283 = vector.load %arg8[%c12_113, %c16_114] : memref<16x32xf32, #tpu.memory_space<vmem>>, vector<2x16xf32>
    tpu.vector_store %arg8[%c12_113, %c16_114], %282 {strides = array<i32>} : memref<16x32xf32, #tpu.memory_space<vmem>>, vector<2x16xf32>,
    %284 = vector.extract_strided_slice %279 {offsets = [0, 0], sizes = [2, 16], strides = [1, 1]} : vector<2x32xf32> to vector<2x16xf32>
    %c12_115 = arith.constant 12 : index
    %c0_116 = arith.constant 0 : index
    %285 = vector.load %arg9[%c12_115, %c0_116] : memref<16x32xf32, #tpu.memory_space<vmem>>, vector<2x16xf32>
    tpu.vector_store %arg9[%c12_115, %c0_116], %284 {strides = array<i32>} : memref<16x32xf32, #tpu.memory_space<vmem>>, vector<2x16xf32>,
    %286 = vector.extract_strided_slice %279 {offsets = [0, 16], sizes = [2, 16], strides = [1, 1]} : vector<2x32xf32> to vector<2x16xf32>
    %c2_117 = arith.constant 2 : index
    %c16_118 = arith.constant 16 : index
    %287 = vector.load %arg9[%c2_117, %c16_118] : memref<16x32xf32, #tpu.memory_space<vmem>>, vector<2x16xf32>
    tpu.vector_store %arg9[%c2_117, %c16_118], %286 {strides = array<i32>} : memref<16x32xf32, #tpu.memory_space<vmem>>, vector<2x16xf32>,
    %288 = vector.extract_strided_slice %233 {offsets = [4, 0], sizes = [2, 128], strides = [1, 1]} : vector<16x128xf32> to vector<2x128xf32>
    %cst_119 = arith.constant dense<0.000000e+00> : vector<2x128xf32>
    %289 = tpu.matmul %279, %220, %cst_119 {dimension_numbers = #tpu.dot_dimension_numbers<[1], [0], [0], [1], [0, 0, 1, 1], [], []>} : vector<2x32xf32>, vector<32x128xf32>, vector<2x128xf32> -> vector<2x128xf32>
    %290 = arith.addf %288, %289 : vector<2x128xf32>
    %291 = arith.negf %290 : vector<2x128xf32>
    %292 = math.exp %291 : vector<2x128xf32>
    %cst_120 = arith.constant 1.000000e+00 : f32
    %293 = vector.broadcast %cst_120 : f32 to vector<2x128xf32>
    %294 = arith.addf %293, %292 : vector<2x128xf32>
    %295 = arith.divf %293, %294 : vector<2x128xf32>
    %296 = math.tanh %290 : vector<2x128xf32>
    %297 = vector.extract_strided_slice %295 {offsets = [0, 32], sizes = [2, 32], strides = [1, 1]} : vector<2x128xf32> to vector<2x32xf32>
    %298 = arith.mulf %297, %276 : vector<2x32xf32>
    %299 = vector.extract_strided_slice %295 {offsets = [0, 0], sizes = [2, 32], strides = [1, 1]} : vector<2x128xf32> to vector<2x32xf32>
    %300 = vector.extract_strided_slice %296 {offsets = [0, 64], sizes = [2, 32], strides = [1, 1]} : vector<2x128xf32> to vector<2x32xf32>
    %301 = arith.mulf %299, %300 : vector<2x32xf32>
    %302 = arith.addf %298, %301 : vector<2x32xf32>
    %303 = vector.extract_strided_slice %295 {offsets = [0, 96], sizes = [2, 32], strides = [1, 1]} : vector<2x128xf32> to vector<2x32xf32>
    %304 = math.tanh %302 : vector<2x32xf32>
    %305 = arith.mulf %303, %304 : vector<2x32xf32>
    %306 = vector.extract_strided_slice %305 {offsets = [0, 0], sizes = [2, 16], strides = [1, 1]} : vector<2x32xf32> to vector<2x16xf32>
    %c4_121 = arith.constant 4 : index
    %c0_122 = arith.constant 0 : index
    %307 = vector.load %arg8[%c4_121, %c0_122] : memref<16x32xf32, #tpu.memory_space<vmem>>, vector<2x16xf32>
    tpu.vector_store %arg8[%c4_121, %c0_122], %306 {strides = array<i32>} : memref<16x32xf32, #tpu.memory_space<vmem>>, vector<2x16xf32>,
    %308 = vector.extract_strided_slice %305 {offsets = [0, 16], sizes = [2, 16], strides = [1, 1]} : vector<2x32xf32> to vector<2x16xf32>
    %c10_123 = arith.constant 10 : index
    %c16_124 = arith.constant 16 : index
    %309 = vector.load %arg8[%c10_123, %c16_124] : memref<16x32xf32, #tpu.memory_space<vmem>>, vector<2x16xf32>
    tpu.vector_store %arg8[%c10_123, %c16_124], %308 {strides = array<i32>} : memref<16x32xf32, #tpu.memory_space<vmem>>, vector<2x16xf32>,
    %310 = vector.extract_strided_slice %305 {offsets = [0, 0], sizes = [2, 16], strides = [1, 1]} : vector<2x32xf32> to vector<2x16xf32>
    %c10_125 = arith.constant 10 : index
    %c0_126 = arith.constant 0 : index
    %311 = vector.load %arg9[%c10_125, %c0_126] : memref<16x32xf32, #tpu.memory_space<vmem>>, vector<2x16xf32>
    tpu.vector_store %arg9[%c10_125, %c0_126], %310 {strides = array<i32>} : memref<16x32xf32, #tpu.memory_space<vmem>>, vector<2x16xf32>,
    %312 = vector.extract_strided_slice %305 {offsets = [0, 16], sizes = [2, 16], strides = [1, 1]} : vector<2x32xf32> to vector<2x16xf32>
    %c4_127 = arith.constant 4 : index
    %c16_128 = arith.constant 16 : index
    %313 = vector.load %arg9[%c4_127, %c16_128] : memref<16x32xf32, #tpu.memory_space<vmem>>, vector<2x16xf32>
    tpu.vector_store %arg9[%c4_127, %c16_128], %312 {strides = array<i32>} : memref<16x32xf32, #tpu.memory_space<vmem>>, vector<2x16xf32>,
    %314 = vector.extract_strided_slice %233 {offsets = [6, 0], sizes = [2, 128], strides = [1, 1]} : vector<16x128xf32> to vector<2x128xf32>
    %cst_129 = arith.constant dense<0.000000e+00> : vector<2x128xf32>
    %315 = tpu.matmul %305, %220, %cst_129 {dimension_numbers = #tpu.dot_dimension_numbers<[1], [0], [0], [1], [0, 0, 1, 1], [], []>} : vector<2x32xf32>, vector<32x128xf32>, vector<2x128xf32> -> vector<2x128xf32>
    %316 = arith.addf %314, %315 : vector<2x128xf32>
    %317 = arith.negf %316 : vector<2x128xf32>
    %318 = math.exp %317 : vector<2x128xf32>
    %cst_130 = arith.constant 1.000000e+00 : f32
    %319 = vector.broadcast %cst_130 : f32 to vector<2x128xf32>
    %320 = arith.addf %319, %318 : vector<2x128xf32>
    %321 = arith.divf %319, %320 : vector<2x128xf32>
    %322 = math.tanh %316 : vector<2x128xf32>
    %323 = vector.extract_strided_slice %321 {offsets = [0, 32], sizes = [2, 32], strides = [1, 1]} : vector<2x128xf32> to vector<2x32xf32>
    %324 = arith.mulf %323, %302 : vector<2x32xf32>
    %325 = vector.extract_strided_slice %321 {offsets = [0, 0], sizes = [2, 32], strides = [1, 1]} : vector<2x128xf32> to vector<2x32xf32>
    %326 = vector.extract_strided_slice %322 {offsets = [0, 64], sizes = [2, 32], strides = [1, 1]} : vector<2x128xf32> to vector<2x32xf32>
    %327 = arith.mulf %325, %326 : vector<2x32xf32>
    %328 = arith.addf %324, %327 : vector<2x32xf32>
    %329 = vector.extract_strided_slice %321 {offsets = [0, 96], sizes = [2, 32], strides = [1, 1]} : vector<2x128xf32> to vector<2x32xf32>
    %330 = math.tanh %328 : vector<2x32xf32>
    %331 = arith.mulf %329, %330 : vector<2x32xf32>
    %332 = vector.extract_strided_slice %331 {offsets = [0, 0], sizes = [2, 16], strides = [1, 1]} : vector<2x32xf32> to vector<2x16xf32>
    %c6_131 = arith.constant 6 : index
    %c0_132 = arith.constant 0 : index
    %333 = vector.load %arg8[%c6_131, %c0_132] : memref<16x32xf32, #tpu.memory_space<vmem>>, vector<2x16xf32>
    tpu.vector_store %arg8[%c6_131, %c0_132], %332 {strides = array<i32>} : memref<16x32xf32, #tpu.memory_space<vmem>>, vector<2x16xf32>,
    %334 = vector.extract_strided_slice %331 {offsets = [0, 16], sizes = [2, 16], strides = [1, 1]} : vector<2x32xf32> to vector<2x16xf32>
    %c8_133 = arith.constant 8 : index
    %c16_134 = arith.constant 16 : index
    %335 = vector.load %arg8[%c8_133, %c16_134] : memref<16x32xf32, #tpu.memory_space<vmem>>, vector<2x16xf32>
    tpu.vector_store %arg8[%c8_133, %c16_134], %334 {strides = array<i32>} : memref<16x32xf32, #tpu.memory_space<vmem>>, vector<2x16xf32>,
    %336 = vector.extract_strided_slice %331 {offsets = [0, 0], sizes = [2, 16], strides = [1, 1]} : vector<2x32xf32> to vector<2x16xf32>
    %c8_135 = arith.constant 8 : index
    %c0_136 = arith.constant 0 : index
    %337 = vector.load %arg9[%c8_135, %c0_136] : memref<16x32xf32, #tpu.memory_space<vmem>>, vector<2x16xf32>
    tpu.vector_store %arg9[%c8_135, %c0_136], %336 {strides = array<i32>} : memref<16x32xf32, #tpu.memory_space<vmem>>, vector<2x16xf32>,
    %338 = vector.extract_strided_slice %331 {offsets = [0, 16], sizes = [2, 16], strides = [1, 1]} : vector<2x32xf32> to vector<2x16xf32>
    %c6_137 = arith.constant 6 : index
    %c16_138 = arith.constant 16 : index
    %339 = vector.load %arg9[%c6_137, %c16_138] : memref<16x32xf32, #tpu.memory_space<vmem>>, vector<2x16xf32>
    tpu.vector_store %arg9[%c6_137, %c16_138], %338 {strides = array<i32>} : memref<16x32xf32, #tpu.memory_space<vmem>>, vector<2x16xf32>,
    %340 = vector.extract_strided_slice %233 {offsets = [8, 0], sizes = [2, 128], strides = [1, 1]} : vector<16x128xf32> to vector<2x128xf32>
    %cst_139 = arith.constant dense<0.000000e+00> : vector<2x128xf32>
    %341 = tpu.matmul %331, %220, %cst_139 {dimension_numbers = #tpu.dot_dimension_numbers<[1], [0], [0], [1], [0, 0, 1, 1], [], []>} : vector<2x32xf32>, vector<32x128xf32>, vector<2x128xf32> -> vector<2x128xf32>
    %342 = arith.addf %340, %341 : vector<2x128xf32>
    %343 = arith.negf %342 : vector<2x128xf32>
    %344 = math.exp %343 : vector<2x128xf32>
    %cst_140 = arith.constant 1.000000e+00 : f32
    %345 = vector.broadcast %cst_140 : f32 to vector<2x128xf32>
    %346 = arith.addf %345, %344 : vector<2x128xf32>
    %347 = arith.divf %345, %346 : vector<2x128xf32>
    %348 = math.tanh %342 : vector<2x128xf32>
    %349 = vector.extract_strided_slice %347 {offsets = [0, 32], sizes = [2, 32], strides = [1, 1]} : vector<2x128xf32> to vector<2x32xf32>
    %350 = arith.mulf %349, %328 : vector<2x32xf32>
    %351 = vector.extract_strided_slice %347 {offsets = [0, 0], sizes = [2, 32], strides = [1, 1]} : vector<2x128xf32> to vector<2x32xf32>
    %352 = vector.extract_strided_slice %348 {offsets = [0, 64], sizes = [2, 32], strides = [1, 1]} : vector<2x128xf32> to vector<2x32xf32>
    %353 = arith.mulf %351, %352 : vector<2x32xf32>
    %354 = arith.addf %350, %353 : vector<2x32xf32>
    %355 = vector.extract_strided_slice %347 {offsets = [0, 96], sizes = [2, 32], strides = [1, 1]} : vector<2x128xf32> to vector<2x32xf32>
    %356 = math.tanh %354 : vector<2x32xf32>
    %357 = arith.mulf %355, %356 : vector<2x32xf32>
    %358 = vector.extract_strided_slice %357 {offsets = [0, 0], sizes = [2, 16], strides = [1, 1]} : vector<2x32xf32> to vector<2x16xf32>
    %c8_141 = arith.constant 8 : index
    %c0_142 = arith.constant 0 : index
    %359 = vector.load %arg8[%c8_141, %c0_142] : memref<16x32xf32, #tpu.memory_space<vmem>>, vector<2x16xf32>
    tpu.vector_store %arg8[%c8_141, %c0_142], %358 {strides = array<i32>} : memref<16x32xf32, #tpu.memory_space<vmem>>, vector<2x16xf32>,
    %360 = vector.extract_strided_slice %357 {offsets = [0, 16], sizes = [2, 16], strides = [1, 1]} : vector<2x32xf32> to vector<2x16xf32>
    %c6_143 = arith.constant 6 : index
    %c16_144 = arith.constant 16 : index
    %361 = vector.load %arg8[%c6_143, %c16_144] : memref<16x32xf32, #tpu.memory_space<vmem>>, vector<2x16xf32>
    tpu.vector_store %arg8[%c6_143, %c16_144], %360 {strides = array<i32>} : memref<16x32xf32, #tpu.memory_space<vmem>>, vector<2x16xf32>,
    %362 = vector.extract_strided_slice %357 {offsets = [0, 0], sizes = [2, 16], strides = [1, 1]} : vector<2x32xf32> to vector<2x16xf32>
    %c6_145 = arith.constant 6 : index
    %c0_146 = arith.constant 0 : index
    %363 = vector.load %arg9[%c6_145, %c0_146] : memref<16x32xf32, #tpu.memory_space<vmem>>, vector<2x16xf32>
    tpu.vector_store %arg9[%c6_145, %c0_146], %362 {strides = array<i32>} : memref<16x32xf32, #tpu.memory_space<vmem>>, vector<2x16xf32>,
    %364 = vector.extract_strided_slice %357 {offsets = [0, 16], sizes = [2, 16], strides = [1, 1]} : vector<2x32xf32> to vector<2x16xf32>
    %c8_147 = arith.constant 8 : index
    %c16_148 = arith.constant 16 : index
    %365 = vector.load %arg9[%c8_147, %c16_148] : memref<16x32xf32, #tpu.memory_space<vmem>>, vector<2x16xf32>
    tpu.vector_store %arg9[%c8_147, %c16_148], %364 {strides = array<i32>} : memref<16x32xf32, #tpu.memory_space<vmem>>, vector<2x16xf32>,
    %366 = vector.extract_strided_slice %233 {offsets = [10, 0], sizes = [2, 128], strides = [1, 1]} : vector<16x128xf32> to vector<2x128xf32>
    %cst_149 = arith.constant dense<0.000000e+00> : vector<2x128xf32>
    %367 = tpu.matmul %357, %220, %cst_149 {dimension_numbers = #tpu.dot_dimension_numbers<[1], [0], [0], [1], [0, 0, 1, 1], [], []>} : vector<2x32xf32>, vector<32x128xf32>, vector<2x128xf32> -> vector<2x128xf32>
    %368 = arith.addf %366, %367 : vector<2x128xf32>
    %369 = arith.negf %368 : vector<2x128xf32>
    %370 = math.exp %369 : vector<2x128xf32>
    %cst_150 = arith.constant 1.000000e+00 : f32
    %371 = vector.broadcast %cst_150 : f32 to vector<2x128xf32>
    %372 = arith.addf %371, %370 : vector<2x128xf32>
    %373 = arith.divf %371, %372 : vector<2x128xf32>
    %374 = math.tanh %368 : vector<2x128xf32>
    %375 = vector.extract_strided_slice %373 {offsets = [0, 32], sizes = [2, 32], strides = [1, 1]} : vector<2x128xf32> to vector<2x32xf32>
    %376 = arith.mulf %375, %354 : vector<2x32xf32>
    %377 = vector.extract_strided_slice %373 {offsets = [0, 0], sizes = [2, 32], strides = [1, 1]} : vector<2x128xf32> to vector<2x32xf32>
    %378 = vector.extract_strided_slice %374 {offsets = [0, 64], sizes = [2, 32], strides = [1, 1]} : vector<2x128xf32> to vector<2x32xf32>
    %379 = arith.mulf %377, %378 : vector<2x32xf32>
    %380 = arith.addf %376, %379 : vector<2x32xf32>
    %381 = vector.extract_strided_slice %373 {offsets = [0, 96], sizes = [2, 32], strides = [1, 1]} : vector<2x128xf32> to vector<2x32xf32>
    %382 = math.tanh %380 : vector<2x32xf32>
    %383 = arith.mulf %381, %382 : vector<2x32xf32>
    %384 = vector.extract_strided_slice %383 {offsets = [0, 0], sizes = [2, 16], strides = [1, 1]} : vector<2x32xf32> to vector<2x16xf32>
    %c10_151 = arith.constant 10 : index
    %c0_152 = arith.constant 0 : index
    %385 = vector.load %arg8[%c10_151, %c0_152] : memref<16x32xf32, #tpu.memory_space<vmem>>, vector<2x16xf32>
    tpu.vector_store %arg8[%c10_151, %c0_152], %384 {strides = array<i32>} : memref<16x32xf32, #tpu.memory_space<vmem>>, vector<2x16xf32>,
    %386 = vector.extract_strided_slice %383 {offsets = [0, 16], sizes = [2, 16], strides = [1, 1]} : vector<2x32xf32> to vector<2x16xf32>
    %c4_153 = arith.constant 4 : index
    %c16_154 = arith.constant 16 : index
    %387 = vector.load %arg8[%c4_153, %c16_154] : memref<16x32xf32, #tpu.memory_space<vmem>>, vector<2x16xf32>
    tpu.vector_store %arg8[%c4_153, %c16_154], %386 {strides = array<i32>} : memref<16x32xf32, #tpu.memory_space<vmem>>, vector<2x16xf32>,
    %388 = vector.extract_strided_slice %383 {offsets = [0, 0], sizes = [2, 16], strides = [1, 1]} : vector<2x32xf32> to vector<2x16xf32>
    %c4_155 = arith.constant 4 : index
    %c0_156 = arith.constant 0 : index
    %389 = vector.load %arg9[%c4_155, %c0_156] : memref<16x32xf32, #tpu.memory_space<vmem>>, vector<2x16xf32>
    tpu.vector_store %arg9[%c4_155, %c0_156], %388 {strides = array<i32>} : memref<16x32xf32, #tpu.memory_space<vmem>>, vector<2x16xf32>,
    %390 = vector.extract_strided_slice %383 {offsets = [0, 16], sizes = [2, 16], strides = [1, 1]} : vector<2x32xf32> to vector<2x16xf32>
    %c10_157 = arith.constant 10 : index
    %c16_158 = arith.constant 16 : index
    %391 = vector.load %arg9[%c10_157, %c16_158] : memref<16x32xf32, #tpu.memory_space<vmem>>, vector<2x16xf32>
    tpu.vector_store %arg9[%c10_157, %c16_158], %390 {strides = array<i32>} : memref<16x32xf32, #tpu.memory_space<vmem>>, vector<2x16xf32>,
    %392 = vector.extract_strided_slice %233 {offsets = [12, 0], sizes = [2, 128], strides = [1, 1]} : vector<16x128xf32> to vector<2x128xf32>
    %cst_159 = arith.constant dense<0.000000e+00> : vector<2x128xf32>
    %393 = tpu.matmul %383, %220, %cst_159 {dimension_numbers = #tpu.dot_dimension_numbers<[1], [0], [0], [1], [0, 0, 1, 1], [], []>} : vector<2x32xf32>, vector<32x128xf32>, vector<2x128xf32> -> vector<2x128xf32>
    %394 = arith.addf %392, %393 : vector<2x128xf32>
    %395 = arith.negf %394 : vector<2x128xf32>
    %396 = math.exp %395 : vector<2x128xf32>
    %cst_160 = arith.constant 1.000000e+00 : f32
    %397 = vector.broadcast %cst_160 : f32 to vector<2x128xf32>
    %398 = arith.addf %397, %396 : vector<2x128xf32>
    %399 = arith.divf %397, %398 : vector<2x128xf32>
    %400 = math.tanh %394 : vector<2x128xf32>
    %401 = vector.extract_strided_slice %399 {offsets = [0, 32], sizes = [2, 32], strides = [1, 1]} : vector<2x128xf32> to vector<2x32xf32>
    %402 = arith.mulf %401, %380 : vector<2x32xf32>
    %403 = vector.extract_strided_slice %399 {offsets = [0, 0], sizes = [2, 32], strides = [1, 1]} : vector<2x128xf32> to vector<2x32xf32>
    %404 = vector.extract_strided_slice %400 {offsets = [0, 64], sizes = [2, 32], strides = [1, 1]} : vector<2x128xf32> to vector<2x32xf32>
    %405 = arith.mulf %403, %404 : vector<2x32xf32>
    %406 = arith.addf %402, %405 : vector<2x32xf32>
    %407 = vector.extract_strided_slice %399 {offsets = [0, 96], sizes = [2, 32], strides = [1, 1]} : vector<2x128xf32> to vector<2x32xf32>
    %408 = math.tanh %406 : vector<2x32xf32>
    %409 = arith.mulf %407, %408 : vector<2x32xf32>
    %410 = vector.extract_strided_slice %409 {offsets = [0, 0], sizes = [2, 16], strides = [1, 1]} : vector<2x32xf32> to vector<2x16xf32>
    %c12_161 = arith.constant 12 : index
    %c0_162 = arith.constant 0 : index
    %411 = vector.load %arg8[%c12_161, %c0_162] : memref<16x32xf32, #tpu.memory_space<vmem>>, vector<2x16xf32>
    tpu.vector_store %arg8[%c12_161, %c0_162], %410 {strides = array<i32>} : memref<16x32xf32, #tpu.memory_space<vmem>>, vector<2x16xf32>,
    %412 = vector.extract_strided_slice %409 {offsets = [0, 16], sizes = [2, 16], strides = [1, 1]} : vector<2x32xf32> to vector<2x16xf32>
    %c2_163 = arith.constant 2 : index
    %c16_164 = arith.constant 16 : index
    %413 = vector.load %arg8[%c2_163, %c16_164] : memref<16x32xf32, #tpu.memory_space<vmem>>, vector<2x16xf32>
    tpu.vector_store %arg8[%c2_163, %c16_164], %412 {strides = array<i32>} : memref<16x32xf32, #tpu.memory_space<vmem>>, vector<2x16xf32>,
    %414 = vector.extract_strided_slice %409 {offsets = [0, 0], sizes = [2, 16], strides = [1, 1]} : vector<2x32xf32> to vector<2x16xf32>
    %c2_165 = arith.constant 2 : index
    %c0_166 = arith.constant 0 : index
    %415 = vector.load %arg9[%c2_165, %c0_166] : memref<16x32xf32, #tpu.memory_space<vmem>>, vector<2x16xf32>
    tpu.vector_store %arg9[%c2_165, %c0_166], %414 {strides = array<i32>} : memref<16x32xf32, #tpu.memory_space<vmem>>, vector<2x16xf32>,
    %416 = vector.extract_strided_slice %409 {offsets = [0, 16], sizes = [2, 16], strides = [1, 1]} : vector<2x32xf32> to vector<2x16xf32>
    %c12_167 = arith.constant 12 : index
    %c16_168 = arith.constant 16 : index
    %417 = vector.load %arg9[%c12_167, %c16_168] : memref<16x32xf32, #tpu.memory_space<vmem>>, vector<2x16xf32>
    tpu.vector_store %arg9[%c12_167, %c16_168], %416 {strides = array<i32>} : memref<16x32xf32, #tpu.memory_space<vmem>>, vector<2x16xf32>,
    %418 = vector.extract_strided_slice %233 {offsets = [14, 0], sizes = [2, 128], strides = [1, 1]} : vector<16x128xf32> to vector<2x128xf32>
    %cst_169 = arith.constant dense<0.000000e+00> : vector<2x128xf32>
    %419 = tpu.matmul %409, %220, %cst_169 {dimension_numbers = #tpu.dot_dimension_numbers<[1], [0], [0], [1], [0, 0, 1, 1], [], []>} : vector<2x32xf32>, vector<32x128xf32>, vector<2x128xf32> -> vector<2x128xf32>
    %420 = arith.addf %418, %419 : vector<2x128xf32>
    %421 = arith.negf %420 : vector<2x128xf32>
    %422 = math.exp %421 : vector<2x128xf32>
    %cst_170 = arith.constant 1.000000e+00 : f32
    %423 = vector.broadcast %cst_170 : f32 to vector<2x128xf32>
    %424 = arith.addf %423, %422 : vector<2x128xf32>
    %425 = arith.divf %423, %424 : vector<2x128xf32>
    %426 = math.tanh %420 : vector<2x128xf32>
    %427 = vector.extract_strided_slice %425 {offsets = [0, 32], sizes = [2, 32], strides = [1, 1]} : vector<2x128xf32> to vector<2x32xf32>
    %428 = arith.mulf %427, %406 : vector<2x32xf32>
    %429 = vector.extract_strided_slice %425 {offsets = [0, 0], sizes = [2, 32], strides = [1, 1]} : vector<2x128xf32> to vector<2x32xf32>
    %430 = vector.extract_strided_slice %426 {offsets = [0, 64], sizes = [2, 32], strides = [1, 1]} : vector<2x128xf32> to vector<2x32xf32>
    %431 = arith.mulf %429, %430 : vector<2x32xf32>
    %432 = arith.addf %428, %431 : vector<2x32xf32>
    %433 = vector.extract_strided_slice %425 {offsets = [0, 96], sizes = [2, 32], strides = [1, 1]} : vector<2x128xf32> to vector<2x32xf32>
    %434 = math.tanh %432 : vector<2x32xf32>
    %435 = arith.mulf %433, %434 : vector<2x32xf32>
    %436 = vector.extract_strided_slice %435 {offsets = [0, 0], sizes = [2, 16], strides = [1, 1]} : vector<2x32xf32> to vector<2x16xf32>
    %c14_171 = arith.constant 14 : index
    %c0_172 = arith.constant 0 : index
    %437 = vector.load %arg8[%c14_171, %c0_172] : memref<16x32xf32, #tpu.memory_space<vmem>>, vector<2x16xf32>
    tpu.vector_store %arg8[%c14_171, %c0_172], %436 {strides = array<i32>} : memref<16x32xf32, #tpu.memory_space<vmem>>, vector<2x16xf32>,
    %438 = vector.extract_strided_slice %435 {offsets = [0, 16], sizes = [2, 16], strides = [1, 1]} : vector<2x32xf32> to vector<2x16xf32>
    %c0_173 = arith.constant 0 : index
    %c16_174 = arith.constant 16 : index
    %439 = vector.load %arg8[%c0_173, %c16_174] : memref<16x32xf32, #tpu.memory_space<vmem>>, vector<2x16xf32>
    tpu.vector_store %arg8[%c0_173, %c16_174], %438 {strides = array<i32>} : memref<16x32xf32, #tpu.memory_space<vmem>>, vector<2x16xf32>,
    %440 = vector.extract_strided_slice %435 {offsets = [0, 0], sizes = [2, 16], strides = [1, 1]} : vector<2x32xf32> to vector<2x16xf32>
    %c0_175 = arith.constant 0 : index
    %c0_176 = arith.constant 0 : index
    %441 = vector.load %arg9[%c0_175, %c0_176] : memref<16x32xf32, #tpu.memory_space<vmem>>, vector<2x16xf32>
    tpu.vector_store %arg9[%c0_175, %c0_176], %440 {strides = array<i32>} : memref<16x32xf32, #tpu.memory_space<vmem>>, vector<2x16xf32>,
    %442 = vector.extract_strided_slice %435 {offsets = [0, 16], sizes = [2, 16], strides = [1, 1]} : vector<2x32xf32> to vector<2x16xf32>
    %c14_177 = arith.constant 14 : index
    %c16_178 = arith.constant 16 : index
    %443 = vector.load %arg9[%c14_177, %c16_178] : memref<16x32xf32, #tpu.memory_space<vmem>>, vector<2x16xf32>
    tpu.vector_store %arg9[%c14_177, %c16_178], %442 {strides = array<i32>} : memref<16x32xf32, #tpu.memory_space<vmem>>, vector<2x16xf32>,
    %c2_179 = arith.constant 2 : index
    %c0_180 = arith.constant 0 : index
    %c0_181 = arith.constant 0 : index
    %444 = vector.load %arg3[%c2_179, %c0_180, %c0_181] : memref<4x32x128xf32, #tpu.memory_space<vmem>>, vector<1x32x128xf32>
    %445 = vector.shape_cast %444 : vector<1x32x128xf32> to vector<32x128xf32>
    %c2_182 = arith.constant 2 : index
    %c0_183 = arith.constant 0 : index
    %c0_184 = arith.constant 0 : index
    %446 = vector.load %arg4[%c2_182, %c0_183, %c0_184] : memref<4x1x128xf32, #tpu.memory_space<vmem>>, vector<1x1x128xf32>
    %447 = vector.shape_cast %446 : vector<1x1x128xf32> to vector<1x128xf32>
    %c0_185 = arith.constant 0 : index
    %c0_186 = arith.constant 0 : index
    %448 = vector.load %arg8[%c0_185, %c0_186] : memref<16x32xf32, #tpu.memory_space<vmem>>, vector<16x32xf32>
    %c0_187 = arith.constant 0 : index
    %c0_188 = arith.constant 0 : index
    %449 = vector.load %arg9[%c0_187, %c0_188] : memref<16x32xf32, #tpu.memory_space<vmem>>, vector<16x32xf32>
    %c1_189 = arith.constant 1 : index
    %c0_190 = arith.constant 0 : index
    %c0_191 = arith.constant 0 : index
    %450 = vector.load %arg2[%c1_189, %c0_190, %c0_191] : memref<3x64x128xf32, #tpu.memory_space<vmem>>, vector<1x64x128xf32>
    %451 = vector.shape_cast %450 : vector<1x64x128xf32> to vector<64x128xf32>
    %452 = vector.extract_strided_slice %451 {offsets = [0, 0], sizes = [32, 128], strides = [1, 1]} : vector<64x128xf32> to vector<32x128xf32>
    %cst_192 = arith.constant dense<0.000000e+00> : vector<16x128xf32>
    %453 = tpu.matmul %448, %452, %cst_192 {dimension_numbers = #tpu.dot_dimension_numbers<[1], [0], [0], [1], [0, 0, 1, 1], [], []>} : vector<16x32xf32>, vector<32x128xf32>, vector<16x128xf32> -> vector<16x128xf32>
    %454 = vector.extract_strided_slice %451 {offsets = [32, 0], sizes = [32, 128], strides = [1, 1]} : vector<64x128xf32> to vector<32x128xf32>
    %cst_193 = arith.constant dense<0.000000e+00> : vector<16x128xf32>
    %455 = tpu.matmul %449, %454, %cst_193 {dimension_numbers = #tpu.dot_dimension_numbers<[1], [0], [0], [1], [0, 0, 1, 1], [], []>} : vector<16x32xf32>, vector<32x128xf32>, vector<16x128xf32> -> vector<16x128xf32>
    %456 = arith.addf %453, %455 : vector<16x128xf32>
    %457 = vector.broadcast %447 : vector<1x128xf32> to vector<16x128xf32>
    %458 = arith.addf %456, %457 : vector<16x128xf32>
    %cst_194 = arith.constant 0.000000e+00 : f32
    %459 = vector.broadcast %cst_194 : f32 to vector<2x32xf32>
    %cst_195 = arith.constant 0.000000e+00 : f32
    %460 = vector.broadcast %cst_195 : f32 to vector<2x32xf32>
    %461 = vector.extract_strided_slice %458 {offsets = [0, 0], sizes = [2, 128], strides = [1, 1]} : vector<16x128xf32> to vector<2x128xf32>
    %cst_196 = arith.constant dense<0.000000e+00> : vector<2x128xf32>
    %462 = tpu.matmul %459, %445, %cst_196 {dimension_numbers = #tpu.dot_dimension_numbers<[1], [0], [0], [1], [0, 0, 1, 1], [], []>} : vector<2x32xf32>, vector<32x128xf32>, vector<2x128xf32> -> vector<2x128xf32>
    %463 = arith.addf %461, %462 : vector<2x128xf32>
    %464 = arith.negf %463 : vector<2x128xf32>
    %465 = math.exp %464 : vector<2x128xf32>
    %cst_197 = arith.constant 1.000000e+00 : f32
    %466 = vector.broadcast %cst_197 : f32 to vector<2x128xf32>
    %467 = arith.addf %466, %465 : vector<2x128xf32>
    %468 = arith.divf %466, %467 : vector<2x128xf32>
    %469 = math.tanh %463 : vector<2x128xf32>
    %470 = vector.extract_strided_slice %468 {offsets = [0, 32], sizes = [2, 32], strides = [1, 1]} : vector<2x128xf32> to vector<2x32xf32>
    %471 = arith.mulf %470, %460 : vector<2x32xf32>
    %472 = vector.extract_strided_slice %468 {offsets = [0, 0], sizes = [2, 32], strides = [1, 1]} : vector<2x128xf32> to vector<2x32xf32>
    %473 = vector.extract_strided_slice %469 {offsets = [0, 64], sizes = [2, 32], strides = [1, 1]} : vector<2x128xf32> to vector<2x32xf32>
    %474 = arith.mulf %472, %473 : vector<2x32xf32>
    %475 = arith.addf %471, %474 : vector<2x32xf32>
    %476 = vector.extract_strided_slice %468 {offsets = [0, 96], sizes = [2, 32], strides = [1, 1]} : vector<2x128xf32> to vector<2x32xf32>
    %477 = math.tanh %475 : vector<2x32xf32>
    %478 = arith.mulf %476, %477 : vector<2x32xf32>
    %479 = vector.extract_strided_slice %478 {offsets = [0, 0], sizes = [2, 16], strides = [1, 1]} : vector<2x32xf32> to vector<2x16xf32>
    %c0_198 = arith.constant 0 : index
    %c0_199 = arith.constant 0 : index
    %480 = vector.load %arg8[%c0_198, %c0_199] : memref<16x32xf32, #tpu.memory_space<vmem>>, vector<2x16xf32>
    tpu.vector_store %arg8[%c0_198, %c0_199], %479 {strides = array<i32>} : memref<16x32xf32, #tpu.memory_space<vmem>>, vector<2x16xf32>,
    %481 = vector.extract_strided_slice %478 {offsets = [0, 16], sizes = [2, 16], strides = [1, 1]} : vector<2x32xf32> to vector<2x16xf32>
    %c14_200 = arith.constant 14 : index
    %c16_201 = arith.constant 16 : index
    %482 = vector.load %arg8[%c14_200, %c16_201] : memref<16x32xf32, #tpu.memory_space<vmem>>, vector<2x16xf32>
    tpu.vector_store %arg8[%c14_200, %c16_201], %481 {strides = array<i32>} : memref<16x32xf32, #tpu.memory_space<vmem>>, vector<2x16xf32>,
    %483 = vector.extract_strided_slice %478 {offsets = [0, 0], sizes = [2, 16], strides = [1, 1]} : vector<2x32xf32> to vector<2x16xf32>
    %c14_202 = arith.constant 14 : index
    %c0_203 = arith.constant 0 : index
    %484 = vector.load %arg9[%c14_202, %c0_203] : memref<16x32xf32, #tpu.memory_space<vmem>>, vector<2x16xf32>
    tpu.vector_store %arg9[%c14_202, %c0_203], %483 {strides = array<i32>} : memref<16x32xf32, #tpu.memory_space<vmem>>, vector<2x16xf32>,
    %485 = vector.extract_strided_slice %478 {offsets = [0, 16], sizes = [2, 16], strides = [1, 1]} : vector<2x32xf32> to vector<2x16xf32>
    %c0_204 = arith.constant 0 : index
    %c16_205 = arith.constant 16 : index
    %486 = vector.load %arg9[%c0_204, %c16_205] : memref<16x32xf32, #tpu.memory_space<vmem>>, vector<2x16xf32>
    tpu.vector_store %arg9[%c0_204, %c16_205], %485 {strides = array<i32>} : memref<16x32xf32, #tpu.memory_space<vmem>>, vector<2x16xf32>,
    %487 = vector.extract_strided_slice %458 {offsets = [2, 0], sizes = [2, 128], strides = [1, 1]} : vector<16x128xf32> to vector<2x128xf32>
    %cst_206 = arith.constant dense<0.000000e+00> : vector<2x128xf32>
    %488 = tpu.matmul %478, %445, %cst_206 {dimension_numbers = #tpu.dot_dimension_numbers<[1], [0], [0], [1], [0, 0, 1, 1], [], []>} : vector<2x32xf32>, vector<32x128xf32>, vector<2x128xf32> -> vector<2x128xf32>
    %489 = arith.addf %487, %488 : vector<2x128xf32>
    %490 = arith.negf %489 : vector<2x128xf32>
    %491 = math.exp %490 : vector<2x128xf32>
    %cst_207 = arith.constant 1.000000e+00 : f32
    %492 = vector.broadcast %cst_207 : f32 to vector<2x128xf32>
    %493 = arith.addf %492, %491 : vector<2x128xf32>
    %494 = arith.divf %492, %493 : vector<2x128xf32>
    %495 = math.tanh %489 : vector<2x128xf32>
    %496 = vector.extract_strided_slice %494 {offsets = [0, 32], sizes = [2, 32], strides = [1, 1]} : vector<2x128xf32> to vector<2x32xf32>
    %497 = arith.mulf %496, %475 : vector<2x32xf32>
    %498 = vector.extract_strided_slice %494 {offsets = [0, 0], sizes = [2, 32], strides = [1, 1]} : vector<2x128xf32> to vector<2x32xf32>
    %499 = vector.extract_strided_slice %495 {offsets = [0, 64], sizes = [2, 32], strides = [1, 1]} : vector<2x128xf32> to vector<2x32xf32>
    %500 = arith.mulf %498, %499 : vector<2x32xf32>
    %501 = arith.addf %497, %500 : vector<2x32xf32>
    %502 = vector.extract_strided_slice %494 {offsets = [0, 96], sizes = [2, 32], strides = [1, 1]} : vector<2x128xf32> to vector<2x32xf32>
    %503 = math.tanh %501 : vector<2x32xf32>
    %504 = arith.mulf %502, %503 : vector<2x32xf32>
    %505 = vector.extract_strided_slice %504 {offsets = [0, 0], sizes = [2, 16], strides = [1, 1]} : vector<2x32xf32> to vector<2x16xf32>
    %c2_208 = arith.constant 2 : index
    %c0_209 = arith.constant 0 : index
    %506 = vector.load %arg8[%c2_208, %c0_209] : memref<16x32xf32, #tpu.memory_space<vmem>>, vector<2x16xf32>
    tpu.vector_store %arg8[%c2_208, %c0_209], %505 {strides = array<i32>} : memref<16x32xf32, #tpu.memory_space<vmem>>, vector<2x16xf32>,
    %507 = vector.extract_strided_slice %504 {offsets = [0, 16], sizes = [2, 16], strides = [1, 1]} : vector<2x32xf32> to vector<2x16xf32>
    %c12_210 = arith.constant 12 : index
    %c16_211 = arith.constant 16 : index
    %508 = vector.load %arg8[%c12_210, %c16_211] : memref<16x32xf32, #tpu.memory_space<vmem>>, vector<2x16xf32>
    tpu.vector_store %arg8[%c12_210, %c16_211], %507 {strides = array<i32>} : memref<16x32xf32, #tpu.memory_space<vmem>>, vector<2x16xf32>,
    %509 = vector.extract_strided_slice %504 {offsets = [0, 0], sizes = [2, 16], strides = [1, 1]} : vector<2x32xf32> to vector<2x16xf32>
    %c12_212 = arith.constant 12 : index
    %c0_213 = arith.constant 0 : index
    %510 = vector.load %arg9[%c12_212, %c0_213] : memref<16x32xf32, #tpu.memory_space<vmem>>, vector<2x16xf32>
    tpu.vector_store %arg9[%c12_212, %c0_213], %509 {strides = array<i32>} : memref<16x32xf32, #tpu.memory_space<vmem>>, vector<2x16xf32>,
    %511 = vector.extract_strided_slice %504 {offsets = [0, 16], sizes = [2, 16], strides = [1, 1]} : vector<2x32xf32> to vector<2x16xf32>
    %c2_214 = arith.constant 2 : index
    %c16_215 = arith.constant 16 : index
    %512 = vector.load %arg9[%c2_214, %c16_215] : memref<16x32xf32, #tpu.memory_space<vmem>>, vector<2x16xf32>
    tpu.vector_store %arg9[%c2_214, %c16_215], %511 {strides = array<i32>} : memref<16x32xf32, #tpu.memory_space<vmem>>, vector<2x16xf32>,
    %513 = vector.extract_strided_slice %458 {offsets = [4, 0], sizes = [2, 128], strides = [1, 1]} : vector<16x128xf32> to vector<2x128xf32>
    %cst_216 = arith.constant dense<0.000000e+00> : vector<2x128xf32>
    %514 = tpu.matmul %504, %445, %cst_216 {dimension_numbers = #tpu.dot_dimension_numbers<[1], [0], [0], [1], [0, 0, 1, 1], [], []>} : vector<2x32xf32>, vector<32x128xf32>, vector<2x128xf32> -> vector<2x128xf32>
    %515 = arith.addf %513, %514 : vector<2x128xf32>
    %516 = arith.negf %515 : vector<2x128xf32>
    %517 = math.exp %516 : vector<2x128xf32>
    %cst_217 = arith.constant 1.000000e+00 : f32
    %518 = vector.broadcast %cst_217 : f32 to vector<2x128xf32>
    %519 = arith.addf %518, %517 : vector<2x128xf32>
    %520 = arith.divf %518, %519 : vector<2x128xf32>
    %521 = math.tanh %515 : vector<2x128xf32>
    %522 = vector.extract_strided_slice %520 {offsets = [0, 32], sizes = [2, 32], strides = [1, 1]} : vector<2x128xf32> to vector<2x32xf32>
    %523 = arith.mulf %522, %501 : vector<2x32xf32>
    %524 = vector.extract_strided_slice %520 {offsets = [0, 0], sizes = [2, 32], strides = [1, 1]} : vector<2x128xf32> to vector<2x32xf32>
    %525 = vector.extract_strided_slice %521 {offsets = [0, 64], sizes = [2, 32], strides = [1, 1]} : vector<2x128xf32> to vector<2x32xf32>
    %526 = arith.mulf %524, %525 : vector<2x32xf32>
    %527 = arith.addf %523, %526 : vector<2x32xf32>
    %528 = vector.extract_strided_slice %520 {offsets = [0, 96], sizes = [2, 32], strides = [1, 1]} : vector<2x128xf32> to vector<2x32xf32>
    %529 = math.tanh %527 : vector<2x32xf32>
    %530 = arith.mulf %528, %529 : vector<2x32xf32>
    %531 = vector.extract_strided_slice %530 {offsets = [0, 0], sizes = [2, 16], strides = [1, 1]} : vector<2x32xf32> to vector<2x16xf32>
    %c4_218 = arith.constant 4 : index
    %c0_219 = arith.constant 0 : index
    %532 = vector.load %arg8[%c4_218, %c0_219] : memref<16x32xf32, #tpu.memory_space<vmem>>, vector<2x16xf32>
    tpu.vector_store %arg8[%c4_218, %c0_219], %531 {strides = array<i32>} : memref<16x32xf32, #tpu.memory_space<vmem>>, vector<2x16xf32>,
    %533 = vector.extract_strided_slice %530 {offsets = [0, 16], sizes = [2, 16], strides = [1, 1]} : vector<2x32xf32> to vector<2x16xf32>
    %c10_220 = arith.constant 10 : index
    %c16_221 = arith.constant 16 : index
    %534 = vector.load %arg8[%c10_220, %c16_221] : memref<16x32xf32, #tpu.memory_space<vmem>>, vector<2x16xf32>
    tpu.vector_store %arg8[%c10_220, %c16_221], %533 {strides = array<i32>} : memref<16x32xf32, #tpu.memory_space<vmem>>, vector<2x16xf32>,
    %535 = vector.extract_strided_slice %530 {offsets = [0, 0], sizes = [2, 16], strides = [1, 1]} : vector<2x32xf32> to vector<2x16xf32>
    %c10_222 = arith.constant 10 : index
    %c0_223 = arith.constant 0 : index
    %536 = vector.load %arg9[%c10_222, %c0_223] : memref<16x32xf32, #tpu.memory_space<vmem>>, vector<2x16xf32>
    tpu.vector_store %arg9[%c10_222, %c0_223], %535 {strides = array<i32>} : memref<16x32xf32, #tpu.memory_space<vmem>>, vector<2x16xf32>,
    %537 = vector.extract_strided_slice %530 {offsets = [0, 16], sizes = [2, 16], strides = [1, 1]} : vector<2x32xf32> to vector<2x16xf32>
    %c4_224 = arith.constant 4 : index
    %c16_225 = arith.constant 16 : index
    %538 = vector.load %arg9[%c4_224, %c16_225] : memref<16x32xf32, #tpu.memory_space<vmem>>, vector<2x16xf32>
    tpu.vector_store %arg9[%c4_224, %c16_225], %537 {strides = array<i32>} : memref<16x32xf32, #tpu.memory_space<vmem>>, vector<2x16xf32>,
    %539 = vector.extract_strided_slice %458 {offsets = [6, 0], sizes = [2, 128], strides = [1, 1]} : vector<16x128xf32> to vector<2x128xf32>
    %cst_226 = arith.constant dense<0.000000e+00> : vector<2x128xf32>
    %540 = tpu.matmul %530, %445, %cst_226 {dimension_numbers = #tpu.dot_dimension_numbers<[1], [0], [0], [1], [0, 0, 1, 1], [], []>} : vector<2x32xf32>, vector<32x128xf32>, vector<2x128xf32> -> vector<2x128xf32>
    %541 = arith.addf %539, %540 : vector<2x128xf32>
    %542 = arith.negf %541 : vector<2x128xf32>
    %543 = math.exp %542 : vector<2x128xf32>
    %cst_227 = arith.constant 1.000000e+00 : f32
    %544 = vector.broadcast %cst_227 : f32 to vector<2x128xf32>
    %545 = arith.addf %544, %543 : vector<2x128xf32>
    %546 = arith.divf %544, %545 : vector<2x128xf32>
    %547 = math.tanh %541 : vector<2x128xf32>
    %548 = vector.extract_strided_slice %546 {offsets = [0, 32], sizes = [2, 32], strides = [1, 1]} : vector<2x128xf32> to vector<2x32xf32>
    %549 = arith.mulf %548, %527 : vector<2x32xf32>
    %550 = vector.extract_strided_slice %546 {offsets = [0, 0], sizes = [2, 32], strides = [1, 1]} : vector<2x128xf32> to vector<2x32xf32>
    %551 = vector.extract_strided_slice %547 {offsets = [0, 64], sizes = [2, 32], strides = [1, 1]} : vector<2x128xf32> to vector<2x32xf32>
    %552 = arith.mulf %550, %551 : vector<2x32xf32>
    %553 = arith.addf %549, %552 : vector<2x32xf32>
    %554 = vector.extract_strided_slice %546 {offsets = [0, 96], sizes = [2, 32], strides = [1, 1]} : vector<2x128xf32> to vector<2x32xf32>
    %555 = math.tanh %553 : vector<2x32xf32>
    %556 = arith.mulf %554, %555 : vector<2x32xf32>
    %557 = vector.extract_strided_slice %556 {offsets = [0, 0], sizes = [2, 16], strides = [1, 1]} : vector<2x32xf32> to vector<2x16xf32>
    %c6_228 = arith.constant 6 : index
    %c0_229 = arith.constant 0 : index
    %558 = vector.load %arg8[%c6_228, %c0_229] : memref<16x32xf32, #tpu.memory_space<vmem>>, vector<2x16xf32>
    tpu.vector_store %arg8[%c6_228, %c0_229], %557 {strides = array<i32>} : memref<16x32xf32, #tpu.memory_space<vmem>>, vector<2x16xf32>,
    %559 = vector.extract_strided_slice %556 {offsets = [0, 16], sizes = [2, 16], strides = [1, 1]} : vector<2x32xf32> to vector<2x16xf32>
    %c8_230 = arith.constant 8 : index
    %c16_231 = arith.constant 16 : index
    %560 = vector.load %arg8[%c8_230, %c16_231] : memref<16x32xf32, #tpu.memory_space<vmem>>, vector<2x16xf32>
    tpu.vector_store %arg8[%c8_230, %c16_231], %559 {strides = array<i32>} : memref<16x32xf32, #tpu.memory_space<vmem>>, vector<2x16xf32>,
    %561 = vector.extract_strided_slice %556 {offsets = [0, 0], sizes = [2, 16], strides = [1, 1]} : vector<2x32xf32> to vector<2x16xf32>
    %c8_232 = arith.constant 8 : index
    %c0_233 = arith.constant 0 : index
    %562 = vector.load %arg9[%c8_232, %c0_233] : memref<16x32xf32, #tpu.memory_space<vmem>>, vector<2x16xf32>
    tpu.vector_store %arg9[%c8_232, %c0_233], %561 {strides = array<i32>} : memref<16x32xf32, #tpu.memory_space<vmem>>, vector<2x16xf32>,
    %563 = vector.extract_strided_slice %556 {offsets = [0, 16], sizes = [2, 16], strides = [1, 1]} : vector<2x32xf32> to vector<2x16xf32>
    %c6_234 = arith.constant 6 : index
    %c16_235 = arith.constant 16 : index
    %564 = vector.load %arg9[%c6_234, %c16_235] : memref<16x32xf32, #tpu.memory_space<vmem>>, vector<2x16xf32>
    tpu.vector_store %arg9[%c6_234, %c16_235], %563 {strides = array<i32>} : memref<16x32xf32, #tpu.memory_space<vmem>>, vector<2x16xf32>,
    %565 = vector.extract_strided_slice %458 {offsets = [8, 0], sizes = [2, 128], strides = [1, 1]} : vector<16x128xf32> to vector<2x128xf32>
    %cst_236 = arith.constant dense<0.000000e+00> : vector<2x128xf32>
    %566 = tpu.matmul %556, %445, %cst_236 {dimension_numbers = #tpu.dot_dimension_numbers<[1], [0], [0], [1], [0, 0, 1, 1], [], []>} : vector<2x32xf32>, vector<32x128xf32>, vector<2x128xf32> -> vector<2x128xf32>
    %567 = arith.addf %565, %566 : vector<2x128xf32>
    %568 = arith.negf %567 : vector<2x128xf32>
    %569 = math.exp %568 : vector<2x128xf32>
    %cst_237 = arith.constant 1.000000e+00 : f32
    %570 = vector.broadcast %cst_237 : f32 to vector<2x128xf32>
    %571 = arith.addf %570, %569 : vector<2x128xf32>
    %572 = arith.divf %570, %571 : vector<2x128xf32>
    %573 = math.tanh %567 : vector<2x128xf32>
    %574 = vector.extract_strided_slice %572 {offsets = [0, 32], sizes = [2, 32], strides = [1, 1]} : vector<2x128xf32> to vector<2x32xf32>
    %575 = arith.mulf %574, %553 : vector<2x32xf32>
    %576 = vector.extract_strided_slice %572 {offsets = [0, 0], sizes = [2, 32], strides = [1, 1]} : vector<2x128xf32> to vector<2x32xf32>
    %577 = vector.extract_strided_slice %573 {offsets = [0, 64], sizes = [2, 32], strides = [1, 1]} : vector<2x128xf32> to vector<2x32xf32>
    %578 = arith.mulf %576, %577 : vector<2x32xf32>
    %579 = arith.addf %575, %578 : vector<2x32xf32>
    %580 = vector.extract_strided_slice %572 {offsets = [0, 96], sizes = [2, 32], strides = [1, 1]} : vector<2x128xf32> to vector<2x32xf32>
    %581 = math.tanh %579 : vector<2x32xf32>
    %582 = arith.mulf %580, %581 : vector<2x32xf32>
    %583 = vector.extract_strided_slice %582 {offsets = [0, 0], sizes = [2, 16], strides = [1, 1]} : vector<2x32xf32> to vector<2x16xf32>
    %c8_238 = arith.constant 8 : index
    %c0_239 = arith.constant 0 : index
    %584 = vector.load %arg8[%c8_238, %c0_239] : memref<16x32xf32, #tpu.memory_space<vmem>>, vector<2x16xf32>
    tpu.vector_store %arg8[%c8_238, %c0_239], %583 {strides = array<i32>} : memref<16x32xf32, #tpu.memory_space<vmem>>, vector<2x16xf32>,
    %585 = vector.extract_strided_slice %582 {offsets = [0, 16], sizes = [2, 16], strides = [1, 1]} : vector<2x32xf32> to vector<2x16xf32>
    %c6_240 = arith.constant 6 : index
    %c16_241 = arith.constant 16 : index
    %586 = vector.load %arg8[%c6_240, %c16_241] : memref<16x32xf32, #tpu.memory_space<vmem>>, vector<2x16xf32>
    tpu.vector_store %arg8[%c6_240, %c16_241], %585 {strides = array<i32>} : memref<16x32xf32, #tpu.memory_space<vmem>>, vector<2x16xf32>,
    %587 = vector.extract_strided_slice %582 {offsets = [0, 0], sizes = [2, 16], strides = [1, 1]} : vector<2x32xf32> to vector<2x16xf32>
    %c6_242 = arith.constant 6 : index
    %c0_243 = arith.constant 0 : index
    %588 = vector.load %arg9[%c6_242, %c0_243] : memref<16x32xf32, #tpu.memory_space<vmem>>, vector<2x16xf32>
    tpu.vector_store %arg9[%c6_242, %c0_243], %587 {strides = array<i32>} : memref<16x32xf32, #tpu.memory_space<vmem>>, vector<2x16xf32>,
    %589 = vector.extract_strided_slice %582 {offsets = [0, 16], sizes = [2, 16], strides = [1, 1]} : vector<2x32xf32> to vector<2x16xf32>
    %c8_244 = arith.constant 8 : index
    %c16_245 = arith.constant 16 : index
    %590 = vector.load %arg9[%c8_244, %c16_245] : memref<16x32xf32, #tpu.memory_space<vmem>>, vector<2x16xf32>
    tpu.vector_store %arg9[%c8_244, %c16_245], %589 {strides = array<i32>} : memref<16x32xf32, #tpu.memory_space<vmem>>, vector<2x16xf32>,
    %591 = vector.extract_strided_slice %458 {offsets = [10, 0], sizes = [2, 128], strides = [1, 1]} : vector<16x128xf32> to vector<2x128xf32>
    %cst_246 = arith.constant dense<0.000000e+00> : vector<2x128xf32>
    %592 = tpu.matmul %582, %445, %cst_246 {dimension_numbers = #tpu.dot_dimension_numbers<[1], [0], [0], [1], [0, 0, 1, 1], [], []>} : vector<2x32xf32>, vector<32x128xf32>, vector<2x128xf32> -> vector<2x128xf32>
    %593 = arith.addf %591, %592 : vector<2x128xf32>
    %594 = arith.negf %593 : vector<2x128xf32>
    %595 = math.exp %594 : vector<2x128xf32>
    %cst_247 = arith.constant 1.000000e+00 : f32
    %596 = vector.broadcast %cst_247 : f32 to vector<2x128xf32>
    %597 = arith.addf %596, %595 : vector<2x128xf32>
    %598 = arith.divf %596, %597 : vector<2x128xf32>
    %599 = math.tanh %593 : vector<2x128xf32>
    %600 = vector.extract_strided_slice %598 {offsets = [0, 32], sizes = [2, 32], strides = [1, 1]} : vector<2x128xf32> to vector<2x32xf32>
    %601 = arith.mulf %600, %579 : vector<2x32xf32>
    %602 = vector.extract_strided_slice %598 {offsets = [0, 0], sizes = [2, 32], strides = [1, 1]} : vector<2x128xf32> to vector<2x32xf32>
    %603 = vector.extract_strided_slice %599 {offsets = [0, 64], sizes = [2, 32], strides = [1, 1]} : vector<2x128xf32> to vector<2x32xf32>
    %604 = arith.mulf %602, %603 : vector<2x32xf32>
    %605 = arith.addf %601, %604 : vector<2x32xf32>
    %606 = vector.extract_strided_slice %598 {offsets = [0, 96], sizes = [2, 32], strides = [1, 1]} : vector<2x128xf32> to vector<2x32xf32>
    %607 = math.tanh %605 : vector<2x32xf32>
    %608 = arith.mulf %606, %607 : vector<2x32xf32>
    %609 = vector.extract_strided_slice %608 {offsets = [0, 0], sizes = [2, 16], strides = [1, 1]} : vector<2x32xf32> to vector<2x16xf32>
    %c10_248 = arith.constant 10 : index
    %c0_249 = arith.constant 0 : index
    %610 = vector.load %arg8[%c10_248, %c0_249] : memref<16x32xf32, #tpu.memory_space<vmem>>, vector<2x16xf32>
    tpu.vector_store %arg8[%c10_248, %c0_249], %609 {strides = array<i32>} : memref<16x32xf32, #tpu.memory_space<vmem>>, vector<2x16xf32>,
    %611 = vector.extract_strided_slice %608 {offsets = [0, 16], sizes = [2, 16], strides = [1, 1]} : vector<2x32xf32> to vector<2x16xf32>
    %c4_250 = arith.constant 4 : index
    %c16_251 = arith.constant 16 : index
    %612 = vector.load %arg8[%c4_250, %c16_251] : memref<16x32xf32, #tpu.memory_space<vmem>>, vector<2x16xf32>
    tpu.vector_store %arg8[%c4_250, %c16_251], %611 {strides = array<i32>} : memref<16x32xf32, #tpu.memory_space<vmem>>, vector<2x16xf32>,
    %613 = vector.extract_strided_slice %608 {offsets = [0, 0], sizes = [2, 16], strides = [1, 1]} : vector<2x32xf32> to vector<2x16xf32>
    %c4_252 = arith.constant 4 : index
    %c0_253 = arith.constant 0 : index
    %614 = vector.load %arg9[%c4_252, %c0_253] : memref<16x32xf32, #tpu.memory_space<vmem>>, vector<2x16xf32>
    tpu.vector_store %arg9[%c4_252, %c0_253], %613 {strides = array<i32>} : memref<16x32xf32, #tpu.memory_space<vmem>>, vector<2x16xf32>,
    %615 = vector.extract_strided_slice %608 {offsets = [0, 16], sizes = [2, 16], strides = [1, 1]} : vector<2x32xf32> to vector<2x16xf32>
    %c10_254 = arith.constant 10 : index
    %c16_255 = arith.constant 16 : index
    %616 = vector.load %arg9[%c10_254, %c16_255] : memref<16x32xf32, #tpu.memory_space<vmem>>, vector<2x16xf32>
    tpu.vector_store %arg9[%c10_254, %c16_255], %615 {strides = array<i32>} : memref<16x32xf32, #tpu.memory_space<vmem>>, vector<2x16xf32>,
    %617 = vector.extract_strided_slice %458 {offsets = [12, 0], sizes = [2, 128], strides = [1, 1]} : vector<16x128xf32> to vector<2x128xf32>
    %cst_256 = arith.constant dense<0.000000e+00> : vector<2x128xf32>
    %618 = tpu.matmul %608, %445, %cst_256 {dimension_numbers = #tpu.dot_dimension_numbers<[1], [0], [0], [1], [0, 0, 1, 1], [], []>} : vector<2x32xf32>, vector<32x128xf32>, vector<2x128xf32> -> vector<2x128xf32>
    %619 = arith.addf %617, %618 : vector<2x128xf32>
    %620 = arith.negf %619 : vector<2x128xf32>
    %621 = math.exp %620 : vector<2x128xf32>
    %cst_257 = arith.constant 1.000000e+00 : f32
    %622 = vector.broadcast %cst_257 : f32 to vector<2x128xf32>
    %623 = arith.addf %622, %621 : vector<2x128xf32>
    %624 = arith.divf %622, %623 : vector<2x128xf32>
    %625 = math.tanh %619 : vector<2x128xf32>
    %626 = vector.extract_strided_slice %624 {offsets = [0, 32], sizes = [2, 32], strides = [1, 1]} : vector<2x128xf32> to vector<2x32xf32>
    %627 = arith.mulf %626, %605 : vector<2x32xf32>
    %628 = vector.extract_strided_slice %624 {offsets = [0, 0], sizes = [2, 32], strides = [1, 1]} : vector<2x128xf32> to vector<2x32xf32>
    %629 = vector.extract_strided_slice %625 {offsets = [0, 64], sizes = [2, 32], strides = [1, 1]} : vector<2x128xf32> to vector<2x32xf32>
    %630 = arith.mulf %628, %629 : vector<2x32xf32>
    %631 = arith.addf %627, %630 : vector<2x32xf32>
    %632 = vector.extract_strided_slice %624 {offsets = [0, 96], sizes = [2, 32], strides = [1, 1]} : vector<2x128xf32> to vector<2x32xf32>
    %633 = math.tanh %631 : vector<2x32xf32>
    %634 = arith.mulf %632, %633 : vector<2x32xf32>
    %635 = vector.extract_strided_slice %634 {offsets = [0, 0], sizes = [2, 16], strides = [1, 1]} : vector<2x32xf32> to vector<2x16xf32>
    %c12_258 = arith.constant 12 : index
    %c0_259 = arith.constant 0 : index
    %636 = vector.load %arg8[%c12_258, %c0_259] : memref<16x32xf32, #tpu.memory_space<vmem>>, vector<2x16xf32>
    tpu.vector_store %arg8[%c12_258, %c0_259], %635 {strides = array<i32>} : memref<16x32xf32, #tpu.memory_space<vmem>>, vector<2x16xf32>,
    %637 = vector.extract_strided_slice %634 {offsets = [0, 16], sizes = [2, 16], strides = [1, 1]} : vector<2x32xf32> to vector<2x16xf32>
    %c2_260 = arith.constant 2 : index
    %c16_261 = arith.constant 16 : index
    %638 = vector.load %arg8[%c2_260, %c16_261] : memref<16x32xf32, #tpu.memory_space<vmem>>, vector<2x16xf32>
    tpu.vector_store %arg8[%c2_260, %c16_261], %637 {strides = array<i32>} : memref<16x32xf32, #tpu.memory_space<vmem>>, vector<2x16xf32>,
    %639 = vector.extract_strided_slice %634 {offsets = [0, 0], sizes = [2, 16], strides = [1, 1]} : vector<2x32xf32> to vector<2x16xf32>
    %c2_262 = arith.constant 2 : index
    %c0_263 = arith.constant 0 : index
    %640 = vector.load %arg9[%c2_262, %c0_263] : memref<16x32xf32, #tpu.memory_space<vmem>>, vector<2x16xf32>
    tpu.vector_store %arg9[%c2_262, %c0_263], %639 {strides = array<i32>} : memref<16x32xf32, #tpu.memory_space<vmem>>, vector<2x16xf32>,
    %641 = vector.extract_strided_slice %634 {offsets = [0, 16], sizes = [2, 16], strides = [1, 1]} : vector<2x32xf32> to vector<2x16xf32>
    %c12_264 = arith.constant 12 : index
    %c16_265 = arith.constant 16 : index
    %642 = vector.load %arg9[%c12_264, %c16_265] : memref<16x32xf32, #tpu.memory_space<vmem>>, vector<2x16xf32>
    tpu.vector_store %arg9[%c12_264, %c16_265], %641 {strides = array<i32>} : memref<16x32xf32, #tpu.memory_space<vmem>>, vector<2x16xf32>,
    %643 = vector.extract_strided_slice %458 {offsets = [14, 0], sizes = [2, 128], strides = [1, 1]} : vector<16x128xf32> to vector<2x128xf32>
    %cst_266 = arith.constant dense<0.000000e+00> : vector<2x128xf32>
    %644 = tpu.matmul %634, %445, %cst_266 {dimension_numbers = #tpu.dot_dimension_numbers<[1], [0], [0], [1], [0, 0, 1, 1], [], []>} : vector<2x32xf32>, vector<32x128xf32>, vector<2x128xf32> -> vector<2x128xf32>
    %645 = arith.addf %643, %644 : vector<2x128xf32>
    %646 = arith.negf %645 : vector<2x128xf32>
    %647 = math.exp %646 : vector<2x128xf32>
    %cst_267 = arith.constant 1.000000e+00 : f32
    %648 = vector.broadcast %cst_267 : f32 to vector<2x128xf32>
    %649 = arith.addf %648, %647 : vector<2x128xf32>
    %650 = arith.divf %648, %649 : vector<2x128xf32>
    %651 = math.tanh %645 : vector<2x128xf32>
    %652 = vector.extract_strided_slice %650 {offsets = [0, 32], sizes = [2, 32], strides = [1, 1]} : vector<2x128xf32> to vector<2x32xf32>
    %653 = arith.mulf %652, %631 : vector<2x32xf32>
    %654 = vector.extract_strided_slice %650 {offsets = [0, 0], sizes = [2, 32], strides = [1, 1]} : vector<2x128xf32> to vector<2x32xf32>
    %655 = vector.extract_strided_slice %651 {offsets = [0, 64], sizes = [2, 32], strides = [1, 1]} : vector<2x128xf32> to vector<2x32xf32>
    %656 = arith.mulf %654, %655 : vector<2x32xf32>
    %657 = arith.addf %653, %656 : vector<2x32xf32>
    %658 = vector.extract_strided_slice %650 {offsets = [0, 96], sizes = [2, 32], strides = [1, 1]} : vector<2x128xf32> to vector<2x32xf32>
    %659 = math.tanh %657 : vector<2x32xf32>
    %660 = arith.mulf %658, %659 : vector<2x32xf32>
    %661 = vector.extract_strided_slice %660 {offsets = [0, 0], sizes = [2, 16], strides = [1, 1]} : vector<2x32xf32> to vector<2x16xf32>
    %c14_268 = arith.constant 14 : index
    %c0_269 = arith.constant 0 : index
    %662 = vector.load %arg8[%c14_268, %c0_269] : memref<16x32xf32, #tpu.memory_space<vmem>>, vector<2x16xf32>
    tpu.vector_store %arg8[%c14_268, %c0_269], %661 {strides = array<i32>} : memref<16x32xf32, #tpu.memory_space<vmem>>, vector<2x16xf32>,
    %663 = vector.extract_strided_slice %660 {offsets = [0, 16], sizes = [2, 16], strides = [1, 1]} : vector<2x32xf32> to vector<2x16xf32>
    %c0_270 = arith.constant 0 : index
    %c16_271 = arith.constant 16 : index
    %664 = vector.load %arg8[%c0_270, %c16_271] : memref<16x32xf32, #tpu.memory_space<vmem>>, vector<2x16xf32>
    tpu.vector_store %arg8[%c0_270, %c16_271], %663 {strides = array<i32>} : memref<16x32xf32, #tpu.memory_space<vmem>>, vector<2x16xf32>,
    %665 = vector.extract_strided_slice %660 {offsets = [0, 0], sizes = [2, 16], strides = [1, 1]} : vector<2x32xf32> to vector<2x16xf32>
    %c0_272 = arith.constant 0 : index
    %c0_273 = arith.constant 0 : index
    %666 = vector.load %arg9[%c0_272, %c0_273] : memref<16x32xf32, #tpu.memory_space<vmem>>, vector<2x16xf32>
    tpu.vector_store %arg9[%c0_272, %c0_273], %665 {strides = array<i32>} : memref<16x32xf32, #tpu.memory_space<vmem>>, vector<2x16xf32>,
    %667 = vector.extract_strided_slice %660 {offsets = [0, 16], sizes = [2, 16], strides = [1, 1]} : vector<2x32xf32> to vector<2x16xf32>
    %c14_274 = arith.constant 14 : index
    %c16_275 = arith.constant 16 : index
    %668 = vector.load %arg9[%c14_274, %c16_275] : memref<16x32xf32, #tpu.memory_space<vmem>>, vector<2x16xf32>
    tpu.vector_store %arg9[%c14_274, %c16_275], %667 {strides = array<i32>} : memref<16x32xf32, #tpu.memory_space<vmem>>, vector<2x16xf32>,
    %c3 = arith.constant 3 : index
    %c0_276 = arith.constant 0 : index
    %c0_277 = arith.constant 0 : index
    %669 = vector.load %arg3[%c3, %c0_276, %c0_277] : memref<4x32x128xf32, #tpu.memory_space<vmem>>, vector<1x32x128xf32>
    %670 = vector.shape_cast %669 : vector<1x32x128xf32> to vector<32x128xf32>
    %c3_278 = arith.constant 3 : index
    %c0_279 = arith.constant 0 : index
    %c0_280 = arith.constant 0 : index
    %671 = vector.load %arg4[%c3_278, %c0_279, %c0_280] : memref<4x1x128xf32, #tpu.memory_space<vmem>>, vector<1x1x128xf32>
    %672 = vector.shape_cast %671 : vector<1x1x128xf32> to vector<1x128xf32>
    %c0_281 = arith.constant 0 : index
    %c0_282 = arith.constant 0 : index
    %673 = vector.load %arg8[%c0_281, %c0_282] : memref<16x32xf32, #tpu.memory_space<vmem>>, vector<16x32xf32>
    %c0_283 = arith.constant 0 : index
    %c0_284 = arith.constant 0 : index
    %674 = vector.load %arg9[%c0_283, %c0_284] : memref<16x32xf32, #tpu.memory_space<vmem>>, vector<16x32xf32>
    %c2_285 = arith.constant 2 : index
    %c0_286 = arith.constant 0 : index
    %c0_287 = arith.constant 0 : index
    %675 = vector.load %arg2[%c2_285, %c0_286, %c0_287] : memref<3x64x128xf32, #tpu.memory_space<vmem>>, vector<1x64x128xf32>
    %676 = vector.shape_cast %675 : vector<1x64x128xf32> to vector<64x128xf32>
    %677 = vector.extract_strided_slice %676 {offsets = [0, 0], sizes = [32, 128], strides = [1, 1]} : vector<64x128xf32> to vector<32x128xf32>
    %cst_288 = arith.constant dense<0.000000e+00> : vector<16x128xf32>
    %678 = tpu.matmul %673, %677, %cst_288 {dimension_numbers = #tpu.dot_dimension_numbers<[1], [0], [0], [1], [0, 0, 1, 1], [], []>} : vector<16x32xf32>, vector<32x128xf32>, vector<16x128xf32> -> vector<16x128xf32>
    %679 = vector.extract_strided_slice %676 {offsets = [32, 0], sizes = [32, 128], strides = [1, 1]} : vector<64x128xf32> to vector<32x128xf32>
    %cst_289 = arith.constant dense<0.000000e+00> : vector<16x128xf32>
    %680 = tpu.matmul %674, %679, %cst_289 {dimension_numbers = #tpu.dot_dimension_numbers<[1], [0], [0], [1], [0, 0, 1, 1], [], []>} : vector<16x32xf32>, vector<32x128xf32>, vector<16x128xf32> -> vector<16x128xf32>
    %681 = arith.addf %678, %680 : vector<16x128xf32>
    %682 = vector.broadcast %672 : vector<1x128xf32> to vector<16x128xf32>
    %683 = arith.addf %681, %682 : vector<16x128xf32>
    %cst_290 = arith.constant 0.000000e+00 : f32
    %684 = vector.broadcast %cst_290 : f32 to vector<2x32xf32>
    %cst_291 = arith.constant 0.000000e+00 : f32
    %685 = vector.broadcast %cst_291 : f32 to vector<2x32xf32>
    %686 = vector.extract_strided_slice %683 {offsets = [0, 0], sizes = [2, 128], strides = [1, 1]} : vector<16x128xf32> to vector<2x128xf32>
    %cst_292 = arith.constant dense<0.000000e+00> : vector<2x128xf32>
    %687 = tpu.matmul %684, %670, %cst_292 {dimension_numbers = #tpu.dot_dimension_numbers<[1], [0], [0], [1], [0, 0, 1, 1], [], []>} : vector<2x32xf32>, vector<32x128xf32>, vector<2x128xf32> -> vector<2x128xf32>
    %688 = arith.addf %686, %687 : vector<2x128xf32>
    %689 = arith.negf %688 : vector<2x128xf32>
    %690 = math.exp %689 : vector<2x128xf32>
    %cst_293 = arith.constant 1.000000e+00 : f32
    %691 = vector.broadcast %cst_293 : f32 to vector<2x128xf32>
    %692 = arith.addf %691, %690 : vector<2x128xf32>
    %693 = arith.divf %691, %692 : vector<2x128xf32>
    %694 = math.tanh %688 : vector<2x128xf32>
    %695 = vector.extract_strided_slice %693 {offsets = [0, 32], sizes = [2, 32], strides = [1, 1]} : vector<2x128xf32> to vector<2x32xf32>
    %696 = arith.mulf %695, %685 : vector<2x32xf32>
    %697 = vector.extract_strided_slice %693 {offsets = [0, 0], sizes = [2, 32], strides = [1, 1]} : vector<2x128xf32> to vector<2x32xf32>
    %698 = vector.extract_strided_slice %694 {offsets = [0, 64], sizes = [2, 32], strides = [1, 1]} : vector<2x128xf32> to vector<2x32xf32>
    %699 = arith.mulf %697, %698 : vector<2x32xf32>
    %700 = arith.addf %696, %699 : vector<2x32xf32>
    %701 = vector.extract_strided_slice %693 {offsets = [0, 96], sizes = [2, 32], strides = [1, 1]} : vector<2x128xf32> to vector<2x32xf32>
    %702 = math.tanh %700 : vector<2x32xf32>
    %703 = arith.mulf %701, %702 : vector<2x32xf32>
    %704 = vector.extract_strided_slice %703 {offsets = [0, 0], sizes = [2, 16], strides = [1, 1]} : vector<2x32xf32> to vector<2x16xf32>
    %c0_294 = arith.constant 0 : index
    %c0_295 = arith.constant 0 : index
    %705 = vector.load %arg8[%c0_294, %c0_295] : memref<16x32xf32, #tpu.memory_space<vmem>>, vector<2x16xf32>
    tpu.vector_store %arg8[%c0_294, %c0_295], %704 {strides = array<i32>} : memref<16x32xf32, #tpu.memory_space<vmem>>, vector<2x16xf32>,
    %706 = vector.extract_strided_slice %703 {offsets = [0, 16], sizes = [2, 16], strides = [1, 1]} : vector<2x32xf32> to vector<2x16xf32>
    %c14_296 = arith.constant 14 : index
    %c16_297 = arith.constant 16 : index
    %707 = vector.load %arg8[%c14_296, %c16_297] : memref<16x32xf32, #tpu.memory_space<vmem>>, vector<2x16xf32>
    tpu.vector_store %arg8[%c14_296, %c16_297], %706 {strides = array<i32>} : memref<16x32xf32, #tpu.memory_space<vmem>>, vector<2x16xf32>,
    %708 = vector.extract_strided_slice %683 {offsets = [2, 0], sizes = [2, 128], strides = [1, 1]} : vector<16x128xf32> to vector<2x128xf32>
    %cst_298 = arith.constant dense<0.000000e+00> : vector<2x128xf32>
    %709 = tpu.matmul %703, %670, %cst_298 {dimension_numbers = #tpu.dot_dimension_numbers<[1], [0], [0], [1], [0, 0, 1, 1], [], []>} : vector<2x32xf32>, vector<32x128xf32>, vector<2x128xf32> -> vector<2x128xf32>
    %710 = arith.addf %708, %709 : vector<2x128xf32>
    %711 = arith.negf %710 : vector<2x128xf32>
    %712 = math.exp %711 : vector<2x128xf32>
    %cst_299 = arith.constant 1.000000e+00 : f32
    %713 = vector.broadcast %cst_299 : f32 to vector<2x128xf32>
    %714 = arith.addf %713, %712 : vector<2x128xf32>
    %715 = arith.divf %713, %714 : vector<2x128xf32>
    %716 = math.tanh %710 : vector<2x128xf32>
    %717 = vector.extract_strided_slice %715 {offsets = [0, 32], sizes = [2, 32], strides = [1, 1]} : vector<2x128xf32> to vector<2x32xf32>
    %718 = arith.mulf %717, %700 : vector<2x32xf32>
    %719 = vector.extract_strided_slice %715 {offsets = [0, 0], sizes = [2, 32], strides = [1, 1]} : vector<2x128xf32> to vector<2x32xf32>
    %720 = vector.extract_strided_slice %716 {offsets = [0, 64], sizes = [2, 32], strides = [1, 1]} : vector<2x128xf32> to vector<2x32xf32>
    %721 = arith.mulf %719, %720 : vector<2x32xf32>
    %722 = arith.addf %718, %721 : vector<2x32xf32>
    %723 = vector.extract_strided_slice %715 {offsets = [0, 96], sizes = [2, 32], strides = [1, 1]} : vector<2x128xf32> to vector<2x32xf32>
    %724 = math.tanh %722 : vector<2x32xf32>
    %725 = arith.mulf %723, %724 : vector<2x32xf32>
    %726 = vector.extract_strided_slice %725 {offsets = [0, 0], sizes = [2, 16], strides = [1, 1]} : vector<2x32xf32> to vector<2x16xf32>
    %c2_300 = arith.constant 2 : index
    %c0_301 = arith.constant 0 : index
    %727 = vector.load %arg8[%c2_300, %c0_301] : memref<16x32xf32, #tpu.memory_space<vmem>>, vector<2x16xf32>
    tpu.vector_store %arg8[%c2_300, %c0_301], %726 {strides = array<i32>} : memref<16x32xf32, #tpu.memory_space<vmem>>, vector<2x16xf32>,
    %728 = vector.extract_strided_slice %725 {offsets = [0, 16], sizes = [2, 16], strides = [1, 1]} : vector<2x32xf32> to vector<2x16xf32>
    %c12_302 = arith.constant 12 : index
    %c16_303 = arith.constant 16 : index
    %729 = vector.load %arg8[%c12_302, %c16_303] : memref<16x32xf32, #tpu.memory_space<vmem>>, vector<2x16xf32>
    tpu.vector_store %arg8[%c12_302, %c16_303], %728 {strides = array<i32>} : memref<16x32xf32, #tpu.memory_space<vmem>>, vector<2x16xf32>,
    %730 = vector.extract_strided_slice %683 {offsets = [4, 0], sizes = [2, 128], strides = [1, 1]} : vector<16x128xf32> to vector<2x128xf32>
    %cst_304 = arith.constant dense<0.000000e+00> : vector<2x128xf32>
    %731 = tpu.matmul %725, %670, %cst_304 {dimension_numbers = #tpu.dot_dimension_numbers<[1], [0], [0], [1], [0, 0, 1, 1], [], []>} : vector<2x32xf32>, vector<32x128xf32>, vector<2x128xf32> -> vector<2x128xf32>
    %732 = arith.addf %730, %731 : vector<2x128xf32>
    %733 = arith.negf %732 : vector<2x128xf32>
    %734 = math.exp %733 : vector<2x128xf32>
    %cst_305 = arith.constant 1.000000e+00 : f32
    %735 = vector.broadcast %cst_305 : f32 to vector<2x128xf32>
    %736 = arith.addf %735, %734 : vector<2x128xf32>
    %737 = arith.divf %735, %736 : vector<2x128xf32>
    %738 = math.tanh %732 : vector<2x128xf32>
    %739 = vector.extract_strided_slice %737 {offsets = [0, 32], sizes = [2, 32], strides = [1, 1]} : vector<2x128xf32> to vector<2x32xf32>
    %740 = arith.mulf %739, %722 : vector<2x32xf32>
    %741 = vector.extract_strided_slice %737 {offsets = [0, 0], sizes = [2, 32], strides = [1, 1]} : vector<2x128xf32> to vector<2x32xf32>
    %742 = vector.extract_strided_slice %738 {offsets = [0, 64], sizes = [2, 32], strides = [1, 1]} : vector<2x128xf32> to vector<2x32xf32>
    %743 = arith.mulf %741, %742 : vector<2x32xf32>
    %744 = arith.addf %740, %743 : vector<2x32xf32>
    %745 = vector.extract_strided_slice %737 {offsets = [0, 96], sizes = [2, 32], strides = [1, 1]} : vector<2x128xf32> to vector<2x32xf32>
    %746 = math.tanh %744 : vector<2x32xf32>
    %747 = arith.mulf %745, %746 : vector<2x32xf32>
    %748 = vector.extract_strided_slice %747 {offsets = [0, 0], sizes = [2, 16], strides = [1, 1]} : vector<2x32xf32> to vector<2x16xf32>
    %c4_306 = arith.constant 4 : index
    %c0_307 = arith.constant 0 : index
    %749 = vector.load %arg8[%c4_306, %c0_307] : memref<16x32xf32, #tpu.memory_space<vmem>>, vector<2x16xf32>
    tpu.vector_store %arg8[%c4_306, %c0_307], %748 {strides = array<i32>} : memref<16x32xf32, #tpu.memory_space<vmem>>, vector<2x16xf32>,
    %750 = vector.extract_strided_slice %747 {offsets = [0, 16], sizes = [2, 16], strides = [1, 1]} : vector<2x32xf32> to vector<2x16xf32>
    %c10_308 = arith.constant 10 : index
    %c16_309 = arith.constant 16 : index
    %751 = vector.load %arg8[%c10_308, %c16_309] : memref<16x32xf32, #tpu.memory_space<vmem>>, vector<2x16xf32>
    tpu.vector_store %arg8[%c10_308, %c16_309], %750 {strides = array<i32>} : memref<16x32xf32, #tpu.memory_space<vmem>>, vector<2x16xf32>,
    %752 = vector.extract_strided_slice %683 {offsets = [6, 0], sizes = [2, 128], strides = [1, 1]} : vector<16x128xf32> to vector<2x128xf32>
    %cst_310 = arith.constant dense<0.000000e+00> : vector<2x128xf32>
    %753 = tpu.matmul %747, %670, %cst_310 {dimension_numbers = #tpu.dot_dimension_numbers<[1], [0], [0], [1], [0, 0, 1, 1], [], []>} : vector<2x32xf32>, vector<32x128xf32>, vector<2x128xf32> -> vector<2x128xf32>
    %754 = arith.addf %752, %753 : vector<2x128xf32>
    %755 = arith.negf %754 : vector<2x128xf32>
    %756 = math.exp %755 : vector<2x128xf32>
    %cst_311 = arith.constant 1.000000e+00 : f32
    %757 = vector.broadcast %cst_311 : f32 to vector<2x128xf32>
    %758 = arith.addf %757, %756 : vector<2x128xf32>
    %759 = arith.divf %757, %758 : vector<2x128xf32>
    %760 = math.tanh %754 : vector<2x128xf32>
    %761 = vector.extract_strided_slice %759 {offsets = [0, 32], sizes = [2, 32], strides = [1, 1]} : vector<2x128xf32> to vector<2x32xf32>
    %762 = arith.mulf %761, %744 : vector<2x32xf32>
    %763 = vector.extract_strided_slice %759 {offsets = [0, 0], sizes = [2, 32], strides = [1, 1]} : vector<2x128xf32> to vector<2x32xf32>
    %764 = vector.extract_strided_slice %760 {offsets = [0, 64], sizes = [2, 32], strides = [1, 1]} : vector<2x128xf32> to vector<2x32xf32>
    %765 = arith.mulf %763, %764 : vector<2x32xf32>
    %766 = arith.addf %762, %765 : vector<2x32xf32>
    %767 = vector.extract_strided_slice %759 {offsets = [0, 96], sizes = [2, 32], strides = [1, 1]} : vector<2x128xf32> to vector<2x32xf32>
    %768 = math.tanh %766 : vector<2x32xf32>
    %769 = arith.mulf %767, %768 : vector<2x32xf32>
    %770 = vector.extract_strided_slice %769 {offsets = [0, 0], sizes = [2, 16], strides = [1, 1]} : vector<2x32xf32> to vector<2x16xf32>
    %c6_312 = arith.constant 6 : index
    %c0_313 = arith.constant 0 : index
    %771 = vector.load %arg8[%c6_312, %c0_313] : memref<16x32xf32, #tpu.memory_space<vmem>>, vector<2x16xf32>
    tpu.vector_store %arg8[%c6_312, %c0_313], %770 {strides = array<i32>} : memref<16x32xf32, #tpu.memory_space<vmem>>, vector<2x16xf32>,
    %772 = vector.extract_strided_slice %769 {offsets = [0, 16], sizes = [2, 16], strides = [1, 1]} : vector<2x32xf32> to vector<2x16xf32>
    %c8_314 = arith.constant 8 : index
    %c16_315 = arith.constant 16 : index
    %773 = vector.load %arg8[%c8_314, %c16_315] : memref<16x32xf32, #tpu.memory_space<vmem>>, vector<2x16xf32>
    tpu.vector_store %arg8[%c8_314, %c16_315], %772 {strides = array<i32>} : memref<16x32xf32, #tpu.memory_space<vmem>>, vector<2x16xf32>,
    %774 = vector.extract_strided_slice %683 {offsets = [8, 0], sizes = [2, 128], strides = [1, 1]} : vector<16x128xf32> to vector<2x128xf32>
    %cst_316 = arith.constant dense<0.000000e+00> : vector<2x128xf32>
    %775 = tpu.matmul %769, %670, %cst_316 {dimension_numbers = #tpu.dot_dimension_numbers<[1], [0], [0], [1], [0, 0, 1, 1], [], []>} : vector<2x32xf32>, vector<32x128xf32>, vector<2x128xf32> -> vector<2x128xf32>
    %776 = arith.addf %774, %775 : vector<2x128xf32>
    %777 = arith.negf %776 : vector<2x128xf32>
    %778 = math.exp %777 : vector<2x128xf32>
    %cst_317 = arith.constant 1.000000e+00 : f32
    %779 = vector.broadcast %cst_317 : f32 to vector<2x128xf32>
    %780 = arith.addf %779, %778 : vector<2x128xf32>
    %781 = arith.divf %779, %780 : vector<2x128xf32>
    %782 = math.tanh %776 : vector<2x128xf32>
    %783 = vector.extract_strided_slice %781 {offsets = [0, 32], sizes = [2, 32], strides = [1, 1]} : vector<2x128xf32> to vector<2x32xf32>
    %784 = arith.mulf %783, %766 : vector<2x32xf32>
    %785 = vector.extract_strided_slice %781 {offsets = [0, 0], sizes = [2, 32], strides = [1, 1]} : vector<2x128xf32> to vector<2x32xf32>
    %786 = vector.extract_strided_slice %782 {offsets = [0, 64], sizes = [2, 32], strides = [1, 1]} : vector<2x128xf32> to vector<2x32xf32>
    %787 = arith.mulf %785, %786 : vector<2x32xf32>
    %788 = arith.addf %784, %787 : vector<2x32xf32>
    %789 = vector.extract_strided_slice %781 {offsets = [0, 96], sizes = [2, 32], strides = [1, 1]} : vector<2x128xf32> to vector<2x32xf32>
    %790 = math.tanh %788 : vector<2x32xf32>
    %791 = arith.mulf %789, %790 : vector<2x32xf32>
    %792 = vector.extract_strided_slice %791 {offsets = [0, 0], sizes = [2, 16], strides = [1, 1]} : vector<2x32xf32> to vector<2x16xf32>
    %c8_318 = arith.constant 8 : index
    %c0_319 = arith.constant 0 : index
    %793 = vector.load %arg8[%c8_318, %c0_319] : memref<16x32xf32, #tpu.memory_space<vmem>>, vector<2x16xf32>
    tpu.vector_store %arg8[%c8_318, %c0_319], %792 {strides = array<i32>} : memref<16x32xf32, #tpu.memory_space<vmem>>, vector<2x16xf32>,
    %794 = vector.extract_strided_slice %791 {offsets = [0, 16], sizes = [2, 16], strides = [1, 1]} : vector<2x32xf32> to vector<2x16xf32>
    %c6_320 = arith.constant 6 : index
    %c16_321 = arith.constant 16 : index
    %795 = vector.load %arg8[%c6_320, %c16_321] : memref<16x32xf32, #tpu.memory_space<vmem>>, vector<2x16xf32>
    tpu.vector_store %arg8[%c6_320, %c16_321], %794 {strides = array<i32>} : memref<16x32xf32, #tpu.memory_space<vmem>>, vector<2x16xf32>,
    %796 = vector.extract_strided_slice %683 {offsets = [10, 0], sizes = [2, 128], strides = [1, 1]} : vector<16x128xf32> to vector<2x128xf32>
    %cst_322 = arith.constant dense<0.000000e+00> : vector<2x128xf32>
    %797 = tpu.matmul %791, %670, %cst_322 {dimension_numbers = #tpu.dot_dimension_numbers<[1], [0], [0], [1], [0, 0, 1, 1], [], []>} : vector<2x32xf32>, vector<32x128xf32>, vector<2x128xf32> -> vector<2x128xf32>
    %798 = arith.addf %796, %797 : vector<2x128xf32>
    %799 = arith.negf %798 : vector<2x128xf32>
    %800 = math.exp %799 : vector<2x128xf32>
    %cst_323 = arith.constant 1.000000e+00 : f32
    %801 = vector.broadcast %cst_323 : f32 to vector<2x128xf32>
    %802 = arith.addf %801, %800 : vector<2x128xf32>
    %803 = arith.divf %801, %802 : vector<2x128xf32>
    %804 = math.tanh %798 : vector<2x128xf32>
    %805 = vector.extract_strided_slice %803 {offsets = [0, 32], sizes = [2, 32], strides = [1, 1]} : vector<2x128xf32> to vector<2x32xf32>
    %806 = arith.mulf %805, %788 : vector<2x32xf32>
    %807 = vector.extract_strided_slice %803 {offsets = [0, 0], sizes = [2, 32], strides = [1, 1]} : vector<2x128xf32> to vector<2x32xf32>
    %808 = vector.extract_strided_slice %804 {offsets = [0, 64], sizes = [2, 32], strides = [1, 1]} : vector<2x128xf32> to vector<2x32xf32>
    %809 = arith.mulf %807, %808 : vector<2x32xf32>
    %810 = arith.addf %806, %809 : vector<2x32xf32>
    %811 = vector.extract_strided_slice %803 {offsets = [0, 96], sizes = [2, 32], strides = [1, 1]} : vector<2x128xf32> to vector<2x32xf32>
    %812 = math.tanh %810 : vector<2x32xf32>
    %813 = arith.mulf %811, %812 : vector<2x32xf32>
    %814 = vector.extract_strided_slice %813 {offsets = [0, 0], sizes = [2, 16], strides = [1, 1]} : vector<2x32xf32> to vector<2x16xf32>
    %c10_324 = arith.constant 10 : index
    %c0_325 = arith.constant 0 : index
    %815 = vector.load %arg8[%c10_324, %c0_325] : memref<16x32xf32, #tpu.memory_space<vmem>>, vector<2x16xf32>
    tpu.vector_store %arg8[%c10_324, %c0_325], %814 {strides = array<i32>} : memref<16x32xf32, #tpu.memory_space<vmem>>, vector<2x16xf32>,
    %816 = vector.extract_strided_slice %813 {offsets = [0, 16], sizes = [2, 16], strides = [1, 1]} : vector<2x32xf32> to vector<2x16xf32>
    %c4_326 = arith.constant 4 : index
    %c16_327 = arith.constant 16 : index
    %817 = vector.load %arg8[%c4_326, %c16_327] : memref<16x32xf32, #tpu.memory_space<vmem>>, vector<2x16xf32>
    tpu.vector_store %arg8[%c4_326, %c16_327], %816 {strides = array<i32>} : memref<16x32xf32, #tpu.memory_space<vmem>>, vector<2x16xf32>,
    %818 = vector.extract_strided_slice %683 {offsets = [12, 0], sizes = [2, 128], strides = [1, 1]} : vector<16x128xf32> to vector<2x128xf32>
    %cst_328 = arith.constant dense<0.000000e+00> : vector<2x128xf32>
    %819 = tpu.matmul %813, %670, %cst_328 {dimension_numbers = #tpu.dot_dimension_numbers<[1], [0], [0], [1], [0, 0, 1, 1], [], []>} : vector<2x32xf32>, vector<32x128xf32>, vector<2x128xf32> -> vector<2x128xf32>
    %820 = arith.addf %818, %819 : vector<2x128xf32>
    %821 = arith.negf %820 : vector<2x128xf32>
    %822 = math.exp %821 : vector<2x128xf32>
    %cst_329 = arith.constant 1.000000e+00 : f32
    %823 = vector.broadcast %cst_329 : f32 to vector<2x128xf32>
    %824 = arith.addf %823, %822 : vector<2x128xf32>
    %825 = arith.divf %823, %824 : vector<2x128xf32>
    %826 = math.tanh %820 : vector<2x128xf32>
    %827 = vector.extract_strided_slice %825 {offsets = [0, 32], sizes = [2, 32], strides = [1, 1]} : vector<2x128xf32> to vector<2x32xf32>
    %828 = arith.mulf %827, %810 : vector<2x32xf32>
    %829 = vector.extract_strided_slice %825 {offsets = [0, 0], sizes = [2, 32], strides = [1, 1]} : vector<2x128xf32> to vector<2x32xf32>
    %830 = vector.extract_strided_slice %826 {offsets = [0, 64], sizes = [2, 32], strides = [1, 1]} : vector<2x128xf32> to vector<2x32xf32>
    %831 = arith.mulf %829, %830 : vector<2x32xf32>
    %832 = arith.addf %828, %831 : vector<2x32xf32>
    %833 = vector.extract_strided_slice %825 {offsets = [0, 96], sizes = [2, 32], strides = [1, 1]} : vector<2x128xf32> to vector<2x32xf32>
    %834 = math.tanh %832 : vector<2x32xf32>
    %835 = arith.mulf %833, %834 : vector<2x32xf32>
    %836 = vector.extract_strided_slice %835 {offsets = [0, 0], sizes = [2, 16], strides = [1, 1]} : vector<2x32xf32> to vector<2x16xf32>
    %c12_330 = arith.constant 12 : index
    %c0_331 = arith.constant 0 : index
    %837 = vector.load %arg8[%c12_330, %c0_331] : memref<16x32xf32, #tpu.memory_space<vmem>>, vector<2x16xf32>
    tpu.vector_store %arg8[%c12_330, %c0_331], %836 {strides = array<i32>} : memref<16x32xf32, #tpu.memory_space<vmem>>, vector<2x16xf32>,
    %838 = vector.extract_strided_slice %835 {offsets = [0, 16], sizes = [2, 16], strides = [1, 1]} : vector<2x32xf32> to vector<2x16xf32>
    %c2_332 = arith.constant 2 : index
    %c16_333 = arith.constant 16 : index
    %839 = vector.load %arg8[%c2_332, %c16_333] : memref<16x32xf32, #tpu.memory_space<vmem>>, vector<2x16xf32>
    tpu.vector_store %arg8[%c2_332, %c16_333], %838 {strides = array<i32>} : memref<16x32xf32, #tpu.memory_space<vmem>>, vector<2x16xf32>,
    %840 = vector.extract_strided_slice %683 {offsets = [14, 0], sizes = [2, 128], strides = [1, 1]} : vector<16x128xf32> to vector<2x128xf32>
    %cst_334 = arith.constant dense<0.000000e+00> : vector<2x128xf32>
    %841 = tpu.matmul %835, %670, %cst_334 {dimension_numbers = #tpu.dot_dimension_numbers<[1], [0], [0], [1], [0, 0, 1, 1], [], []>} : vector<2x32xf32>, vector<32x128xf32>, vector<2x128xf32> -> vector<2x128xf32>
    %842 = arith.addf %840, %841 : vector<2x128xf32>
    %843 = arith.negf %842 : vector<2x128xf32>
    %844 = math.exp %843 : vector<2x128xf32>
    %cst_335 = arith.constant 1.000000e+00 : f32
    %845 = vector.broadcast %cst_335 : f32 to vector<2x128xf32>
    %846 = arith.addf %845, %844 : vector<2x128xf32>
    %847 = arith.divf %845, %846 : vector<2x128xf32>
    %848 = math.tanh %842 : vector<2x128xf32>
    %849 = vector.extract_strided_slice %847 {offsets = [0, 32], sizes = [2, 32], strides = [1, 1]} : vector<2x128xf32> to vector<2x32xf32>
    %850 = arith.mulf %849, %832 : vector<2x32xf32>
    %851 = vector.extract_strided_slice %847 {offsets = [0, 0], sizes = [2, 32], strides = [1, 1]} : vector<2x128xf32> to vector<2x32xf32>
    %852 = vector.extract_strided_slice %848 {offsets = [0, 64], sizes = [2, 32], strides = [1, 1]} : vector<2x128xf32> to vector<2x32xf32>
    %853 = arith.mulf %851, %852 : vector<2x32xf32>
    %854 = arith.addf %850, %853 : vector<2x32xf32>
    %855 = vector.extract_strided_slice %847 {offsets = [0, 96], sizes = [2, 32], strides = [1, 1]} : vector<2x128xf32> to vector<2x32xf32>
    %856 = math.tanh %854 : vector<2x32xf32>
    %857 = arith.mulf %855, %856 : vector<2x32xf32>
    %858 = vector.extract_strided_slice %857 {offsets = [0, 0], sizes = [2, 16], strides = [1, 1]} : vector<2x32xf32> to vector<2x16xf32>
    %c14_336 = arith.constant 14 : index
    %c0_337 = arith.constant 0 : index
    %859 = vector.load %arg8[%c14_336, %c0_337] : memref<16x32xf32, #tpu.memory_space<vmem>>, vector<2x16xf32>
    tpu.vector_store %arg8[%c14_336, %c0_337], %858 {strides = array<i32>} : memref<16x32xf32, #tpu.memory_space<vmem>>, vector<2x16xf32>,
    %860 = vector.extract_strided_slice %857 {offsets = [0, 16], sizes = [2, 16], strides = [1, 1]} : vector<2x32xf32> to vector<2x16xf32>
    %c0_338 = arith.constant 0 : index
    %c16_339 = arith.constant 16 : index
    %861 = vector.load %arg8[%c0_338, %c16_339] : memref<16x32xf32, #tpu.memory_space<vmem>>, vector<2x16xf32>
    tpu.vector_store %arg8[%c0_338, %c16_339], %860 {strides = array<i32>} : memref<16x32xf32, #tpu.memory_space<vmem>>, vector<2x16xf32>,
    %c0_340 = arith.constant 0 : index
    %c0_341 = arith.constant 0 : index
    %862 = vector.load %arg8[%c0_340, %c0_341] : memref<16x32xf32, #tpu.memory_space<vmem>>, vector<16x32xf32>
    %c0_342 = arith.constant 0 : index
    %c0_343 = arith.constant 0 : index
    %863 = vector.load %arg5[%c0_342, %c0_343] : memref<32x128xf32, #tpu.memory_space<vmem>>, vector<32x128xf32>
    %cst_344 = arith.constant dense<0.000000e+00> : vector<16x128xf32>
    %864 = tpu.matmul %862, %863, %cst_344 {dimension_numbers = #tpu.dot_dimension_numbers<[1], [0], [0], [1], [0, 0, 1, 1], [], []>} : vector<16x32xf32>, vector<32x128xf32>, vector<16x128xf32> -> vector<16x128xf32>
    %c0_345 = arith.constant 0 : index
    %c0_346 = arith.constant 0 : index
    %865 = vector.load %arg6[%c0_345, %c0_346] : memref<1x128xf32, #tpu.memory_space<vmem>>, vector<1x128xf32>
    %866 = vector.broadcast %865 : vector<1x128xf32> to vector<16x128xf32>
    %867 = arith.addf %864, %866 : vector<16x128xf32>
    %c0_347 = arith.constant 0 : index
    %c0_348 = arith.constant 0 : index
    %868 = vector.load %arg7[%c0_347, %c0_348] : memref<16x128xf32, #tpu.memory_space<vmem>>, vector<16x128xf32>
    tpu.vector_store %arg7[%c0_347, %c0_348], %867 {strides = array<i32>} : memref<16x128xf32, #tpu.memory_space<vmem>>, vector<16x128xf32>,
    return
  }
}

</mosaic_0001>

<llo_original>
// kernel: tpu_custom_call.1
$region0: #{tpu_custom_call.1}
  #allocation0 [shape = 'u32[]', space=smem, size = 0x4, offset = 0x4, fixed_abs, tag = 'smem constant byte address 0x4 - core index']
  #allocation1 [shape = 'u32[144,128]{1,0:T(1,128)}', space=vmem, size = 0x12000, scoped, tag = 'internal scratch']
  #allocation2 [shape = 'f32[16,32]{1,0:T(8,128)}', space=vmem, size = 0x2000, scoped, tag = 'scratch operand']
  #allocation3 [shape = 'f32[16,32]{1,0:T(8,128)}', space=vmem, size = 0x2000, scoped, tag = 'scratch operand']
  %s0 = inlined_call_operand.hbm [shape: f32[16,10], index: 0, kind: input, shape index: {}]
  %s1 = inlined_call_operand.hbm [shape: f32[10,128], index: 1, kind: input, shape index: {}]
  %s2 = inlined_call_operand.hbm [shape: f32[3,64,128], index: 2, kind: input, shape index: {}]
  %s3 = inlined_call_operand.hbm [shape: f32[4,32,128], index: 3, kind: input, shape index: {}]
  %s4 = inlined_call_operand.vmem [shape: f32[4,1,128], index: 4, kind: input, shape index: {}]
  %s5 = inlined_call_operand.hbm [shape: f32[32,128], index: 5, kind: input, shape index: {}]
  %s6 = inlined_call_operand.vmem [shape: f32[1,128], index: 6, kind: input, shape index: {}]
  %s7 = inlined_call_operand.hbm [shape: f32[16,128], index: 7, kind: output, shape index: {}]
  %s8 = sld [smem:[#allocation0]]
  $region58: #{tpu_custom_call.1} parent=0
    _
  %s10 = ssub.s32 1, %s8
  %s11 = scalar_select 0, %s10, %s8
  $region1: #{tpu_custom_call.1} parent=0
    #allocation4 [shape = 'u8[8192]{0}', space=vmem, size = 0x2000, scoped, tag = 'input window, operand 0, single buffered']
    #allocation5 [shape = 's32[1]{0}', space=sflag, size = 0x4, scoped, tag = 'scoped memory for tpu_custom_call.1']
    #allocation6 [shape = 's32[1]{0}', space=sflag, size = 0x4, scoped, tag = 'scoped memory for tpu_custom_call.1']
    #allocation7 [shape = 'u8[8192]{0}', space=vmem, size = 0x2000, scoped, tag = 'input window, operand 1, single buffered']
    #allocation8 [shape = 's32[1]{0}', space=sflag, size = 0x4, scoped, tag = 'scoped memory for tpu_custom_call.1']
    #allocation9 [shape = 'u8[98304]{0}', space=vmem, size = 0x18000, scoped, tag = 'input window, operand 2, single buffered']
    #allocation10 [shape = 'u8[65536]{0}', space=vmem, size = 0x10000, scoped, tag = 'input window, operand 3, single buffered']
    #allocation11 [shape = 's32[1]{0}', space=sflag, size = 0x4, scoped, tag = 'scoped memory for tpu_custom_call.1']
    #allocation12 [shape = 'u8[16384]{0}', space=vmem, size = 0x4000, scoped, tag = 'input window, operand 5, single buffered']
    #allocation13 [shape = 'u8[8192]{0}', space=vmem, size = 0x2000, scoped, tag = 'output window, operand 0, single buffered']
    %12 = vsyncpa [#allocation5], 0
    %13 = vsyncpa [#allocation8], 0
    %14 = vsyncpa [#allocation11], 0
    %15 = vsyncpa [#allocation6], 0
    // Predicated region
    $region2: #{tpu_custom_call.1} parent=1 // pred_check
      _
    $region3: #{tpu_custom_call.1} parent=1 // pred_check_branch
      %17 = sbr.rel (0) target = $region5
    $region4: #{tpu_custom_call.1} parent=1 // pred_region
      %s19 = ssub.s32 256, 256
      %20 = vsyncadd [#allocation5], %s19
      %s21 = sshll.u32 [#allocation4], 4
      %s22 = int_to_ptr.vmem [resolvable:$true] %s21
      %27 = dma.hbm_to_vmem [thread:$0]  %s0, 256, %s22, [#allocation5], 128, 128, 8
    $region5: #{tpu_custom_call.1} parent=1 // pred_fallthru
      _
    // Predicated region
    $region6: #{tpu_custom_call.1} parent=1 // pred_check
      _
    $region7: #{tpu_custom_call.1} parent=1 // pred_check_branch
      %29 = sbr.rel (0) target = $region9
    $region8: #{tpu_custom_call.1} parent=1 // pred_region
      %s31 = ssub.s32 256, 256
      %32 = vsyncadd [#allocation8], %s31
      %s33 = sshll.u32 [#allocation7], 4
      %s34 = int_to_ptr.vmem [resolvable:$true] %s33
      %39 = dma.hbm_to_vmem [thread:$0]  %s1, 256, %s34, [#allocation8], 128, 128, 8
    $region9: #{tpu_custom_call.1} parent=1 // pred_fallthru
      _
    // Predicated region
    $region10: #{tpu_custom_call.1} parent=1 // pred_check
      _
    $region11: #{tpu_custom_call.1} parent=1 // pred_check_branch
      %41 = sbr.rel (0) target = $region13
    $region12: #{tpu_custom_call.1} parent=1 // pred_region
      %s43 = ssub.s32 3072, 3072
      %44 = vsyncadd [#allocation8], %s43
      %s45 = sshll.u32 [#allocation9], 4
      %s46 = int_to_ptr.vmem [resolvable:$true] %s45
      %51 = dma.hbm_to_vmem [thread:$0]  %s2, 3072, %s46, [#allocation8], 128, 128, 8
    $region13: #{tpu_custom_call.1} parent=1 // pred_fallthru
      _
    // Predicated region
    $region14: #{tpu_custom_call.1} parent=1 // pred_check
      _
    $region15: #{tpu_custom_call.1} parent=1 // pred_check_branch
      %53 = sbr.rel (0) target = $region17
    $region16: #{tpu_custom_call.1} parent=1 // pred_region
      %s55 = ssub.s32 2048, 2048
      %56 = vsyncadd [#allocation11], %s55
      %s57 = sshll.u32 [#allocation10], 4
      %s58 = int_to_ptr.vmem [resolvable:$true] %s57
      %63 = dma.hbm_to_vmem [thread:$0]  %s3, 2048, %s58, [#allocation11], 128, 128, 8
    $region17: #{tpu_custom_call.1} parent=1 // pred_fallthru
      _
    // Predicated region
    $region18: #{tpu_custom_call.1} parent=1 // pred_check
      _
    $region19: #{tpu_custom_call.1} parent=1 // pred_check_branch
      %65 = sbr.rel (0) target = $region21
    $region20: #{tpu_custom_call.1} parent=1 // pred_region
      _
    $region21: #{tpu_custom_call.1} parent=1 // pred_fallthru
      _
    // Predicated region
    $region22: #{tpu_custom_call.1} parent=1 // pred_check
      _
    $region23: #{tpu_custom_call.1} parent=1 // pred_check_branch
      %67 = sbr.rel (0) target = $region25
    $region24: #{tpu_custom_call.1} parent=1 // pred_region
      %s69 = ssub.s32 512, 512
      %70 = vsyncadd [#allocation11], %s69
      %s71 = sshll.u32 [#allocation12], 4
      %s72 = int_to_ptr.vmem [resolvable:$true] %s71
      %77 = dma.hbm_to_vmem [thread:$0]  %s5, 512, %s72, [#allocation11], 128, 128, 8
    $region25: #{tpu_custom_call.1} parent=1 // pred_fallthru
      _
    // Predicated region
    $region26: #{tpu_custom_call.1} parent=1 // pred_check
      _
    $region27: #{tpu_custom_call.1} parent=1 // pred_check_branch
      %79 = sbr.rel (0) target = $region29
    $region28: #{tpu_custom_call.1} parent=1 // pred_region
      _
    $region29: #{tpu_custom_call.1} parent=1 // pred_fallthru
      _
    // Predicated region
    $region30: #{tpu_custom_call.1} parent=1 // pred_check
      _
    $region31: #{tpu_custom_call.1} parent=1 // pred_check_branch
      %81 = sbr.rel (0) target = $region33
    $region32: #{tpu_custom_call.1} parent=1 // pred_region
      %82 = dma.done [#allocation5], 256
    $region33: #{tpu_custom_call.1} parent=1 // pred_fallthru
      _
    // Predicated region
    $region34: #{tpu_custom_call.1} parent=1 // pred_check
      _
    $region35: #{tpu_custom_call.1} parent=1 // pred_check_branch
      %84 = sbr.rel (0) target = $region37
    $region36: #{tpu_custom_call.1} parent=1 // pred_region
      %85 = dma.done [#allocation8], 256
    $region37: #{tpu_custom_call.1} parent=1 // pred_fallthru
      _
    // Predicated region
    $region38: #{tpu_custom_call.1} parent=1 // pred_check
      _
    $region39: #{tpu_custom_call.1} parent=1 // pred_check_branch
      %87 = sbr.rel (0) target = $region41
    $region40: #{tpu_custom_call.1} parent=1 // pred_region
      %88 = dma.done [#allocation8], 3072
    $region41: #{tpu_custom_call.1} parent=1 // pred_fallthru
      _
    // Predicated region
    $region42: #{tpu_custom_call.1} parent=1 // pred_check
      _
    $region43: #{tpu_custom_call.1} parent=1 // pred_check_branch
      %90 = sbr.rel (0) target = $region45
    $region44: #{tpu_custom_call.1} parent=1 // pred_region
      %91 = dma.done [#allocation11], 2048
    $region45: #{tpu_custom_call.1} parent=1 // pred_fallthru
      _
    // Predicated region
    $region46: #{tpu_custom_call.1} parent=1 // pred_check
      _
    $region47: #{tpu_custom_call.1} parent=1 // pred_check_branch
      %93 = sbr.rel (0) target = $region49
    $region48: #{tpu_custom_call.1} parent=1 // pred_region
      %94 = dma.done [#allocation11], 512
    $region49: #{tpu_custom_call.1} parent=1 // pred_fallthru
      _
    %v95 = vld [vmem:[#allocation10] sm:$0xff]
    %v96 = vld [vmem:[#allocation10 + $0x8] sm:$0xff]
    %v97 = vld [vmem:[#allocation10 + $0x10] sm:$0xff]
    %v98 = vld [vmem:[#allocation10 + $0x18] sm:$0xff]
    %v99 = vld [vmem:[%s4] sm:$0x1]
    %v100 = vld [vmem:[#allocation4] sm:$0xff]
    %v101 = vld [vmem:[#allocation4 + $0x8] sm:$0xff]
    %v102 = vld [vmem:[#allocation7] sm:$0xff]
    %v103 = vld [vmem:[#allocation7 + $0x8] sm:$0x3]
    %v105 = vlaneseq
    %v106 = vshrl.u32 %v105, 7
    %v107 = vsub.s32 0, %v106
    %v108 = vrot.slane %v99, %v107
    %vm110 = vcmask 80896
    %v112 = vsel %vm110, %v100, 0
    %v115 = vsel %vm110, %v101, 0
    %vm117 = vcmask 1041408
    %v119 = vsel %vm117, %v103, 0
    %121 = vmatprep.subr.mxu0 0.0
    %122 = vmatpush1.msra.mxu0 %v102
    %123 = vmatprep.subr.mxu0 0.0
    %124 = vmatpush1.msra.mxu0 %v119
    %125 = vmatprep.subr.mxu0 0.0
    %126 = vmatpush1.msra.mxu0 0.0
    %127 = vmatprep.subr.mxu0 0.0
    %128 = vmatpush1.msra.mxu0 0.0
    %129 = vmatprep.subr.mxu0 0.0
    %130 = vmatpush1.msra.mxu0 0.0
    %131 = vmatprep.subr.mxu0 0.0
    %132 = vmatpush1.msra.mxu0 0.0
    %133 = vmatprep.subr.mxu0 0.0
    %134 = vmatpush1.msra.mxu0 0.0
    %135 = vmatprep.subr.mxu0 0.0
    %136 = vmatpush1.msra.mxu0 0.0
    %137 = vmatprep.subr.mxu0 0.0
    %138 = vmatpush1.msra.mxu0 0.0
    %139 = vmatprep.subr.mxu0 0.0
    %140 = vmatpush1.msra.mxu0 0.0
    %141 = vmatprep.subr.mxu0 0.0
    %142 = vmatpush1.msra.mxu0 0.0
    %143 = vmatprep.subr.mxu0 0.0
    %144 = vmatpush1.msra.mxu0 0.0
    %145 = vmatprep.subr.mxu0 0.0
    %146 = vmatpush1.msra.mxu0 0.0
    %147 = vmatprep.subr.mxu0 0.0
    %148 = vmatpush1.msra.mxu0 0.0
    %149 = vmatprep.subr.mxu0 0.0
    %150 = vmatpush1.msra.mxu0 0.0
    %151 = vmatprep.subr.mxu0 0.0
    %152 = vmatpush1.msra.mxu0 0.0
    %153 = vmatprep.subr.mxu0 0.0
    %154 = vmatpush1.msra.mxu0 0.0
    %155 = vmatprep.subr.mxu0 0.0
    %156 = vmatpush1.msra.mxu0 0.0
    %157 = vmatprep.subr.mxu0 0.0
    %158 = vmatpush1.msra.mxu0 0.0
    %159 = vmatprep.subr.mxu0 0.0
    %160 = vmatpush1.msra.mxu0 0.0
    %161 = vmatprep.subr.mxu0 0.0
    %162 = vmatpush1.msra.mxu0 0.0
    %163 = vmatprep.subr.mxu0 0.0
    %164 = vmatpush1.msra.mxu0 0.0
    %165 = vmatprep.subr.mxu0 0.0
    %166 = vmatpush1.msra.mxu0 0.0
    %167 = vmatprep.subr.mxu0 0.0
    %168 = vmatpush1.msra.mxu0 0.0
    %169 = vmatprep.subr.mxu0 0.0
    %170 = vmatpush1.msra.mxu0 0.0
    %171 = vmatprep.subr.mxu0 0.0
    %172 = vmatpush1.msra.mxu0 0.0
    %173 = vmatprep.subr.mxu0 0.0
    %174 = vmatpush1.msra.mxu0 0.0
    %175 = vmatprep.subr.mxu0 0.0
    %176 = vmatpush1.msra.mxu0 0.0
    %177 = vmatprep.subr.mxu0 0.0
    %178 = vmatpush1.msra.mxu0 0.0
    %179 = vmatprep.subr.mxu0 0.0
    %180 = vmatpush1.msra.mxu0 0.0
    %181 = vmatprep.subr.mxu0 0.0
    %182 = vmatpush1.msra.mxu0 0.0
    %183 = vmatprep.subr.mxu0 0.0
    %184 = vmatpush1.msra.mxu0 0.0
    %185 = vmatprep.mubr.f32.mxu0 0.0
    %186 = vmatmul.mubr.f32.gmra.mrb[0].mxu0 %v112
    %v187 = vpop.f32.mrb[0].mxu0
    %v188 = vadd.f32 %v108, %v187
    %v189 = vpop.f32.mrb[0].mxu0
    %190 = vmatprep.mubr.f32.mxu0 0.0
    %191 = vmatmul.mubr.f32.gmra.mrb[0].mxu0 %v115
    %v192 = vpop.f32.mrb[0].mxu0
    %v193 = vadd.f32 %v108, %v192
    %v194 = vpop.f32.mrb[0].mxu0
    %195 = vdwg.mxu0
    %vm196 = vcmask 261120
    %v198 = vsel %vm196, 0.0, 0
    %200 = vmatprep.subr.mxu0 0.0
    %201 = vmatpush1.msra.mxu0 %v95
    %202 = vmatprep.subr.mxu0 0.0
    %203 = vmatpush1.msra.mxu0 %v96
    %204 = vmatprep.subr.mxu0 0.0
    %205 = vmatpush1.msra.mxu0 %v97
    %206 = vmatprep.subr.mxu0 0.0
    %207 = vmatpush1.msra.mxu0 %v98
    %208 = vmatprep.subr.mxu0 0.0
    %209 = vmatpush1.msra.mxu0 0.0
    %210 = vmatprep.subr.mxu0 0.0
    %211 = vmatpush1.msra.mxu0 0.0
    %212 = vmatprep.subr.mxu0 0.0
    %213 = vmatpush1.msra.mxu0 0.0
    %214 = vmatprep.subr.mxu0 0.0
    %215 = vmatpush1.msra.mxu0 0.0
    %216 = vmatprep.subr.mxu0 0.0
    %217 = vmatpush1.msra.mxu0 0.0
    %218 = vmatprep.subr.mxu0 0.0
    %219 = vmatpush1.msra.mxu0 0.0
    %220 = vmatprep.subr.mxu0 0.0
    %221 = vmatpush1.msra.mxu0 0.0
    %222 = vmatprep.subr.mxu0 0.0
    %223 = vmatpush1.msra.mxu0 0.0
    %224 = vmatprep.subr.mxu0 0.0
    %225 = vmatpush1.msra.mxu0 0.0
    %226 = vmatprep.subr.mxu0 0.0
    %227 = vmatpush1.msra.mxu0 0.0
    %228 = vmatprep.subr.mxu0 0.0
    %229 = vmatpush1.msra.mxu0 0.0
    %230 = vmatprep.subr.mxu0 0.0
    %231 = vmatpush1.msra.mxu0 0.0
    %232 = vmatprep.subr.mxu0 0.0
    %233 = vmatpush1.msra.mxu0 0.0
    %234 = vmatprep.subr.mxu0 0.0
    %235 = vmatpush1.msra.mxu0 0.0
    %236 = vmatprep.subr.mxu0 0.0
    %237 = vmatpush1.msra.mxu0 0.0
    %238 = vmatprep.subr.mxu0 0.0
    %239 = vmatpush1.msra.mxu0 0.0
    %240 = vmatprep.subr.mxu0 0.0
    %241 = vmatpush1.msra.mxu0 0.0
    %242 = vmatprep.subr.mxu0 0.0
    %243 = vmatpush1.msra.mxu0 0.0
    %244 = vmatprep.subr.mxu0 0.0
    %245 = vmatpush1.msra.mxu0 0.0
    %246 = vmatprep.subr.mxu0 0.0
    %247 = vmatpush1.msra.mxu0 0.0
    %248 = vmatprep.subr.mxu0 0.0
    %249 = vmatpush1.msra.mxu0 0.0
    %250 = vmatprep.subr.mxu0 0.0
    %251 = vmatpush1.msra.mxu0 0.0
    %252 = vmatprep.subr.mxu0 0.0
    %253 = vmatpush1.msra.mxu0 0.0
    %254 = vmatprep.subr.mxu0 0.0
    %255 = vmatpush1.msra.mxu0 0.0
    %256 = vmatprep.subr.mxu0 0.0
    %257 = vmatpush1.msra.mxu0 0.0
    %258 = vmatprep.subr.mxu0 0.0
    %259 = vmatpush1.msra.mxu0 0.0
    %260 = vmatprep.subr.mxu0 0.0
    %261 = vmatpush1.msra.mxu0 0.0
    %262 = vmatprep.subr.mxu0 0.0
    %263 = vmatpush1.msra.mxu0 0.0
    %264 = vmatprep.mubr.f32.mxu0 0.0
    %265 = vmatmul.mubr.f32.gmra.mrb[0].mxu0 %v198
    %v266 = vpop.f32.mrb[0].mxu0
    %v267 = vadd.f32 0.0, %v266
    %v268 = vpop.f32.mrb[0].mxu0
    %269 = vdwg.mxu0
    %v270 = vadd.f32 %v188, %v267
    %v271 = vxor.u32 %v270, 2147483648
    %v272 = vmul.f32 %v271, 1.442695
    %v273 = vpow.pop %v272
    %v274 = vadd.f32 %v273, 1.0
    %v275 = vrcp.pop %v274
    %v276 = vmul.f32 1.0, %v275
    %v277 = vtanh.pop %v270
    %v278 = vmul.f32 %v276, 0.0
    %280 = vrot.lane.b32.xlu0 %v277, 64
    %v281 = vpop.permute.xlu0 %280
    %v283 = vmul.f32 %v276, %v281
    %285 = vrot.lane.b32.xlu0 %v283, 32
    %v286 = vpop.permute.xlu0 %285
    %v288 = vadd.f32 %v278, %v286
    %v289 = vtanh.pop %v288
    %291 = vrot.lane.b32.xlu0 %v289, 64
    %v292 = vpop.permute.xlu0 %291
    %v294 = vmul.f32 %v276, %v292
    %296 = vrot.lane.b32.xlu0 %v294, 32
    %v297 = vpop.permute.xlu0 %296
    %vm299 = vcmask 123904
    %300 = vst.msk [vmem:[#allocation2] sm:$0x3] %vm299, %v297
    %vm301 = vcmask 255104
    %302 = vst.msk [vmem:[#allocation2 + $0xe] sm:$0x3] %vm301, %v297
    %303 = vst.msk [vmem:[#allocation3 + $0xe] sm:$0x3] %vm299, %v297
    %304 = vst.msk [vmem:[#allocation3] sm:$0x3] %vm301, %v297
    %v305 = vsel %vm196, %v297, 0
    %307 = vmatprep.subr.mxu0 0.0
    %308 = vmatpush1.msra.mxu0 %v95
    %309 = vmatprep.subr.mxu0 0.0
    %310 = vmatpush1.msra.mxu0 %v96
    %311 = vmatprep.subr.mxu0 0.0
    %312 = vmatpush1.msra.mxu0 %v97
    %313 = vmatprep.subr.mxu0 0.0
    %314 = vmatpush1.msra.mxu0 %v98
    %315 = vmatprep.subr.mxu0 0.0
    %316 = vmatpush1.msra.mxu0 0.0
    %317 = vmatprep.subr.mxu0 0.0
    %318 = vmatpush1.msra.mxu0 0.0
    %319 = vmatprep.subr.mxu0 0.0
    %320 = vmatpush1.msra.mxu0 0.0
    %321 = vmatprep.subr.mxu0 0.0
    %322 = vmatpush1.msra.mxu0 0.0
    %323 = vmatprep.subr.mxu0 0.0
    %324 = vmatpush1.msra.mxu0 0.0
    %325 = vmatprep.subr.mxu0 0.0
    %326 = vmatpush1.msra.mxu0 0.0
    %327 = vmatprep.subr.mxu0 0.0
    %328 = vmatpush1.msra.mxu0 0.0
    %329 = vmatprep.subr.mxu0 0.0
    %330 = vmatpush1.msra.mxu0 0.0
    %331 = vmatprep.subr.mxu0 0.0
    %332 = vmatpush1.msra.mxu0 0.0
    %333 = vmatprep.subr.mxu0 0.0
    %334 = vmatpush1.msra.mxu0 0.0
    %335 = vmatprep.subr.mxu0 0.0
    %336 = vmatpush1.msra.mxu0 0.0
    %337 = vmatprep.subr.mxu0 0.0
    %338 = vmatpush1.msra.mxu0 0.0
    %339 = vmatprep.subr.mxu0 0.0
    %340 = vmatpush1.msra.mxu0 0.0
    %341 = vmatprep.subr.mxu0 0.0
    %342 = vmatpush1.msra.mxu0 0.0
    %343 = vmatprep.subr.mxu0 0.0
    %344 = vmatpush1.msra.mxu0 0.0
    %345 = vmatprep.subr.mxu0 0.0
    %346 = vmatpush1.msra.mxu0 0.0
    %347 = vmatprep.subr.mxu0 0.0
    %348 = vmatpush1.msra.mxu0 0.0
    %349 = vmatprep.subr.mxu0 0.0
    %350 = vmatpush1.msra.mxu0 0.0
    %351 = vmatprep.subr.mxu0 0.0
    %352 = vmatpush1.msra.mxu0 0.0
    %353 = vmatprep.subr.mxu0 0.0
    %354 = vmatpush1.msra.mxu0 0.0
    %355 = vmatprep.subr.mxu0 0.0
    %356 = vmatpush1.msra.mxu0 0.0
    %357 = vmatprep.subr.mxu0 0.0
    %358 = vmatpush1.msra.mxu0 0.0
    %359 = vmatprep.subr.mxu0 0.0
    %360 = vmatpush1.msra.mxu0 0.0
    %361 = vmatprep.subr.mxu0 0.0
    %362 = vmatpush1.msra.mxu0 0.0
    %363 = vmatprep.subr.mxu0 0.0
    %364 = vmatpush1.msra.mxu0 0.0
    %365 = vmatprep.subr.mxu0 0.0
    %366 = vmatpush1.msra.mxu0 0.0
    %367 = vmatprep.subr.mxu0 0.0
    %368 = vmatpush1.msra.mxu0 0.0
    %369 = vmatprep.subr.mxu0 0.0
    %370 = vmatpush1.msra.mxu0 0.0
    %371 = vmatprep.mubr.f32.mxu0 0.0
    %372 = vmatmul.mubr.f32.gmra.mrb[0].mxu0 %v305
    %v373 = vpop.f32.mrb[0].mxu0
    %v374 = vadd.f32 0.0, %v373
    %v375 = vpop.f32.mrb[0].mxu0
    %376 = vdwg.mxu0
    %v378 = vrot.slane %v374, 6
    %v380 = vadd.f32 %v188, %v378
    %v381 = vxor.u32 %v380, 2147483648
    %v382 = vmul.f32 %v381, 1.442695
    %v383 = vpow.pop %v382
    %v384 = vadd.f32 %v383, 1.0
    %v385 = vrcp.pop %v384
    %v386 = vmul.f32 1.0, %v385
    %v387 = vtanh.pop %v380
    %v389 = vrot.slane %v288, 6
    %v391 = vmul.f32 %v386, %v389
    %393 = vrot.lane.b32.xlu0 %v387, 64
    %v394 = vpop.permute.xlu0 %393
    %v396 = vmul.f32 %v386, %v394
    %398 = vrot.lane.b32.xlu0 %v396, 32
    %v399 = vpop.permute.xlu0 %398
    %v401 = vadd.f32 %v391, %v399
    %v402 = vtanh.pop %v401
    %404 = vrot.lane.b32.xlu0 %v402, 64
    %v405 = vpop.permute.xlu0 %404
    %v407 = vmul.f32 %v386, %v405
    %409 = vrot.lane.b32.xlu0 %v407, 32
    %v410 = vpop.permute.xlu0 %409
    %vm412 = vcmask 125954
    %413 = vst.msk [vmem:[#allocation2] sm:$0xc] %vm412, %v410
    %vm414 = vcmask 257154
    %415 = vst.msk [vmem:[#allocation2 + $0xa] sm:$0xc] %vm414, %v410
    %416 = vst.msk [vmem:[#allocation3 + $0xa] sm:$0xc] %vm412, %v410
    %417 = vst.msk [vmem:[#allocation3] sm:$0xc] %vm414, %v410
    %v418 = vrot.slane %v407, 2
    %419 = vrot.lane.b32.xlu0 %v418, 32
    %v420 = vpop.permute.xlu0 %419
    %v421 = vsel %vm196, %v420, 0
    %423 = vmatprep.subr.mxu0 0.0
    %424 = vmatpush1.msra.mxu0 %v95
    %425 = vmatprep.subr.mxu0 0.0
    %426 = vmatpush1.msra.mxu0 %v96
    %427 = vmatprep.subr.mxu0 0.0
    %428 = vmatpush1.msra.mxu0 %v97
    %429 = vmatprep.subr.mxu0 0.0
    %430 = vmatpush1.msra.mxu0 %v98
    %431 = vmatprep.subr.mxu0 0.0
    %432 = vmatpush1.msra.mxu0 0.0
    %433 = vmatprep.subr.mxu0 0.0
    %434 = vmatpush1.msra.mxu0 0.0
    %435 = vmatprep.subr.mxu0 0.0
    %436 = vmatpush1.msra.mxu0 0.0
    %437 = vmatprep.subr.mxu0 0.0
    %438 = vmatpush1.msra.mxu0 0.0
    %439 = vmatprep.subr.mxu0 0.0
    %440 = vmatpush1.msra.mxu0 0.0
    %441 = vmatprep.subr.mxu0 0.0
    %442 = vmatpush1.msra.mxu0 0.0
    %443 = vmatprep.subr.mxu0 0.0
    %444 = vmatpush1.msra.mxu0 0.0
    %445 = vmatprep.subr.mxu0 0.0
    %446 = vmatpush1.msra.mxu0 0.0
    %447 = vmatprep.subr.mxu0 0.0
    %448 = vmatpush1.msra.mxu0 0.0
    %449 = vmatprep.subr.mxu0 0.0
    %450 = vmatpush1.msra.mxu0 0.0
    %451 = vmatprep.subr.mxu0 0.0
    %452 = vmatpush1.msra.mxu0 0.0
    %453 = vmatprep.subr.mxu0 0.0
    %454 = vmatpush1.msra.mxu0 0.0
    %455 = vmatprep.subr.mxu0 0.0
    %456 = vmatpush1.msra.mxu0 0.0
    %457 = vmatprep.subr.mxu0 0.0
    %458 = vmatpush1.msra.mxu0 0.0
    %459 = vmatprep.subr.mxu0 0.0
    %460 = vmatpush1.msra.mxu0 0.0
    %461 = vmatprep.subr.mxu0 0.0
    %462 = vmatpush1.msra.mxu0 0.0
    %463 = vmatprep.subr.mxu0 0.0
    %464 = vmatpush1.msra.mxu0 0.0
    %465 = vmatprep.subr.mxu0 0.0
    %466 = vmatpush1.msra.mxu0 0.0
    %467 = vmatprep.subr.mxu0 0.0
    %468 = vmatpush1.msra.mxu0 0.0
    %469 = vmatprep.subr.mxu0 0.0
    %470 = vmatpush1.msra.mxu0 0.0
    %471 = vmatprep.subr.mxu0 0.0
    %472 = vmatpush1.msra.mxu0 0.0
    %473 = vmatprep.subr.mxu0 0.0
    %474 = vmatpush1.msra.mxu0 0.0
    %475 = vmatprep.subr.mxu0 0.0
    %476 = vmatpush1.msra.mxu0 0.0
    %477 = vmatprep.subr.mxu0 0.0
    %478 = vmatpush1.msra.mxu0 0.0
    %479 = vmatprep.subr.mxu0 0.0
    %480 = vmatpush1.msra.mxu0 0.0
    %481 = vmatprep.subr.mxu0 0.0
    %482 = vmatpush1.msra.mxu0 0.0
    %483 = vmatprep.subr.mxu0 0.0
    %484 = vmatpush1.msra.mxu0 0.0
    %485 = vmatprep.subr.mxu0 0.0
    %486 = vmatpush1.msra.mxu0 0.0
    %487 = vmatprep.mubr.f32.mxu0 0.0
    %488 = vmatmul.mubr.f32.gmra.mrb[0].mxu0 %v421
    %v489 = vpop.f32.mrb[0].mxu0
    %v490 = vadd.f32 0.0, %v489
    %v491 = vpop.f32.mrb[0].mxu0
    %492 = vdwg.mxu0
    %v494 = vrot.slane %v490, 4
    %v496 = vadd.f32 %v188, %v494
    %v497 = vxor.u32 %v496, 2147483648
    %v498 = vmul.f32 %v497, 1.442695
    %v499 = vpow.pop %v498
    %v500 = vadd.f32 %v499, 1.0
    %v501 = vrcp.pop %v500
    %v502 = vmul.f32 1.0, %v501
    %v503 = vtanh.pop %v496
    %v505 = vrot.slane %v401, 6
    %v507 = vmul.f32 %v502, %v505
    %509 = vrot.lane.b32.xlu0 %v503, 64
    %v510 = vpop.permute.xlu0 %509
    %v512 = vmul.f32 %v502, %v510
    %514 = vrot.lane.b32.xlu0 %v512, 32
    %v515 = vpop.permute.xlu0 %514
    %v517 = vadd.f32 %v507, %v515
    %v518 = vtanh.pop %v517
    %520 = vrot.lane.b32.xlu0 %v518, 64
    %v521 = vpop.permute.xlu0 %520
    %v523 = vmul.f32 %v502, %v521
    %525 = vrot.lane.b32.xlu0 %v523, 32
    %v526 = vpop.permute.xlu0 %525
    %vm528 = vcmask 128004
    %529 = vst.msk [vmem:[#allocation2] sm:$0x30] %vm528, %v526
    %vm530 = vcmask 259204
    %531 = vst.msk [vmem:[#allocation2 + $0x6] sm:$0x30] %vm530, %v526
    %532 = vst.msk [vmem:[#allocation3 + $0x6] sm:$0x30] %vm528, %v526
    %533 = vst.msk [vmem:[#allocation3] sm:$0x30] %vm530, %v526
    %v534 = vrot.slane %v523, 4
    %535 = vrot.lane.b32.xlu0 %v534, 32
    %v536 = vpop.permute.xlu0 %535
    %v537 = vsel %vm196, %v536, 0
    %539 = vmatprep.subr.mxu0 0.0
    %540 = vmatpush1.msra.mxu0 %v95
    %541 = vmatprep.subr.mxu0 0.0
    %542 = vmatpush1.msra.mxu0 %v96
    %543 = vmatprep.subr.mxu0 0.0
    %544 = vmatpush1.msra.mxu0 %v97
    %545 = vmatprep.subr.mxu0 0.0
    %546 = vmatpush1.msra.mxu0 %v98
    %547 = vmatprep.subr.mxu0 0.0
    %548 = vmatpush1.msra.mxu0 0.0
    %549 = vmatprep.subr.mxu0 0.0
    %550 = vmatpush1.msra.mxu0 0.0
    %551 = vmatprep.subr.mxu0 0.0
    %552 = vmatpush1.msra.mxu0 0.0
    %553 = vmatprep.subr.mxu0 0.0
    %554 = vmatpush1.msra.mxu0 0.0
    %555 = vmatprep.subr.mxu0 0.0
    %556 = vmatpush1.msra.mxu0 0.0
    %557 = vmatprep.subr.mxu0 0.0
    %558 = vmatpush1.msra.mxu0 0.0
    %559 = vmatprep.subr.mxu0 0.0
    %560 = vmatpush1.msra.mxu0 0.0
    %561 = vmatprep.subr.mxu0 0.0
    %562 = vmatpush1.msra.mxu0 0.0
    %563 = vmatprep.subr.mxu0 0.0
    %564 = vmatpush1.msra.mxu0 0.0
    %565 = vmatprep.subr.mxu0 0.0
    %566 = vmatpush1.msra.mxu0 0.0
    %567 = vmatprep.subr.mxu0 0.0
    %568 = vmatpush1.msra.mxu0 0.0
    %569 = vmatprep.subr.mxu0 0.0
    %570 = vmatpush1.msra.mxu0 0.0
    %571 = vmatprep.subr.mxu0 0.0
    %572 = vmatpush1.msra.mxu0 0.0
    %573 = vmatprep.subr.mxu0 0.0
    %574 = vmatpush1.msra.mxu0 0.0
    %575 = vmatprep.subr.mxu0 0.0
    %576 = vmatpush1.msra.mxu0 0.0
    %577 = vmatprep.subr.mxu0 0.0
    %578 = vmatpush1.msra.mxu0 0.0
    %579 = vmatprep.subr.mxu0 0.0
    %580 = vmatpush1.msra.mxu0 0.0
    %581 = vmatprep.subr.mxu0 0.0
    %582 = vmatpush1.msra.mxu0 0.0
    %583 = vmatprep.subr.mxu0 0.0
    %584 = vmatpush1.msra.mxu0 0.0
    %585 = vmatprep.subr.mxu0 0.0
    %586 = vmatpush1.msra.mxu0 0.0
    %587 = vmatprep.subr.mxu0 0.0
    %588 = vmatpush1.msra.mxu0 0.0
    %589 = vmatprep.subr.mxu0 0.0
    %590 = vmatpush1.msra.mxu0 0.0
    %591 = vmatprep.subr.mxu0 0.0
    %592 = vmatpush1.msra.mxu0 0.0
    %593 = vmatprep.subr.mxu0 0.0
    %594 = vmatpush1.msra.mxu0 0.0
    %595 = vmatprep.subr.mxu0 0.0
    %596 = vmatpush1.msra.mxu0 0.0
    %597 = vmatprep.subr.mxu0 0.0
    %598 = vmatpush1.msra.mxu0 0.0
    %599 = vmatprep.subr.mxu0 0.0
    %600 = vmatpush1.msra.mxu0 0.0
    %601 = vmatprep.subr.mxu0 0.0
    %602 = vmatpush1.msra.mxu0 0.0
    %603 = vmatprep.mubr.f32.mxu0 0.0
    %604 = vmatmul.mubr.f32.gmra.mrb[0].mxu0 %v537
    %v605 = vpop.f32.mrb[0].mxu0
    %v606 = vadd.f32 0.0, %v605
    %v607 = vpop.f32.mrb[0].mxu0
    %608 = vdwg.mxu0
    %v610 = vrot.slane %v606, 2
    %v612 = vadd.f32 %v188, %v610
    %v613 = vxor.u32 %v612, 2147483648
    %v614 = vmul.f32 %v613, 1.442695
    %v615 = vpow.pop %v614
    %v616 = vadd.f32 %v615, 1.0
    %v617 = vrcp.pop %v616
    %v618 = vmul.f32 1.0, %v617
    %v619 = vtanh.pop %v612
    %v621 = vrot.slane %v517, 6
    %v623 = vmul.f32 %v618, %v621
    %625 = vrot.lane.b32.xlu0 %v619, 64
    %v626 = vpop.permute.xlu0 %625
    %v628 = vmul.f32 %v618, %v626
    %630 = vrot.lane.b32.xlu0 %v628, 32
    %v631 = vpop.permute.xlu0 %630
    %v633 = vadd.f32 %v623, %v631
    %v634 = vtanh.pop %v633
    %636 = vrot.lane.b32.xlu0 %v634, 64
    %v637 = vpop.permute.xlu0 %636
    %v639 = vmul.f32 %v618, %v637
    %641 = vrot.lane.b32.xlu0 %v639, 32
    %v642 = vpop.permute.xlu0 %641
    %vm644 = vcmask 130054
    %645 = vst.msk [vmem:[#allocation2] sm:$0xc0] %vm644, %v642
    %vm646 = vcmask 261254
    %647 = vst.msk [vmem:[#allocation2 + $0x2] sm:$0xc0] %vm646, %v642
    %648 = vst.msk [vmem:[#allocation3 + $0x2] sm:$0xc0] %vm644, %v642
    %649 = vst.msk [vmem:[#allocation3] sm:$0xc0] %vm646, %v642
    %v650 = vrot.slane %v639, 6
    %651 = vrot.lane.b32.xlu0 %v650, 32
    %v652 = vpop.permute.xlu0 %651
    %v653 = vsel %vm196, %v652, 0
    %655 = vmatprep.subr.mxu0 0.0
    %656 = vmatpush1.msra.mxu0 %v95
    %657 = vmatprep.subr.mxu0 0.0
    %658 = vmatpush1.msra.mxu0 %v96
    %659 = vmatprep.subr.mxu0 0.0
    %660 = vmatpush1.msra.mxu0 %v97
    %661 = vmatprep.subr.mxu0 0.0
    %662 = vmatpush1.msra.mxu0 %v98
    %663 = vmatprep.subr.mxu0 0.0
    %664 = vmatpush1.msra.mxu0 0.0
    %665 = vmatprep.subr.mxu0 0.0
    %666 = vmatpush1.msra.mxu0 0.0
    %667 = vmatprep.subr.mxu0 0.0
    %668 = vmatpush1.msra.mxu0 0.0
    %669 = vmatprep.subr.mxu0 0.0
    %670 = vmatpush1.msra.mxu0 0.0
    %671 = vmatprep.subr.mxu0 0.0
    %672 = vmatpush1.msra.mxu0 0.0
    %673 = vmatprep.subr.mxu0 0.0
    %674 = vmatpush1.msra.mxu0 0.0
    %675 = vmatprep.subr.mxu0 0.0
    %676 = vmatpush1.msra.mxu0 0.0
    %677 = vmatprep.subr.mxu0 0.0
    %678 = vmatpush1.msra.mxu0 0.0
    %679 = vmatprep.subr.mxu0 0.0
    %680 = vmatpush1.msra.mxu0 0.0
    %681 = vmatprep.subr.mxu0 0.0
    %682 = vmatpush1.msra.mxu0 0.0
    %683 = vmatprep.subr.mxu0 0.0
    %684 = vmatpush1.msra.mxu0 0.0
    %685 = vmatprep.subr.mxu0 0.0
    %686 = vmatpush1.msra.mxu0 0.0
    %687 = vmatprep.subr.mxu0 0.0
    %688 = vmatpush1.msra.mxu0 0.0
    %689 = vmatprep.subr.mxu0 0.0
    %690 = vmatpush1.msra.mxu0 0.0
    %691 = vmatprep.subr.mxu0 0.0
    %692 = vmatpush1.msra.mxu0 0.0
    %693 = vmatprep.subr.mxu0 0.0
    %694 = vmatpush1.msra.mxu0 0.0
    %695 = vmatprep.subr.mxu0 0.0
    %696 = vmatpush1.msra.mxu0 0.0
    %697 = vmatprep.subr.mxu0 0.0
    %698 = vmatpush1.msra.mxu0 0.0
    %699 = vmatprep.subr.mxu0 0.0
    %700 = vmatpush1.msra.mxu0 0.0
    %701 = vmatprep.subr.mxu0 0.0
    %702 = vmatpush1.msra.mxu0 0.0
    %703 = vmatprep.subr.mxu0 0.0
    %704 = vmatpush1.msra.mxu0 0.0
    %705 = vmatprep.subr.mxu0 0.0
    %706 = vmatpush1.msra.mxu0 0.0
    %707 = vmatprep.subr.mxu0 0.0
    %708 = vmatpush1.msra.mxu0 0.0
    %709 = vmatprep.subr.mxu0 0.0
    %710 = vmatpush1.msra.mxu0 0.0
    %711 = vmatprep.subr.mxu0 0.0
    %712 = vmatpush1.msra.mxu0 0.0
    %713 = vmatprep.subr.mxu0 0.0
    %714 = vmatpush1.msra.mxu0 0.0
    %715 = vmatprep.subr.mxu0 0.0
    %716 = vmatpush1.msra.mxu0 0.0
    %717 = vmatprep.subr.mxu0 0.0
    %718 = vmatpush1.msra.mxu0 0.0
    %719 = vmatprep.mubr.f32.mxu0 0.0
    %720 = vmatmul.mubr.f32.gmra.mrb[0].mxu0 %v653
    %v721 = vpop.f32.mrb[0].mxu0
    %v722 = vadd.f32 0.0, %v721
    %v723 = vpop.f32.mrb[0].mxu0
    %724 = vdwg.mxu0
    %v725 = vadd.f32 %v193, %v722
    %v726 = vxor.u32 %v725, 2147483648
    %v727 = vmul.f32 %v726, 1.442695
    %v728 = vpow.pop %v727
    %v729 = vadd.f32 %v728, 1.0
    %v730 = vrcp.pop %v729
    %v731 = vmul.f32 1.0, %v730
    %v732 = vtanh.pop %v725
    %v734 = vrot.slane %v633, 6
    %v736 = vmul.f32 %v731, %v734
    %738 = vrot.lane.b32.xlu0 %v732, 64
    %v739 = vpop.permute.xlu0 %738
    %v741 = vmul.f32 %v731, %v739
    %743 = vrot.lane.b32.xlu0 %v741, 32
    %v744 = vpop.permute.xlu0 %743
    %v746 = vadd.f32 %v736, %v744
    %v747 = vtanh.pop %v746
    %749 = vrot.lane.b32.xlu0 %v747, 64
    %v750 = vpop.permute.xlu0 %749
    %v752 = vmul.f32 %v731, %v750
    %754 = vrot.lane.b32.xlu0 %v752, 32
    %v755 = vpop.permute.xlu0 %754
    %757 = vst.msk [vmem:[#allocation2 + $0x8] sm:$0x3] %vm299, %v755
    %758 = vst.msk [vmem:[#allocation2 + $0x6] sm:$0x3] %vm301, %v755
    %759 = vst.msk [vmem:[#allocation3 + $0x6] sm:$0x3] %vm299, %v755
    %760 = vst.msk [vmem:[#allocation3 + $0x8] sm:$0x3] %vm301, %v755
    %v761 = vsel %vm196, %v755, 0
    %763 = vmatprep.subr.mxu0 0.0
    %764 = vmatpush1.msra.mxu0 %v95
    %765 = vmatprep.subr.mxu0 0.0
    %766 = vmatpush1.msra.mxu0 %v96
    %767 = vmatprep.subr.mxu0 0.0
    %768 = vmatpush1.msra.mxu0 %v97
    %769 = vmatprep.subr.mxu0 0.0
    %770 = vmatpush1.msra.mxu0 %v98
    %771 = vmatprep.subr.mxu0 0.0
    %772 = vmatpush1.msra.mxu0 0.0
    %773 = vmatprep.subr.mxu0 0.0
    %774 = vmatpush1.msra.mxu0 0.0
    %775 = vmatprep.subr.mxu0 0.0
    %776 = vmatpush1.msra.mxu0 0.0
    %777 = vmatprep.subr.mxu0 0.0
    %778 = vmatpush1.msra.mxu0 0.0
    %779 = vmatprep.subr.mxu0 0.0
    %780 = vmatpush1.msra.mxu0 0.0
    %781 = vmatprep.subr.mxu0 0.0
    %782 = vmatpush1.msra.mxu0 0.0
    %783 = vmatprep.subr.mxu0 0.0
    %784 = vmatpush1.msra.mxu0 0.0
    %785 = vmatprep.subr.mxu0 0.0
    %786 = vmatpush1.msra.mxu0 0.0
    %787 = vmatprep.subr.mxu0 0.0
    %788 = vmatpush1.msra.mxu0 0.0
    %789 = vmatprep.subr.mxu0 0.0
    %790 = vmatpush1.msra.mxu0 0.0
    %791 = vmatprep.subr.mxu0 0.0
    %792 = vmatpush1.msra.mxu0 0.0
    %793 = vmatprep.subr.mxu0 0.0
    %794 = vmatpush1.msra.mxu0 0.0
    %795 = vmatprep.subr.mxu0 0.0
    %796 = vmatpush1.msra.mxu0 0.0
    %797 = vmatprep.subr.mxu0 0.0
    %798 = vmatpush1.msra.mxu0 0.0
    %799 = vmatprep.subr.mxu0 0.0
    %800 = vmatpush1.msra.mxu0 0.0
    %801 = vmatprep.subr.mxu0 0.0
    %802 = vmatpush1.msra.mxu0 0.0
    %803 = vmatprep.subr.mxu0 0.0
    %804 = vmatpush1.msra.mxu0 0.0
    %805 = vmatprep.subr.mxu0 0.0
    %806 = vmatpush1.msra.mxu0 0.0
    %807 = vmatprep.subr.mxu0 0.0
    %808 = vmatpush1.msra.mxu0 0.0
    %809 = vmatprep.subr.mxu0 0.0
    %810 = vmatpush1.msra.mxu0 0.0
    %811 = vmatprep.subr.mxu0 0.0
    %812 = vmatpush1.msra.mxu0 0.0
    %813 = vmatprep.subr.mxu0 0.0
    %814 = vmatpush1.msra.mxu0 0.0
    %815 = vmatprep.subr.mxu0 0.0
    %816 = vmatpush1.msra.mxu0 0.0
    %817 = vmatprep.subr.mxu0 0.0
    %818 = vmatpush1.msra.mxu0 0.0
    %819 = vmatprep.subr.mxu0 0.0
    %820 = vmatpush1.msra.mxu0 0.0
    %821 = vmatprep.subr.mxu0 0.0
    %822 = vmatpush1.msra.mxu0 0.0
    %823 = vmatprep.subr.mxu0 0.0
    %824 = vmatpush1.msra.mxu0 0.0
    %825 = vmatprep.subr.mxu0 0.0
    %826 = vmatpush1.msra.mxu0 0.0
    %827 = vmatprep.mubr.f32.mxu0 0.0
    %828 = vmatmul.mubr.f32.gmra.mrb[0].mxu0 %v761
    %v829 = vpop.f32.mrb[0].mxu0
    %v830 = vadd.f32 0.0, %v829
    %v831 = vpop.f32.mrb[0].mxu0
    %832 = vdwg.mxu0
    %v834 = vrot.slane %v830, 6
    %v836 = vadd.f32 %v193, %v834
    %v837 = vxor.u32 %v836, 2147483648
    %v838 = vmul.f32 %v837, 1.442695
    %v839 = vpow.pop %v838
    %v840 = vadd.f32 %v839, 1.0
    %v841 = vrcp.pop %v840
    %v842 = vmul.f32 1.0, %v841
    %v843 = vtanh.pop %v836
    %v845 = vrot.slane %v746, 6
    %v847 = vmul.f32 %v842, %v845
    %849 = vrot.lane.b32.xlu0 %v843, 64
    %v850 = vpop.permute.xlu0 %849
    %v852 = vmul.f32 %v842, %v850
    %854 = vrot.lane.b32.xlu0 %v852, 32
    %v855 = vpop.permute.xlu0 %854
    %v857 = vadd.f32 %v847, %v855
    %v858 = vtanh.pop %v857
    %860 = vrot.lane.b32.xlu0 %v858, 64
    %v861 = vpop.permute.xlu0 %860
    %v863 = vmul.f32 %v842, %v861
    %865 = vrot.lane.b32.xlu0 %v863, 32
    %v866 = vpop.permute.xlu0 %865
    %868 = vst.msk [vmem:[#allocation2 + $0x8] sm:$0xc] %vm412, %v866
    %869 = vst.msk [vmem:[#allocation2 + $0x2] sm:$0xc] %vm414, %v866
    %870 = vst.msk [vmem:[#allocation3 + $0x2] sm:$0xc] %vm412, %v866
    %871 = vst.msk [vmem:[#allocation3 + $0x8] sm:$0xc] %vm414, %v866
    %v872 = vrot.slane %v863, 2
    %873 = vrot.lane.b32.xlu0 %v872, 32
    %v874 = vpop.permute.xlu0 %873
    %v875 = vsel %vm196, %v874, 0
    %877 = vmatprep.subr.mxu0 0.0
    %878 = vmatpush1.msra.mxu0 %v95
    %879 = vmatprep.subr.mxu0 0.0
    %880 = vmatpush1.msra.mxu0 %v96
    %881 = vmatprep.subr.mxu0 0.0
    %882 = vmatpush1.msra.mxu0 %v97
    %883 = vmatprep.subr.mxu0 0.0
    %884 = vmatpush1.msra.mxu0 %v98
    %885 = vmatprep.subr.mxu0 0.0
    %886 = vmatpush1.msra.mxu0 0.0
    %887 = vmatprep.subr.mxu0 0.0
    %888 = vmatpush1.msra.mxu0 0.0
    %889 = vmatprep.subr.mxu0 0.0
    %890 = vmatpush1.msra.mxu0 0.0
    %891 = vmatprep.subr.mxu0 0.0
    %892 = vmatpush1.msra.mxu0 0.0
    %893 = vmatprep.subr.mxu0 0.0
    %894 = vmatpush1.msra.mxu0 0.0
    %895 = vmatprep.subr.mxu0 0.0
    %896 = vmatpush1.msra.mxu0 0.0
    %897 = vmatprep.subr.mxu0 0.0
    %898 = vmatpush1.msra.mxu0 0.0
    %899 = vmatprep.subr.mxu0 0.0
    %900 = vmatpush1.msra.mxu0 0.0
    %901 = vmatprep.subr.mxu0 0.0
    %902 = vmatpush1.msra.mxu0 0.0
    %903 = vmatprep.subr.mxu0 0.0
    %904 = vmatpush1.msra.mxu0 0.0
    %905 = vmatprep.subr.mxu0 0.0
    %906 = vmatpush1.msra.mxu0 0.0
    %907 = vmatprep.subr.mxu0 0.0
    %908 = vmatpush1.msra.mxu0 0.0
    %909 = vmatprep.subr.mxu0 0.0
    %910 = vmatpush1.msra.mxu0 0.0
    %911 = vmatprep.subr.mxu0 0.0
    %912 = vmatpush1.msra.mxu0 0.0
    %913 = vmatprep.subr.mxu0 0.0
    %914 = vmatpush1.msra.mxu0 0.0
    %915 = vmatprep.subr.mxu0 0.0
    %916 = vmatpush1.msra.mxu0 0.0
    %917 = vmatprep.subr.mxu0 0.0
    %918 = vmatpush1.msra.mxu0 0.0
    %919 = vmatprep.subr.mxu0 0.0
    %920 = vmatpush1.msra.mxu0 0.0
    %921 = vmatprep.subr.mxu0 0.0
    %922 = vmatpush1.msra.mxu0 0.0
    %923 = vmatprep.subr.mxu0 0.0
    %924 = vmatpush1.msra.mxu0 0.0
    %925 = vmatprep.subr.mxu0 0.0
    %926 = vmatpush1.msra.mxu0 0.0
    %927 = vmatprep.subr.mxu0 0.0
    %928 = vmatpush1.msra.mxu0 0.0
    %929 = vmatprep.subr.mxu0 0.0
    %930 = vmatpush1.msra.mxu0 0.0
    %931 = vmatprep.subr.mxu0 0.0
    %932 = vmatpush1.msra.mxu0 0.0
    %933 = vmatprep.subr.mxu0 0.0
    %934 = vmatpush1.msra.mxu0 0.0
    %935 = vmatprep.subr.mxu0 0.0
    %936 = vmatpush1.msra.mxu0 0.0
    %937 = vmatprep.subr.mxu0 0.0
    %938 = vmatpush1.msra.mxu0 0.0
    %939 = vmatprep.subr.mxu0 0.0
    %940 = vmatpush1.msra.mxu0 0.0
    %941 = vmatprep.mubr.f32.mxu0 0.0
    %942 = vmatmul.mubr.f32.gmra.mrb[0].mxu0 %v875
    %v943 = vpop.f32.mrb[0].mxu0
    %v944 = vadd.f32 0.0, %v943
    %v945 = vpop.f32.mrb[0].mxu0
    %946 = vdwg.mxu0
    %v948 = vrot.slane %v944, 4
    %v950 = vadd.f32 %v193, %v948
    %v951 = vxor.u32 %v950, 2147483648
    %v952 = vmul.f32 %v951, 1.442695
    %v953 = vpow.pop %v952
    %v954 = vadd.f32 %v953, 1.0
    %v955 = vrcp.pop %v954
    %v956 = vmul.f32 1.0, %v955
    %v957 = vtanh.pop %v950
    %v959 = vrot.slane %v857, 6
    %v961 = vmul.f32 %v956, %v959
    %963 = vrot.lane.b32.xlu0 %v957, 64
    %v964 = vpop.permute.xlu0 %963
    %v966 = vmul.f32 %v956, %v964
    %968 = vrot.lane.b32.xlu0 %v966, 32
    %v969 = vpop.permute.xlu0 %968
    %v971 = vadd.f32 %v961, %v969
    %v972 = vtanh.pop %v971
    %974 = vrot.lane.b32.xlu0 %v972, 64
    %v975 = vpop.permute.xlu0 %974
    %v977 = vmul.f32 %v956, %v975
    %979 = vrot.lane.b32.xlu0 %v977, 32
    %v980 = vpop.permute.xlu0 %979
    %982 = vst.msk [vmem:[#allocation2 + $0x8] sm:$0x30] %vm528, %v980
    %983 = vst.msk [vmem:[#allocation2 - $0x2] sm:$0x30] %vm530, %v980
    %984 = vst.msk [vmem:[#allocation3 - $0x2] sm:$0x30] %vm528, %v980
    %985 = vst.msk [vmem:[#allocation3 + $0x8] sm:$0x30] %vm530, %v980
    %v986 = vrot.slane %v977, 4
    %987 = vrot.lane.b32.xlu0 %v986, 32
    %v988 = vpop.permute.xlu0 %987
    %v989 = vsel %vm196, %v988, 0
    %991 = vmatprep.subr.mxu0 0.0
    %992 = vmatpush1.msra.mxu0 %v95
    %993 = vmatprep.subr.mxu0 0.0
    %994 = vmatpush1.msra.mxu0 %v96
    %995 = vmatprep.subr.mxu0 0.0
    %996 = vmatpush1.msra.mxu0 %v97
    %997 = vmatprep.subr.mxu0 0.0
    %998 = vmatpush1.msra.mxu0 %v98
    %999 = vmatprep.subr.mxu0 0.0
    %1000 = vmatpush1.msra.mxu0 0.0
    %1001 = vmatprep.subr.mxu0 0.0
    %1002 = vmatpush1.msra.mxu0 0.0
    %1003 = vmatprep.subr.mxu0 0.0
    %1004 = vmatpush1.msra.mxu0 0.0
    %1005 = vmatprep.subr.mxu0 0.0
    %1006 = vmatpush1.msra.mxu0 0.0
    %1007 = vmatprep.subr.mxu0 0.0
    %1008 = vmatpush1.msra.mxu0 0.0
    %1009 = vmatprep.subr.mxu0 0.0
    %1010 = vmatpush1.msra.mxu0 0.0
    %1011 = vmatprep.subr.mxu0 0.0
    %1012 = vmatpush1.msra.mxu0 0.0
    %1013 = vmatprep.subr.mxu0 0.0
    %1014 = vmatpush1.msra.mxu0 0.0
    %1015 = vmatprep.subr.mxu0 0.0
    %1016 = vmatpush1.msra.mxu0 0.0
    %1017 = vmatprep.subr.mxu0 0.0
    %1018 = vmatpush1.msra.mxu0 0.0
    %1019 = vmatprep.subr.mxu0 0.0
    %1020 = vmatpush1.msra.mxu0 0.0
    %1021 = vmatprep.subr.mxu0 0.0
    %1022 = vmatpush1.msra.mxu0 0.0
    %1023 = vmatprep.subr.mxu0 0.0
    %1024 = vmatpush1.msra.mxu0 0.0
    %1025 = vmatprep.subr.mxu0 0.0
    %1026 = vmatpush1.msra.mxu0 0.0
    %1027 = vmatprep.subr.mxu0 0.0
    %1028 = vmatpush1.msra.mxu0 0.0
    %1029 = vmatprep.subr.mxu0 0.0
    %1030 = vmatpush1.msra.mxu0 0.0
    %1031 = vmatprep.subr.mxu0 0.0
    %1032 = vmatpush1.msra.mxu0 0.0
    %1033 = vmatprep.subr.mxu0 0.0
    %1034 = vmatpush1.msra.mxu0 0.0
    %1035 = vmatprep.subr.mxu0 0.0
    %1036 = vmatpush1.msra.mxu0 0.0
    %1037 = vmatprep.subr.mxu0 0.0
    %1038 = vmatpush1.msra.mxu0 0.0
    %1039 = vmatprep.subr.mxu0 0.0
    %1040 = vmatpush1.msra.mxu0 0.0
    %1041 = vmatprep.subr.mxu0 0.0
    %1042 = vmatpush1.msra.mxu0 0.0
    %1043 = vmatprep.subr.mxu0 0.0
    %1044 = vmatpush1.msra.mxu0 0.0
    %1045 = vmatprep.subr.mxu0 0.0
    %1046 = vmatpush1.msra.mxu0 0.0
    %1047 = vmatprep.subr.mxu0 0.0
    %1048 = vmatpush1.msra.mxu0 0.0
    %1049 = vmatprep.subr.mxu0 0.0
    %1050 = vmatpush1.msra.mxu0 0.0
    %1051 = vmatprep.subr.mxu0 0.0
    %1052 = vmatpush1.msra.mxu0 0.0
    %1053 = vmatprep.subr.mxu0 0.0
    %1054 = vmatpush1.msra.mxu0 0.0
    %1055 = vmatprep.mubr.f32.mxu0 0.0
    %1056 = vmatmul.mubr.f32.gmra.mrb[0].mxu0 %v989
    %v1057 = vpop.f32.mrb[0].mxu0
    %v1058 = vadd.f32 0.0, %v1057
    %v1059 = vpop.f32.mrb[0].mxu0
    %1060 = vdwg.mxu0
    %v1062 = vrot.slane %v1058, 2
    %v1064 = vadd.f32 %v193, %v1062
    %v1065 = vxor.u32 %v1064, 2147483648
    %v1066 = vmul.f32 %v1065, 1.442695
    %v1067 = vpow.pop %v1066
    %v1068 = vadd.f32 %v1067, 1.0
    %v1069 = vrcp.pop %v1068
    %v1070 = vmul.f32 1.0, %v1069
    %v1071 = vtanh.pop %v1064
    %v1073 = vrot.slane %v971, 6
    %v1075 = vmul.f32 %v1070, %v1073
    %1077 = vrot.lane.b32.xlu0 %v1071, 64
    %v1078 = vpop.permute.xlu0 %1077
    %v1080 = vmul.f32 %v1070, %v1078
    %1082 = vrot.lane.b32.xlu0 %v1080, 32
    %v1083 = vpop.permute.xlu0 %1082
    %v1085 = vadd.f32 %v1075, %v1083
    %v1086 = vtanh.pop %v1085
    %1088 = vrot.lane.b32.xlu0 %v1086, 64
    %v1089 = vpop.permute.xlu0 %1088
    %v1091 = vmul.f32 %v1070, %v1089
    %1093 = vrot.lane.b32.xlu0 %v1091, 32
    %v1094 = vpop.permute.xlu0 %1093
    %1096 = vst.msk [vmem:[#allocation2 + $0x8] sm:$0xc0] %vm644, %v1094
    %1097 = vst.msk [vmem:[#allocation2 - $0x6] sm:$0xc0] %vm646, %v1094
    %1098 = vst.msk [vmem:[#allocation3 - $0x6] sm:$0xc0] %vm644, %v1094
    %1099 = vst.msk [vmem:[#allocation3 + $0x8] sm:$0xc0] %vm646, %v1094
    %s1100 = scalar_lea.vmem [#allocation10], 32
    %v1101 = vld [vmem:[%s1100] sm:$0xff]
    %v1102 = vld [vmem:[%s1100 + $0x8] sm:$0xff]
    %v1103 = vld [vmem:[%s1100 + $0x10] sm:$0xff]
    %v1104 = vld [vmem:[%s1100 + $0x18] sm:$0xff]
    %s1105 = scalar_lea.vmem %s4, 1
    %v1106 = vld [vmem:[%s1105] sm:$0x1]
    %v1107 = vld [vmem:[#allocation2] sm:$0xff]
    %v1108 = vld [vmem:[#allocation2 + $0x8] sm:$0xff]
    %v1109 = vld [vmem:[#allocation3] sm:$0xff]
    %v1110 = vld [vmem:[#allocation3 + $0x8] sm:$0xff]
    %v1111 = vld [vmem:[#allocation9] sm:$0xff]
    %v1112 = vld [vmem:[#allocation9 + $0x8] sm:$0xff]
    %v1113 = vld [vmem:[#allocation9 + $0x10] sm:$0xff]
    %v1114 = vld [vmem:[#allocation9 + $0x18] sm:$0xff]
    %v1115 = vld [vmem:[#allocation9 + $0x20] sm:$0xff]
    %v1116 = vld [vmem:[#allocation9 + $0x28] sm:$0xff]
    %v1117 = vld [vmem:[#allocation9 + $0x30] sm:$0xff]
    %v1118 = vld [vmem:[#allocation9 + $0x38] sm:$0xff]
    %v1120 = vsel %vm196, %v1109, 0
    %v1123 = vsel %vm196, %v1110, 0
    %1125 = vmatprep.subr.mxu0 0.0
    %1126 = vmatpush1.msra.mxu0 %v1115
    %1127 = vmatprep.subr.mxu0 0.0
    %1128 = vmatpush1.msra.mxu0 %v1116
    %1129 = vmatprep.subr.mxu0 0.0
    %1130 = vmatpush1.msra.mxu0 %v1117
    %1131 = vmatprep.subr.mxu0 0.0
    %1132 = vmatpush1.msra.mxu0 %v1118
    %1133 = vmatprep.subr.mxu0 0.0
    %1134 = vmatpush1.msra.mxu0 0.0
    %1135 = vmatprep.subr.mxu0 0.0
    %1136 = vmatpush1.msra.mxu0 0.0
    %1137 = vmatprep.subr.mxu0 0.0
    %1138 = vmatpush1.msra.mxu0 0.0
    %1139 = vmatprep.subr.mxu0 0.0
    %1140 = vmatpush1.msra.mxu0 0.0
    %1141 = vmatprep.subr.mxu0 0.0
    %1142 = vmatpush1.msra.mxu0 0.0
    %1143 = vmatprep.subr.mxu0 0.0
    %1144 = vmatpush1.msra.mxu0 0.0
    %1145 = vmatprep.subr.mxu0 0.0
    %1146 = vmatpush1.msra.mxu0 0.0
    %1147 = vmatprep.subr.mxu0 0.0
    %1148 = vmatpush1.msra.mxu0 0.0
    %1149 = vmatprep.subr.mxu0 0.0
    %1150 = vmatpush1.msra.mxu0 0.0
    %1151 = vmatprep.subr.mxu0 0.0
    %1152 = vmatpush1.msra.mxu0 0.0
    %1153 = vmatprep.subr.mxu0 0.0
    %1154 = vmatpush1.msra.mxu0 0.0
    %1155 = vmatprep.subr.mxu0 0.0
    %1156 = vmatpush1.msra.mxu0 0.0
    %1157 = vmatprep.subr.mxu0 0.0
    %1158 = vmatpush1.msra.mxu0 0.0
    %1159 = vmatprep.subr.mxu0 0.0
    %1160 = vmatpush1.msra.mxu0 0.0
    %1161 = vmatprep.subr.mxu0 0.0
    %1162 = vmatpush1.msra.mxu0 0.0
    %1163 = vmatprep.subr.mxu0 0.0
    %1164 = vmatpush1.msra.mxu0 0.0
    %1165 = vmatprep.subr.mxu0 0.0
    %1166 = vmatpush1.msra.mxu0 0.0
    %1167 = vmatprep.subr.mxu0 0.0
    %1168 = vmatpush1.msra.mxu0 0.0
    %1169 = vmatprep.subr.mxu0 0.0
    %1170 = vmatpush1.msra.mxu0 0.0
    %1171 = vmatprep.subr.mxu0 0.0
    %1172 = vmatpush1.msra.mxu0 0.0
    %1173 = vmatprep.subr.mxu0 0.0
    %1174 = vmatpush1.msra.mxu0 0.0
    %1175 = vmatprep.subr.mxu0 0.0
    %1176 = vmatpush1.msra.mxu0 0.0
    %1177 = vmatprep.subr.mxu0 0.0
    %1178 = vmatpush1.msra.mxu0 0.0
    %1179 = vmatprep.subr.mxu0 0.0
    %1180 = vmatpush1.msra.mxu0 0.0
    %1181 = vmatprep.subr.mxu0 0.0
    %1182 = vmatpush1.msra.mxu0 0.0
    %1183 = vmatprep.subr.mxu0 0.0
    %1184 = vmatpush1.msra.mxu0 0.0
    %1185 = vmatprep.subr.mxu0 0.0
    %1186 = vmatpush1.msra.mxu0 0.0
    %1187 = vmatprep.subr.mxu0 0.0
    %1188 = vmatpush1.msra.mxu0 0.0
    %1189 = vmatprep.mubr.f32.mxu0 0.0
    %1190 = vmatmul.mubr.f32.gmra.mrb[0].mxu0 %v1120
    %v1191 = vpop.f32.mrb[0].mxu0
    %v1192 = vadd.f32 0.0, %v1191
    %v1193 = vpop.f32.mrb[0].mxu0
    %1194 = vmatprep.mubr.f32.mxu0 0.0
    %1195 = vmatmul.mubr.f32.gmra.mrb[0].mxu0 %v1123
    %v1196 = vpop.f32.mrb[0].mxu0
    %v1197 = vadd.f32 0.0, %v1196
    %v1198 = vpop.f32.mrb[0].mxu0
    %1199 = vdwg.mxu0
    %v1201 = vsel %vm196, %v1107, 0
    %v1204 = vsel %vm196, %v1108, 0
    %1206 = vmatprep.subr.mxu0 0.0
    %1207 = vmatpush1.msra.mxu0 %v1111
    %1208 = vmatprep.subr.mxu0 0.0
    %1209 = vmatpush1.msra.mxu0 %v1112
    %1210 = vmatprep.subr.mxu0 0.0
    %1211 = vmatpush1.msra.mxu0 %v1113
    %1212 = vmatprep.subr.mxu0 0.0
    %1213 = vmatpush1.msra.mxu0 %v1114
    %1214 = vmatprep.subr.mxu0 0.0
    %1215 = vmatpush1.msra.mxu0 0.0
    %1216 = vmatprep.subr.mxu0 0.0
    %1217 = vmatpush1.msra.mxu0 0.0
    %1218 = vmatprep.subr.mxu0 0.0
    %1219 = vmatpush1.msra.mxu0 0.0
    %1220 = vmatprep.subr.mxu0 0.0
    %1221 = vmatpush1.msra.mxu0 0.0
    %1222 = vmatprep.subr.mxu0 0.0
    %1223 = vmatpush1.msra.mxu0 0.0
    %1224 = vmatprep.subr.mxu0 0.0
    %1225 = vmatpush1.msra.mxu0 0.0
    %1226 = vmatprep.subr.mxu0 0.0
    %1227 = vmatpush1.msra.mxu0 0.0
    %1228 = vmatprep.subr.mxu0 0.0
    %1229 = vmatpush1.msra.mxu0 0.0
    %1230 = vmatprep.subr.mxu0 0.0
    %1231 = vmatpush1.msra.mxu0 0.0
    %1232 = vmatprep.subr.mxu0 0.0
    %1233 = vmatpush1.msra.mxu0 0.0
    %1234 = vmatprep.subr.mxu0 0.0
    %1235 = vmatpush1.msra.mxu0 0.0
    %1236 = vmatprep.subr.mxu0 0.0
    %1237 = vmatpush1.msra.mxu0 0.0
    %1238 = vmatprep.subr.mxu0 0.0
    %1239 = vmatpush1.msra.mxu0 0.0
    %1240 = vmatprep.subr.mxu0 0.0
    %1241 = vmatpush1.msra.mxu0 0.0
    %1242 = vmatprep.subr.mxu0 0.0
    %1243 = vmatpush1.msra.mxu0 0.0
    %1244 = vmatprep.subr.mxu0 0.0
    %1245 = vmatpush1.msra.mxu0 0.0
    %1246 = vmatprep.subr.mxu0 0.0
    %1247 = vmatpush1.msra.mxu0 0.0
    %1248 = vmatprep.subr.mxu0 0.0
    %1249 = vmatpush1.msra.mxu0 0.0
    %1250 = vmatprep.subr.mxu0 0.0
    %1251 = vmatpush1.msra.mxu0 0.0
    %1252 = vmatprep.subr.mxu0 0.0
    %1253 = vmatpush1.msra.mxu0 0.0
    %1254 = vmatprep.subr.mxu0 0.0
    %1255 = vmatpush1.msra.mxu0 0.0
    %1256 = vmatprep.subr.mxu0 0.0
    %1257 = vmatpush1.msra.mxu0 0.0
    %1258 = vmatprep.subr.mxu0 0.0
    %1259 = vmatpush1.msra.mxu0 0.0
    %1260 = vmatprep.subr.mxu0 0.0
    %1261 = vmatpush1.msra.mxu0 0.0
    %1262 = vmatprep.subr.mxu0 0.0
    %1263 = vmatpush1.msra.mxu0 0.0
    %1264 = vmatprep.subr.mxu0 0.0
    %1265 = vmatpush1.msra.mxu0 0.0
    %1266 = vmatprep.subr.mxu0 0.0
    %1267 = vmatpush1.msra.mxu0 0.0
    %1268 = vmatprep.subr.mxu0 0.0
    %1269 = vmatpush1.msra.mxu0 0.0
    %1270 = vmatprep.mubr.f32.mxu0 0.0
    %1271 = vmatmul.mubr.f32.gmra.mrb[0].mxu0 %v1201
    %v1272 = vpop.f32.mrb[0].mxu0
    %v1273 = vadd.f32 %v1192, %v1272
    %v1274 = vpop.f32.mrb[0].mxu0
    %1275 = vmatprep.mubr.f32.mxu0 0.0
    %1276 = vmatmul.mubr.f32.gmra.mrb[0].mxu0 %v1204
    %v1277 = vpop.f32.mrb[0].mxu0
    %v1278 = vadd.f32 %v1197, %v1277
    %v1279 = vpop.f32.mrb[0].mxu0
    %1280 = vdwg.mxu0
    %v1282 = vlaneseq
    %v1283 = vshrl.u32 %v1282, 7
    %v1284 = vsub.s32 0, %v1283
    %v1285 = vrot.slane %v1106, %v1284
    %v1287 = vadd.f32 %v1273, %v1285
    %v1288 = vadd.f32 %v1278, %v1285
    %1289 = vmatprep.subr.mxu0 0.0
    %1290 = vmatpush1.msra.mxu0 %v1101
    %1291 = vmatprep.subr.mxu0 0.0
    %1292 = vmatpush1.msra.mxu0 %v1102
    %1293 = vmatprep.subr.mxu0 0.0
    %1294 = vmatpush1.msra.mxu0 %v1103
    %1295 = vmatprep.subr.mxu0 0.0
    %1296 = vmatpush1.msra.mxu0 %v1104
    %1297 = vmatprep.subr.mxu0 0.0
    %1298 = vmatpush1.msra.mxu0 0.0
    %1299 = vmatprep.subr.mxu0 0.0
    %1300 = vmatpush1.msra.mxu0 0.0
    %1301 = vmatprep.subr.mxu0 0.0
    %1302 = vmatpush1.msra.mxu0 0.0
    %1303 = vmatprep.subr.mxu0 0.0
    %1304 = vmatpush1.msra.mxu0 0.0
    %1305 = vmatprep.subr.mxu0 0.0
    %1306 = vmatpush1.msra.mxu0 0.0
    %1307 = vmatprep.subr.mxu0 0.0
    %1308 = vmatpush1.msra.mxu0 0.0
    %1309 = vmatprep.subr.mxu0 0.0
    %1310 = vmatpush1.msra.mxu0 0.0
    %1311 = vmatprep.subr.mxu0 0.0
    %1312 = vmatpush1.msra.mxu0 0.0
    %1313 = vmatprep.subr.mxu0 0.0
    %1314 = vmatpush1.msra.mxu0 0.0
    %1315 = vmatprep.subr.mxu0 0.0
    %1316 = vmatpush1.msra.mxu0 0.0
    %1317 = vmatprep.subr.mxu0 0.0
    %1318 = vmatpush1.msra.mxu0 0.0
    %1319 = vmatprep.subr.mxu0 0.0
    %1320 = vmatpush1.msra.mxu0 0.0
    %1321 = vmatprep.subr.mxu0 0.0
    %1322 = vmatpush1.msra.mxu0 0.0
    %1323 = vmatprep.subr.mxu0 0.0
    %1324 = vmatpush1.msra.mxu0 0.0
    %1325 = vmatprep.subr.mxu0 0.0
    %1326 = vmatpush1.msra.mxu0 0.0
    %1327 = vmatprep.subr.mxu0 0.0
    %1328 = vmatpush1.msra.mxu0 0.0
    %1329 = vmatprep.subr.mxu0 0.0
    %1330 = vmatpush1.msra.mxu0 0.0
    %1331 = vmatprep.subr.mxu0 0.0
    %1332 = vmatpush1.msra.mxu0 0.0
    %1333 = vmatprep.subr.mxu0 0.0
    %1334 = vmatpush1.msra.mxu0 0.0
    %1335 = vmatprep.subr.mxu0 0.0
    %1336 = vmatpush1.msra.mxu0 0.0
    %1337 = vmatprep.subr.mxu0 0.0
    %1338 = vmatpush1.msra.mxu0 0.0
    %1339 = vmatprep.subr.mxu0 0.0
    %1340 = vmatpush1.msra.mxu0 0.0
    %1341 = vmatprep.subr.mxu0 0.0
    %1342 = vmatpush1.msra.mxu0 0.0
    %1343 = vmatprep.subr.mxu0 0.0
    %1344 = vmatpush1.msra.mxu0 0.0
    %1345 = vmatprep.subr.mxu0 0.0
    %1346 = vmatpush1.msra.mxu0 0.0
    %1347 = vmatprep.subr.mxu0 0.0
    %1348 = vmatpush1.msra.mxu0 0.0
    %1349 = vmatprep.subr.mxu0 0.0
    %1350 = vmatpush1.msra.mxu0 0.0
    %1351 = vmatprep.subr.mxu0 0.0
    %1352 = vmatpush1.msra.mxu0 0.0
    %1353 = vmatprep.mubr.f32.mxu0 0.0
    %1354 = vmatmul.mubr.f32.gmra.mrb[0].mxu0 %v198
    %v1355 = vpop.f32.mrb[0].mxu0
    %v1356 = vadd.f32 0.0, %v1355
    %v1357 = vpop.f32.mrb[0].mxu0
    %1358 = vdwg.mxu0
    %v1359 = vadd.f32 %v1287, %v1356
    %v1360 = vxor.u32 %v1359, 2147483648
    %v1361 = vmul.f32 %v1360, 1.442695
    %v1362 = vpow.pop %v1361
    %v1363 = vadd.f32 %v1362, 1.0
    %v1364 = vrcp.pop %v1363
    %v1365 = vmul.f32 1.0, %v1364
    %v1366 = vtanh.pop %v1359
    %v1367 = vmul.f32 %v1365, 0.0
    %1369 = vrot.lane.b32.xlu0 %v1366, 64
    %v1370 = vpop.permute.xlu0 %1369
    %v1372 = vmul.f32 %v1365, %v1370
    %1374 = vrot.lane.b32.xlu0 %v1372, 32
    %v1375 = vpop.permute.xlu0 %1374
    %v1377 = vadd.f32 %v1367, %v1375
    %v1378 = vtanh.pop %v1377
    %1380 = vrot.lane.b32.xlu0 %v1378, 64
    %v1381 = vpop.permute.xlu0 %1380
    %v1383 = vmul.f32 %v1365, %v1381
    %1385 = vrot.lane.b32.xlu0 %v1383, 32
    %v1386 = vpop.permute.xlu0 %1385
    %1388 = vst.msk [vmem:[#allocation2] sm:$0x3] %vm299, %v1386
    %1389 = vst.msk [vmem:[#allocation2 + $0xe] sm:$0x3] %vm301, %v1386
    %1390 = vst.msk [vmem:[#allocation3 + $0xe] sm:$0x3] %vm299, %v1386
    %1391 = vst.msk [vmem:[#allocation3] sm:$0x3] %vm301, %v1386
    %v1392 = vsel %vm196, %v1386, 0
    %1394 = vmatprep.subr.mxu0 0.0
    %1395 = vmatpush1.msra.mxu0 %v1101
    %1396 = vmatprep.subr.mxu0 0.0
    %1397 = vmatpush1.msra.mxu0 %v1102
    %1398 = vmatprep.subr.mxu0 0.0
    %1399 = vmatpush1.msra.mxu0 %v1103
    %1400 = vmatprep.subr.mxu0 0.0
    %1401 = vmatpush1.msra.mxu0 %v1104
    %1402 = vmatprep.subr.mxu0 0.0
    %1403 = vmatpush1.msra.mxu0 0.0
    %1404 = vmatprep.subr.mxu0 0.0
    %1405 = vmatpush1.msra.mxu0 0.0
    %1406 = vmatprep.subr.mxu0 0.0
    %1407 = vmatpush1.msra.mxu0 0.0
    %1408 = vmatprep.subr.mxu0 0.0
    %1409 = vmatpush1.msra.mxu0 0.0
    %1410 = vmatprep.subr.mxu0 0.0
    %1411 = vmatpush1.msra.mxu0 0.0
    %1412 = vmatprep.subr.mxu0 0.0
    %1413 = vmatpush1.msra.mxu0 0.0
    %1414 = vmatprep.subr.mxu0 0.0
    %1415 = vmatpush1.msra.mxu0 0.0
    %1416 = vmatprep.subr.mxu0 0.0
    %1417 = vmatpush1.msra.mxu0 0.0
    %1418 = vmatprep.subr.mxu0 0.0
    %1419 = vmatpush1.msra.mxu0 0.0
    %1420 = vmatprep.subr.mxu0 0.0
    %1421 = vmatpush1.msra.mxu0 0.0
    %1422 = vmatprep.subr.mxu0 0.0
    %1423 = vmatpush1.msra.mxu0 0.0
    %1424 = vmatprep.subr.mxu0 0.0
    %1425 = vmatpush1.msra.mxu0 0.0
    %1426 = vmatprep.subr.mxu0 0.0
    %1427 = vmatpush1.msra.mxu0 0.0
    %1428 = vmatprep.subr.mxu0 0.0
    %1429 = vmatpush1.msra.mxu0 0.0
    %1430 = vmatprep.subr.mxu0 0.0
    %1431 = vmatpush1.msra.mxu0 0.0
    %1432 = vmatprep.subr.mxu0 0.0
    %1433 = vmatpush1.msra.mxu0 0.0
    %1434 = vmatprep.subr.mxu0 0.0
    %1435 = vmatpush1.msra.mxu0 0.0
    %1436 = vmatprep.subr.mxu0 0.0
    %1437 = vmatpush1.msra.mxu0 0.0
    %1438 = vmatprep.subr.mxu0 0.0
    %1439 = vmatpush1.msra.mxu0 0.0
    %1440 = vmatprep.subr.mxu0 0.0
    %1441 = vmatpush1.msra.mxu0 0.0
    %1442 = vmatprep.subr.mxu0 0.0
    %1443 = vmatpush1.msra.mxu0 0.0
    %1444 = vmatprep.subr.mxu0 0.0
    %1445 = vmatpush1.msra.mxu0 0.0
    %1446 = vmatprep.subr.mxu0 0.0
    %1447 = vmatpush1.msra.mxu0 0.0
    %1448 = vmatprep.subr.mxu0 0.0
    %1449 = vmatpush1.msra.mxu0 0.0
    %1450 = vmatprep.subr.mxu0 0.0
    %1451 = vmatpush1.msra.mxu0 0.0
    %1452 = vmatprep.subr.mxu0 0.0
    %1453 = vmatpush1.msra.mxu0 0.0
    %1454 = vmatprep.subr.mxu0 0.0
    %1455 = vmatpush1.msra.mxu0 0.0
    %1456 = vmatprep.subr.mxu0 0.0
    %1457 = vmatpush1.msra.mxu0 0.0
    %1458 = vmatprep.mubr.f32.mxu0 0.0
    %1459 = vmatmul.mubr.f32.gmra.mrb[0].mxu0 %v1392
    %v1460 = vpop.f32.mrb[0].mxu0
    %v1461 = vadd.f32 0.0, %v1460
    %v1462 = vpop.f32.mrb[0].mxu0
    %1463 = vdwg.mxu0
    %v1465 = vrot.slane %v1461, 6
    %v1467 = vadd.f32 %v1287, %v1465
    %v1468 = vxor.u32 %v1467, 2147483648
    %v1469 = vmul.f32 %v1468, 1.442695
    %v1470 = vpow.pop %v1469
    %v1471 = vadd.f32 %v1470, 1.0
    %v1472 = vrcp.pop %v1471
    %v1473 = vmul.f32 1.0, %v1472
    %v1474 = vtanh.pop %v1467
    %v1476 = vrot.slane %v1377, 6
    %v1478 = vmul.f32 %v1473, %v1476
    %1480 = vrot.lane.b32.xlu0 %v1474, 64
    %v1481 = vpop.permute.xlu0 %1480
    %v1483 = vmul.f32 %v1473, %v1481
    %1485 = vrot.lane.b32.xlu0 %v1483, 32
    %v1486 = vpop.permute.xlu0 %1485
    %v1488 = vadd.f32 %v1478, %v1486
    %v1489 = vtanh.pop %v1488
    %1491 = vrot.lane.b32.xlu0 %v1489, 64
    %v1492 = vpop.permute.xlu0 %1491
    %v1494 = vmul.f32 %v1473, %v1492
    %1496 = vrot.lane.b32.xlu0 %v1494, 32
    %v1497 = vpop.permute.xlu0 %1496
    %1499 = vst.msk [vmem:[#allocation2] sm:$0xc] %vm412, %v1497
    %1500 = vst.msk [vmem:[#allocation2 + $0xa] sm:$0xc] %vm414, %v1497
    %1501 = vst.msk [vmem:[#allocation3 + $0xa] sm:$0xc] %vm412, %v1497
    %1502 = vst.msk [vmem:[#allocation3] sm:$0xc] %vm414, %v1497
    %v1503 = vrot.slane %v1494, 2
    %1504 = vrot.lane.b32.xlu0 %v1503, 32
    %v1505 = vpop.permute.xlu0 %1504
    %v1506 = vsel %vm196, %v1505, 0
    %1508 = vmatprep.subr.mxu0 0.0
    %1509 = vmatpush1.msra.mxu0 %v1101
    %1510 = vmatprep.subr.mxu0 0.0
    %1511 = vmatpush1.msra.mxu0 %v1102
    %1512 = vmatprep.subr.mxu0 0.0
    %1513 = vmatpush1.msra.mxu0 %v1103
    %1514 = vmatprep.subr.mxu0 0.0
    %1515 = vmatpush1.msra.mxu0 %v1104
    %1516 = vmatprep.subr.mxu0 0.0
    %1517 = vmatpush1.msra.mxu0 0.0
    %1518 = vmatprep.subr.mxu0 0.0
    %1519 = vmatpush1.msra.mxu0 0.0
    %1520 = vmatprep.subr.mxu0 0.0
    %1521 = vmatpush1.msra.mxu0 0.0
    %1522 = vmatprep.subr.mxu0 0.0
    %1523 = vmatpush1.msra.mxu0 0.0
    %1524 = vmatprep.subr.mxu0 0.0
    %1525 = vmatpush1.msra.mxu0 0.0
    %1526 = vmatprep.subr.mxu0 0.0
    %1527 = vmatpush1.msra.mxu0 0.0
    %1528 = vmatprep.subr.mxu0 0.0
    %1529 = vmatpush1.msra.mxu0 0.0
    %1530 = vmatprep.subr.mxu0 0.0
    %1531 = vmatpush1.msra.mxu0 0.0
    %1532 = vmatprep.subr.mxu0 0.0
    %1533 = vmatpush1.msra.mxu0 0.0
    %1534 = vmatprep.subr.mxu0 0.0
    %1535 = vmatpush1.msra.mxu0 0.0
    %1536 = vmatprep.subr.mxu0 0.0
    %1537 = vmatpush1.msra.mxu0 0.0
    %1538 = vmatprep.subr.mxu0 0.0
    %1539 = vmatpush1.msra.mxu0 0.0
    %1540 = vmatprep.subr.mxu0 0.0
    %1541 = vmatpush1.msra.mxu0 0.0
    %1542 = vmatprep.subr.mxu0 0.0
    %1543 = vmatpush1.msra.mxu0 0.0
    %1544 = vmatprep.subr.mxu0 0.0
    %1545 = vmatpush1.msra.mxu0 0.0
    %1546 = vmatprep.subr.mxu0 0.0
    %1547 = vmatpush1.msra.mxu0 0.0
    %1548 = vmatprep.subr.mxu0 0.0
    %1549 = vmatpush1.msra.mxu0 0.0
    %1550 = vmatprep.subr.mxu0 0.0
    %1551 = vmatpush1.msra.mxu0 0.0
    %1552 = vmatprep.subr.mxu0 0.0
    %1553 = vmatpush1.msra.mxu0 0.0
    %1554 = vmatprep.subr.mxu0 0.0
    %1555 = vmatpush1.msra.mxu0 0.0
    %1556 = vmatprep.subr.mxu0 0.0
    %1557 = vmatpush1.msra.mxu0 0.0
    %1558 = vmatprep.subr.mxu0 0.0
    %1559 = vmatpush1.msra.mxu0 0.0
    %1560 = vmatprep.subr.mxu0 0.0
    %1561 = vmatpush1.msra.mxu0 0.0
    %1562 = vmatprep.subr.mxu0 0.0
    %1563 = vmatpush1.msra.mxu0 0.0
    %1564 = vmatprep.subr.mxu0 0.0
    %1565 = vmatpush1.msra.mxu0 0.0
    %1566 = vmatprep.subr.mxu0 0.0
    %1567 = vmatpush1.msra.mxu0 0.0
    %1568 = vmatprep.subr.mxu0 0.0
    %1569 = vmatpush1.msra.mxu0 0.0
    %1570 = vmatprep.subr.mxu0 0.0
    %1571 = vmatpush1.msra.mxu0 0.0
    %1572 = vmatprep.mubr.f32.mxu0 0.0
    %1573 = vmatmul.mubr.f32.gmra.mrb[0].mxu0 %v1506
    %v1574 = vpop.f32.mrb[0].mxu0
    %v1575 = vadd.f32 0.0, %v1574
    %v1576 = vpop.f32.mrb[0].mxu0
    %1577 = vdwg.mxu0
    %v1579 = vrot.slane %v1575, 4
    %v1581 = vadd.f32 %v1287, %v1579
    %v1582 = vxor.u32 %v1581, 2147483648
    %v1583 = vmul.f32 %v1582, 1.442695
    %v1584 = vpow.pop %v1583
    %v1585 = vadd.f32 %v1584, 1.0
    %v1586 = vrcp.pop %v1585
    %v1587 = vmul.f32 1.0, %v1586
    %v1588 = vtanh.pop %v1581
    %v1590 = vrot.slane %v1488, 6
    %v1592 = vmul.f32 %v1587, %v1590
    %1594 = vrot.lane.b32.xlu0 %v1588, 64
    %v1595 = vpop.permute.xlu0 %1594
    %v1597 = vmul.f32 %v1587, %v1595
    %1599 = vrot.lane.b32.xlu0 %v1597, 32
    %v1600 = vpop.permute.xlu0 %1599
    %v1602 = vadd.f32 %v1592, %v1600
    %v1603 = vtanh.pop %v1602
    %1605 = vrot.lane.b32.xlu0 %v1603, 64
    %v1606 = vpop.permute.xlu0 %1605
    %v1608 = vmul.f32 %v1587, %v1606
    %1610 = vrot.lane.b32.xlu0 %v1608, 32
    %v1611 = vpop.permute.xlu0 %1610
    %1613 = vst.msk [vmem:[#allocation2] sm:$0x30] %vm528, %v1611
    %1614 = vst.msk [vmem:[#allocation2 + $0x6] sm:$0x30] %vm530, %v1611
    %1615 = vst.msk [vmem:[#allocation3 + $0x6] sm:$0x30] %vm528, %v1611
    %1616 = vst.msk [vmem:[#allocation3] sm:$0x30] %vm530, %v1611
    %v1617 = vrot.slane %v1608, 4
    %1618 = vrot.lane.b32.xlu0 %v1617, 32
    %v1619 = vpop.permute.xlu0 %1618
    %v1620 = vsel %vm196, %v1619, 0
    %1622 = vmatprep.subr.mxu0 0.0
    %1623 = vmatpush1.msra.mxu0 %v1101
    %1624 = vmatprep.subr.mxu0 0.0
    %1625 = vmatpush1.msra.mxu0 %v1102
    %1626 = vmatprep.subr.mxu0 0.0
    %1627 = vmatpush1.msra.mxu0 %v1103
    %1628 = vmatprep.subr.mxu0 0.0
    %1629 = vmatpush1.msra.mxu0 %v1104
    %1630 = vmatprep.subr.mxu0 0.0
    %1631 = vmatpush1.msra.mxu0 0.0
    %1632 = vmatprep.subr.mxu0 0.0
    %1633 = vmatpush1.msra.mxu0 0.0
    %1634 = vmatprep.subr.mxu0 0.0
    %1635 = vmatpush1.msra.mxu0 0.0
    %1636 = vmatprep.subr.mxu0 0.0
    %1637 = vmatpush1.msra.mxu0 0.0
    %1638 = vmatprep.subr.mxu0 0.0
    %1639 = vmatpush1.msra.mxu0 0.0
    %1640 = vmatprep.subr.mxu0 0.0
    %1641 = vmatpush1.msra.mxu0 0.0
    %1642 = vmatprep.subr.mxu0 0.0
    %1643 = vmatpush1.msra.mxu0 0.0
    %1644 = vmatprep.subr.mxu0 0.0
    %1645 = vmatpush1.msra.mxu0 0.0
    %1646 = vmatprep.subr.mxu0 0.0
    %1647 = vmatpush1.msra.mxu0 0.0
    %1648 = vmatprep.subr.mxu0 0.0
    %1649 = vmatpush1.msra.mxu0 0.0
    %1650 = vmatprep.subr.mxu0 0.0
    %1651 = vmatpush1.msra.mxu0 0.0
    %1652 = vmatprep.subr.mxu0 0.0
    %1653 = vmatpush1.msra.mxu0 0.0
    %1654 = vmatprep.subr.mxu0 0.0
    %1655 = vmatpush1.msra.mxu0 0.0
    %1656 = vmatprep.subr.mxu0 0.0
    %1657 = vmatpush1.msra.mxu0 0.0
    %1658 = vmatprep.subr.mxu0 0.0
    %1659 = vmatpush1.msra.mxu0 0.0
    %1660 = vmatprep.subr.mxu0 0.0
    %1661 = vmatpush1.msra.mxu0 0.0
    %1662 = vmatprep.subr.mxu0 0.0
    %1663 = vmatpush1.msra.mxu0 0.0
    %1664 = vmatprep.subr.mxu0 0.0
    %1665 = vmatpush1.msra.mxu0 0.0
    %1666 = vmatprep.subr.mxu0 0.0
    %1667 = vmatpush1.msra.mxu0 0.0
    %1668 = vmatprep.subr.mxu0 0.0
    %1669 = vmatpush1.msra.mxu0 0.0
    %1670 = vmatprep.subr.mxu0 0.0
    %1671 = vmatpush1.msra.mxu0 0.0
    %1672 = vmatprep.subr.mxu0 0.0
    %1673 = vmatpush1.msra.mxu0 0.0
    %1674 = vmatprep.subr.mxu0 0.0
    %1675 = vmatpush1.msra.mxu0 0.0
    %1676 = vmatprep.subr.mxu0 0.0
    %1677 = vmatpush1.msra.mxu0 0.0
    %1678 = vmatprep.subr.mxu0 0.0
    %1679 = vmatpush1.msra.mxu0 0.0
    %1680 = vmatprep.subr.mxu0 0.0
    %1681 = vmatpush1.msra.mxu0 0.0
    %1682 = vmatprep.subr.mxu0 0.0
    %1683 = vmatpush1.msra.mxu0 0.0
    %1684 = vmatprep.subr.mxu0 0.0
    %1685 = vmatpush1.msra.mxu0 0.0
    %1686 = vmatprep.mubr.f32.mxu0 0.0
    %1687 = vmatmul.mubr.f32.gmra.mrb[0].mxu0 %v1620
    %v1688 = vpop.f32.mrb[0].mxu0
    %v1689 = vadd.f32 0.0, %v1688
    %v1690 = vpop.f32.mrb[0].mxu0
    %1691 = vdwg.mxu0
    %v1693 = vrot.slane %v1689, 2
    %v1695 = vadd.f32 %v1287, %v1693
    %v1696 = vxor.u32 %v1695, 2147483648
    %v1697 = vmul.f32 %v1696, 1.442695
    %v1698 = vpow.pop %v1697
    %v1699 = vadd.f32 %v1698, 1.0
    %v1700 = vrcp.pop %v1699
    %v1701 = vmul.f32 1.0, %v1700
    %v1702 = vtanh.pop %v1695
    %v1704 = vrot.slane %v1602, 6
    %v1706 = vmul.f32 %v1701, %v1704
    %1708 = vrot.lane.b32.xlu0 %v1702, 64
    %v1709 = vpop.permute.xlu0 %1708
    %v1711 = vmul.f32 %v1701, %v1709
    %1713 = vrot.lane.b32.xlu0 %v1711, 32
    %v1714 = vpop.permute.xlu0 %1713
    %v1716 = vadd.f32 %v1706, %v1714
    %v1717 = vtanh.pop %v1716
    %1719 = vrot.lane.b32.xlu0 %v1717, 64
    %v1720 = vpop.permute.xlu0 %1719
    %v1722 = vmul.f32 %v1701, %v1720
    %1724 = vrot.lane.b32.xlu0 %v1722, 32
    %v1725 = vpop.permute.xlu0 %1724
    %1727 = vst.msk [vmem:[#allocation2] sm:$0xc0] %vm644, %v1725
    %1728 = vst.msk [vmem:[#allocation2 + $0x2] sm:$0xc0] %vm646, %v1725
    %1729 = vst.msk [vmem:[#allocation3 + $0x2] sm:$0xc0] %vm644, %v1725
    %1730 = vst.msk [vmem:[#allocation3] sm:$0xc0] %vm646, %v1725
    %v1731 = vrot.slane %v1722, 6
    %1732 = vrot.lane.b32.xlu0 %v1731, 32
    %v1733 = vpop.permute.xlu0 %1732
    %v1734 = vsel %vm196, %v1733, 0
    %1736 = vmatprep.subr.mxu0 0.0
    %1737 = vmatpush1.msra.mxu0 %v1101
    %1738 = vmatprep.subr.mxu0 0.0
    %1739 = vmatpush1.msra.mxu0 %v1102
    %1740 = vmatprep.subr.mxu0 0.0
    %1741 = vmatpush1.msra.mxu0 %v1103
    %1742 = vmatprep.subr.mxu0 0.0
    %1743 = vmatpush1.msra.mxu0 %v1104
    %1744 = vmatprep.subr.mxu0 0.0
    %1745 = vmatpush1.msra.mxu0 0.0
    %1746 = vmatprep.subr.mxu0 0.0
    %1747 = vmatpush1.msra.mxu0 0.0
    %1748 = vmatprep.subr.mxu0 0.0
    %1749 = vmatpush1.msra.mxu0 0.0
    %1750 = vmatprep.subr.mxu0 0.0
    %1751 = vmatpush1.msra.mxu0 0.0
    %1752 = vmatprep.subr.mxu0 0.0
    %1753 = vmatpush1.msra.mxu0 0.0
    %1754 = vmatprep.subr.mxu0 0.0
    %1755 = vmatpush1.msra.mxu0 0.0
    %1756 = vmatprep.subr.mxu0 0.0
    %1757 = vmatpush1.msra.mxu0 0.0
    %1758 = vmatprep.subr.mxu0 0.0
    %1759 = vmatpush1.msra.mxu0 0.0
    %1760 = vmatprep.subr.mxu0 0.0
    %1761 = vmatpush1.msra.mxu0 0.0
    %1762 = vmatprep.subr.mxu0 0.0
    %1763 = vmatpush1.msra.mxu0 0.0
    %1764 = vmatprep.subr.mxu0 0.0
    %1765 = vmatpush1.msra.mxu0 0.0
    %1766 = vmatprep.subr.mxu0 0.0
    %1767 = vmatpush1.msra.mxu0 0.0
    %1768 = vmatprep.subr.mxu0 0.0
    %1769 = vmatpush1.msra.mxu0 0.0
    %1770 = vmatprep.subr.mxu0 0.0
    %1771 = vmatpush1.msra.mxu0 0.0
    %1772 = vmatprep.subr.mxu0 0.0
    %1773 = vmatpush1.msra.mxu0 0.0
    %1774 = vmatprep.subr.mxu0 0.0
    %1775 = vmatpush1.msra.mxu0 0.0
    %1776 = vmatprep.subr.mxu0 0.0
    %1777 = vmatpush1.msra.mxu0 0.0
    %1778 = vmatprep.subr.mxu0 0.0
    %1779 = vmatpush1.msra.mxu0 0.0
    %1780 = vmatprep.subr.mxu0 0.0
    %1781 = vmatpush1.msra.mxu0 0.0
    %1782 = vmatprep.subr.mxu0 0.0
    %1783 = vmatpush1.msra.mxu0 0.0
    %1784 = vmatprep.subr.mxu0 0.0
    %1785 = vmatpush1.msra.mxu0 0.0
    %1786 = vmatprep.subr.mxu0 0.0
    %1787 = vmatpush1.msra.mxu0 0.0
    %1788 = vmatprep.subr.mxu0 0.0
    %1789 = vmatpush1.msra.mxu0 0.0
    %1790 = vmatprep.subr.mxu0 0.0
    %1791 = vmatpush1.msra.mxu0 0.0
    %1792 = vmatprep.subr.mxu0 0.0
    %1793 = vmatpush1.msra.mxu0 0.0
    %1794 = vmatprep.subr.mxu0 0.0
    %1795 = vmatpush1.msra.mxu0 0.0
    %1796 = vmatprep.subr.mxu0 0.0
    %1797 = vmatpush1.msra.mxu0 0.0
    %1798 = vmatprep.subr.mxu0 0.0
    %1799 = vmatpush1.msra.mxu0 0.0
    %1800 = vmatprep.mubr.f32.mxu0 0.0
    %1801 = vmatmul.mubr.f32.gmra.mrb[0].mxu0 %v1734
    %v1802 = vpop.f32.mrb[0].mxu0
    %v1803 = vadd.f32 0.0, %v1802
    %v1804 = vpop.f32.mrb[0].mxu0
    %1805 = vdwg.mxu0
    %v1806 = vadd.f32 %v1288, %v1803
    %v1807 = vxor.u32 %v1806, 2147483648
    %v1808 = vmul.f32 %v1807, 1.442695
    %v1809 = vpow.pop %v1808
    %v1810 = vadd.f32 %v1809, 1.0
    %v1811 = vrcp.pop %v1810
    %v1812 = vmul.f32 1.0, %v1811
    %v1813 = vtanh.pop %v1806
    %v1815 = vrot.slane %v1716, 6
    %v1817 = vmul.f32 %v1812, %v1815
    %1819 = vrot.lane.b32.xlu0 %v1813, 64
    %v1820 = vpop.permute.xlu0 %1819
    %v1822 = vmul.f32 %v1812, %v1820
    %1824 = vrot.lane.b32.xlu0 %v1822, 32
    %v1825 = vpop.permute.xlu0 %1824
    %v1827 = vadd.f32 %v1817, %v1825
    %v1828 = vtanh.pop %v1827
    %1830 = vrot.lane.b32.xlu0 %v1828, 64
    %v1831 = vpop.permute.xlu0 %1830
    %v1833 = vmul.f32 %v1812, %v1831
    %1835 = vrot.lane.b32.xlu0 %v1833, 32
    %v1836 = vpop.permute.xlu0 %1835
    %1838 = vst.msk [vmem:[#allocation2 + $0x8] sm:$0x3] %vm299, %v1836
    %1839 = vst.msk [vmem:[#allocation2 + $0x6] sm:$0x3] %vm301, %v1836
    %1840 = vst.msk [vmem:[#allocation3 + $0x6] sm:$0x3] %vm299, %v1836
    %1841 = vst.msk [vmem:[#allocation3 + $0x8] sm:$0x3] %vm301, %v1836
    %v1842 = vsel %vm196, %v1836, 0
    %1844 = vmatprep.subr.mxu0 0.0
    %1845 = vmatpush1.msra.mxu0 %v1101
    %1846 = vmatprep.subr.mxu0 0.0
    %1847 = vmatpush1.msra.mxu0 %v1102
    %1848 = vmatprep.subr.mxu0 0.0
    %1849 = vmatpush1.msra.mxu0 %v1103
    %1850 = vmatprep.subr.mxu0 0.0
    %1851 = vmatpush1.msra.mxu0 %v1104
    %1852 = vmatprep.subr.mxu0 0.0
    %1853 = vmatpush1.msra.mxu0 0.0
    %1854 = vmatprep.subr.mxu0 0.0
    %1855 = vmatpush1.msra.mxu0 0.0
    %1856 = vmatprep.subr.mxu0 0.0
    %1857 = vmatpush1.msra.mxu0 0.0
    %1858 = vmatprep.subr.mxu0 0.0
    %1859 = vmatpush1.msra.mxu0 0.0
    %1860 = vmatprep.subr.mxu0 0.0
    %1861 = vmatpush1.msra.mxu0 0.0
    %1862 = vmatprep.subr.mxu0 0.0
    %1863 = vmatpush1.msra.mxu0 0.0
    %1864 = vmatprep.subr.mxu0 0.0
    %1865 = vmatpush1.msra.mxu0 0.0
    %1866 = vmatprep.subr.mxu0 0.0
    %1867 = vmatpush1.msra.mxu0 0.0
    %1868 = vmatprep.subr.mxu0 0.0
    %1869 = vmatpush1.msra.mxu0 0.0
    %1870 = vmatprep.subr.mxu0 0.0
    %1871 = vmatpush1.msra.mxu0 0.0
    %1872 = vmatprep.subr.mxu0 0.0
    %1873 = vmatpush1.msra.mxu0 0.0
    %1874 = vmatprep.subr.mxu0 0.0
    %1875 = vmatpush1.msra.mxu0 0.0
    %1876 = vmatprep.subr.mxu0 0.0
    %1877 = vmatpush1.msra.mxu0 0.0
    %1878 = vmatprep.subr.mxu0 0.0
    %1879 = vmatpush1.msra.mxu0 0.0
    %1880 = vmatprep.subr.mxu0 0.0
    %1881 = vmatpush1.msra.mxu0 0.0
    %1882 = vmatprep.subr.mxu0 0.0
    %1883 = vmatpush1.msra.mxu0 0.0
    %1884 = vmatprep.subr.mxu0 0.0
    %1885 = vmatpush1.msra.mxu0 0.0
    %1886 = vmatprep.subr.mxu0 0.0
    %1887 = vmatpush1.msra.mxu0 0.0
    %1888 = vmatprep.subr.mxu0 0.0
    %1889 = vmatpush1.msra.mxu0 0.0
    %1890 = vmatprep.subr.mxu0 0.0
    %1891 = vmatpush1.msra.mxu0 0.0
    %1892 = vmatprep.subr.mxu0 0.0
    %1893 = vmatpush1.msra.mxu0 0.0
    %1894 = vmatprep.subr.mxu0 0.0
    %1895 = vmatpush1.msra.mxu0 0.0
    %1896 = vmatprep.subr.mxu0 0.0
    %1897 = vmatpush1.msra.mxu0 0.0
    %1898 = vmatprep.subr.mxu0 0.0
    %1899 = vmatpush1.msra.mxu0 0.0
    %1900 = vmatprep.subr.mxu0 0.0
    %1901 = vmatpush1.msra.mxu0 0.0
    %1902 = vmatprep.subr.mxu0 0.0
    %1903 = vmatpush1.msra.mxu0 0.0
    %1904 = vmatprep.subr.mxu0 0.0
    %1905 = vmatpush1.msra.mxu0 0.0
    %1906 = vmatprep.subr.mxu0 0.0
    %1907 = vmatpush1.msra.mxu0 0.0
    %1908 = vmatprep.mubr.f32.mxu0 0.0
    %1909 = vmatmul.mubr.f32.gmra.mrb[0].mxu0 %v1842
    %v1910 = vpop.f32.mrb[0].mxu0
    %v1911 = vadd.f32 0.0, %v1910
    %v1912 = vpop.f32.mrb[0].mxu0
    %1913 = vdwg.mxu0
    %v1915 = vrot.slane %v1911, 6
    %v1917 = vadd.f32 %v1288, %v1915
    %v1918 = vxor.u32 %v1917, 2147483648
    %v1919 = vmul.f32 %v1918, 1.442695
    %v1920 = vpow.pop %v1919
    %v1921 = vadd.f32 %v1920, 1.0
    %v1922 = vrcp.pop %v1921
    %v1923 = vmul.f32 1.0, %v1922
    %v1924 = vtanh.pop %v1917
    %v1926 = vrot.slane %v1827, 6
    %v1928 = vmul.f32 %v1923, %v1926
    %1930 = vrot.lane.b32.xlu0 %v1924, 64
    %v1931 = vpop.permute.xlu0 %1930
    %v1933 = vmul.f32 %v1923, %v1931
    %1935 = vrot.lane.b32.xlu0 %v1933, 32
    %v1936 = vpop.permute.xlu0 %1935
    %v1938 = vadd.f32 %v1928, %v1936
    %v1939 = vtanh.pop %v1938
    %1941 = vrot.lane.b32.xlu0 %v1939, 64
    %v1942 = vpop.permute.xlu0 %1941
    %v1944 = vmul.f32 %v1923, %v1942
    %1946 = vrot.lane.b32.xlu0 %v1944, 32
    %v1947 = vpop.permute.xlu0 %1946
    %1949 = vst.msk [vmem:[#allocation2 + $0x8] sm:$0xc] %vm412, %v1947
    %1950 = vst.msk [vmem:[#allocation2 + $0x2] sm:$0xc] %vm414, %v1947
    %1951 = vst.msk [vmem:[#allocation3 + $0x2] sm:$0xc] %vm412, %v1947
    %1952 = vst.msk [vmem:[#allocation3 + $0x8] sm:$0xc] %vm414, %v1947
    %v1953 = vrot.slane %v1944, 2
    %1954 = vrot.lane.b32.xlu0 %v1953, 32
    %v1955 = vpop.permute.xlu0 %1954
    %v1956 = vsel %vm196, %v1955, 0
    %1958 = vmatprep.subr.mxu0 0.0
    %1959 = vmatpush1.msra.mxu0 %v1101
    %1960 = vmatprep.subr.mxu0 0.0
    %1961 = vmatpush1.msra.mxu0 %v1102
    %1962 = vmatprep.subr.mxu0 0.0
    %1963 = vmatpush1.msra.mxu0 %v1103
    %1964 = vmatprep.subr.mxu0 0.0
    %1965 = vmatpush1.msra.mxu0 %v1104
    %1966 = vmatprep.subr.mxu0 0.0
    %1967 = vmatpush1.msra.mxu0 0.0
    %1968 = vmatprep.subr.mxu0 0.0
    %1969 = vmatpush1.msra.mxu0 0.0
    %1970 = vmatprep.subr.mxu0 0.0
    %1971 = vmatpush1.msra.mxu0 0.0
    %1972 = vmatprep.subr.mxu0 0.0
    %1973 = vmatpush1.msra.mxu0 0.0
    %1974 = vmatprep.subr.mxu0 0.0
    %1975 = vmatpush1.msra.mxu0 0.0
    %1976 = vmatprep.subr.mxu0 0.0
    %1977 = vmatpush1.msra.mxu0 0.0
    %1978 = vmatprep.subr.mxu0 0.0
    %1979 = vmatpush1.msra.mxu0 0.0
    %1980 = vmatprep.subr.mxu0 0.0
    %1981 = vmatpush1.msra.mxu0 0.0
    %1982 = vmatprep.subr.mxu0 0.0
    %1983 = vmatpush1.msra.mxu0 0.0
    %1984 = vmatprep.subr.mxu0 0.0
    %1985 = vmatpush1.msra.mxu0 0.0
    %1986 = vmatprep.subr.mxu0 0.0
    %1987 = vmatpush1.msra.mxu0 0.0
    %1988 = vmatprep.subr.mxu0 0.0
    %1989 = vmatpush1.msra.mxu0 0.0
    %1990 = vmatprep.subr.mxu0 0.0
    %1991 = vmatpush1.msra.mxu0 0.0
    %1992 = vmatprep.subr.mxu0 0.0
    %1993 = vmatpush1.msra.mxu0 0.0
    %1994 = vmatprep.subr.mxu0 0.0
    %1995 = vmatpush1.msra.mxu0 0.0
    %1996 = vmatprep.subr.mxu0 0.0
    %1997 = vmatpush1.msra.mxu0 0.0
    %1998 = vmatprep.subr.mxu0 0.0
    %1999 = vmatpush1.msra.mxu0 0.0
    %2000 = vmatprep.subr.mxu0 0.0
    %2001 = vmatpush1.msra.mxu0 0.0
    %2002 = vmatprep.subr.mxu0 0.0
    %2003 = vmatpush1.msra.mxu0 0.0
    %2004 = vmatprep.subr.mxu0 0.0
    %2005 = vmatpush1.msra.mxu0 0.0
    %2006 = vmatprep.subr.mxu0 0.0
    %2007 = vmatpush1.msra.mxu0 0.0
    %2008 = vmatprep.subr.mxu0 0.0
    %2009 = vmatpush1.msra.mxu0 0.0
    %2010 = vmatprep.subr.mxu0 0.0
    %2011 = vmatpush1.msra.mxu0 0.0
    %2012 = vmatprep.subr.mxu0 0.0
    %2013 = vmatpush1.msra.mxu0 0.0
    %2014 = vmatprep.subr.mxu0 0.0
    %2015 = vmatpush1.msra.mxu0 0.0
    %2016 = vmatprep.subr.mxu0 0.0
    %2017 = vmatpush1.msra.mxu0 0.0
    %2018 = vmatprep.subr.mxu0 0.0
    %2019 = vmatpush1.msra.mxu0 0.0
    %2020 = vmatprep.subr.mxu0 0.0
    %2021 = vmatpush1.msra.mxu0 0.0
    %2022 = vmatprep.mubr.f32.mxu0 0.0
    %2023 = vmatmul.mubr.f32.gmra.mrb[0].mxu0 %v1956
    %v2024 = vpop.f32.mrb[0].mxu0
    %v2025 = vadd.f32 0.0, %v2024
    %v2026 = vpop.f32.mrb[0].mxu0
    %2027 = vdwg.mxu0
    %v2029 = vrot.slane %v2025, 4
    %v2031 = vadd.f32 %v1288, %v2029
    %v2032 = vxor.u32 %v2031, 2147483648
    %v2033 = vmul.f32 %v2032, 1.442695
    %v2034 = vpow.pop %v2033
    %v2035 = vadd.f32 %v2034, 1.0
    %v2036 = vrcp.pop %v2035
    %v2037 = vmul.f32 1.0, %v2036
    %v2038 = vtanh.pop %v2031
    %v2040 = vrot.slane %v1938, 6
    %v2042 = vmul.f32 %v2037, %v2040
    %2044 = vrot.lane.b32.xlu0 %v2038, 64
    %v2045 = vpop.permute.xlu0 %2044
    %v2047 = vmul.f32 %v2037, %v2045
    %2049 = vrot.lane.b32.xlu0 %v2047, 32
    %v2050 = vpop.permute.xlu0 %2049
    %v2052 = vadd.f32 %v2042, %v2050
    %v2053 = vtanh.pop %v2052
    %2055 = vrot.lane.b32.xlu0 %v2053, 64
    %v2056 = vpop.permute.xlu0 %2055
    %v2058 = vmul.f32 %v2037, %v2056
    %2060 = vrot.lane.b32.xlu0 %v2058, 32
    %v2061 = vpop.permute.xlu0 %2060
    %2063 = vst.msk [vmem:[#allocation2 + $0x8] sm:$0x30] %vm528, %v2061
    %2064 = vst.msk [vmem:[#allocation2 - $0x2] sm:$0x30] %vm530, %v2061
    %2065 = vst.msk [vmem:[#allocation3 - $0x2] sm:$0x30] %vm528, %v2061
    %2066 = vst.msk [vmem:[#allocation3 + $0x8] sm:$0x30] %vm530, %v2061
    %v2067 = vrot.slane %v2058, 4
    %2068 = vrot.lane.b32.xlu0 %v2067, 32
    %v2069 = vpop.permute.xlu0 %2068
    %v2070 = vsel %vm196, %v2069, 0
    %2072 = vmatprep.subr.mxu0 0.0
    %2073 = vmatpush1.msra.mxu0 %v1101
    %2074 = vmatprep.subr.mxu0 0.0
    %2075 = vmatpush1.msra.mxu0 %v1102
    %2076 = vmatprep.subr.mxu0 0.0
    %2077 = vmatpush1.msra.mxu0 %v1103
    %2078 = vmatprep.subr.mxu0 0.0
    %2079 = vmatpush1.msra.mxu0 %v1104
    %2080 = vmatprep.subr.mxu0 0.0
    %2081 = vmatpush1.msra.mxu0 0.0
    %2082 = vmatprep.subr.mxu0 0.0
    %2083 = vmatpush1.msra.mxu0 0.0
    %2084 = vmatprep.subr.mxu0 0.0
    %2085 = vmatpush1.msra.mxu0 0.0
    %2086 = vmatprep.subr.mxu0 0.0
    %2087 = vmatpush1.msra.mxu0 0.0
    %2088 = vmatprep.subr.mxu0 0.0
    %2089 = vmatpush1.msra.mxu0 0.0
    %2090 = vmatprep.subr.mxu0 0.0
    %2091 = vmatpush1.msra.mxu0 0.0
    %2092 = vmatprep.subr.mxu0 0.0
    %2093 = vmatpush1.msra.mxu0 0.0
    %2094 = vmatprep.subr.mxu0 0.0
    %2095 = vmatpush1.msra.mxu0 0.0
    %2096 = vmatprep.subr.mxu0 0.0
    %2097 = vmatpush1.msra.mxu0 0.0
    %2098 = vmatprep.subr.mxu0 0.0
    %2099 = vmatpush1.msra.mxu0 0.0
    %2100 = vmatprep.subr.mxu0 0.0
    %2101 = vmatpush1.msra.mxu0 0.0
    %2102 = vmatprep.subr.mxu0 0.0
    %2103 = vmatpush1.msra.mxu0 0.0
    %2104 = vmatprep.subr.mxu0 0.0
    %2105 = vmatpush1.msra.mxu0 0.0
    %2106 = vmatprep.subr.mxu0 0.0
    %2107 = vmatpush1.msra.mxu0 0.0
    %2108 = vmatprep.subr.mxu0 0.0
    %2109 = vmatpush1.msra.mxu0 0.0
    %2110 = vmatprep.subr.mxu0 0.0
    %2111 = vmatpush1.msra.mxu0 0.0
    %2112 = vmatprep.subr.mxu0 0.0
    %2113 = vmatpush1.msra.mxu0 0.0
    %2114 = vmatprep.subr.mxu0 0.0
    %2115 = vmatpush1.msra.mxu0 0.0
    %2116 = vmatprep.subr.mxu0 0.0
    %2117 = vmatpush1.msra.mxu0 0.0
    %2118 = vmatprep.subr.mxu0 0.0
    %2119 = vmatpush1.msra.mxu0 0.0
    %2120 = vmatprep.subr.mxu0 0.0
    %2121 = vmatpush1.msra.mxu0 0.0
    %2122 = vmatprep.subr.mxu0 0.0
    %2123 = vmatpush1.msra.mxu0 0.0
    %2124 = vmatprep.subr.mxu0 0.0
    %2125 = vmatpush1.msra.mxu0 0.0
    %2126 = vmatprep.subr.mxu0 0.0
    %2127 = vmatpush1.msra.mxu0 0.0
    %2128 = vmatprep.subr.mxu0 0.0
    %2129 = vmatpush1.msra.mxu0 0.0
    %2130 = vmatprep.subr.mxu0 0.0
    %2131 = vmatpush1.msra.mxu0 0.0
    %2132 = vmatprep.subr.mxu0 0.0
    %2133 = vmatpush1.msra.mxu0 0.0
    %2134 = vmatprep.subr.mxu0 0.0
    %2135 = vmatpush1.msra.mxu0 0.0
    %2136 = vmatprep.mubr.f32.mxu0 0.0
    %2137 = vmatmul.mubr.f32.gmra.mrb[0].mxu0 %v2070
    %v2138 = vpop.f32.mrb[0].mxu0
    %v2139 = vadd.f32 0.0, %v2138
    %v2140 = vpop.f32.mrb[0].mxu0
    %2141 = vdwg.mxu0
    %v2143 = vrot.slane %v2139, 2
    %v2145 = vadd.f32 %v1288, %v2143
    %v2146 = vxor.u32 %v2145, 2147483648
    %v2147 = vmul.f32 %v2146, 1.442695
    %v2148 = vpow.pop %v2147
    %v2149 = vadd.f32 %v2148, 1.0
    %v2150 = vrcp.pop %v2149
    %v2151 = vmul.f32 1.0, %v2150
    %v2152 = vtanh.pop %v2145
    %v2154 = vrot.slane %v2052, 6
    %v2156 = vmul.f32 %v2151, %v2154
    %2158 = vrot.lane.b32.xlu0 %v2152, 64
    %v2159 = vpop.permute.xlu0 %2158
    %v2161 = vmul.f32 %v2151, %v2159
    %2163 = vrot.lane.b32.xlu0 %v2161, 32
    %v2164 = vpop.permute.xlu0 %2163
    %v2166 = vadd.f32 %v2156, %v2164
    %v2167 = vtanh.pop %v2166
    %2169 = vrot.lane.b32.xlu0 %v2167, 64
    %v2170 = vpop.permute.xlu0 %2169
    %v2172 = vmul.f32 %v2151, %v2170
    %2174 = vrot.lane.b32.xlu0 %v2172, 32
    %v2175 = vpop.permute.xlu0 %2174
    %2177 = vst.msk [vmem:[#allocation2 + $0x8] sm:$0xc0] %vm644, %v2175
    %2178 = vst.msk [vmem:[#allocation2 - $0x6] sm:$0xc0] %vm646, %v2175
    %2179 = vst.msk [vmem:[#allocation3 - $0x6] sm:$0xc0] %vm644, %v2175
    %2180 = vst.msk [vmem:[#allocation3 + $0x8] sm:$0xc0] %vm646, %v2175
    %s2181 = scalar_lea.vmem [#allocation10], 64
    %v2182 = vld [vmem:[%s2181] sm:$0xff]
    %v2183 = vld [vmem:[%s2181 + $0x8] sm:$0xff]
    %v2184 = vld [vmem:[%s2181 + $0x10] sm:$0xff]
    %v2185 = vld [vmem:[%s2181 + $0x18] sm:$0xff]
    %s2186 = scalar_lea.vmem %s4, 2
    %v2187 = vld [vmem:[%s2186] sm:$0x1]
    %v2188 = vld [vmem:[#allocation2] sm:$0xff]
    %v2189 = vld [vmem:[#allocation2 + $0x8] sm:$0xff]
    %v2190 = vld [vmem:[#allocation3] sm:$0xff]
    %v2191 = vld [vmem:[#allocation3 + $0x8] sm:$0xff]
    %s2192 = scalar_lea.vmem [#allocation9], 64
    %v2193 = vld [vmem:[%s2192] sm:$0xff]
    %v2194 = vld [vmem:[%s2192 + $0x8] sm:$0xff]
    %v2195 = vld [vmem:[%s2192 + $0x10] sm:$0xff]
    %v2196 = vld [vmem:[%s2192 + $0x18] sm:$0xff]
    %v2197 = vld [vmem:[%s2192 + $0x20] sm:$0xff]
    %v2198 = vld [vmem:[%s2192 + $0x28] sm:$0xff]
    %v2199 = vld [vmem:[%s2192 + $0x30] sm:$0xff]
    %v2200 = vld [vmem:[%s2192 + $0x38] sm:$0xff]
    %v2202 = vsel %vm196, %v2190, 0
    %v2205 = vsel %vm196, %v2191, 0
    %2207 = vmatprep.subr.mxu0 0.0
    %2208 = vmatpush1.msra.mxu0 %v2197
    %2209 = vmatprep.subr.mxu0 0.0
    %2210 = vmatpush1.msra.mxu0 %v2198
    %2211 = vmatprep.subr.mxu0 0.0
    %2212 = vmatpush1.msra.mxu0 %v2199
    %2213 = vmatprep.subr.mxu0 0.0
    %2214 = vmatpush1.msra.mxu0 %v2200
    %2215 = vmatprep.subr.mxu0 0.0
    %2216 = vmatpush1.msra.mxu0 0.0
    %2217 = vmatprep.subr.mxu0 0.0
    %2218 = vmatpush1.msra.mxu0 0.0
    %2219 = vmatprep.subr.mxu0 0.0
    %2220 = vmatpush1.msra.mxu0 0.0
    %2221 = vmatprep.subr.mxu0 0.0
    %2222 = vmatpush1.msra.mxu0 0.0
    %2223 = vmatprep.subr.mxu0 0.0
    %2224 = vmatpush1.msra.mxu0 0.0
    %2225 = vmatprep.subr.mxu0 0.0
    %2226 = vmatpush1.msra.mxu0 0.0
    %2227 = vmatprep.subr.mxu0 0.0
    %2228 = vmatpush1.msra.mxu0 0.0
    %2229 = vmatprep.subr.mxu0 0.0
    %2230 = vmatpush1.msra.mxu0 0.0
    %2231 = vmatprep.subr.mxu0 0.0
    %2232 = vmatpush1.msra.mxu0 0.0
    %2233 = vmatprep.subr.mxu0 0.0
    %2234 = vmatpush1.msra.mxu0 0.0
    %2235 = vmatprep.subr.mxu0 0.0
    %2236 = vmatpush1.msra.mxu0 0.0
    %2237 = vmatprep.subr.mxu0 0.0
    %2238 = vmatpush1.msra.mxu0 0.0
    %2239 = vmatprep.subr.mxu0 0.0
    %2240 = vmatpush1.msra.mxu0 0.0
    %2241 = vmatprep.subr.mxu0 0.0
    %2242 = vmatpush1.msra.mxu0 0.0
    %2243 = vmatprep.subr.mxu0 0.0
    %2244 = vmatpush1.msra.mxu0 0.0
    %2245 = vmatprep.subr.mxu0 0.0
    %2246 = vmatpush1.msra.mxu0 0.0
    %2247 = vmatprep.subr.mxu0 0.0
    %2248 = vmatpush1.msra.mxu0 0.0
    %2249 = vmatprep.subr.mxu0 0.0
    %2250 = vmatpush1.msra.mxu0 0.0
    %2251 = vmatprep.subr.mxu0 0.0
    %2252 = vmatpush1.msra.mxu0 0.0
    %2253 = vmatprep.subr.mxu0 0.0
    %2254 = vmatpush1.msra.mxu0 0.0
    %2255 = vmatprep.subr.mxu0 0.0
    %2256 = vmatpush1.msra.mxu0 0.0
    %2257 = vmatprep.subr.mxu0 0.0
    %2258 = vmatpush1.msra.mxu0 0.0
    %2259 = vmatprep.subr.mxu0 0.0
    %2260 = vmatpush1.msra.mxu0 0.0
    %2261 = vmatprep.subr.mxu0 0.0
    %2262 = vmatpush1.msra.mxu0 0.0
    %2263 = vmatprep.subr.mxu0 0.0
    %2264 = vmatpush1.msra.mxu0 0.0
    %2265 = vmatprep.subr.mxu0 0.0
    %2266 = vmatpush1.msra.mxu0 0.0
    %2267 = vmatprep.subr.mxu0 0.0
    %2268 = vmatpush1.msra.mxu0 0.0
    %2269 = vmatprep.subr.mxu0 0.0
    %2270 = vmatpush1.msra.mxu0 0.0
    %2271 = vmatprep.mubr.f32.mxu0 0.0
    %2272 = vmatmul.mubr.f32.gmra.mrb[0].mxu0 %v2202
    %v2273 = vpop.f32.mrb[0].mxu0
    %v2274 = vadd.f32 0.0, %v2273
    %v2275 = vpop.f32.mrb[0].mxu0
    %2276 = vmatprep.mubr.f32.mxu0 0.0
    %2277 = vmatmul.mubr.f32.gmra.mrb[0].mxu0 %v2205
    %v2278 = vpop.f32.mrb[0].mxu0
    %v2279 = vadd.f32 0.0, %v2278
    %v2280 = vpop.f32.mrb[0].mxu0
    %2281 = vdwg.mxu0
    %v2283 = vsel %vm196, %v2188, 0
    %v2286 = vsel %vm196, %v2189, 0
    %2288 = vmatprep.subr.mxu0 0.0
    %2289 = vmatpush1.msra.mxu0 %v2193
    %2290 = vmatprep.subr.mxu0 0.0
    %2291 = vmatpush1.msra.mxu0 %v2194
    %2292 = vmatprep.subr.mxu0 0.0
    %2293 = vmatpush1.msra.mxu0 %v2195
    %2294 = vmatprep.subr.mxu0 0.0
    %2295 = vmatpush1.msra.mxu0 %v2196
    %2296 = vmatprep.subr.mxu0 0.0
    %2297 = vmatpush1.msra.mxu0 0.0
    %2298 = vmatprep.subr.mxu0 0.0
    %2299 = vmatpush1.msra.mxu0 0.0
    %2300 = vmatprep.subr.mxu0 0.0
    %2301 = vmatpush1.msra.mxu0 0.0
    %2302 = vmatprep.subr.mxu0 0.0
    %2303 = vmatpush1.msra.mxu0 0.0
    %2304 = vmatprep.subr.mxu0 0.0
    %2305 = vmatpush1.msra.mxu0 0.0
    %2306 = vmatprep.subr.mxu0 0.0
    %2307 = vmatpush1.msra.mxu0 0.0
    %2308 = vmatprep.subr.mxu0 0.0
    %2309 = vmatpush1.msra.mxu0 0.0
    %2310 = vmatprep.subr.mxu0 0.0
    %2311 = vmatpush1.msra.mxu0 0.0
    %2312 = vmatprep.subr.mxu0 0.0
    %2313 = vmatpush1.msra.mxu0 0.0
    %2314 = vmatprep.subr.mxu0 0.0
    %2315 = vmatpush1.msra.mxu0 0.0
    %2316 = vmatprep.subr.mxu0 0.0
    %2317 = vmatpush1.msra.mxu0 0.0
    %2318 = vmatprep.subr.mxu0 0.0
    %2319 = vmatpush1.msra.mxu0 0.0
    %2320 = vmatprep.subr.mxu0 0.0
    %2321 = vmatpush1.msra.mxu0 0.0
    %2322 = vmatprep.subr.mxu0 0.0
    %2323 = vmatpush1.msra.mxu0 0.0
    %2324 = vmatprep.subr.mxu0 0.0
    %2325 = vmatpush1.msra.mxu0 0.0
    %2326 = vmatprep.subr.mxu0 0.0
    %2327 = vmatpush1.msra.mxu0 0.0
    %2328 = vmatprep.subr.mxu0 0.0
    %2329 = vmatpush1.msra.mxu0 0.0
    %2330 = vmatprep.subr.mxu0 0.0
    %2331 = vmatpush1.msra.mxu0 0.0
    %2332 = vmatprep.subr.mxu0 0.0
    %2333 = vmatpush1.msra.mxu0 0.0
    %2334 = vmatprep.subr.mxu0 0.0
    %2335 = vmatpush1.msra.mxu0 0.0
    %2336 = vmatprep.subr.mxu0 0.0
    %2337 = vmatpush1.msra.mxu0 0.0
    %2338 = vmatprep.subr.mxu0 0.0
    %2339 = vmatpush1.msra.mxu0 0.0
    %2340 = vmatprep.subr.mxu0 0.0
    %2341 = vmatpush1.msra.mxu0 0.0
    %2342 = vmatprep.subr.mxu0 0.0
    %2343 = vmatpush1.msra.mxu0 0.0
    %2344 = vmatprep.subr.mxu0 0.0
    %2345 = vmatpush1.msra.mxu0 0.0
    %2346 = vmatprep.subr.mxu0 0.0
    %2347 = vmatpush1.msra.mxu0 0.0
    %2348 = vmatprep.subr.mxu0 0.0
    %2349 = vmatpush1.msra.mxu0 0.0
    %2350 = vmatprep.subr.mxu0 0.0
    %2351 = vmatpush1.msra.mxu0 0.0
    %2352 = vmatprep.mubr.f32.mxu0 0.0
    %2353 = vmatmul.mubr.f32.gmra.mrb[0].mxu0 %v2283
    %v2354 = vpop.f32.mrb[0].mxu0
    %v2355 = vadd.f32 %v2274, %v2354
    %v2356 = vpop.f32.mrb[0].mxu0
    %2357 = vmatprep.mubr.f32.mxu0 0.0
    %2358 = vmatmul.mubr.f32.gmra.mrb[0].mxu0 %v2286
    %v2359 = vpop.f32.mrb[0].mxu0
    %v2360 = vadd.f32 %v2279, %v2359
    %v2361 = vpop.f32.mrb[0].mxu0
    %2362 = vdwg.mxu0
    %v2364 = vlaneseq
    %v2365 = vshrl.u32 %v2364, 7
    %v2366 = vsub.s32 0, %v2365
    %v2367 = vrot.slane %v2187, %v2366
    %v2369 = vadd.f32 %v2355, %v2367
    %v2370 = vadd.f32 %v2360, %v2367
    %2371 = vmatprep.subr.mxu0 0.0
    %2372 = vmatpush1.msra.mxu0 %v2182
    %2373 = vmatprep.subr.mxu0 0.0
    %2374 = vmatpush1.msra.mxu0 %v2183
    %2375 = vmatprep.subr.mxu0 0.0
    %2376 = vmatpush1.msra.mxu0 %v2184
    %2377 = vmatprep.subr.mxu0 0.0
    %2378 = vmatpush1.msra.mxu0 %v2185
    %2379 = vmatprep.subr.mxu0 0.0
    %2380 = vmatpush1.msra.mxu0 0.0
    %2381 = vmatprep.subr.mxu0 0.0
    %2382 = vmatpush1.msra.mxu0 0.0
    %2383 = vmatprep.subr.mxu0 0.0
    %2384 = vmatpush1.msra.mxu0 0.0
    %2385 = vmatprep.subr.mxu0 0.0
    %2386 = vmatpush1.msra.mxu0 0.0
    %2387 = vmatprep.subr.mxu0 0.0
    %2388 = vmatpush1.msra.mxu0 0.0
    %2389 = vmatprep.subr.mxu0 0.0
    %2390 = vmatpush1.msra.mxu0 0.0
    %2391 = vmatprep.subr.mxu0 0.0
    %2392 = vmatpush1.msra.mxu0 0.0
    %2393 = vmatprep.subr.mxu0 0.0
    %2394 = vmatpush1.msra.mxu0 0.0
    %2395 = vmatprep.subr.mxu0 0.0
    %2396 = vmatpush1.msra.mxu0 0.0
    %2397 = vmatprep.subr.mxu0 0.0
    %2398 = vmatpush1.msra.mxu0 0.0
    %2399 = vmatprep.subr.mxu0 0.0
    %2400 = vmatpush1.msra.mxu0 0.0
    %2401 = vmatprep.subr.mxu0 0.0
    %2402 = vmatpush1.msra.mxu0 0.0
    %2403 = vmatprep.subr.mxu0 0.0
    %2404 = vmatpush1.msra.mxu0 0.0
    %2405 = vmatprep.subr.mxu0 0.0
    %2406 = vmatpush1.msra.mxu0 0.0
    %2407 = vmatprep.subr.mxu0 0.0
    %2408 = vmatpush1.msra.mxu0 0.0
    %2409 = vmatprep.subr.mxu0 0.0
    %2410 = vmatpush1.msra.mxu0 0.0
    %2411 = vmatprep.subr.mxu0 0.0
    %2412 = vmatpush1.msra.mxu0 0.0
    %2413 = vmatprep.subr.mxu0 0.0
    %2414 = vmatpush1.msra.mxu0 0.0
    %2415 = vmatprep.subr.mxu0 0.0
    %2416 = vmatpush1.msra.mxu0 0.0
    %2417 = vmatprep.subr.mxu0 0.0
    %2418 = vmatpush1.msra.mxu0 0.0
    %2419 = vmatprep.subr.mxu0 0.0
    %2420 = vmatpush1.msra.mxu0 0.0
    %2421 = vmatprep.subr.mxu0 0.0
    %2422 = vmatpush1.msra.mxu0 0.0
    %2423 = vmatprep.subr.mxu0 0.0
    %2424 = vmatpush1.msra.mxu0 0.0
    %2425 = vmatprep.subr.mxu0 0.0
    %2426 = vmatpush1.msra.mxu0 0.0
    %2427 = vmatprep.subr.mxu0 0.0
    %2428 = vmatpush1.msra.mxu0 0.0
    %2429 = vmatprep.subr.mxu0 0.0
    %2430 = vmatpush1.msra.mxu0 0.0
    %2431 = vmatprep.subr.mxu0 0.0
    %2432 = vmatpush1.msra.mxu0 0.0
    %2433 = vmatprep.subr.mxu0 0.0
    %2434 = vmatpush1.msra.mxu0 0.0
    %2435 = vmatprep.mubr.f32.mxu0 0.0
    %2436 = vmatmul.mubr.f32.gmra.mrb[0].mxu0 %v198
    %v2437 = vpop.f32.mrb[0].mxu0
    %v2438 = vadd.f32 0.0, %v2437
    %v2439 = vpop.f32.mrb[0].mxu0
    %2440 = vdwg.mxu0
    %v2441 = vadd.f32 %v2369, %v2438
    %v2442 = vxor.u32 %v2441, 2147483648
    %v2443 = vmul.f32 %v2442, 1.442695
    %v2444 = vpow.pop %v2443
    %v2445 = vadd.f32 %v2444, 1.0
    %v2446 = vrcp.pop %v2445
    %v2447 = vmul.f32 1.0, %v2446
    %v2448 = vtanh.pop %v2441
    %v2449 = vmul.f32 %v2447, 0.0
    %2451 = vrot.lane.b32.xlu0 %v2448, 64
    %v2452 = vpop.permute.xlu0 %2451
    %v2454 = vmul.f32 %v2447, %v2452
    %2456 = vrot.lane.b32.xlu0 %v2454, 32
    %v2457 = vpop.permute.xlu0 %2456
    %v2459 = vadd.f32 %v2449, %v2457
    %v2460 = vtanh.pop %v2459
    %2462 = vrot.lane.b32.xlu0 %v2460, 64
    %v2463 = vpop.permute.xlu0 %2462
    %v2465 = vmul.f32 %v2447, %v2463
    %2467 = vrot.lane.b32.xlu0 %v2465, 32
    %v2468 = vpop.permute.xlu0 %2467
    %2470 = vst.msk [vmem:[#allocation2] sm:$0x3] %vm299, %v2468
    %2471 = vst.msk [vmem:[#allocation2 + $0xe] sm:$0x3] %vm301, %v2468
    %2472 = vst.msk [vmem:[#allocation3 + $0xe] sm:$0x3] %vm299, %v2468
    %2473 = vst.msk [vmem:[#allocation3] sm:$0x3] %vm301, %v2468
    %v2474 = vsel %vm196, %v2468, 0
    %2476 = vmatprep.subr.mxu0 0.0
    %2477 = vmatpush1.msra.mxu0 %v2182
    %2478 = vmatprep.subr.mxu0 0.0
    %2479 = vmatpush1.msra.mxu0 %v2183
    %2480 = vmatprep.subr.mxu0 0.0
    %2481 = vmatpush1.msra.mxu0 %v2184
    %2482 = vmatprep.subr.mxu0 0.0
    %2483 = vmatpush1.msra.mxu0 %v2185
    %2484 = vmatprep.subr.mxu0 0.0
    %2485 = vmatpush1.msra.mxu0 0.0
    %2486 = vmatprep.subr.mxu0 0.0
    %2487 = vmatpush1.msra.mxu0 0.0
    %2488 = vmatprep.subr.mxu0 0.0
    %2489 = vmatpush1.msra.mxu0 0.0
    %2490 = vmatprep.subr.mxu0 0.0
    %2491 = vmatpush1.msra.mxu0 0.0
    %2492 = vmatprep.subr.mxu0 0.0
    %2493 = vmatpush1.msra.mxu0 0.0
    %2494 = vmatprep.subr.mxu0 0.0
    %2495 = vmatpush1.msra.mxu0 0.0
    %2496 = vmatprep.subr.mxu0 0.0
    %2497 = vmatpush1.msra.mxu0 0.0
    %2498 = vmatprep.subr.mxu0 0.0
    %2499 = vmatpush1.msra.mxu0 0.0
    %2500 = vmatprep.subr.mxu0 0.0
    %2501 = vmatpush1.msra.mxu0 0.0
    %2502 = vmatprep.subr.mxu0 0.0
    %2503 = vmatpush1.msra.mxu0 0.0
    %2504 = vmatprep.subr.mxu0 0.0
    %2505 = vmatpush1.msra.mxu0 0.0
    %2506 = vmatprep.subr.mxu0 0.0
    %2507 = vmatpush1.msra.mxu0 0.0
    %2508 = vmatprep.subr.mxu0 0.0
    %2509 = vmatpush1.msra.mxu0 0.0
    %2510 = vmatprep.subr.mxu0 0.0
    %2511 = vmatpush1.msra.mxu0 0.0
    %2512 = vmatprep.subr.mxu0 0.0
    %2513 = vmatpush1.msra.mxu0 0.0
    %2514 = vmatprep.subr.mxu0 0.0
    %2515 = vmatpush1.msra.mxu0 0.0
    %2516 = vmatprep.subr.mxu0 0.0
    %2517 = vmatpush1.msra.mxu0 0.0
    %2518 = vmatprep.subr.mxu0 0.0
    %2519 = vmatpush1.msra.mxu0 0.0
    %2520 = vmatprep.subr.mxu0 0.0
    %2521 = vmatpush1.msra.mxu0 0.0
    %2522 = vmatprep.subr.mxu0 0.0
    %2523 = vmatpush1.msra.mxu0 0.0
    %2524 = vmatprep.subr.mxu0 0.0
    %2525 = vmatpush1.msra.mxu0 0.0
    %2526 = vmatprep.subr.mxu0 0.0
    %2527 = vmatpush1.msra.mxu0 0.0
    %2528 = vmatprep.subr.mxu0 0.0
    %2529 = vmatpush1.msra.mxu0 0.0
    %2530 = vmatprep.subr.mxu0 0.0
    %2531 = vmatpush1.msra.mxu0 0.0
    %2532 = vmatprep.subr.mxu0 0.0
    %2533 = vmatpush1.msra.mxu0 0.0
    %2534 = vmatprep.subr.mxu0 0.0
    %2535 = vmatpush1.msra.mxu0 0.0
    %2536 = vmatprep.subr.mxu0 0.0
    %2537 = vmatpush1.msra.mxu0 0.0
    %2538 = vmatprep.subr.mxu0 0.0
    %2539 = vmatpush1.msra.mxu0 0.0
    %2540 = vmatprep.mubr.f32.mxu0 0.0
    %2541 = vmatmul.mubr.f32.gmra.mrb[0].mxu0 %v2474
    %v2542 = vpop.f32.mrb[0].mxu0
    %v2543 = vadd.f32 0.0, %v2542
    %v2544 = vpop.f32.mrb[0].mxu0
    %2545 = vdwg.mxu0
    %v2547 = vrot.slane %v2543, 6
    %v2549 = vadd.f32 %v2369, %v2547
    %v2550 = vxor.u32 %v2549, 2147483648
    %v2551 = vmul.f32 %v2550, 1.442695
    %v2552 = vpow.pop %v2551
    %v2553 = vadd.f32 %v2552, 1.0
    %v2554 = vrcp.pop %v2553
    %v2555 = vmul.f32 1.0, %v2554
    %v2556 = vtanh.pop %v2549
    %v2558 = vrot.slane %v2459, 6
    %v2560 = vmul.f32 %v2555, %v2558
    %2562 = vrot.lane.b32.xlu0 %v2556, 64
    %v2563 = vpop.permute.xlu0 %2562
    %v2565 = vmul.f32 %v2555, %v2563
    %2567 = vrot.lane.b32.xlu0 %v2565, 32
    %v2568 = vpop.permute.xlu0 %2567
    %v2570 = vadd.f32 %v2560, %v2568
    %v2571 = vtanh.pop %v2570
    %2573 = vrot.lane.b32.xlu0 %v2571, 64
    %v2574 = vpop.permute.xlu0 %2573
    %v2576 = vmul.f32 %v2555, %v2574
    %2578 = vrot.lane.b32.xlu0 %v2576, 32
    %v2579 = vpop.permute.xlu0 %2578
    %2581 = vst.msk [vmem:[#allocation2] sm:$0xc] %vm412, %v2579
    %2582 = vst.msk [vmem:[#allocation2 + $0xa] sm:$0xc] %vm414, %v2579
    %2583 = vst.msk [vmem:[#allocation3 + $0xa] sm:$0xc] %vm412, %v2579
    %2584 = vst.msk [vmem:[#allocation3] sm:$0xc] %vm414, %v2579
    %v2585 = vrot.slane %v2576, 2
    %2586 = vrot.lane.b32.xlu0 %v2585, 32
    %v2587 = vpop.permute.xlu0 %2586
    %v2588 = vsel %vm196, %v2587, 0
    %2590 = vmatprep.subr.mxu0 0.0
    %2591 = vmatpush1.msra.mxu0 %v2182
    %2592 = vmatprep.subr.mxu0 0.0
    %2593 = vmatpush1.msra.mxu0 %v2183
    %2594 = vmatprep.subr.mxu0 0.0
    %2595 = vmatpush1.msra.mxu0 %v2184
    %2596 = vmatprep.subr.mxu0 0.0
    %2597 = vmatpush1.msra.mxu0 %v2185
    %2598 = vmatprep.subr.mxu0 0.0
    %2599 = vmatpush1.msra.mxu0 0.0
    %2600 = vmatprep.subr.mxu0 0.0
    %2601 = vmatpush1.msra.mxu0 0.0
    %2602 = vmatprep.subr.mxu0 0.0
    %2603 = vmatpush1.msra.mxu0 0.0
    %2604 = vmatprep.subr.mxu0 0.0
    %2605 = vmatpush1.msra.mxu0 0.0
    %2606 = vmatprep.subr.mxu0 0.0
    %2607 = vmatpush1.msra.mxu0 0.0
    %2608 = vmatprep.subr.mxu0 0.0
    %2609 = vmatpush1.msra.mxu0 0.0
    %2610 = vmatprep.subr.mxu0 0.0
    %2611 = vmatpush1.msra.mxu0 0.0
    %2612 = vmatprep.subr.mxu0 0.0
    %2613 = vmatpush1.msra.mxu0 0.0
    %2614 = vmatprep.subr.mxu0 0.0
    %2615 = vmatpush1.msra.mxu0 0.0
    %2616 = vmatprep.subr.mxu0 0.0
    %2617 = vmatpush1.msra.mxu0 0.0
    %2618 = vmatprep.subr.mxu0 0.0
    %2619 = vmatpush1.msra.mxu0 0.0
    %2620 = vmatprep.subr.mxu0 0.0
    %2621 = vmatpush1.msra.mxu0 0.0
    %2622 = vmatprep.subr.mxu0 0.0
    %2623 = vmatpush1.msra.mxu0 0.0
    %2624 = vmatprep.subr.mxu0 0.0
    %2625 = vmatpush1.msra.mxu0 0.0
    %2626 = vmatprep.subr.mxu0 0.0
    %2627 = vmatpush1.msra.mxu0 0.0
    %2628 = vmatprep.subr.mxu0 0.0
    %2629 = vmatpush1.msra.mxu0 0.0
    %2630 = vmatprep.subr.mxu0 0.0
    %2631 = vmatpush1.msra.mxu0 0.0
    %2632 = vmatprep.subr.mxu0 0.0
    %2633 = vmatpush1.msra.mxu0 0.0
    %2634 = vmatprep.subr.mxu0 0.0
    %2635 = vmatpush1.msra.mxu0 0.0
    %2636 = vmatprep.subr.mxu0 0.0
    %2637 = vmatpush1.msra.mxu0 0.0
    %2638 = vmatprep.subr.mxu0 0.0
    %2639 = vmatpush1.msra.mxu0 0.0
    %2640 = vmatprep.subr.mxu0 0.0
    %2641 = vmatpush1.msra.mxu0 0.0
    %2642 = vmatprep.subr.mxu0 0.0
    %2643 = vmatpush1.msra.mxu0 0.0
    %2644 = vmatprep.subr.mxu0 0.0
    %2645 = vmatpush1.msra.mxu0 0.0
    %2646 = vmatprep.subr.mxu0 0.0
    %2647 = vmatpush1.msra.mxu0 0.0
    %2648 = vmatprep.subr.mxu0 0.0
    %2649 = vmatpush1.msra.mxu0 0.0
    %2650 = vmatprep.subr.mxu0 0.0
    %2651 = vmatpush1.msra.mxu0 0.0
    %2652 = vmatprep.subr.mxu0 0.0
    %2653 = vmatpush1.msra.mxu0 0.0
    %2654 = vmatprep.mubr.f32.mxu0 0.0
    %2655 = vmatmul.mubr.f32.gmra.mrb[0].mxu0 %v2588
    %v2656 = vpop.f32.mrb[0].mxu0
    %v2657 = vadd.f32 0.0, %v2656
    %v2658 = vpop.f32.mrb[0].mxu0
    %2659 = vdwg.mxu0
    %v2661 = vrot.slane %v2657, 4
    %v2663 = vadd.f32 %v2369, %v2661
    %v2664 = vxor.u32 %v2663, 2147483648
    %v2665 = vmul.f32 %v2664, 1.442695
    %v2666 = vpow.pop %v2665
    %v2667 = vadd.f32 %v2666, 1.0
    %v2668 = vrcp.pop %v2667
    %v2669 = vmul.f32 1.0, %v2668
    %v2670 = vtanh.pop %v2663
    %v2672 = vrot.slane %v2570, 6
    %v2674 = vmul.f32 %v2669, %v2672
    %2676 = vrot.lane.b32.xlu0 %v2670, 64
    %v2677 = vpop.permute.xlu0 %2676
    %v2679 = vmul.f32 %v2669, %v2677
    %2681 = vrot.lane.b32.xlu0 %v2679, 32
    %v2682 = vpop.permute.xlu0 %2681
    %v2684 = vadd.f32 %v2674, %v2682
    %v2685 = vtanh.pop %v2684
    %2687 = vrot.lane.b32.xlu0 %v2685, 64
    %v2688 = vpop.permute.xlu0 %2687
    %v2690 = vmul.f32 %v2669, %v2688
    %2692 = vrot.lane.b32.xlu0 %v2690, 32
    %v2693 = vpop.permute.xlu0 %2692
    %2695 = vst.msk [vmem:[#allocation2] sm:$0x30] %vm528, %v2693
    %2696 = vst.msk [vmem:[#allocation2 + $0x6] sm:$0x30] %vm530, %v2693
    %2697 = vst.msk [vmem:[#allocation3 + $0x6] sm:$0x30] %vm528, %v2693
    %2698 = vst.msk [vmem:[#allocation3] sm:$0x30] %vm530, %v2693
    %v2699 = vrot.slane %v2690, 4
    %2700 = vrot.lane.b32.xlu0 %v2699, 32
    %v2701 = vpop.permute.xlu0 %2700
    %v2702 = vsel %vm196, %v2701, 0
    %2704 = vmatprep.subr.mxu0 0.0
    %2705 = vmatpush1.msra.mxu0 %v2182
    %2706 = vmatprep.subr.mxu0 0.0
    %2707 = vmatpush1.msra.mxu0 %v2183
    %2708 = vmatprep.subr.mxu0 0.0
    %2709 = vmatpush1.msra.mxu0 %v2184
    %2710 = vmatprep.subr.mxu0 0.0
    %2711 = vmatpush1.msra.mxu0 %v2185
    %2712 = vmatprep.subr.mxu0 0.0
    %2713 = vmatpush1.msra.mxu0 0.0
    %2714 = vmatprep.subr.mxu0 0.0
    %2715 = vmatpush1.msra.mxu0 0.0
    %2716 = vmatprep.subr.mxu0 0.0
    %2717 = vmatpush1.msra.mxu0 0.0
    %2718 = vmatprep.subr.mxu0 0.0
    %2719 = vmatpush1.msra.mxu0 0.0
    %2720 = vmatprep.subr.mxu0 0.0
    %2721 = vmatpush1.msra.mxu0 0.0
    %2722 = vmatprep.subr.mxu0 0.0
    %2723 = vmatpush1.msra.mxu0 0.0
    %2724 = vmatprep.subr.mxu0 0.0
    %2725 = vmatpush1.msra.mxu0 0.0
    %2726 = vmatprep.subr.mxu0 0.0
    %2727 = vmatpush1.msra.mxu0 0.0
    %2728 = vmatprep.subr.mxu0 0.0
    %2729 = vmatpush1.msra.mxu0 0.0
    %2730 = vmatprep.subr.mxu0 0.0
    %2731 = vmatpush1.msra.mxu0 0.0
    %2732 = vmatprep.subr.mxu0 0.0
    %2733 = vmatpush1.msra.mxu0 0.0
    %2734 = vmatprep.subr.mxu0 0.0
    %2735 = vmatpush1.msra.mxu0 0.0
    %2736 = vmatprep.subr.mxu0 0.0
    %2737 = vmatpush1.msra.mxu0 0.0
    %2738 = vmatprep.subr.mxu0 0.0
    %2739 = vmatpush1.msra.mxu0 0.0
    %2740 = vmatprep.subr.mxu0 0.0
    %2741 = vmatpush1.msra.mxu0 0.0
    %2742 = vmatprep.subr.mxu0 0.0
    %2743 = vmatpush1.msra.mxu0 0.0
    %2744 = vmatprep.subr.mxu0 0.0
    %2745 = vmatpush1.msra.mxu0 0.0
    %2746 = vmatprep.subr.mxu0 0.0
    %2747 = vmatpush1.msra.mxu0 0.0
    %2748 = vmatprep.subr.mxu0 0.0
    %2749 = vmatpush1.msra.mxu0 0.0
    %2750 = vmatprep.subr.mxu0 0.0
    %2751 = vmatpush1.msra.mxu0 0.0
    %2752 = vmatprep.subr.mxu0 0.0
    %2753 = vmatpush1.msra.mxu0 0.0
    %2754 = vmatprep.subr.mxu0 0.0
    %2755 = vmatpush1.msra.mxu0 0.0
    %2756 = vmatprep.subr.mxu0 0.0
    %2757 = vmatpush1.msra.mxu0 0.0
    %2758 = vmatprep.subr.mxu0 0.0
    %2759 = vmatpush1.msra.mxu0 0.0
    %2760 = vmatprep.subr.mxu0 0.0
    %2761 = vmatpush1.msra.mxu0 0.0
    %2762 = vmatprep.subr.mxu0 0.0
    %2763 = vmatpush1.msra.mxu0 0.0
    %2764 = vmatprep.subr.mxu0 0.0
    %2765 = vmatpush1.msra.mxu0 0.0
    %2766 = vmatprep.subr.mxu0 0.0
    %2767 = vmatpush1.msra.mxu0 0.0
    %2768 = vmatprep.mubr.f32.mxu0 0.0
    %2769 = vmatmul.mubr.f32.gmra.mrb[0].mxu0 %v2702
    %v2770 = vpop.f32.mrb[0].mxu0
    %v2771 = vadd.f32 0.0, %v2770
    %v2772 = vpop.f32.mrb[0].mxu0
    %2773 = vdwg.mxu0
    %v2775 = vrot.slane %v2771, 2
    %v2777 = vadd.f32 %v2369, %v2775
    %v2778 = vxor.u32 %v2777, 2147483648
    %v2779 = vmul.f32 %v2778, 1.442695
    %v2780 = vpow.pop %v2779
    %v2781 = vadd.f32 %v2780, 1.0
    %v2782 = vrcp.pop %v2781
    %v2783 = vmul.f32 1.0, %v2782
    %v2784 = vtanh.pop %v2777
    %v2786 = vrot.slane %v2684, 6
    %v2788 = vmul.f32 %v2783, %v2786
    %2790 = vrot.lane.b32.xlu0 %v2784, 64
    %v2791 = vpop.permute.xlu0 %2790
    %v2793 = vmul.f32 %v2783, %v2791
    %2795 = vrot.lane.b32.xlu0 %v2793, 32
    %v2796 = vpop.permute.xlu0 %2795
    %v2798 = vadd.f32 %v2788, %v2796
    %v2799 = vtanh.pop %v2798
    %2801 = vrot.lane.b32.xlu0 %v2799, 64
    %v2802 = vpop.permute.xlu0 %2801
    %v2804 = vmul.f32 %v2783, %v2802
    %2806 = vrot.lane.b32.xlu0 %v2804, 32
    %v2807 = vpop.permute.xlu0 %2806
    %2809 = vst.msk [vmem:[#allocation2] sm:$0xc0] %vm644, %v2807
    %2810 = vst.msk [vmem:[#allocation2 + $0x2] sm:$0xc0] %vm646, %v2807
    %2811 = vst.msk [vmem:[#allocation3 + $0x2] sm:$0xc0] %vm644, %v2807
    %2812 = vst.msk [vmem:[#allocation3] sm:$0xc0] %vm646, %v2807
    %v2813 = vrot.slane %v2804, 6
    %2814 = vrot.lane.b32.xlu0 %v2813, 32
    %v2815 = vpop.permute.xlu0 %2814
    %v2816 = vsel %vm196, %v2815, 0
    %2818 = vmatprep.subr.mxu0 0.0
    %2819 = vmatpush1.msra.mxu0 %v2182
    %2820 = vmatprep.subr.mxu0 0.0
    %2821 = vmatpush1.msra.mxu0 %v2183
    %2822 = vmatprep.subr.mxu0 0.0
    %2823 = vmatpush1.msra.mxu0 %v2184
    %2824 = vmatprep.subr.mxu0 0.0
    %2825 = vmatpush1.msra.mxu0 %v2185
    %2826 = vmatprep.subr.mxu0 0.0
    %2827 = vmatpush1.msra.mxu0 0.0
    %2828 = vmatprep.subr.mxu0 0.0
    %2829 = vmatpush1.msra.mxu0 0.0
    %2830 = vmatprep.subr.mxu0 0.0
    %2831 = vmatpush1.msra.mxu0 0.0
    %2832 = vmatprep.subr.mxu0 0.0
    %2833 = vmatpush1.msra.mxu0 0.0
    %2834 = vmatprep.subr.mxu0 0.0
    %2835 = vmatpush1.msra.mxu0 0.0
    %2836 = vmatprep.subr.mxu0 0.0
    %2837 = vmatpush1.msra.mxu0 0.0
    %2838 = vmatprep.subr.mxu0 0.0
    %2839 = vmatpush1.msra.mxu0 0.0
    %2840 = vmatprep.subr.mxu0 0.0
    %2841 = vmatpush1.msra.mxu0 0.0
    %2842 = vmatprep.subr.mxu0 0.0
    %2843 = vmatpush1.msra.mxu0 0.0
    %2844 = vmatprep.subr.mxu0 0.0
    %2845 = vmatpush1.msra.mxu0 0.0
    %2846 = vmatprep.subr.mxu0 0.0
    %2847 = vmatpush1.msra.mxu0 0.0
    %2848 = vmatprep.subr.mxu0 0.0
    %2849 = vmatpush1.msra.mxu0 0.0
    %2850 = vmatprep.subr.mxu0 0.0
    %2851 = vmatpush1.msra.mxu0 0.0
    %2852 = vmatprep.subr.mxu0 0.0
    %2853 = vmatpush1.msra.mxu0 0.0
    %2854 = vmatprep.subr.mxu0 0.0
    %2855 = vmatpush1.msra.mxu0 0.0
    %2856 = vmatprep.subr.mxu0 0.0
    %2857 = vmatpush1.msra.mxu0 0.0
    %2858 = vmatprep.subr.mxu0 0.0
    %2859 = vmatpush1.msra.mxu0 0.0
    %2860 = vmatprep.subr.mxu0 0.0
    %2861 = vmatpush1.msra.mxu0 0.0
    %2862 = vmatprep.subr.mxu0 0.0
    %2863 = vmatpush1.msra.mxu0 0.0
    %2864 = vmatprep.subr.mxu0 0.0
    %2865 = vmatpush1.msra.mxu0 0.0
    %2866 = vmatprep.subr.mxu0 0.0
    %2867 = vmatpush1.msra.mxu0 0.0
    %2868 = vmatprep.subr.mxu0 0.0
    %2869 = vmatpush1.msra.mxu0 0.0
    %2870 = vmatprep.subr.mxu0 0.0
    %2871 = vmatpush1.msra.mxu0 0.0
    %2872 = vmatprep.subr.mxu0 0.0
    %2873 = vmatpush1.msra.mxu0 0.0
    %2874 = vmatprep.subr.mxu0 0.0
    %2875 = vmatpush1.msra.mxu0 0.0
    %2876 = vmatprep.subr.mxu0 0.0
    %2877 = vmatpush1.msra.mxu0 0.0
    %2878 = vmatprep.subr.mxu0 0.0
    %2879 = vmatpush1.msra.mxu0 0.0
    %2880 = vmatprep.subr.mxu0 0.0
    %2881 = vmatpush1.msra.mxu0 0.0
    %2882 = vmatprep.mubr.f32.mxu0 0.0
    %2883 = vmatmul.mubr.f32.gmra.mrb[0].mxu0 %v2816
    %v2884 = vpop.f32.mrb[0].mxu0
    %v2885 = vadd.f32 0.0, %v2884
    %v2886 = vpop.f32.mrb[0].mxu0
    %2887 = vdwg.mxu0
    %v2888 = vadd.f32 %v2370, %v2885
    %v2889 = vxor.u32 %v2888, 2147483648
    %v2890 = vmul.f32 %v2889, 1.442695
    %v2891 = vpow.pop %v2890
    %v2892 = vadd.f32 %v2891, 1.0
    %v2893 = vrcp.pop %v2892
    %v2894 = vmul.f32 1.0, %v2893
    %v2895 = vtanh.pop %v2888
    %v2897 = vrot.slane %v2798, 6
    %v2899 = vmul.f32 %v2894, %v2897
    %2901 = vrot.lane.b32.xlu0 %v2895, 64
    %v2902 = vpop.permute.xlu0 %2901
    %v2904 = vmul.f32 %v2894, %v2902
    %2906 = vrot.lane.b32.xlu0 %v2904, 32
    %v2907 = vpop.permute.xlu0 %2906
    %v2909 = vadd.f32 %v2899, %v2907
    %v2910 = vtanh.pop %v2909
    %2912 = vrot.lane.b32.xlu0 %v2910, 64
    %v2913 = vpop.permute.xlu0 %2912
    %v2915 = vmul.f32 %v2894, %v2913
    %2917 = vrot.lane.b32.xlu0 %v2915, 32
    %v2918 = vpop.permute.xlu0 %2917
    %2920 = vst.msk [vmem:[#allocation2 + $0x8] sm:$0x3] %vm299, %v2918
    %2921 = vst.msk [vmem:[#allocation2 + $0x6] sm:$0x3] %vm301, %v2918
    %2922 = vst.msk [vmem:[#allocation3 + $0x6] sm:$0x3] %vm299, %v2918
    %2923 = vst.msk [vmem:[#allocation3 + $0x8] sm:$0x3] %vm301, %v2918
    %v2924 = vsel %vm196, %v2918, 0
    %2926 = vmatprep.subr.mxu0 0.0
    %2927 = vmatpush1.msra.mxu0 %v2182
    %2928 = vmatprep.subr.mxu0 0.0
    %2929 = vmatpush1.msra.mxu0 %v2183
    %2930 = vmatprep.subr.mxu0 0.0
    %2931 = vmatpush1.msra.mxu0 %v2184
    %2932 = vmatprep.subr.mxu0 0.0
    %2933 = vmatpush1.msra.mxu0 %v2185
    %2934 = vmatprep.subr.mxu0 0.0
    %2935 = vmatpush1.msra.mxu0 0.0
    %2936 = vmatprep.subr.mxu0 0.0
    %2937 = vmatpush1.msra.mxu0 0.0
    %2938 = vmatprep.subr.mxu0 0.0
    %2939 = vmatpush1.msra.mxu0 0.0
    %2940 = vmatprep.subr.mxu0 0.0
    %2941 = vmatpush1.msra.mxu0 0.0
    %2942 = vmatprep.subr.mxu0 0.0
    %2943 = vmatpush1.msra.mxu0 0.0
    %2944 = vmatprep.subr.mxu0 0.0
    %2945 = vmatpush1.msra.mxu0 0.0
    %2946 = vmatprep.subr.mxu0 0.0
    %2947 = vmatpush1.msra.mxu0 0.0
    %2948 = vmatprep.subr.mxu0 0.0
    %2949 = vmatpush1.msra.mxu0 0.0
    %2950 = vmatprep.subr.mxu0 0.0
    %2951 = vmatpush1.msra.mxu0 0.0
    %2952 = vmatprep.subr.mxu0 0.0
    %2953 = vmatpush1.msra.mxu0 0.0
    %2954 = vmatprep.subr.mxu0 0.0
    %2955 = vmatpush1.msra.mxu0 0.0
    %2956 = vmatprep.subr.mxu0 0.0
    %2957 = vmatpush1.msra.mxu0 0.0
    %2958 = vmatprep.subr.mxu0 0.0
    %2959 = vmatpush1.msra.mxu0 0.0
    %2960 = vmatprep.subr.mxu0 0.0
    %2961 = vmatpush1.msra.mxu0 0.0
    %2962 = vmatprep.subr.mxu0 0.0
    %2963 = vmatpush1.msra.mxu0 0.0
    %2964 = vmatprep.subr.mxu0 0.0
    %2965 = vmatpush1.msra.mxu0 0.0
    %2966 = vmatprep.subr.mxu0 0.0
    %2967 = vmatpush1.msra.mxu0 0.0
    %2968 = vmatprep.subr.mxu0 0.0
    %2969 = vmatpush1.msra.mxu0 0.0
    %2970 = vmatprep.subr.mxu0 0.0
    %2971 = vmatpush1.msra.mxu0 0.0
    %2972 = vmatprep.subr.mxu0 0.0
    %2973 = vmatpush1.msra.mxu0 0.0
    %2974 = vmatprep.subr.mxu0 0.0
    %2975 = vmatpush1.msra.mxu0 0.0
    %2976 = vmatprep.subr.mxu0 0.0
    %2977 = vmatpush1.msra.mxu0 0.0
    %2978 = vmatprep.subr.mxu0 0.0
    %2979 = vmatpush1.msra.mxu0 0.0
    %2980 = vmatprep.subr.mxu0 0.0
    %2981 = vmatpush1.msra.mxu0 0.0
    %2982 = vmatprep.subr.mxu0 0.0
    %2983 = vmatpush1.msra.mxu0 0.0
    %2984 = vmatprep.subr.mxu0 0.0
    %2985 = vmatpush1.msra.mxu0 0.0
    %2986 = vmatprep.subr.mxu0 0.0
    %2987 = vmatpush1.msra.mxu0 0.0
    %2988 = vmatprep.subr.mxu0 0.0
    %2989 = vmatpush1.msra.mxu0 0.0
    %2990 = vmatprep.mubr.f32.mxu0 0.0
    %2991 = vmatmul.mubr.f32.gmra.mrb[0].mxu0 %v2924
    %v2992 = vpop.f32.mrb[0].mxu0
    %v2993 = vadd.f32 0.0, %v2992
    %v2994 = vpop.f32.mrb[0].mxu0
    %2995 = vdwg.mxu0
    %v2997 = vrot.slane %v2993, 6
    %v2999 = vadd.f32 %v2370, %v2997
    %v3000 = vxor.u32 %v2999, 2147483648
    %v3001 = vmul.f32 %v3000, 1.442695
    %v3002 = vpow.pop %v3001
    %v3003 = vadd.f32 %v3002, 1.0
    %v3004 = vrcp.pop %v3003
    %v3005 = vmul.f32 1.0, %v3004
    %v3006 = vtanh.pop %v2999
    %v3008 = vrot.slane %v2909, 6
    %v3010 = vmul.f32 %v3005, %v3008
    %3012 = vrot.lane.b32.xlu0 %v3006, 64
    %v3013 = vpop.permute.xlu0 %3012
    %v3015 = vmul.f32 %v3005, %v3013
    %3017 = vrot.lane.b32.xlu0 %v3015, 32
    %v3018 = vpop.permute.xlu0 %3017
    %v3020 = vadd.f32 %v3010, %v3018
    %v3021 = vtanh.pop %v3020
    %3023 = vrot.lane.b32.xlu0 %v3021, 64
    %v3024 = vpop.permute.xlu0 %3023
    %v3026 = vmul.f32 %v3005, %v3024
    %3028 = vrot.lane.b32.xlu0 %v3026, 32
    %v3029 = vpop.permute.xlu0 %3028
    %3031 = vst.msk [vmem:[#allocation2 + $0x8] sm:$0xc] %vm412, %v3029
    %3032 = vst.msk [vmem:[#allocation2 + $0x2] sm:$0xc] %vm414, %v3029
    %3033 = vst.msk [vmem:[#allocation3 + $0x2] sm:$0xc] %vm412, %v3029
    %3034 = vst.msk [vmem:[#allocation3 + $0x8] sm:$0xc] %vm414, %v3029
    %v3035 = vrot.slane %v3026, 2
    %3036 = vrot.lane.b32.xlu0 %v3035, 32
    %v3037 = vpop.permute.xlu0 %3036
    %v3038 = vsel %vm196, %v3037, 0
    %3040 = vmatprep.subr.mxu0 0.0
    %3041 = vmatpush1.msra.mxu0 %v2182
    %3042 = vmatprep.subr.mxu0 0.0
    %3043 = vmatpush1.msra.mxu0 %v2183
    %3044 = vmatprep.subr.mxu0 0.0
    %3045 = vmatpush1.msra.mxu0 %v2184
    %3046 = vmatprep.subr.mxu0 0.0
    %3047 = vmatpush1.msra.mxu0 %v2185
    %3048 = vmatprep.subr.mxu0 0.0
    %3049 = vmatpush1.msra.mxu0 0.0
    %3050 = vmatprep.subr.mxu0 0.0
    %3051 = vmatpush1.msra.mxu0 0.0
    %3052 = vmatprep.subr.mxu0 0.0
    %3053 = vmatpush1.msra.mxu0 0.0
    %3054 = vmatprep.subr.mxu0 0.0
    %3055 = vmatpush1.msra.mxu0 0.0
    %3056 = vmatprep.subr.mxu0 0.0
    %3057 = vmatpush1.msra.mxu0 0.0
    %3058 = vmatprep.subr.mxu0 0.0
    %3059 = vmatpush1.msra.mxu0 0.0
    %3060 = vmatprep.subr.mxu0 0.0
    %3061 = vmatpush1.msra.mxu0 0.0
    %3062 = vmatprep.subr.mxu0 0.0
    %3063 = vmatpush1.msra.mxu0 0.0
    %3064 = vmatprep.subr.mxu0 0.0
    %3065 = vmatpush1.msra.mxu0 0.0
    %3066 = vmatprep.subr.mxu0 0.0
    %3067 = vmatpush1.msra.mxu0 0.0
    %3068 = vmatprep.subr.mxu0 0.0
    %3069 = vmatpush1.msra.mxu0 0.0
    %3070 = vmatprep.subr.mxu0 0.0
    %3071 = vmatpush1.msra.mxu0 0.0
    %3072 = vmatprep.subr.mxu0 0.0
    %3073 = vmatpush1.msra.mxu0 0.0
    %3074 = vmatprep.subr.mxu0 0.0
    %3075 = vmatpush1.msra.mxu0 0.0
    %3076 = vmatprep.subr.mxu0 0.0
    %3077 = vmatpush1.msra.mxu0 0.0
    %3078 = vmatprep.subr.mxu0 0.0
    %3079 = vmatpush1.msra.mxu0 0.0
    %3080 = vmatprep.subr.mxu0 0.0
    %3081 = vmatpush1.msra.mxu0 0.0
    %3082 = vmatprep.subr.mxu0 0.0
    %3083 = vmatpush1.msra.mxu0 0.0
    %3084 = vmatprep.subr.mxu0 0.0
    %3085 = vmatpush1.msra.mxu0 0.0
    %3086 = vmatprep.subr.mxu0 0.0
    %3087 = vmatpush1.msra.mxu0 0.0
    %3088 = vmatprep.subr.mxu0 0.0
    %3089 = vmatpush1.msra.mxu0 0.0
    %3090 = vmatprep.subr.mxu0 0.0
    %3091 = vmatpush1.msra.mxu0 0.0
    %3092 = vmatprep.subr.mxu0 0.0
    %3093 = vmatpush1.msra.mxu0 0.0
    %3094 = vmatprep.subr.mxu0 0.0
    %3095 = vmatpush1.msra.mxu0 0.0
    %3096 = vmatprep.subr.mxu0 0.0
    %3097 = vmatpush1.msra.mxu0 0.0
    %3098 = vmatprep.subr.mxu0 0.0
    %3099 = vmatpush1.msra.mxu0 0.0
    %3100 = vmatprep.subr.mxu0 0.0
    %3101 = vmatpush1.msra.mxu0 0.0
    %3102 = vmatprep.subr.mxu0 0.0
    %3103 = vmatpush1.msra.mxu0 0.0
    %3104 = vmatprep.mubr.f32.mxu0 0.0
    %3105 = vmatmul.mubr.f32.gmra.mrb[0].mxu0 %v3038
    %v3106 = vpop.f32.mrb[0].mxu0
    %v3107 = vadd.f32 0.0, %v3106
    %v3108 = vpop.f32.mrb[0].mxu0
    %3109 = vdwg.mxu0
    %v3111 = vrot.slane %v3107, 4
    %v3113 = vadd.f32 %v2370, %v3111
    %v3114 = vxor.u32 %v3113, 2147483648
    %v3115 = vmul.f32 %v3114, 1.442695
    %v3116 = vpow.pop %v3115
    %v3117 = vadd.f32 %v3116, 1.0
    %v3118 = vrcp.pop %v3117
    %v3119 = vmul.f32 1.0, %v3118
    %v3120 = vtanh.pop %v3113
    %v3122 = vrot.slane %v3020, 6
    %v3124 = vmul.f32 %v3119, %v3122
    %3126 = vrot.lane.b32.xlu0 %v3120, 64
    %v3127 = vpop.permute.xlu0 %3126
    %v3129 = vmul.f32 %v3119, %v3127
    %3131 = vrot.lane.b32.xlu0 %v3129, 32
    %v3132 = vpop.permute.xlu0 %3131
    %v3134 = vadd.f32 %v3124, %v3132
    %v3135 = vtanh.pop %v3134
    %3137 = vrot.lane.b32.xlu0 %v3135, 64
    %v3138 = vpop.permute.xlu0 %3137
    %v3140 = vmul.f32 %v3119, %v3138
    %3142 = vrot.lane.b32.xlu0 %v3140, 32
    %v3143 = vpop.permute.xlu0 %3142
    %3145 = vst.msk [vmem:[#allocation2 + $0x8] sm:$0x30] %vm528, %v3143
    %3146 = vst.msk [vmem:[#allocation2 - $0x2] sm:$0x30] %vm530, %v3143
    %3147 = vst.msk [vmem:[#allocation3 - $0x2] sm:$0x30] %vm528, %v3143
    %3148 = vst.msk [vmem:[#allocation3 + $0x8] sm:$0x30] %vm530, %v3143
    %v3149 = vrot.slane %v3140, 4
    %3150 = vrot.lane.b32.xlu0 %v3149, 32
    %v3151 = vpop.permute.xlu0 %3150
    %v3152 = vsel %vm196, %v3151, 0
    %3154 = vmatprep.subr.mxu0 0.0
    %3155 = vmatpush1.msra.mxu0 %v2182
    %3156 = vmatprep.subr.mxu0 0.0
    %3157 = vmatpush1.msra.mxu0 %v2183
    %3158 = vmatprep.subr.mxu0 0.0
    %3159 = vmatpush1.msra.mxu0 %v2184
    %3160 = vmatprep.subr.mxu0 0.0
    %3161 = vmatpush1.msra.mxu0 %v2185
    %3162 = vmatprep.subr.mxu0 0.0
    %3163 = vmatpush1.msra.mxu0 0.0
    %3164 = vmatprep.subr.mxu0 0.0
    %3165 = vmatpush1.msra.mxu0 0.0
    %3166 = vmatprep.subr.mxu0 0.0
    %3167 = vmatpush1.msra.mxu0 0.0
    %3168 = vmatprep.subr.mxu0 0.0
    %3169 = vmatpush1.msra.mxu0 0.0
    %3170 = vmatprep.subr.mxu0 0.0
    %3171 = vmatpush1.msra.mxu0 0.0
    %3172 = vmatprep.subr.mxu0 0.0
    %3173 = vmatpush1.msra.mxu0 0.0
    %3174 = vmatprep.subr.mxu0 0.0
    %3175 = vmatpush1.msra.mxu0 0.0
    %3176 = vmatprep.subr.mxu0 0.0
    %3177 = vmatpush1.msra.mxu0 0.0
    %3178 = vmatprep.subr.mxu0 0.0
    %3179 = vmatpush1.msra.mxu0 0.0
    %3180 = vmatprep.subr.mxu0 0.0
    %3181 = vmatpush1.msra.mxu0 0.0
    %3182 = vmatprep.subr.mxu0 0.0
    %3183 = vmatpush1.msra.mxu0 0.0
    %3184 = vmatprep.subr.mxu0 0.0
    %3185 = vmatpush1.msra.mxu0 0.0
    %3186 = vmatprep.subr.mxu0 0.0
    %3187 = vmatpush1.msra.mxu0 0.0
    %3188 = vmatprep.subr.mxu0 0.0
    %3189 = vmatpush1.msra.mxu0 0.0
    %3190 = vmatprep.subr.mxu0 0.0
    %3191 = vmatpush1.msra.mxu0 0.0
    %3192 = vmatprep.subr.mxu0 0.0
    %3193 = vmatpush1.msra.mxu0 0.0
    %3194 = vmatprep.subr.mxu0 0.0
    %3195 = vmatpush1.msra.mxu0 0.0
    %3196 = vmatprep.subr.mxu0 0.0
    %3197 = vmatpush1.msra.mxu0 0.0
    %3198 = vmatprep.subr.mxu0 0.0
    %3199 = vmatpush1.msra.mxu0 0.0
    %3200 = vmatprep.subr.mxu0 0.0
    %3201 = vmatpush1.msra.mxu0 0.0
    %3202 = vmatprep.subr.mxu0 0.0
    %3203 = vmatpush1.msra.mxu0 0.0
    %3204 = vmatprep.subr.mxu0 0.0
    %3205 = vmatpush1.msra.mxu0 0.0
    %3206 = vmatprep.subr.mxu0 0.0
    %3207 = vmatpush1.msra.mxu0 0.0
    %3208 = vmatprep.subr.mxu0 0.0
    %3209 = vmatpush1.msra.mxu0 0.0
    %3210 = vmatprep.subr.mxu0 0.0
    %3211 = vmatpush1.msra.mxu0 0.0
    %3212 = vmatprep.subr.mxu0 0.0
    %3213 = vmatpush1.msra.mxu0 0.0
    %3214 = vmatprep.subr.mxu0 0.0
    %3215 = vmatpush1.msra.mxu0 0.0
    %3216 = vmatprep.subr.mxu0 0.0
    %3217 = vmatpush1.msra.mxu0 0.0
    %3218 = vmatprep.mubr.f32.mxu0 0.0
    %3219 = vmatmul.mubr.f32.gmra.mrb[0].mxu0 %v3152
    %v3220 = vpop.f32.mrb[0].mxu0
    %v3221 = vadd.f32 0.0, %v3220
    %v3222 = vpop.f32.mrb[0].mxu0
    %3223 = vdwg.mxu0
    %v3225 = vrot.slane %v3221, 2
    %v3227 = vadd.f32 %v2370, %v3225
    %v3228 = vxor.u32 %v3227, 2147483648
    %v3229 = vmul.f32 %v3228, 1.442695
    %v3230 = vpow.pop %v3229
    %v3231 = vadd.f32 %v3230, 1.0
    %v3232 = vrcp.pop %v3231
    %v3233 = vmul.f32 1.0, %v3232
    %v3234 = vtanh.pop %v3227
    %v3236 = vrot.slane %v3134, 6
    %v3238 = vmul.f32 %v3233, %v3236
    %3240 = vrot.lane.b32.xlu0 %v3234, 64
    %v3241 = vpop.permute.xlu0 %3240
    %v3243 = vmul.f32 %v3233, %v3241
    %3245 = vrot.lane.b32.xlu0 %v3243, 32
    %v3246 = vpop.permute.xlu0 %3245
    %v3248 = vadd.f32 %v3238, %v3246
    %v3249 = vtanh.pop %v3248
    %3251 = vrot.lane.b32.xlu0 %v3249, 64
    %v3252 = vpop.permute.xlu0 %3251
    %v3254 = vmul.f32 %v3233, %v3252
    %3256 = vrot.lane.b32.xlu0 %v3254, 32
    %v3257 = vpop.permute.xlu0 %3256
    %3259 = vst.msk [vmem:[#allocation2 + $0x8] sm:$0xc0] %vm644, %v3257
    %3260 = vst.msk [vmem:[#allocation2 - $0x6] sm:$0xc0] %vm646, %v3257
    %3261 = vst.msk [vmem:[#allocation3 - $0x6] sm:$0xc0] %vm644, %v3257
    %3262 = vst.msk [vmem:[#allocation3 + $0x8] sm:$0xc0] %vm646, %v3257
    %s3263 = scalar_lea.vmem [#allocation10], 96
    %v3264 = vld [vmem:[%s3263] sm:$0xff]
    %v3265 = vld [vmem:[%s3263 + $0x8] sm:$0xff]
    %v3266 = vld [vmem:[%s3263 + $0x10] sm:$0xff]
    %v3267 = vld [vmem:[%s3263 + $0x18] sm:$0xff]
    %s3268 = scalar_lea.vmem %s4, 3
    %v3269 = vld [vmem:[%s3268] sm:$0x1]
    %v3270 = vld [vmem:[#allocation2] sm:$0xff]
    %v3271 = vld [vmem:[#allocation2 + $0x8] sm:$0xff]
    %v3272 = vld [vmem:[#allocation3] sm:$0xff]
    %v3273 = vld [vmem:[#allocation3 + $0x8] sm:$0xff]
    %s3274 = scalar_lea.vmem [#allocation9], 128
    %v3275 = vld [vmem:[%s3274] sm:$0xff]
    %v3276 = vld [vmem:[%s3274 + $0x8] sm:$0xff]
    %v3277 = vld [vmem:[%s3274 + $0x10] sm:$0xff]
    %v3278 = vld [vmem:[%s3274 + $0x18] sm:$0xff]
    %v3279 = vld [vmem:[%s3274 + $0x20] sm:$0xff]
    %v3280 = vld [vmem:[%s3274 + $0x28] sm:$0xff]
    %v3281 = vld [vmem:[%s3274 + $0x30] sm:$0xff]
    %v3282 = vld [vmem:[%s3274 + $0x38] sm:$0xff]
    %v3284 = vsel %vm196, %v3272, 0
    %v3287 = vsel %vm196, %v3273, 0
    %3289 = vmatprep.subr.mxu0 0.0
    %3290 = vmatpush1.msra.mxu0 %v3279
    %3291 = vmatprep.subr.mxu0 0.0
    %3292 = vmatpush1.msra.mxu0 %v3280
    %3293 = vmatprep.subr.mxu0 0.0
    %3294 = vmatpush1.msra.mxu0 %v3281
    %3295 = vmatprep.subr.mxu0 0.0
    %3296 = vmatpush1.msra.mxu0 %v3282
    %3297 = vmatprep.subr.mxu0 0.0
    %3298 = vmatpush1.msra.mxu0 0.0
    %3299 = vmatprep.subr.mxu0 0.0
    %3300 = vmatpush1.msra.mxu0 0.0
    %3301 = vmatprep.subr.mxu0 0.0
    %3302 = vmatpush1.msra.mxu0 0.0
    %3303 = vmatprep.subr.mxu0 0.0
    %3304 = vmatpush1.msra.mxu0 0.0
    %3305 = vmatprep.subr.mxu0 0.0
    %3306 = vmatpush1.msra.mxu0 0.0
    %3307 = vmatprep.subr.mxu0 0.0
    %3308 = vmatpush1.msra.mxu0 0.0
    %3309 = vmatprep.subr.mxu0 0.0
    %3310 = vmatpush1.msra.mxu0 0.0
    %3311 = vmatprep.subr.mxu0 0.0
    %3312 = vmatpush1.msra.mxu0 0.0
    %3313 = vmatprep.subr.mxu0 0.0
    %3314 = vmatpush1.msra.mxu0 0.0
    %3315 = vmatprep.subr.mxu0 0.0
    %3316 = vmatpush1.msra.mxu0 0.0
    %3317 = vmatprep.subr.mxu0 0.0
    %3318 = vmatpush1.msra.mxu0 0.0
    %3319 = vmatprep.subr.mxu0 0.0
    %3320 = vmatpush1.msra.mxu0 0.0
    %3321 = vmatprep.subr.mxu0 0.0
    %3322 = vmatpush1.msra.mxu0 0.0
    %3323 = vmatprep.subr.mxu0 0.0
    %3324 = vmatpush1.msra.mxu0 0.0
    %3325 = vmatprep.subr.mxu0 0.0
    %3326 = vmatpush1.msra.mxu0 0.0
    %3327 = vmatprep.subr.mxu0 0.0
    %3328 = vmatpush1.msra.mxu0 0.0
    %3329 = vmatprep.subr.mxu0 0.0
    %3330 = vmatpush1.msra.mxu0 0.0
    %3331 = vmatprep.subr.mxu0 0.0
    %3332 = vmatpush1.msra.mxu0 0.0
    %3333 = vmatprep.subr.mxu0 0.0
    %3334 = vmatpush1.msra.mxu0 0.0
    %3335 = vmatprep.subr.mxu0 0.0
    %3336 = vmatpush1.msra.mxu0 0.0
    %3337 = vmatprep.subr.mxu0 0.0
    %3338 = vmatpush1.msra.mxu0 0.0
    %3339 = vmatprep.subr.mxu0 0.0
    %3340 = vmatpush1.msra.mxu0 0.0
    %3341 = vmatprep.subr.mxu0 0.0
    %3342 = vmatpush1.msra.mxu0 0.0
    %3343 = vmatprep.subr.mxu0 0.0
    %3344 = vmatpush1.msra.mxu0 0.0
    %3345 = vmatprep.subr.mxu0 0.0
    %3346 = vmatpush1.msra.mxu0 0.0
    %3347 = vmatprep.subr.mxu0 0.0
    %3348 = vmatpush1.msra.mxu0 0.0
    %3349 = vmatprep.subr.mxu0 0.0
    %3350 = vmatpush1.msra.mxu0 0.0
    %3351 = vmatprep.subr.mxu0 0.0
    %3352 = vmatpush1.msra.mxu0 0.0
    %3353 = vmatprep.mubr.f32.mxu0 0.0
    %3354 = vmatmul.mubr.f32.gmra.mrb[0].mxu0 %v3284
    %v3355 = vpop.f32.mrb[0].mxu0
    %v3356 = vadd.f32 0.0, %v3355
    %v3357 = vpop.f32.mrb[0].mxu0
    %3358 = vmatprep.mubr.f32.mxu0 0.0
    %3359 = vmatmul.mubr.f32.gmra.mrb[0].mxu0 %v3287
    %v3360 = vpop.f32.mrb[0].mxu0
    %v3361 = vadd.f32 0.0, %v3360
    %v3362 = vpop.f32.mrb[0].mxu0
    %3363 = vdwg.mxu0
    %v3365 = vsel %vm196, %v3270, 0
    %v3368 = vsel %vm196, %v3271, 0
    %3370 = vmatprep.subr.mxu0 0.0
    %3371 = vmatpush1.msra.mxu0 %v3275
    %3372 = vmatprep.subr.mxu0 0.0
    %3373 = vmatpush1.msra.mxu0 %v3276
    %3374 = vmatprep.subr.mxu0 0.0
    %3375 = vmatpush1.msra.mxu0 %v3277
    %3376 = vmatprep.subr.mxu0 0.0
    %3377 = vmatpush1.msra.mxu0 %v3278
    %3378 = vmatprep.subr.mxu0 0.0
    %3379 = vmatpush1.msra.mxu0 0.0
    %3380 = vmatprep.subr.mxu0 0.0
    %3381 = vmatpush1.msra.mxu0 0.0
    %3382 = vmatprep.subr.mxu0 0.0
    %3383 = vmatpush1.msra.mxu0 0.0
    %3384 = vmatprep.subr.mxu0 0.0
    %3385 = vmatpush1.msra.mxu0 0.0
    %3386 = vmatprep.subr.mxu0 0.0
    %3387 = vmatpush1.msra.mxu0 0.0
    %3388 = vmatprep.subr.mxu0 0.0
    %3389 = vmatpush1.msra.mxu0 0.0
    %3390 = vmatprep.subr.mxu0 0.0
    %3391 = vmatpush1.msra.mxu0 0.0
    %3392 = vmatprep.subr.mxu0 0.0
    %3393 = vmatpush1.msra.mxu0 0.0
    %3394 = vmatprep.subr.mxu0 0.0
    %3395 = vmatpush1.msra.mxu0 0.0
    %3396 = vmatprep.subr.mxu0 0.0
    %3397 = vmatpush1.msra.mxu0 0.0
    %3398 = vmatprep.subr.mxu0 0.0
    %3399 = vmatpush1.msra.mxu0 0.0
    %3400 = vmatprep.subr.mxu0 0.0
    %3401 = vmatpush1.msra.mxu0 0.0
    %3402 = vmatprep.subr.mxu0 0.0
    %3403 = vmatpush1.msra.mxu0 0.0
    %3404 = vmatprep.subr.mxu0 0.0
    %3405 = vmatpush1.msra.mxu0 0.0
    %3406 = vmatprep.subr.mxu0 0.0
    %3407 = vmatpush1.msra.mxu0 0.0
    %3408 = vmatprep.subr.mxu0 0.0
    %3409 = vmatpush1.msra.mxu0 0.0
    %3410 = vmatprep.subr.mxu0 0.0
    %3411 = vmatpush1.msra.mxu0 0.0
    %3412 = vmatprep.subr.mxu0 0.0
    %3413 = vmatpush1.msra.mxu0 0.0
    %3414 = vmatprep.subr.mxu0 0.0
    %3415 = vmatpush1.msra.mxu0 0.0
    %3416 = vmatprep.subr.mxu0 0.0
    %3417 = vmatpush1.msra.mxu0 0.0
    %3418 = vmatprep.subr.mxu0 0.0
    %3419 = vmatpush1.msra.mxu0 0.0
    %3420 = vmatprep.subr.mxu0 0.0
    %3421 = vmatpush1.msra.mxu0 0.0
    %3422 = vmatprep.subr.mxu0 0.0
    %3423 = vmatpush1.msra.mxu0 0.0
    %3424 = vmatprep.subr.mxu0 0.0
    %3425 = vmatpush1.msra.mxu0 0.0
    %3426 = vmatprep.subr.mxu0 0.0
    %3427 = vmatpush1.msra.mxu0 0.0
    %3428 = vmatprep.subr.mxu0 0.0
    %3429 = vmatpush1.msra.mxu0 0.0
    %3430 = vmatprep.subr.mxu0 0.0
    %3431 = vmatpush1.msra.mxu0 0.0
    %3432 = vmatprep.subr.mxu0 0.0
    %3433 = vmatpush1.msra.mxu0 0.0
    %3434 = vmatprep.mubr.f32.mxu0 0.0
    %3435 = vmatmul.mubr.f32.gmra.mrb[0].mxu0 %v3365
    %v3436 = vpop.f32.mrb[0].mxu0
    %v3437 = vadd.f32 %v3356, %v3436
    %v3438 = vpop.f32.mrb[0].mxu0
    %3439 = vmatprep.mubr.f32.mxu0 0.0
    %3440 = vmatmul.mubr.f32.gmra.mrb[0].mxu0 %v3368
    %v3441 = vpop.f32.mrb[0].mxu0
    %v3442 = vadd.f32 %v3361, %v3441
    %v3443 = vpop.f32.mrb[0].mxu0
    %3444 = vdwg.mxu0
    %v3446 = vlaneseq
    %v3447 = vshrl.u32 %v3446, 7
    %v3448 = vsub.s32 0, %v3447
    %v3449 = vrot.slane %v3269, %v3448
    %v3451 = vadd.f32 %v3437, %v3449
    %v3452 = vadd.f32 %v3442, %v3449
    %3453 = vmatprep.subr.mxu0 0.0
    %3454 = vmatpush1.msra.mxu0 %v3264
    %3455 = vmatprep.subr.mxu0 0.0
    %3456 = vmatpush1.msra.mxu0 %v3265
    %3457 = vmatprep.subr.mxu0 0.0
    %3458 = vmatpush1.msra.mxu0 %v3266
    %3459 = vmatprep.subr.mxu0 0.0
    %3460 = vmatpush1.msra.mxu0 %v3267
    %3461 = vmatprep.subr.mxu0 0.0
    %3462 = vmatpush1.msra.mxu0 0.0
    %3463 = vmatprep.subr.mxu0 0.0
    %3464 = vmatpush1.msra.mxu0 0.0
    %3465 = vmatprep.subr.mxu0 0.0
    %3466 = vmatpush1.msra.mxu0 0.0
    %3467 = vmatprep.subr.mxu0 0.0
    %3468 = vmatpush1.msra.mxu0 0.0
    %3469 = vmatprep.subr.mxu0 0.0
    %3470 = vmatpush1.msra.mxu0 0.0
    %3471 = vmatprep.subr.mxu0 0.0
    %3472 = vmatpush1.msra.mxu0 0.0
    %3473 = vmatprep.subr.mxu0 0.0
    %3474 = vmatpush1.msra.mxu0 0.0
    %3475 = vmatprep.subr.mxu0 0.0
    %3476 = vmatpush1.msra.mxu0 0.0
    %3477 = vmatprep.subr.mxu0 0.0
    %3478 = vmatpush1.msra.mxu0 0.0
    %3479 = vmatprep.subr.mxu0 0.0
    %3480 = vmatpush1.msra.mxu0 0.0
    %3481 = vmatprep.subr.mxu0 0.0
    %3482 = vmatpush1.msra.mxu0 0.0
    %3483 = vmatprep.subr.mxu0 0.0
    %3484 = vmatpush1.msra.mxu0 0.0
    %3485 = vmatprep.subr.mxu0 0.0
    %3486 = vmatpush1.msra.mxu0 0.0
    %3487 = vmatprep.subr.mxu0 0.0
    %3488 = vmatpush1.msra.mxu0 0.0
    %3489 = vmatprep.subr.mxu0 0.0
    %3490 = vmatpush1.msra.mxu0 0.0
    %3491 = vmatprep.subr.mxu0 0.0
    %3492 = vmatpush1.msra.mxu0 0.0
    %3493 = vmatprep.subr.mxu0 0.0
    %3494 = vmatpush1.msra.mxu0 0.0
    %3495 = vmatprep.subr.mxu0 0.0
    %3496 = vmatpush1.msra.mxu0 0.0
    %3497 = vmatprep.subr.mxu0 0.0
    %3498 = vmatpush1.msra.mxu0 0.0
    %3499 = vmatprep.subr.mxu0 0.0
    %3500 = vmatpush1.msra.mxu0 0.0
    %3501 = vmatprep.subr.mxu0 0.0
    %3502 = vmatpush1.msra.mxu0 0.0
    %3503 = vmatprep.subr.mxu0 0.0
    %3504 = vmatpush1.msra.mxu0 0.0
    %3505 = vmatprep.subr.mxu0 0.0
    %3506 = vmatpush1.msra.mxu0 0.0
    %3507 = vmatprep.subr.mxu0 0.0
    %3508 = vmatpush1.msra.mxu0 0.0
    %3509 = vmatprep.subr.mxu0 0.0
    %3510 = vmatpush1.msra.mxu0 0.0
    %3511 = vmatprep.subr.mxu0 0.0
    %3512 = vmatpush1.msra.mxu0 0.0
    %3513 = vmatprep.subr.mxu0 0.0
    %3514 = vmatpush1.msra.mxu0 0.0
    %3515 = vmatprep.subr.mxu0 0.0
    %3516 = vmatpush1.msra.mxu0 0.0
    %3517 = vmatprep.mubr.f32.mxu0 0.0
    %3518 = vmatmul.mubr.f32.gmra.mrb[0].mxu0 %v198
    %v3519 = vpop.f32.mrb[0].mxu0
    %v3520 = vadd.f32 0.0, %v3519
    %v3521 = vpop.f32.mrb[0].mxu0
    %3522 = vdwg.mxu0
    %v3523 = vadd.f32 %v3451, %v3520
    %v3524 = vxor.u32 %v3523, 2147483648
    %v3525 = vmul.f32 %v3524, 1.442695
    %v3526 = vpow.pop %v3525
    %v3527 = vadd.f32 %v3526, 1.0
    %v3528 = vrcp.pop %v3527
    %v3529 = vmul.f32 1.0, %v3528
    %v3530 = vtanh.pop %v3523
    %v3531 = vmul.f32 %v3529, 0.0
    %3533 = vrot.lane.b32.xlu0 %v3530, 64
    %v3534 = vpop.permute.xlu0 %3533
    %v3536 = vmul.f32 %v3529, %v3534
    %3538 = vrot.lane.b32.xlu0 %v3536, 32
    %v3539 = vpop.permute.xlu0 %3538
    %v3541 = vadd.f32 %v3531, %v3539
    %v3542 = vtanh.pop %v3541
    %3544 = vrot.lane.b32.xlu0 %v3542, 64
    %v3545 = vpop.permute.xlu0 %3544
    %v3547 = vmul.f32 %v3529, %v3545
    %3549 = vrot.lane.b32.xlu0 %v3547, 32
    %v3550 = vpop.permute.xlu0 %3549
    %3552 = vst.msk [vmem:[#allocation2] sm:$0x3] %vm299, %v3550
    %3553 = vst.msk [vmem:[#allocation2 + $0xe] sm:$0x3] %vm301, %v3550
    %v3554 = vsel %vm196, %v3550, 0
    %3556 = vmatprep.subr.mxu0 0.0
    %3557 = vmatpush1.msra.mxu0 %v3264
    %3558 = vmatprep.subr.mxu0 0.0
    %3559 = vmatpush1.msra.mxu0 %v3265
    %3560 = vmatprep.subr.mxu0 0.0
    %3561 = vmatpush1.msra.mxu0 %v3266
    %3562 = vmatprep.subr.mxu0 0.0
    %3563 = vmatpush1.msra.mxu0 %v3267
    %3564 = vmatprep.subr.mxu0 0.0
    %3565 = vmatpush1.msra.mxu0 0.0
    %3566 = vmatprep.subr.mxu0 0.0
    %3567 = vmatpush1.msra.mxu0 0.0
    %3568 = vmatprep.subr.mxu0 0.0
    %3569 = vmatpush1.msra.mxu0 0.0
    %3570 = vmatprep.subr.mxu0 0.0
    %3571 = vmatpush1.msra.mxu0 0.0
    %3572 = vmatprep.subr.mxu0 0.0
    %3573 = vmatpush1.msra.mxu0 0.0
    %3574 = vmatprep.subr.mxu0 0.0
    %3575 = vmatpush1.msra.mxu0 0.0
    %3576 = vmatprep.subr.mxu0 0.0
    %3577 = vmatpush1.msra.mxu0 0.0
    %3578 = vmatprep.subr.mxu0 0.0
    %3579 = vmatpush1.msra.mxu0 0.0
    %3580 = vmatprep.subr.mxu0 0.0
    %3581 = vmatpush1.msra.mxu0 0.0
    %3582 = vmatprep.subr.mxu0 0.0
    %3583 = vmatpush1.msra.mxu0 0.0
    %3584 = vmatprep.subr.mxu0 0.0
    %3585 = vmatpush1.msra.mxu0 0.0
    %3586 = vmatprep.subr.mxu0 0.0
    %3587 = vmatpush1.msra.mxu0 0.0
    %3588 = vmatprep.subr.mxu0 0.0
    %3589 = vmatpush1.msra.mxu0 0.0
    %3590 = vmatprep.subr.mxu0 0.0
    %3591 = vmatpush1.msra.mxu0 0.0
    %3592 = vmatprep.subr.mxu0 0.0
    %3593 = vmatpush1.msra.mxu0 0.0
    %3594 = vmatprep.subr.mxu0 0.0
    %3595 = vmatpush1.msra.mxu0 0.0
    %3596 = vmatprep.subr.mxu0 0.0
    %3597 = vmatpush1.msra.mxu0 0.0
    %3598 = vmatprep.subr.mxu0 0.0
    %3599 = vmatpush1.msra.mxu0 0.0
    %3600 = vmatprep.subr.mxu0 0.0
    %3601 = vmatpush1.msra.mxu0 0.0
    %3602 = vmatprep.subr.mxu0 0.0
    %3603 = vmatpush1.msra.mxu0 0.0
    %3604 = vmatprep.subr.mxu0 0.0
    %3605 = vmatpush1.msra.mxu0 0.0
    %3606 = vmatprep.subr.mxu0 0.0
    %3607 = vmatpush1.msra.mxu0 0.0
    %3608 = vmatprep.subr.mxu0 0.0
    %3609 = vmatpush1.msra.mxu0 0.0
    %3610 = vmatprep.subr.mxu0 0.0
    %3611 = vmatpush1.msra.mxu0 0.0
    %3612 = vmatprep.subr.mxu0 0.0
    %3613 = vmatpush1.msra.mxu0 0.0
    %3614 = vmatprep.subr.mxu0 0.0
    %3615 = vmatpush1.msra.mxu0 0.0
    %3616 = vmatprep.subr.mxu0 0.0
    %3617 = vmatpush1.msra.mxu0 0.0
    %3618 = vmatprep.subr.mxu0 0.0
    %3619 = vmatpush1.msra.mxu0 0.0
    %3620 = vmatprep.mubr.f32.mxu0 0.0
    %3621 = vmatmul.mubr.f32.gmra.mrb[0].mxu0 %v3554
    %v3622 = vpop.f32.mrb[0].mxu0
    %v3623 = vadd.f32 0.0, %v3622
    %v3624 = vpop.f32.mrb[0].mxu0
    %3625 = vdwg.mxu0
    %v3627 = vrot.slane %v3623, 6
    %v3629 = vadd.f32 %v3451, %v3627
    %v3630 = vxor.u32 %v3629, 2147483648
    %v3631 = vmul.f32 %v3630, 1.442695
    %v3632 = vpow.pop %v3631
    %v3633 = vadd.f32 %v3632, 1.0
    %v3634 = vrcp.pop %v3633
    %v3635 = vmul.f32 1.0, %v3634
    %v3636 = vtanh.pop %v3629
    %v3638 = vrot.slane %v3541, 6
    %v3640 = vmul.f32 %v3635, %v3638
    %3642 = vrot.lane.b32.xlu0 %v3636, 64
    %v3643 = vpop.permute.xlu0 %3642
    %v3645 = vmul.f32 %v3635, %v3643
    %3647 = vrot.lane.b32.xlu0 %v3645, 32
    %v3648 = vpop.permute.xlu0 %3647
    %v3650 = vadd.f32 %v3640, %v3648
    %v3651 = vtanh.pop %v3650
    %3653 = vrot.lane.b32.xlu0 %v3651, 64
    %v3654 = vpop.permute.xlu0 %3653
    %v3656 = vmul.f32 %v3635, %v3654
    %3658 = vrot.lane.b32.xlu0 %v3656, 32
    %v3659 = vpop.permute.xlu0 %3658
    %3661 = vst.msk [vmem:[#allocation2] sm:$0xc] %vm412, %v3659
    %3662 = vst.msk [vmem:[#allocation2 + $0xa] sm:$0xc] %vm414, %v3659
    %v3663 = vrot.slane %v3656, 2
    %3664 = vrot.lane.b32.xlu0 %v3663, 32
    %v3665 = vpop.permute.xlu0 %3664
    %v3666 = vsel %vm196, %v3665, 0
    %3668 = vmatprep.subr.mxu0 0.0
    %3669 = vmatpush1.msra.mxu0 %v3264
    %3670 = vmatprep.subr.mxu0 0.0
    %3671 = vmatpush1.msra.mxu0 %v3265
    %3672 = vmatprep.subr.mxu0 0.0
    %3673 = vmatpush1.msra.mxu0 %v3266
    %3674 = vmatprep.subr.mxu0 0.0
    %3675 = vmatpush1.msra.mxu0 %v3267
    %3676 = vmatprep.subr.mxu0 0.0
    %3677 = vmatpush1.msra.mxu0 0.0
    %3678 = vmatprep.subr.mxu0 0.0
    %3679 = vmatpush1.msra.mxu0 0.0
    %3680 = vmatprep.subr.mxu0 0.0
    %3681 = vmatpush1.msra.mxu0 0.0
    %3682 = vmatprep.subr.mxu0 0.0
    %3683 = vmatpush1.msra.mxu0 0.0
    %3684 = vmatprep.subr.mxu0 0.0
    %3685 = vmatpush1.msra.mxu0 0.0
    %3686 = vmatprep.subr.mxu0 0.0
    %3687 = vmatpush1.msra.mxu0 0.0
    %3688 = vmatprep.subr.mxu0 0.0
    %3689 = vmatpush1.msra.mxu0 0.0
    %3690 = vmatprep.subr.mxu0 0.0
    %3691 = vmatpush1.msra.mxu0 0.0
    %3692 = vmatprep.subr.mxu0 0.0
    %3693 = vmatpush1.msra.mxu0 0.0
    %3694 = vmatprep.subr.mxu0 0.0
    %3695 = vmatpush1.msra.mxu0 0.0
    %3696 = vmatprep.subr.mxu0 0.0
    %3697 = vmatpush1.msra.mxu0 0.0
    %3698 = vmatprep.subr.mxu0 0.0
    %3699 = vmatpush1.msra.mxu0 0.0
    %3700 = vmatprep.subr.mxu0 0.0
    %3701 = vmatpush1.msra.mxu0 0.0
    %3702 = vmatprep.subr.mxu0 0.0
    %3703 = vmatpush1.msra.mxu0 0.0
    %3704 = vmatprep.subr.mxu0 0.0
    %3705 = vmatpush1.msra.mxu0 0.0
    %3706 = vmatprep.subr.mxu0 0.0
    %3707 = vmatpush1.msra.mxu0 0.0
    %3708 = vmatprep.subr.mxu0 0.0
    %3709 = vmatpush1.msra.mxu0 0.0
    %3710 = vmatprep.subr.mxu0 0.0
    %3711 = vmatpush1.msra.mxu0 0.0
    %3712 = vmatprep.subr.mxu0 0.0
    %3713 = vmatpush1.msra.mxu0 0.0
    %3714 = vmatprep.subr.mxu0 0.0
    %3715 = vmatpush1.msra.mxu0 0.0
    %3716 = vmatprep.subr.mxu0 0.0
    %3717 = vmatpush1.msra.mxu0 0.0
    %3718 = vmatprep.subr.mxu0 0.0
    %3719 = vmatpush1.msra.mxu0 0.0
    %3720 = vmatprep.subr.mxu0 0.0
    %3721 = vmatpush1.msra.mxu0 0.0
    %3722 = vmatprep.subr.mxu0 0.0
    %3723 = vmatpush1.msra.mxu0 0.0
    %3724 = vmatprep.subr.mxu0 0.0
    %3725 = vmatpush1.msra.mxu0 0.0
    %3726 = vmatprep.subr.mxu0 0.0
    %3727 = vmatpush1.msra.mxu0 0.0
    %3728 = vmatprep.subr.mxu0 0.0
    %3729 = vmatpush1.msra.mxu0 0.0
    %3730 = vmatprep.subr.mxu0 0.0
    %3731 = vmatpush1.msra.mxu0 0.0
    %3732 = vmatprep.mubr.f32.mxu0 0.0
    %3733 = vmatmul.mubr.f32.gmra.mrb[0].mxu0 %v3666
    %v3734 = vpop.f32.mrb[0].mxu0
    %v3735 = vadd.f32 0.0, %v3734
    %v3736 = vpop.f32.mrb[0].mxu0
    %3737 = vdwg.mxu0
    %v3739 = vrot.slane %v3735, 4
    %v3741 = vadd.f32 %v3451, %v3739
    %v3742 = vxor.u32 %v3741, 2147483648
    %v3743 = vmul.f32 %v3742, 1.442695
    %v3744 = vpow.pop %v3743
    %v3745 = vadd.f32 %v3744, 1.0
    %v3746 = vrcp.pop %v3745
    %v3747 = vmul.f32 1.0, %v3746
    %v3748 = vtanh.pop %v3741
    %v3750 = vrot.slane %v3650, 6
    %v3752 = vmul.f32 %v3747, %v3750
    %3754 = vrot.lane.b32.xlu0 %v3748, 64
    %v3755 = vpop.permute.xlu0 %3754
    %v3757 = vmul.f32 %v3747, %v3755
    %3759 = vrot.lane.b32.xlu0 %v3757, 32
    %v3760 = vpop.permute.xlu0 %3759
    %v3762 = vadd.f32 %v3752, %v3760
    %v3763 = vtanh.pop %v3762
    %3765 = vrot.lane.b32.xlu0 %v3763, 64
    %v3766 = vpop.permute.xlu0 %3765
    %v3768 = vmul.f32 %v3747, %v3766
    %3770 = vrot.lane.b32.xlu0 %v3768, 32
    %v3771 = vpop.permute.xlu0 %3770
    %3773 = vst.msk [vmem:[#allocation2] sm:$0x30] %vm528, %v3771
    %3774 = vst.msk [vmem:[#allocation2 + $0x6] sm:$0x30] %vm530, %v3771
    %v3775 = vrot.slane %v3768, 4
    %3776 = vrot.lane.b32.xlu0 %v3775, 32
    %v3777 = vpop.permute.xlu0 %3776
    %v3778 = vsel %vm196, %v3777, 0
    %3780 = vmatprep.subr.mxu0 0.0
    %3781 = vmatpush1.msra.mxu0 %v3264
    %3782 = vmatprep.subr.mxu0 0.0
    %3783 = vmatpush1.msra.mxu0 %v3265
    %3784 = vmatprep.subr.mxu0 0.0
    %3785 = vmatpush1.msra.mxu0 %v3266
    %3786 = vmatprep.subr.mxu0 0.0
    %3787 = vmatpush1.msra.mxu0 %v3267
    %3788 = vmatprep.subr.mxu0 0.0
    %3789 = vmatpush1.msra.mxu0 0.0
    %3790 = vmatprep.subr.mxu0 0.0
    %3791 = vmatpush1.msra.mxu0 0.0
    %3792 = vmatprep.subr.mxu0 0.0
    %3793 = vmatpush1.msra.mxu0 0.0
    %3794 = vmatprep.subr.mxu0 0.0
    %3795 = vmatpush1.msra.mxu0 0.0
    %3796 = vmatprep.subr.mxu0 0.0
    %3797 = vmatpush1.msra.mxu0 0.0
    %3798 = vmatprep.subr.mxu0 0.0
    %3799 = vmatpush1.msra.mxu0 0.0
    %3800 = vmatprep.subr.mxu0 0.0
    %3801 = vmatpush1.msra.mxu0 0.0
    %3802 = vmatprep.subr.mxu0 0.0
    %3803 = vmatpush1.msra.mxu0 0.0
    %3804 = vmatprep.subr.mxu0 0.0
    %3805 = vmatpush1.msra.mxu0 0.0
    %3806 = vmatprep.subr.mxu0 0.0
    %3807 = vmatpush1.msra.mxu0 0.0
    %3808 = vmatprep.subr.mxu0 0.0
    %3809 = vmatpush1.msra.mxu0 0.0
    %3810 = vmatprep.subr.mxu0 0.0
    %3811 = vmatpush1.msra.mxu0 0.0
    %3812 = vmatprep.subr.mxu0 0.0
    %3813 = vmatpush1.msra.mxu0 0.0
    %3814 = vmatprep.subr.mxu0 0.0
    %3815 = vmatpush1.msra.mxu0 0.0
    %3816 = vmatprep.subr.mxu0 0.0
    %3817 = vmatpush1.msra.mxu0 0.0
    %3818 = vmatprep.subr.mxu0 0.0
    %3819 = vmatpush1.msra.mxu0 0.0
    %3820 = vmatprep.subr.mxu0 0.0
    %3821 = vmatpush1.msra.mxu0 0.0
    %3822 = vmatprep.subr.mxu0 0.0
    %3823 = vmatpush1.msra.mxu0 0.0
    %3824 = vmatprep.subr.mxu0 0.0
    %3825 = vmatpush1.msra.mxu0 0.0
    %3826 = vmatprep.subr.mxu0 0.0
    %3827 = vmatpush1.msra.mxu0 0.0
    %3828 = vmatprep.subr.mxu0 0.0
    %3829 = vmatpush1.msra.mxu0 0.0
    %3830 = vmatprep.subr.mxu0 0.0
    %3831 = vmatpush1.msra.mxu0 0.0
    %3832 = vmatprep.subr.mxu0 0.0
    %3833 = vmatpush1.msra.mxu0 0.0
    %3834 = vmatprep.subr.mxu0 0.0
    %3835 = vmatpush1.msra.mxu0 0.0
    %3836 = vmatprep.subr.mxu0 0.0
    %3837 = vmatpush1.msra.mxu0 0.0
    %3838 = vmatprep.subr.mxu0 0.0
    %3839 = vmatpush1.msra.mxu0 0.0
    %3840 = vmatprep.subr.mxu0 0.0
    %3841 = vmatpush1.msra.mxu0 0.0
    %3842 = vmatprep.subr.mxu0 0.0
    %3843 = vmatpush1.msra.mxu0 0.0
    %3844 = vmatprep.mubr.f32.mxu0 0.0
    %3845 = vmatmul.mubr.f32.gmra.mrb[0].mxu0 %v3778
    %v3846 = vpop.f32.mrb[0].mxu0
    %v3847 = vadd.f32 0.0, %v3846
    %v3848 = vpop.f32.mrb[0].mxu0
    %3849 = vdwg.mxu0
    %v3851 = vrot.slane %v3847, 2
    %v3853 = vadd.f32 %v3451, %v3851
    %v3854 = vxor.u32 %v3853, 2147483648
    %v3855 = vmul.f32 %v3854, 1.442695
    %v3856 = vpow.pop %v3855
    %v3857 = vadd.f32 %v3856, 1.0
    %v3858 = vrcp.pop %v3857
    %v3859 = vmul.f32 1.0, %v3858
    %v3860 = vtanh.pop %v3853
    %v3862 = vrot.slane %v3762, 6
    %v3864 = vmul.f32 %v3859, %v3862
    %3866 = vrot.lane.b32.xlu0 %v3860, 64
    %v3867 = vpop.permute.xlu0 %3866
    %v3869 = vmul.f32 %v3859, %v3867
    %3871 = vrot.lane.b32.xlu0 %v3869, 32
    %v3872 = vpop.permute.xlu0 %3871
    %v3874 = vadd.f32 %v3864, %v3872
    %v3875 = vtanh.pop %v3874
    %3877 = vrot.lane.b32.xlu0 %v3875, 64
    %v3878 = vpop.permute.xlu0 %3877
    %v3880 = vmul.f32 %v3859, %v3878
    %3882 = vrot.lane.b32.xlu0 %v3880, 32
    %v3883 = vpop.permute.xlu0 %3882
    %3885 = vst.msk [vmem:[#allocation2] sm:$0xc0] %vm644, %v3883
    %3886 = vst.msk [vmem:[#allocation2 + $0x2] sm:$0xc0] %vm646, %v3883
    %v3887 = vrot.slane %v3880, 6
    %3888 = vrot.lane.b32.xlu0 %v3887, 32
    %v3889 = vpop.permute.xlu0 %3888
    %v3890 = vsel %vm196, %v3889, 0
    %3892 = vmatprep.subr.mxu0 0.0
    %3893 = vmatpush1.msra.mxu0 %v3264
    %3894 = vmatprep.subr.mxu0 0.0
    %3895 = vmatpush1.msra.mxu0 %v3265
    %3896 = vmatprep.subr.mxu0 0.0
    %3897 = vmatpush1.msra.mxu0 %v3266
    %3898 = vmatprep.subr.mxu0 0.0
    %3899 = vmatpush1.msra.mxu0 %v3267
    %3900 = vmatprep.subr.mxu0 0.0
    %3901 = vmatpush1.msra.mxu0 0.0
    %3902 = vmatprep.subr.mxu0 0.0
    %3903 = vmatpush1.msra.mxu0 0.0
    %3904 = vmatprep.subr.mxu0 0.0
    %3905 = vmatpush1.msra.mxu0 0.0
    %3906 = vmatprep.subr.mxu0 0.0
    %3907 = vmatpush1.msra.mxu0 0.0
    %3908 = vmatprep.subr.mxu0 0.0
    %3909 = vmatpush1.msra.mxu0 0.0
    %3910 = vmatprep.subr.mxu0 0.0
    %3911 = vmatpush1.msra.mxu0 0.0
    %3912 = vmatprep.subr.mxu0 0.0
    %3913 = vmatpush1.msra.mxu0 0.0
    %3914 = vmatprep.subr.mxu0 0.0
    %3915 = vmatpush1.msra.mxu0 0.0
    %3916 = vmatprep.subr.mxu0 0.0
    %3917 = vmatpush1.msra.mxu0 0.0
    %3918 = vmatprep.subr.mxu0 0.0
    %3919 = vmatpush1.msra.mxu0 0.0
    %3920 = vmatprep.subr.mxu0 0.0
    %3921 = vmatpush1.msra.mxu0 0.0
    %3922 = vmatprep.subr.mxu0 0.0
    %3923 = vmatpush1.msra.mxu0 0.0
    %3924 = vmatprep.subr.mxu0 0.0
    %3925 = vmatpush1.msra.mxu0 0.0
    %3926 = vmatprep.subr.mxu0 0.0
    %3927 = vmatpush1.msra.mxu0 0.0
    %3928 = vmatprep.subr.mxu0 0.0
    %3929 = vmatpush1.msra.mxu0 0.0
    %3930 = vmatprep.subr.mxu0 0.0
    %3931 = vmatpush1.msra.mxu0 0.0
    %3932 = vmatprep.subr.mxu0 0.0
    %3933 = vmatpush1.msra.mxu0 0.0
    %3934 = vmatprep.subr.mxu0 0.0
    %3935 = vmatpush1.msra.mxu0 0.0
    %3936 = vmatprep.subr.mxu0 0.0
    %3937 = vmatpush1.msra.mxu0 0.0
    %3938 = vmatprep.subr.mxu0 0.0
    %3939 = vmatpush1.msra.mxu0 0.0
    %3940 = vmatprep.subr.mxu0 0.0
    %3941 = vmatpush1.msra.mxu0 0.0
    %3942 = vmatprep.subr.mxu0 0.0
    %3943 = vmatpush1.msra.mxu0 0.0
    %3944 = vmatprep.subr.mxu0 0.0
    %3945 = vmatpush1.msra.mxu0 0.0
    %3946 = vmatprep.subr.mxu0 0.0
    %3947 = vmatpush1.msra.mxu0 0.0
    %3948 = vmatprep.subr.mxu0 0.0
    %3949 = vmatpush1.msra.mxu0 0.0
    %3950 = vmatprep.subr.mxu0 0.0
    %3951 = vmatpush1.msra.mxu0 0.0
    %3952 = vmatprep.subr.mxu0 0.0
    %3953 = vmatpush1.msra.mxu0 0.0
    %3954 = vmatprep.subr.mxu0 0.0
    %3955 = vmatpush1.msra.mxu0 0.0
    %3956 = vmatprep.mubr.f32.mxu0 0.0
    %3957 = vmatmul.mubr.f32.gmra.mrb[0].mxu0 %v3890
    %v3958 = vpop.f32.mrb[0].mxu0
    %v3959 = vadd.f32 0.0, %v3958
    %v3960 = vpop.f32.mrb[0].mxu0
    %3961 = vdwg.mxu0
    %v3962 = vadd.f32 %v3452, %v3959
    %v3963 = vxor.u32 %v3962, 2147483648
    %v3964 = vmul.f32 %v3963, 1.442695
    %v3965 = vpow.pop %v3964
    %v3966 = vadd.f32 %v3965, 1.0
    %v3967 = vrcp.pop %v3966
    %v3968 = vmul.f32 1.0, %v3967
    %v3969 = vtanh.pop %v3962
    %v3971 = vrot.slane %v3874, 6
    %v3973 = vmul.f32 %v3968, %v3971
    %3975 = vrot.lane.b32.xlu0 %v3969, 64
    %v3976 = vpop.permute.xlu0 %3975
    %v3978 = vmul.f32 %v3968, %v3976
    %3980 = vrot.lane.b32.xlu0 %v3978, 32
    %v3981 = vpop.permute.xlu0 %3980
    %v3983 = vadd.f32 %v3973, %v3981
    %v3984 = vtanh.pop %v3983
    %3986 = vrot.lane.b32.xlu0 %v3984, 64
    %v3987 = vpop.permute.xlu0 %3986
    %v3989 = vmul.f32 %v3968, %v3987
    %3991 = vrot.lane.b32.xlu0 %v3989, 32
    %v3992 = vpop.permute.xlu0 %3991
    %3994 = vst.msk [vmem:[#allocation2 + $0x8] sm:$0x3] %vm299, %v3992
    %3995 = vst.msk [vmem:[#allocation2 + $0x6] sm:$0x3] %vm301, %v3992
    %v3996 = vsel %vm196, %v3992, 0
    %3998 = vmatprep.subr.mxu0 0.0
    %3999 = vmatpush1.msra.mxu0 %v3264
    %4000 = vmatprep.subr.mxu0 0.0
    %4001 = vmatpush1.msra.mxu0 %v3265
    %4002 = vmatprep.subr.mxu0 0.0
    %4003 = vmatpush1.msra.mxu0 %v3266
    %4004 = vmatprep.subr.mxu0 0.0
    %4005 = vmatpush1.msra.mxu0 %v3267
    %4006 = vmatprep.subr.mxu0 0.0
    %4007 = vmatpush1.msra.mxu0 0.0
    %4008 = vmatprep.subr.mxu0 0.0
    %4009 = vmatpush1.msra.mxu0 0.0
    %4010 = vmatprep.subr.mxu0 0.0
    %4011 = vmatpush1.msra.mxu0 0.0
    %4012 = vmatprep.subr.mxu0 0.0
    %4013 = vmatpush1.msra.mxu0 0.0
    %4014 = vmatprep.subr.mxu0 0.0
    %4015 = vmatpush1.msra.mxu0 0.0
    %4016 = vmatprep.subr.mxu0 0.0
    %4017 = vmatpush1.msra.mxu0 0.0
    %4018 = vmatprep.subr.mxu0 0.0
    %4019 = vmatpush1.msra.mxu0 0.0
    %4020 = vmatprep.subr.mxu0 0.0
    %4021 = vmatpush1.msra.mxu0 0.0
    %4022 = vmatprep.subr.mxu0 0.0
    %4023 = vmatpush1.msra.mxu0 0.0
    %4024 = vmatprep.subr.mxu0 0.0
    %4025 = vmatpush1.msra.mxu0 0.0
    %4026 = vmatprep.subr.mxu0 0.0
    %4027 = vmatpush1.msra.mxu0 0.0
    %4028 = vmatprep.subr.mxu0 0.0
    %4029 = vmatpush1.msra.mxu0 0.0
    %4030 = vmatprep.subr.mxu0 0.0
    %4031 = vmatpush1.msra.mxu0 0.0
    %4032 = vmatprep.subr.mxu0 0.0
    %4033 = vmatpush1.msra.mxu0 0.0
    %4034 = vmatprep.subr.mxu0 0.0
    %4035 = vmatpush1.msra.mxu0 0.0
    %4036 = vmatprep.subr.mxu0 0.0
    %4037 = vmatpush1.msra.mxu0 0.0
    %4038 = vmatprep.subr.mxu0 0.0
    %4039 = vmatpush1.msra.mxu0 0.0
    %4040 = vmatprep.subr.mxu0 0.0
    %4041 = vmatpush1.msra.mxu0 0.0
    %4042 = vmatprep.subr.mxu0 0.0
    %4043 = vmatpush1.msra.mxu0 0.0
    %4044 = vmatprep.subr.mxu0 0.0
    %4045 = vmatpush1.msra.mxu0 0.0
    %4046 = vmatprep.subr.mxu0 0.0
    %4047 = vmatpush1.msra.mxu0 0.0
    %4048 = vmatprep.subr.mxu0 0.0
    %4049 = vmatpush1.msra.mxu0 0.0
    %4050 = vmatprep.subr.mxu0 0.0
    %4051 = vmatpush1.msra.mxu0 0.0
    %4052 = vmatprep.subr.mxu0 0.0
    %4053 = vmatpush1.msra.mxu0 0.0
    %4054 = vmatprep.subr.mxu0 0.0
    %4055 = vmatpush1.msra.mxu0 0.0
    %4056 = vmatprep.subr.mxu0 0.0
    %4057 = vmatpush1.msra.mxu0 0.0
    %4058 = vmatprep.subr.mxu0 0.0
    %4059 = vmatpush1.msra.mxu0 0.0
    %4060 = vmatprep.subr.mxu0 0.0
    %4061 = vmatpush1.msra.mxu0 0.0
    %4062 = vmatprep.mubr.f32.mxu0 0.0
    %4063 = vmatmul.mubr.f32.gmra.mrb[0].mxu0 %v3996
    %v4064 = vpop.f32.mrb[0].mxu0
    %v4065 = vadd.f32 0.0, %v4064
    %v4066 = vpop.f32.mrb[0].mxu0
    %4067 = vdwg.mxu0
    %v4069 = vrot.slane %v4065, 6
    %v4071 = vadd.f32 %v3452, %v4069
    %v4072 = vxor.u32 %v4071, 2147483648
    %v4073 = vmul.f32 %v4072, 1.442695
    %v4074 = vpow.pop %v4073
    %v4075 = vadd.f32 %v4074, 1.0
    %v4076 = vrcp.pop %v4075
    %v4077 = vmul.f32 1.0, %v4076
    %v4078 = vtanh.pop %v4071
    %v4080 = vrot.slane %v3983, 6
    %v4082 = vmul.f32 %v4077, %v4080
    %4084 = vrot.lane.b32.xlu0 %v4078, 64
    %v4085 = vpop.permute.xlu0 %4084
    %v4087 = vmul.f32 %v4077, %v4085
    %4089 = vrot.lane.b32.xlu0 %v4087, 32
    %v4090 = vpop.permute.xlu0 %4089
    %v4092 = vadd.f32 %v4082, %v4090
    %v4093 = vtanh.pop %v4092
    %4095 = vrot.lane.b32.xlu0 %v4093, 64
    %v4096 = vpop.permute.xlu0 %4095
    %v4098 = vmul.f32 %v4077, %v4096
    %4100 = vrot.lane.b32.xlu0 %v4098, 32
    %v4101 = vpop.permute.xlu0 %4100
    %4103 = vst.msk [vmem:[#allocation2 + $0x8] sm:$0xc] %vm412, %v4101
    %4104 = vst.msk [vmem:[#allocation2 + $0x2] sm:$0xc] %vm414, %v4101
    %v4105 = vrot.slane %v4098, 2
    %4106 = vrot.lane.b32.xlu0 %v4105, 32
    %v4107 = vpop.permute.xlu0 %4106
    %v4108 = vsel %vm196, %v4107, 0
    %4110 = vmatprep.subr.mxu0 0.0
    %4111 = vmatpush1.msra.mxu0 %v3264
    %4112 = vmatprep.subr.mxu0 0.0
    %4113 = vmatpush1.msra.mxu0 %v3265
    %4114 = vmatprep.subr.mxu0 0.0
    %4115 = vmatpush1.msra.mxu0 %v3266
    %4116 = vmatprep.subr.mxu0 0.0
    %4117 = vmatpush1.msra.mxu0 %v3267
    %4118 = vmatprep.subr.mxu0 0.0
    %4119 = vmatpush1.msra.mxu0 0.0
    %4120 = vmatprep.subr.mxu0 0.0
    %4121 = vmatpush1.msra.mxu0 0.0
    %4122 = vmatprep.subr.mxu0 0.0
    %4123 = vmatpush1.msra.mxu0 0.0
    %4124 = vmatprep.subr.mxu0 0.0
    %4125 = vmatpush1.msra.mxu0 0.0
    %4126 = vmatprep.subr.mxu0 0.0
    %4127 = vmatpush1.msra.mxu0 0.0
    %4128 = vmatprep.subr.mxu0 0.0
    %4129 = vmatpush1.msra.mxu0 0.0
    %4130 = vmatprep.subr.mxu0 0.0
    %4131 = vmatpush1.msra.mxu0 0.0
    %4132 = vmatprep.subr.mxu0 0.0
    %4133 = vmatpush1.msra.mxu0 0.0
    %4134 = vmatprep.subr.mxu0 0.0
    %4135 = vmatpush1.msra.mxu0 0.0
    %4136 = vmatprep.subr.mxu0 0.0
    %4137 = vmatpush1.msra.mxu0 0.0
    %4138 = vmatprep.subr.mxu0 0.0
    %4139 = vmatpush1.msra.mxu0 0.0
    %4140 = vmatprep.subr.mxu0 0.0
    %4141 = vmatpush1.msra.mxu0 0.0
    %4142 = vmatprep.subr.mxu0 0.0
    %4143 = vmatpush1.msra.mxu0 0.0
    %4144 = vmatprep.subr.mxu0 0.0
    %4145 = vmatpush1.msra.mxu0 0.0
    %4146 = vmatprep.subr.mxu0 0.0
    %4147 = vmatpush1.msra.mxu0 0.0
    %4148 = vmatprep.subr.mxu0 0.0
    %4149 = vmatpush1.msra.mxu0 0.0
    %4150 = vmatprep.subr.mxu0 0.0
    %4151 = vmatpush1.msra.mxu0 0.0
    %4152 = vmatprep.subr.mxu0 0.0
    %4153 = vmatpush1.msra.mxu0 0.0
    %4154 = vmatprep.subr.mxu0 0.0
    %4155 = vmatpush1.msra.mxu0 0.0
    %4156 = vmatprep.subr.mxu0 0.0
    %4157 = vmatpush1.msra.mxu0 0.0
    %4158 = vmatprep.subr.mxu0 0.0
    %4159 = vmatpush1.msra.mxu0 0.0
    %4160 = vmatprep.subr.mxu0 0.0
    %4161 = vmatpush1.msra.mxu0 0.0
    %4162 = vmatprep.subr.mxu0 0.0
    %4163 = vmatpush1.msra.mxu0 0.0
    %4164 = vmatprep.subr.mxu0 0.0
    %4165 = vmatpush1.msra.mxu0 0.0
    %4166 = vmatprep.subr.mxu0 0.0
    %4167 = vmatpush1.msra.mxu0 0.0
    %4168 = vmatprep.subr.mxu0 0.0
    %4169 = vmatpush1.msra.mxu0 0.0
    %4170 = vmatprep.subr.mxu0 0.0
    %4171 = vmatpush1.msra.mxu0 0.0
    %4172 = vmatprep.subr.mxu0 0.0
    %4173 = vmatpush1.msra.mxu0 0.0
    %4174 = vmatprep.mubr.f32.mxu0 0.0
    %4175 = vmatmul.mubr.f32.gmra.mrb[0].mxu0 %v4108
    %v4176 = vpop.f32.mrb[0].mxu0
    %v4177 = vadd.f32 0.0, %v4176
    %v4178 = vpop.f32.mrb[0].mxu0
    %4179 = vdwg.mxu0
    %v4181 = vrot.slane %v4177, 4
    %v4183 = vadd.f32 %v3452, %v4181
    %v4184 = vxor.u32 %v4183, 2147483648
    %v4185 = vmul.f32 %v4184, 1.442695
    %v4186 = vpow.pop %v4185
    %v4187 = vadd.f32 %v4186, 1.0
    %v4188 = vrcp.pop %v4187
    %v4189 = vmul.f32 1.0, %v4188
    %v4190 = vtanh.pop %v4183
    %v4192 = vrot.slane %v4092, 6
    %v4194 = vmul.f32 %v4189, %v4192
    %4196 = vrot.lane.b32.xlu0 %v4190, 64
    %v4197 = vpop.permute.xlu0 %4196
    %v4199 = vmul.f32 %v4189, %v4197
    %4201 = vrot.lane.b32.xlu0 %v4199, 32
    %v4202 = vpop.permute.xlu0 %4201
    %v4204 = vadd.f32 %v4194, %v4202
    %v4205 = vtanh.pop %v4204
    %4207 = vrot.lane.b32.xlu0 %v4205, 64
    %v4208 = vpop.permute.xlu0 %4207
    %v4210 = vmul.f32 %v4189, %v4208
    %4212 = vrot.lane.b32.xlu0 %v4210, 32
    %v4213 = vpop.permute.xlu0 %4212
    %4215 = vst.msk [vmem:[#allocation2 + $0x8] sm:$0x30] %vm528, %v4213
    %4216 = vst.msk [vmem:[#allocation2 - $0x2] sm:$0x30] %vm530, %v4213
    %v4217 = vrot.slane %v4210, 4
    %4218 = vrot.lane.b32.xlu0 %v4217, 32
    %v4219 = vpop.permute.xlu0 %4218
    %v4220 = vsel %vm196, %v4219, 0
    %4222 = vmatprep.subr.mxu0 0.0
    %4223 = vmatpush1.msra.mxu0 %v3264
    %4224 = vmatprep.subr.mxu0 0.0
    %4225 = vmatpush1.msra.mxu0 %v3265
    %4226 = vmatprep.subr.mxu0 0.0
    %4227 = vmatpush1.msra.mxu0 %v3266
    %4228 = vmatprep.subr.mxu0 0.0
    %4229 = vmatpush1.msra.mxu0 %v3267
    %4230 = vmatprep.subr.mxu0 0.0
    %4231 = vmatpush1.msra.mxu0 0.0
    %4232 = vmatprep.subr.mxu0 0.0
    %4233 = vmatpush1.msra.mxu0 0.0
    %4234 = vmatprep.subr.mxu0 0.0
    %4235 = vmatpush1.msra.mxu0 0.0
    %4236 = vmatprep.subr.mxu0 0.0
    %4237 = vmatpush1.msra.mxu0 0.0
    %4238 = vmatprep.subr.mxu0 0.0
    %4239 = vmatpush1.msra.mxu0 0.0
    %4240 = vmatprep.subr.mxu0 0.0
    %4241 = vmatpush1.msra.mxu0 0.0
    %4242 = vmatprep.subr.mxu0 0.0
    %4243 = vmatpush1.msra.mxu0 0.0
    %4244 = vmatprep.subr.mxu0 0.0
    %4245 = vmatpush1.msra.mxu0 0.0
    %4246 = vmatprep.subr.mxu0 0.0
    %4247 = vmatpush1.msra.mxu0 0.0
    %4248 = vmatprep.subr.mxu0 0.0
    %4249 = vmatpush1.msra.mxu0 0.0
    %4250 = vmatprep.subr.mxu0 0.0
    %4251 = vmatpush1.msra.mxu0 0.0
    %4252 = vmatprep.subr.mxu0 0.0
    %4253 = vmatpush1.msra.mxu0 0.0
    %4254 = vmatprep.subr.mxu0 0.0
    %4255 = vmatpush1.msra.mxu0 0.0
    %4256 = vmatprep.subr.mxu0 0.0
    %4257 = vmatpush1.msra.mxu0 0.0
    %4258 = vmatprep.subr.mxu0 0.0
    %4259 = vmatpush1.msra.mxu0 0.0
    %4260 = vmatprep.subr.mxu0 0.0
    %4261 = vmatpush1.msra.mxu0 0.0
    %4262 = vmatprep.subr.mxu0 0.0
    %4263 = vmatpush1.msra.mxu0 0.0
    %4264 = vmatprep.subr.mxu0 0.0
    %4265 = vmatpush1.msra.mxu0 0.0
    %4266 = vmatprep.subr.mxu0 0.0
    %4267 = vmatpush1.msra.mxu0 0.0
    %4268 = vmatprep.subr.mxu0 0.0
    %4269 = vmatpush1.msra.mxu0 0.0
    %4270 = vmatprep.subr.mxu0 0.0
    %4271 = vmatpush1.msra.mxu0 0.0
    %4272 = vmatprep.subr.mxu0 0.0
    %4273 = vmatpush1.msra.mxu0 0.0
    %4274 = vmatprep.subr.mxu0 0.0
    %4275 = vmatpush1.msra.mxu0 0.0
    %4276 = vmatprep.subr.mxu0 0.0
    %4277 = vmatpush1.msra.mxu0 0.0
    %4278 = vmatprep.subr.mxu0 0.0
    %4279 = vmatpush1.msra.mxu0 0.0
    %4280 = vmatprep.subr.mxu0 0.0
    %4281 = vmatpush1.msra.mxu0 0.0
    %4282 = vmatprep.subr.mxu0 0.0
    %4283 = vmatpush1.msra.mxu0 0.0
    %4284 = vmatprep.subr.mxu0 0.0
    %4285 = vmatpush1.msra.mxu0 0.0
    %4286 = vmatprep.mubr.f32.mxu0 0.0
    %4287 = vmatmul.mubr.f32.gmra.mrb[0].mxu0 %v4220
    %v4288 = vpop.f32.mrb[0].mxu0
    %v4289 = vadd.f32 0.0, %v4288
    %v4290 = vpop.f32.mrb[0].mxu0
    %4291 = vdwg.mxu0
    %v4293 = vrot.slane %v4289, 2
    %v4295 = vadd.f32 %v3452, %v4293
    %v4296 = vxor.u32 %v4295, 2147483648
    %v4297 = vmul.f32 %v4296, 1.442695
    %v4298 = vpow.pop %v4297
    %v4299 = vadd.f32 %v4298, 1.0
    %v4300 = vrcp.pop %v4299
    %v4301 = vmul.f32 1.0, %v4300
    %v4302 = vtanh.pop %v4295
    %v4304 = vrot.slane %v4204, 6
    %v4306 = vmul.f32 %v4301, %v4304
    %4308 = vrot.lane.b32.xlu0 %v4302, 64
    %v4309 = vpop.permute.xlu0 %4308
    %v4311 = vmul.f32 %v4301, %v4309
    %4313 = vrot.lane.b32.xlu0 %v4311, 32
    %v4314 = vpop.permute.xlu0 %4313
    %v4316 = vadd.f32 %v4306, %v4314
    %v4317 = vtanh.pop %v4316
    %4319 = vrot.lane.b32.xlu0 %v4317, 64
    %v4320 = vpop.permute.xlu0 %4319
    %v4322 = vmul.f32 %v4301, %v4320
    %4324 = vrot.lane.b32.xlu0 %v4322, 32
    %v4325 = vpop.permute.xlu0 %4324
    %4327 = vst.msk [vmem:[#allocation2 + $0x8] sm:$0xc0] %vm644, %v4325
    %4328 = vst.msk [vmem:[#allocation2 - $0x6] sm:$0xc0] %vm646, %v4325
    %v4329 = vld [vmem:[#allocation2] sm:$0xff]
    %v4330 = vld [vmem:[#allocation2 + $0x8] sm:$0xff]
    %v4331 = vld [vmem:[#allocation12] sm:$0xff]
    %v4332 = vld [vmem:[#allocation12 + $0x8] sm:$0xff]
    %v4333 = vld [vmem:[#allocation12 + $0x10] sm:$0xff]
    %v4334 = vld [vmem:[#allocation12 + $0x18] sm:$0xff]
    %v4335 = vld [vmem:[%s6] sm:$0x1]
    %v4337 = vlaneseq
    %v4338 = vshrl.u32 %v4337, 7
    %v4339 = vsub.s32 0, %v4338
    %v4340 = vrot.slane %v4335, %v4339
    %v4343 = vsel %vm196, %v4329, 0
    %v4346 = vsel %vm196, %v4330, 0
    %4348 = vmatprep.subr.mxu0 0.0
    %4349 = vmatpush1.msra.mxu0 %v4331
    %4350 = vmatprep.subr.mxu0 0.0
    %4351 = vmatpush1.msra.mxu0 %v4332
    %4352 = vmatprep.subr.mxu0 0.0
    %4353 = vmatpush1.msra.mxu0 %v4333
    %4354 = vmatprep.subr.mxu0 0.0
    %4355 = vmatpush1.msra.mxu0 %v4334
    %4356 = vmatprep.subr.mxu0 0.0
    %4357 = vmatpush1.msra.mxu0 0.0
    %4358 = vmatprep.subr.mxu0 0.0
    %4359 = vmatpush1.msra.mxu0 0.0
    %4360 = vmatprep.subr.mxu0 0.0
    %4361 = vmatpush1.msra.mxu0 0.0
    %4362 = vmatprep.subr.mxu0 0.0
    %4363 = vmatpush1.msra.mxu0 0.0
    %4364 = vmatprep.subr.mxu0 0.0
    %4365 = vmatpush1.msra.mxu0 0.0
    %4366 = vmatprep.subr.mxu0 0.0
    %4367 = vmatpush1.msra.mxu0 0.0
    %4368 = vmatprep.subr.mxu0 0.0
    %4369 = vmatpush1.msra.mxu0 0.0
    %4370 = vmatprep.subr.mxu0 0.0
    %4371 = vmatpush1.msra.mxu0 0.0
    %4372 = vmatprep.subr.mxu0 0.0
    %4373 = vmatpush1.msra.mxu0 0.0
    %4374 = vmatprep.subr.mxu0 0.0
    %4375 = vmatpush1.msra.mxu0 0.0
    %4376 = vmatprep.subr.mxu0 0.0
    %4377 = vmatpush1.msra.mxu0 0.0
    %4378 = vmatprep.subr.mxu0 0.0
    %4379 = vmatpush1.msra.mxu0 0.0
    %4380 = vmatprep.subr.mxu0 0.0
    %4381 = vmatpush1.msra.mxu0 0.0
    %4382 = vmatprep.subr.mxu0 0.0
    %4383 = vmatpush1.msra.mxu0 0.0
    %4384 = vmatprep.subr.mxu0 0.0
    %4385 = vmatpush1.msra.mxu0 0.0
    %4386 = vmatprep.subr.mxu0 0.0
    %4387 = vmatpush1.msra.mxu0 0.0
    %4388 = vmatprep.subr.mxu0 0.0
    %4389 = vmatpush1.msra.mxu0 0.0
    %4390 = vmatprep.subr.mxu0 0.0
    %4391 = vmatpush1.msra.mxu0 0.0
    %4392 = vmatprep.subr.mxu0 0.0
    %4393 = vmatpush1.msra.mxu0 0.0
    %4394 = vmatprep.subr.mxu0 0.0
    %4395 = vmatpush1.msra.mxu0 0.0
    %4396 = vmatprep.subr.mxu0 0.0
    %4397 = vmatpush1.msra.mxu0 0.0
    %4398 = vmatprep.subr.mxu0 0.0
    %4399 = vmatpush1.msra.mxu0 0.0
    %4400 = vmatprep.subr.mxu0 0.0
    %4401 = vmatpush1.msra.mxu0 0.0
    %4402 = vmatprep.subr.mxu0 0.0
    %4403 = vmatpush1.msra.mxu0 0.0
    %4404 = vmatprep.subr.mxu0 0.0
    %4405 = vmatpush1.msra.mxu0 0.0
    %4406 = vmatprep.subr.mxu0 0.0
    %4407 = vmatpush1.msra.mxu0 0.0
    %4408 = vmatprep.subr.mxu0 0.0
    %4409 = vmatpush1.msra.mxu0 0.0
    %4410 = vmatprep.subr.mxu0 0.0
    %4411 = vmatpush1.msra.mxu0 0.0
    %4412 = vmatprep.mubr.f32.mxu0 0.0
    %4413 = vmatmul.mubr.f32.gmra.mrb[0].mxu0 %v4343
    %v4414 = vpop.f32.mrb[0].mxu0
    %v4415 = vadd.f32 %v4340, %v4414
    %v4416 = vpop.f32.mrb[0].mxu0
    %4417 = vmatprep.mubr.f32.mxu0 0.0
    %4418 = vmatmul.mubr.f32.gmra.mrb[0].mxu0 %v4346
    %v4419 = vpop.f32.mrb[0].mxu0
    %v4420 = vadd.f32 %v4340, %v4419
    %v4421 = vpop.f32.mrb[0].mxu0
    %4422 = vdwg.mxu0
    %4423 = vst [vmem:[#allocation13] sm:$0xff] %v4415
    %4424 = vst [vmem:[#allocation13 + $0x8] sm:$0xff] %v4420
    // Predicated region
    $region50: #{tpu_custom_call.1} parent=1 // pred_check
      _
    $region51: #{tpu_custom_call.1} parent=1 // pred_check_branch
      %4426 = sbr.rel (0) target = $region53
    $region52: #{tpu_custom_call.1} parent=1 // pred_region
      %s4428 = ssub.s32 256, 256
      %4429 = vsyncadd [#allocation6], %s4428
      %s4430 = sshll.u32 [#allocation13], 4
      %s4431 = int_to_ptr.vmem [resolvable:$true] %s4430
      %4436 = dma.vmem_to_hbm [thread:$0]  %s4431, 256, %s7, [#allocation6], 128, 128, 8
    $region53: #{tpu_custom_call.1} parent=1 // pred_fallthru
      _
    // Predicated region
    $region54: #{tpu_custom_call.1} parent=1 // pred_check
      _
    $region55: #{tpu_custom_call.1} parent=1 // pred_check_branch
      %4438 = sbr.rel (0) target = $region57
    $region56: #{tpu_custom_call.1} parent=1 // pred_region
      %4439 = dma.done [#allocation6], 256
    $region57: #{tpu_custom_call.1} parent=1 // pred_fallthru
      _
    %4440 = vsyncpa [#allocation5], 1
    %4441 = vsyncpa [#allocation8], 1
    %4442 = vsyncpa [#allocation11], 1
    %4443 = vsyncpa [#allocation6], 1

</llo_original>
